<compile_context>
chip_gen: v7x
topology: tpu7x:2x2x1
jax: 0.10.0
libtpu: 0.0.40
codegen_flags: <defaults>
</compile_context>

<pallas_src>
import functools

import jax
import jax.numpy as jnp
from jax.experimental import pallas as pl
from jax.experimental.pallas import tpu as pltpu


def _make_rcab3d_kernel(D, H, W, C, k, res_scale, nb, chunk_taps, n_chunks):
    p = k // 2
    S = D * H * W
    n_taps = k * k * k
    max_shift = p * (H * W) + p * W + p
    PAD = max(128, ((max_shift + 127) // 128) * 128)   # lane-tile aligned halo
    rows_per_chunk = chunk_taps * C

    taps = [(kd, kh, kw) for kd in range(k) for kh in range(k) for kw in range(k)]
    center = (p * k + p) * k + p                        # tap with all-ones mask

    def kernel(betas_ref, x_ref, wmat_ref, cb_ref, masks_ref,
               w1t_ref, b1_ref, w2_ref, b2_ref, out_ref,
               xpad_ref, col_ref):
        beta1 = betas_ref[0]
        beta2 = betas_ref[1]
        beta_ca = betas_ref[2]

        def sigmoid(v):
            # EUP exp + approx reciprocal: keeps the divide off the VPU slot.
            return pl.reciprocal(1.0 + jnp.exp(-v), approx=True)

        def swish(v, beta):
            return v * sigmoid(beta * v)

        # The halo only has to be *finite* (its contribution is masked to 0),
        # but scratch is uninitialized, so zero it.  Done every grid step so
        # "parallel" batch sharding across v7x TensorCores stays safe.
        xpad_ref[:, 0:PAD] = jnp.zeros((C, PAD), jnp.bfloat16)
        xpad_ref[:, PAD + S:PAD + S + PAD] = jnp.zeros((C, PAD), jnp.bfloat16)

        def conv(src_f32):
            # src: (C, S) f32 value.  bf16 im2col in K-chunks, accumulating
            # MXU dot per chunk; f32 accumulator, bias added at the end.
            xpad_ref[:, PAD:PAD + S] = src_f32.astype(jnp.bfloat16)
            acc = jnp.zeros((C, S), jnp.float32)
            for c in range(n_chunks):
                lo = c * chunk_taps
                hi = min(lo + chunk_taps, n_taps)
                for t in range(lo, hi):
                    kd, kh, kw = taps[t]
                    delta = (kd - p) * H * W + (kh - p) * W + (kw - p)
                    shifted = xpad_ref[:, PAD + delta:PAD + delta + S]   # (C,S) bf16
                    r = (t - lo) * C
                    if t == center:
                        col_ref[r:r + C, :] = shifted                    # mask == 1
                    else:
                        col_ref[r:r + C, :] = shifted * masks_ref[t:t + 1, :]
                # Rows beyond (hi-lo)*C hold stale-but-finite data from the
                # previous chunk; their wmat columns are zero-padded, so they
                # contribute exactly 0 to the accumulation.
                acc = acc + jnp.dot(
                    wmat_ref[:, c * rows_per_chunk:(c + 1) * rows_per_chunk],
                    col_ref[...], preferred_element_type=jnp.float32)
            return acc + cb_ref[...]

        for b in range(nb):
            x = x_ref[b]                                   # (C, S) f32, lane-dense

            # res = swish1(conv(x)); res = swish2(conv(res))   (same conv twice)
            res = swish(conv(x), beta1)
            res = swish(conv(res), beta2)

            # CAlayer3D: global avg pool -> 1x1x1 conv -> swish -> 1x1x1 conv
            # -> sigmoid gate.  Tiny matvecs stay on VPU/XLU in f32.
            pooled = jnp.mean(res, axis=1, keepdims=True)                       # (C,1)
            y = jnp.sum(w1t_ref[...] * pooled, axis=0, keepdims=True) + b1_ref[...]
            y = swish(y, beta_ca)                                               # (1,Cr)
            y = jnp.sum(w2_ref[...] * y, axis=1, keepdims=True) + b2_ref[...]   # (C,1)
            gate = sigmoid(y)

            scaled = res * gate
            if res_scale != 1.0:
                scaled = scaled * res_scale
            out_ref[b] = scaled + x

    return kernel, PAD


@functools.partial(jax.jit, static_argnames=("res_scale",))
def rcab3d_pallas(x_ncdhw, conv_w, conv_b, w1, b1, w2, b2, betas, res_scale=1.0):
    # x_ncdhw: (N, C, D, H, W) PyTorch layout.  conv_w: (C_out, C_in, k, k, k).
    # w1: (C//r, C), w2: (C, C//r)  (1x1x1 conv weights as matrices).
    N, C, D, H, W = x_ncdhw.shape
    k = conv_w.shape[-1]
    Cr = w1.shape[0]
    p = k // 2
    S = D * H * W
    n_taps = k * k * k
    assert S % 128 == 0, "flattened spatial dim must be a multiple of 128"

    # Batch blocking: amortize the ~0.35us per-grid-step overhead (v5e/v6e)
    # while always keeping >=2 grid steps so the "parallel" axis can shard
    # across v7x's two TensorCores.
    NB = 1
    for cand in (4, 3, 2):
        if N % cand == 0 and N // cand >= 2:
            NB = cand
            break

    # K-chunking of the im2col contraction (<=128 rows per chunk).
    chunk_taps = max(1, 128 // C)
    n_chunks = -(-n_taps // chunk_taps)
    rows_per_chunk = chunk_taps * C

    x = x_ncdhw.reshape(N, C, S).astype(jnp.float32)

    # Conv weight as im2col matrix (C_out, k^3*C_in), zero-padded to whole
    # chunks, cast to bf16 for the MXU-native path.
    wmat = jnp.transpose(conv_w.astype(jnp.float32),
                         (0, 2, 3, 4, 1)).reshape(C, n_taps * C)
    wmat = jnp.pad(wmat, ((0, 0), (0, n_chunks * rows_per_chunk - n_taps * C)))
    wmat = wmat.astype(jnp.bfloat16)
    cb = conv_b.reshape(C, 1).astype(jnp.float32)
    w1t = jnp.transpose(w1.astype(jnp.float32))               # (C, Cr)
    b1r = b1.reshape(1, Cr).astype(jnp.float32)
    w2m = w2.astype(jnp.float32)                              # (C, Cr)
    b2r = b2.reshape(C, 1).astype(jnp.float32)

    # ONE boundary-mask row per tap on the flattened spatial axis (broadcast
    # over channels inside the kernel), sublane-padded, bf16 (0/1 is exact).
    s_idx = jnp.arange(S)
    d_idx = s_idx // (H * W)
    h_idx = (s_idx // W) % H
    w_idx = s_idx % W
    mask_rows = []
    for kd in range(k):
        for kh in range(k):
            for kw in range(k):
                dd, dh, dw = kd - p, kh - p, kw - p
                m = ((d_idx + dd >= 0) & (d_idx + dd < D) &
                     (h_idx + dh >= 0) & (h_idx + dh < H) &
                     (w_idx + dw >= 0) & (w_idx + dw < W))
                mask_rows.append(m)
    n_mask_rows = -(-n_taps // 8) * 8
    masks = jnp.stack(mask_rows).astype(jnp.bfloat16)          # (27, S)
    masks = jnp.pad(masks, ((0, n_mask_rows - n_taps), (0, 0)))

    kernel, PAD = _make_rcab3d_kernel(D, H, W, C, k, float(res_scale),
                                      NB, chunk_taps, n_chunks)

    out = pl.pallas_call(
        kernel,
        out_shape=jax.ShapeDtypeStruct((N, C, S), jnp.float32),
        grid=(N // NB,),
        in_specs=[
            pl.BlockSpec(memory_space=pltpu.MemorySpace.SMEM),             # betas (3,)
            pl.BlockSpec((NB, C, S), lambda n: (n, 0, 0)),                 # x
            pl.BlockSpec((C, n_chunks * rows_per_chunk), lambda n: (0, 0)),  # conv W
            pl.BlockSpec((C, 1), lambda n: (0, 0)),                        # conv bias
            pl.BlockSpec((n_mask_rows, S), lambda n: (0, 0)),              # tap masks
            pl.BlockSpec((C, Cr), lambda n: (0, 0)),                       # CA conv1 W^T
            pl.BlockSpec((1, Cr), lambda n: (0, 0)),                       # CA conv1 b
            pl.BlockSpec((C, Cr), lambda n: (0, 0)),                       # CA conv2 W
            pl.BlockSpec((C, 1), lambda n: (0, 0)),                        # CA conv2 b
        ],
        out_specs=pl.BlockSpec((NB, C, S), lambda n: (n, 0, 0)),
        scratch_shapes=[
            pltpu.VMEM((C, PAD + S + PAD), jnp.bfloat16),      # padded line buffer
            pltpu.VMEM((rows_per_chunk, S), jnp.bfloat16),     # per-chunk im2col RHS
        ],
        compiler_params=pltpu.CompilerParams(
            dimension_semantics=("parallel",)),
    )(betas.astype(jnp.float32), x, wmat, cb, masks, w1t, b1r, w2m, b2r)

    return out.reshape(N, C, D, H, W)


def rcab3d_ref(x, conv_w, conv_b, w1, b1, w2, b2, betas, res_scale=1.0):
    # Pure-JAX f32 reference in NCDHW with the same parameter layouts.
    N, C, D, H, W = x.shape
    k = conv_w.shape[-1]
    p = k // 2
    x = x.astype(jnp.float32)

    def swish(v, beta):
        return v * jax.nn.sigmoid(beta * v)

    def conv(v):
        vp = jnp.pad(v, ((0, 0), (0, 0), (p, p), (p, p), (p, p)))
        out = jnp.zeros((N, C, D, H, W), jnp.float32)
        for kd in range(k):
            for kh in range(k):
                for kw in range(k):
                    out = out + jnp.einsum(
                        'ncdhw,oc->nodhw',
                        vp[:, :, kd:kd + D, kh:kh + H, kw:kw + W],
                        conv_w[:, :, kd, kh, kw])
        return out + conv_b.reshape(1, C, 1, 1, 1)

    res = swish(conv(x), betas[0])
    res = swish(conv(res), betas[1])
    pooled = jnp.mean(res, axis=(2, 3, 4), keepdims=True)        # (N, C, 1, 1, 1)
    y = jnp.einsum('oc,ncdhw->nodhw', w1, pooled) + b1.reshape(1, -1, 1, 1, 1)
    y = swish(y, betas[2])
    y = jnp.einsum('oc,ncdhw->nodhw', w2, y) + b2.reshape(1, -1, 1, 1, 1)
    y = jax.nn.sigmoid(y)
    return res * y * res_scale + x


if __name__ == "__main__":
    # Module config: in_channel=8, kernel_size=3, reduction=2 -> Cr=4.
    N, C, D, H, W = 2, 8, 8, 8, 8
    k, reduction = 3, 2
    Cr = C // reduction

    key = jax.random.PRNGKey(0)
    ks = jax.random.split(key, 8)
    conv_w = jax.random.normal(ks[0], (C, C, k, k, k), jnp.float32) * 0.1  # OIDHW
    conv_b = jax.random.normal(ks[1], (C,), jnp.float32) * 0.1
    w1 = jax.random.normal(ks[2], (Cr, C), jnp.float32) * 0.1   # CA conv1 (1x1x1)
    b1 = jax.random.normal(ks[3], (Cr,), jnp.float32) * 0.1
    w2 = jax.random.normal(ks[4], (C, Cr), jnp.float32) * 0.1   # CA conv2 (1x1x1)
    b2 = jax.random.normal(ks[5], (C,), jnp.float32) * 0.1
    betas = jnp.ones((3,), jnp.float32)                         # Swish betas init=1
    x = jax.random.normal(ks[6], (N, C, D, H, W), jnp.float32)

    out = rcab3d_pallas(x, conv_w, conv_b, w1, b1, w2, b2, betas, res_scale=1.0)
    out = jax.block_until_ready(out)

    ref = rcab3d_ref(x, conv_w, conv_b, w1, b1, w2, b2, betas, res_scale=1.0)
    assert out.shape == x.shape
    # bf16 conv path + approx-reciprocal sigmoid: looser tolerance than f32.
    err = float(jnp.max(jnp.abs(out - ref)))
    assert err < 5e-2, err

    # TODO(synk): BatchNorm3d branch (if_bn=True) not implemented; default path is bn=False.
    print("KERNEL_OK")
</pallas_src>

<mosaic_0001>
module attributes {stable_mosaic.version = 11 : i64} {
  func.func @kernel(%arg0: i32, %arg1: memref<3xf32, #tpu.memory_space<smem>>, %arg2: memref<1x8x512xf32, #tpu.memory_space<vmem>>, %arg3: memref<8x256xbf16, #tpu.memory_space<vmem>>, %arg4: memref<8x1xf32, #tpu.memory_space<vmem>>, %arg5: memref<32x512xbf16, #tpu.memory_space<vmem>>, %arg6: memref<8x4xf32, #tpu.memory_space<vmem>>, %arg7: memref<1x4xf32, #tpu.memory_space<vmem>>, %arg8: memref<8x4xf32, #tpu.memory_space<vmem>>, %arg9: memref<8x1xf32, #tpu.memory_space<vmem>>, %arg10: memref<1x8x512xf32, #tpu.memory_space<vmem>>, %arg11: memref<8x768xbf16, #tpu.memory_space<vmem>>, %arg12: memref<128x512xbf16, #tpu.memory_space<vmem>>) attributes {dimension_semantics = [#tpu.dimension_semantics<parallel>], iteration_bounds = array<i64: 2>, scalar_prefetch = 0 : i64, scratch_operands = 2 : i64, tpu.core_type = #tpu.core_type<tc>, window_params = [{transform_indices = @transform_0, window_bounds = array<i64: 3>}, {transform_indices = @transform_1, window_bounds = array<i64: 1, 8, 512>}, {pipeline_mode = #tpu.pipeline_mode<synchronous>, transform_indices = @transform_2, window_bounds = array<i64: 8, 256>}, {pipeline_mode = #tpu.pipeline_mode<synchronous>, transform_indices = @transform_3, window_bounds = array<i64: 8, 1>}, {pipeline_mode = #tpu.pipeline_mode<synchronous>, transform_indices = @transform_4, window_bounds = array<i64: 32, 512>}, {pipeline_mode = #tpu.pipeline_mode<synchronous>, transform_indices = @transform_5, window_bounds = array<i64: 8, 4>}, {pipeline_mode = #tpu.pipeline_mode<synchronous>, transform_indices = @transform_6, window_bounds = array<i64: 1, 4>}, {pipeline_mode = #tpu.pipeline_mode<synchronous>, transform_indices = @transform_7, window_bounds = array<i64: 8, 4>}, {pipeline_mode = #tpu.pipeline_mode<synchronous>, transform_indices = @transform_8, window_bounds = array<i64: 8, 1>}, {transform_indices = @transform_9, window_bounds = array<i64: 1, 8, 512>}]} {
    %c0 = arith.constant 0 : index
    %0 = memref.load %arg1[%c0] : memref<3xf32, #tpu.memory_space<smem>>
    %c1 = arith.constant 1 : index
    %1 = memref.load %arg1[%c1] : memref<3xf32, #tpu.memory_space<smem>>
    %c2 = arith.constant 2 : index
    %2 = memref.load %arg1[%c2] : memref<3xf32, #tpu.memory_space<smem>>
    %cst = arith.constant 0.000000e+00 : bf16
    %3 = vector.broadcast %cst : bf16 to vector<8x128xbf16>
    %c0_0 = arith.constant 0 : index
    %c0_1 = arith.constant 0 : index
    %4 = vector.load %arg11[%c0_0, %c0_1] : memref<8x768xbf16, #tpu.memory_space<vmem>>, vector<8x128xbf16>
    tpu.vector_store %arg11[%c0_0, %c0_1], %3 {strides = array<i32>} : memref<8x768xbf16, #tpu.memory_space<vmem>>, vector<8x128xbf16>,
    %cst_2 = arith.constant 0.000000e+00 : bf16
    %5 = vector.broadcast %cst_2 : bf16 to vector<8x128xbf16>
    %c0_3 = arith.constant 0 : index
    %c640 = arith.constant 640 : index
    %6 = vector.load %arg11[%c0_3, %c640] : memref<8x768xbf16, #tpu.memory_space<vmem>>, vector<8x128xbf16>
    tpu.vector_store %arg11[%c0_3, %c640], %5 {strides = array<i32>} : memref<8x768xbf16, #tpu.memory_space<vmem>>, vector<8x128xbf16>,
    %c0_4 = arith.constant 0 : index
    %c0_5 = arith.constant 0 : index
    %c0_6 = arith.constant 0 : index
    %7 = vector.load %arg2[%c0_4, %c0_5, %c0_6] : memref<1x8x512xf32, #tpu.memory_space<vmem>>, vector<1x8x512xf32>
    %8 = vector.shape_cast %7 : vector<1x8x512xf32> to vector<8x512xf32>
    %9 = arith.truncf %8 : vector<8x512xf32> to vector<8x512xbf16>
    %c0_7 = arith.constant 0 : index
    %c128 = arith.constant 128 : index
    %10 = vector.load %arg11[%c0_7, %c128] : memref<8x768xbf16, #tpu.memory_space<vmem>>, vector<8x512xbf16>
    tpu.vector_store %arg11[%c0_7, %c128], %9 {strides = array<i32>} : memref<8x768xbf16, #tpu.memory_space<vmem>>, vector<8x512xbf16>,
    %cst_8 = arith.constant 0.000000e+00 : f32
    %11 = vector.broadcast %cst_8 : f32 to vector<8x512xf32>
    %c0_9 = arith.constant 0 : index
    %c55 = arith.constant 55 : index
    %12 = vector.load %arg11[%c0_9, %c55] : memref<8x768xbf16, #tpu.memory_space<vmem>>, vector<8x512xbf16>
    %c0_10 = arith.constant 0 : index
    %c0_11 = arith.constant 0 : index
    %13 = vector.load %arg5[%c0_10, %c0_11] : memref<32x512xbf16, #tpu.memory_space<vmem>>, vector<1x512xbf16>
    %14 = vector.broadcast %13 : vector<1x512xbf16> to vector<8x512xbf16>
    %15 = arith.mulf %12, %14 : vector<8x512xbf16>
    %c0_12 = arith.constant 0 : index
    %c0_13 = arith.constant 0 : index
    %16 = vector.load %arg12[%c0_12, %c0_13] : memref<128x512xbf16, #tpu.memory_space<vmem>>, vector<8x512xbf16>
    tpu.vector_store %arg12[%c0_12, %c0_13], %15 {strides = array<i32>} : memref<128x512xbf16, #tpu.memory_space<vmem>>, vector<8x512xbf16>,
    %c0_14 = arith.constant 0 : index
    %c56 = arith.constant 56 : index
    %17 = vector.load %arg11[%c0_14, %c56] : memref<8x768xbf16, #tpu.memory_space<vmem>>, vector<8x512xbf16>
    %c1_15 = arith.constant 1 : index
    %c0_16 = arith.constant 0 : index
    %18 = vector.load %arg5[%c1_15, %c0_16] : memref<32x512xbf16, #tpu.memory_space<vmem>>, vector<1x512xbf16>
    %19 = vector.broadcast %18 : vector<1x512xbf16> to vector<8x512xbf16>
    %20 = arith.mulf %17, %19 : vector<8x512xbf16>
    %c8 = arith.constant 8 : index
    %c0_17 = arith.constant 0 : index
    %21 = vector.load %arg12[%c8, %c0_17] : memref<128x512xbf16, #tpu.memory_space<vmem>>, vector<8x512xbf16>
    tpu.vector_store %arg12[%c8, %c0_17], %20 {strides = array<i32>} : memref<128x512xbf16, #tpu.memory_space<vmem>>, vector<8x512xbf16>,
    %c0_18 = arith.constant 0 : index
    %c57 = arith.constant 57 : index
    %22 = vector.load %arg11[%c0_18, %c57] : memref<8x768xbf16, #tpu.memory_space<vmem>>, vector<8x512xbf16>
    %c2_19 = arith.constant 2 : index
    %c0_20 = arith.constant 0 : index
    %23 = vector.load %arg5[%c2_19, %c0_20] : memref<32x512xbf16, #tpu.memory_space<vmem>>, vector<1x512xbf16>
    %24 = vector.broadcast %23 : vector<1x512xbf16> to vector<8x512xbf16>
    %25 = arith.mulf %22, %24 : vector<8x512xbf16>
    %c16 = arith.constant 16 : index
    %c0_21 = arith.constant 0 : index
    %26 = vector.load %arg12[%c16, %c0_21] : memref<128x512xbf16, #tpu.memory_space<vmem>>, vector<8x512xbf16>
    tpu.vector_store %arg12[%c16, %c0_21], %25 {strides = array<i32>} : memref<128x512xbf16, #tpu.memory_space<vmem>>, vector<8x512xbf16>,
    %c0_22 = arith.constant 0 : index
    %c63 = arith.constant 63 : index
    %27 = vector.load %arg11[%c0_22, %c63] : memref<8x768xbf16, #tpu.memory_space<vmem>>, vector<8x512xbf16>
    %c3 = arith.constant 3 : index
    %c0_23 = arith.constant 0 : index
    %28 = vector.load %arg5[%c3, %c0_23] : memref<32x512xbf16, #tpu.memory_space<vmem>>, vector<1x512xbf16>
    %29 = vector.broadcast %28 : vector<1x512xbf16> to vector<8x512xbf16>
    %30 = arith.mulf %27, %29 : vector<8x512xbf16>
    %c24 = arith.constant 24 : index
    %c0_24 = arith.constant 0 : index
    %31 = vector.load %arg12[%c24, %c0_24] : memref<128x512xbf16, #tpu.memory_space<vmem>>, vector<8x512xbf16>
    tpu.vector_store %arg12[%c24, %c0_24], %30 {strides = array<i32>} : memref<128x512xbf16, #tpu.memory_space<vmem>>, vector<8x512xbf16>,
    %c0_25 = arith.constant 0 : index
    %c64 = arith.constant 64 : index
    %32 = vector.load %arg11[%c0_25, %c64] : memref<8x768xbf16, #tpu.memory_space<vmem>>, vector<8x512xbf16>
    %c4 = arith.constant 4 : index
    %c0_26 = arith.constant 0 : index
    %33 = vector.load %arg5[%c4, %c0_26] : memref<32x512xbf16, #tpu.memory_space<vmem>>, vector<1x512xbf16>
    %34 = vector.broadcast %33 : vector<1x512xbf16> to vector<8x512xbf16>
    %35 = arith.mulf %32, %34 : vector<8x512xbf16>
    %c32 = arith.constant 32 : index
    %c0_27 = arith.constant 0 : index
    %36 = vector.load %arg12[%c32, %c0_27] : memref<128x512xbf16, #tpu.memory_space<vmem>>, vector<8x512xbf16>
    tpu.vector_store %arg12[%c32, %c0_27], %35 {strides = array<i32>} : memref<128x512xbf16, #tpu.memory_space<vmem>>, vector<8x512xbf16>,
    %c0_28 = arith.constant 0 : index
    %c65 = arith.constant 65 : index
    %37 = vector.load %arg11[%c0_28, %c65] : memref<8x768xbf16, #tpu.memory_space<vmem>>, vector<8x512xbf16>
    %c5 = arith.constant 5 : index
    %c0_29 = arith.constant 0 : index
    %38 = vector.load %arg5[%c5, %c0_29] : memref<32x512xbf16, #tpu.memory_space<vmem>>, vector<1x512xbf16>
    %39 = vector.broadcast %38 : vector<1x512xbf16> to vector<8x512xbf16>
    %40 = arith.mulf %37, %39 : vector<8x512xbf16>
    %c40 = arith.constant 40 : index
    %c0_30 = arith.constant 0 : index
    %41 = vector.load %arg12[%c40, %c0_30] : memref<128x512xbf16, #tpu.memory_space<vmem>>, vector<8x512xbf16>
    tpu.vector_store %arg12[%c40, %c0_30], %40 {strides = array<i32>} : memref<128x512xbf16, #tpu.memory_space<vmem>>, vector<8x512xbf16>,
    %c0_31 = arith.constant 0 : index
    %c71 = arith.constant 71 : index
    %42 = vector.load %arg11[%c0_31, %c71] : memref<8x768xbf16, #tpu.memory_space<vmem>>, vector<8x512xbf16>
    %c6 = arith.constant 6 : index
    %c0_32 = arith.constant 0 : index
    %43 = vector.load %arg5[%c6, %c0_32] : memref<32x512xbf16, #tpu.memory_space<vmem>>, vector<1x512xbf16>
    %44 = vector.broadcast %43 : vector<1x512xbf16> to vector<8x512xbf16>
    %45 = arith.mulf %42, %44 : vector<8x512xbf16>
    %c48 = arith.constant 48 : index
    %c0_33 = arith.constant 0 : index
    %46 = vector.load %arg12[%c48, %c0_33] : memref<128x512xbf16, #tpu.memory_space<vmem>>, vector<8x512xbf16>
    tpu.vector_store %arg12[%c48, %c0_33], %45 {strides = array<i32>} : memref<128x512xbf16, #tpu.memory_space<vmem>>, vector<8x512xbf16>,
    %c0_34 = arith.constant 0 : index
    %c72 = arith.constant 72 : index
    %47 = vector.load %arg11[%c0_34, %c72] : memref<8x768xbf16, #tpu.memory_space<vmem>>, vector<8x512xbf16>
    %c7 = arith.constant 7 : index
    %c0_35 = arith.constant 0 : index
    %48 = vector.load %arg5[%c7, %c0_35] : memref<32x512xbf16, #tpu.memory_space<vmem>>, vector<1x512xbf16>
    %49 = vector.broadcast %48 : vector<1x512xbf16> to vector<8x512xbf16>
    %50 = arith.mulf %47, %49 : vector<8x512xbf16>
    %c56_36 = arith.constant 56 : index
    %c0_37 = arith.constant 0 : index
    %51 = vector.load %arg12[%c56_36, %c0_37] : memref<128x512xbf16, #tpu.memory_space<vmem>>, vector<8x512xbf16>
    tpu.vector_store %arg12[%c56_36, %c0_37], %50 {strides = array<i32>} : memref<128x512xbf16, #tpu.memory_space<vmem>>, vector<8x512xbf16>,
    %c0_38 = arith.constant 0 : index
    %c73 = arith.constant 73 : index
    %52 = vector.load %arg11[%c0_38, %c73] : memref<8x768xbf16, #tpu.memory_space<vmem>>, vector<8x512xbf16>
    %c8_39 = arith.constant 8 : index
    %c0_40 = arith.constant 0 : index
    %53 = vector.load %arg5[%c8_39, %c0_40] : memref<32x512xbf16, #tpu.memory_space<vmem>>, vector<1x512xbf16>
    %54 = vector.broadcast %53 : vector<1x512xbf16> to vector<8x512xbf16>
    %55 = arith.mulf %52, %54 : vector<8x512xbf16>
    %c64_41 = arith.constant 64 : index
    %c0_42 = arith.constant 0 : index
    %56 = vector.load %arg12[%c64_41, %c0_42] : memref<128x512xbf16, #tpu.memory_space<vmem>>, vector<8x512xbf16>
    tpu.vector_store %arg12[%c64_41, %c0_42], %55 {strides = array<i32>} : memref<128x512xbf16, #tpu.memory_space<vmem>>, vector<8x512xbf16>,
    %c0_43 = arith.constant 0 : index
    %c119 = arith.constant 119 : index
    %57 = vector.load %arg11[%c0_43, %c119] : memref<8x768xbf16, #tpu.memory_space<vmem>>, vector<8x512xbf16>
    %c9 = arith.constant 9 : index
    %c0_44 = arith.constant 0 : index
    %58 = vector.load %arg5[%c9, %c0_44] : memref<32x512xbf16, #tpu.memory_space<vmem>>, vector<1x512xbf16>
    %59 = vector.broadcast %58 : vector<1x512xbf16> to vector<8x512xbf16>
    %60 = arith.mulf %57, %59 : vector<8x512xbf16>
    %c72_45 = arith.constant 72 : index
    %c0_46 = arith.constant 0 : index
    %61 = vector.load %arg12[%c72_45, %c0_46] : memref<128x512xbf16, #tpu.memory_space<vmem>>, vector<8x512xbf16>
    tpu.vector_store %arg12[%c72_45, %c0_46], %60 {strides = array<i32>} : memref<128x512xbf16, #tpu.memory_space<vmem>>, vector<8x512xbf16>,
    %c0_47 = arith.constant 0 : index
    %c120 = arith.constant 120 : index
    %62 = vector.load %arg11[%c0_47, %c120] : memref<8x768xbf16, #tpu.memory_space<vmem>>, vector<8x512xbf16>
    %c10 = arith.constant 10 : index
    %c0_48 = arith.constant 0 : index
    %63 = vector.load %arg5[%c10, %c0_48] : memref<32x512xbf16, #tpu.memory_space<vmem>>, vector<1x512xbf16>
    %64 = vector.broadcast %63 : vector<1x512xbf16> to vector<8x512xbf16>
    %65 = arith.mulf %62, %64 : vector<8x512xbf16>
    %c80 = arith.constant 80 : index
    %c0_49 = arith.constant 0 : index
    %66 = vector.load %arg12[%c80, %c0_49] : memref<128x512xbf16, #tpu.memory_space<vmem>>, vector<8x512xbf16>
    tpu.vector_store %arg12[%c80, %c0_49], %65 {strides = array<i32>} : memref<128x512xbf16, #tpu.memory_space<vmem>>, vector<8x512xbf16>,
    %c0_50 = arith.constant 0 : index
    %c121 = arith.constant 121 : index
    %67 = vector.load %arg11[%c0_50, %c121] : memref<8x768xbf16, #tpu.memory_space<vmem>>, vector<8x512xbf16>
    %c11 = arith.constant 11 : index
    %c0_51 = arith.constant 0 : index
    %68 = vector.load %arg5[%c11, %c0_51] : memref<32x512xbf16, #tpu.memory_space<vmem>>, vector<1x512xbf16>
    %69 = vector.broadcast %68 : vector<1x512xbf16> to vector<8x512xbf16>
    %70 = arith.mulf %67, %69 : vector<8x512xbf16>
    %c88 = arith.constant 88 : index
    %c0_52 = arith.constant 0 : index
    %71 = vector.load %arg12[%c88, %c0_52] : memref<128x512xbf16, #tpu.memory_space<vmem>>, vector<8x512xbf16>
    tpu.vector_store %arg12[%c88, %c0_52], %70 {strides = array<i32>} : memref<128x512xbf16, #tpu.memory_space<vmem>>, vector<8x512xbf16>,
    %c0_53 = arith.constant 0 : index
    %c127 = arith.constant 127 : index
    %72 = vector.load %arg11[%c0_53, %c127] : memref<8x768xbf16, #tpu.memory_space<vmem>>, vector<8x512xbf16>
    %c12 = arith.constant 12 : index
    %c0_54 = arith.constant 0 : index
    %73 = vector.load %arg5[%c12, %c0_54] : memref<32x512xbf16, #tpu.memory_space<vmem>>, vector<1x512xbf16>
    %74 = vector.broadcast %73 : vector<1x512xbf16> to vector<8x512xbf16>
    %75 = arith.mulf %72, %74 : vector<8x512xbf16>
    %c96 = arith.constant 96 : index
    %c0_55 = arith.constant 0 : index
    %76 = vector.load %arg12[%c96, %c0_55] : memref<128x512xbf16, #tpu.memory_space<vmem>>, vector<8x512xbf16>
    tpu.vector_store %arg12[%c96, %c0_55], %75 {strides = array<i32>} : memref<128x512xbf16, #tpu.memory_space<vmem>>, vector<8x512xbf16>,
    %c0_56 = arith.constant 0 : index
    %c128_57 = arith.constant 128 : index
    %77 = vector.load %arg11[%c0_56, %c128_57] : memref<8x768xbf16, #tpu.memory_space<vmem>>, vector<8x512xbf16>
    %c104 = arith.constant 104 : index
    %c0_58 = arith.constant 0 : index
    %78 = vector.load %arg12[%c104, %c0_58] : memref<128x512xbf16, #tpu.memory_space<vmem>>, vector<8x512xbf16>
    tpu.vector_store %arg12[%c104, %c0_58], %77 {strides = array<i32>} : memref<128x512xbf16, #tpu.memory_space<vmem>>, vector<8x512xbf16>,
    %c0_59 = arith.constant 0 : index
    %c129 = arith.constant 129 : index
    %79 = vector.load %arg11[%c0_59, %c129] : memref<8x768xbf16, #tpu.memory_space<vmem>>, vector<8x512xbf16>
    %c14 = arith.constant 14 : index
    %c0_60 = arith.constant 0 : index
    %80 = vector.load %arg5[%c14, %c0_60] : memref<32x512xbf16, #tpu.memory_space<vmem>>, vector<1x512xbf16>
    %81 = vector.broadcast %80 : vector<1x512xbf16> to vector<8x512xbf16>
    %82 = arith.mulf %79, %81 : vector<8x512xbf16>
    %c112 = arith.constant 112 : index
    %c0_61 = arith.constant 0 : index
    %83 = vector.load %arg12[%c112, %c0_61] : memref<128x512xbf16, #tpu.memory_space<vmem>>, vector<8x512xbf16>
    tpu.vector_store %arg12[%c112, %c0_61], %82 {strides = array<i32>} : memref<128x512xbf16, #tpu.memory_space<vmem>>, vector<8x512xbf16>,
    %c0_62 = arith.constant 0 : index
    %c135 = arith.constant 135 : index
    %84 = vector.load %arg11[%c0_62, %c135] : memref<8x768xbf16, #tpu.memory_space<vmem>>, vector<8x512xbf16>
    %c15 = arith.constant 15 : index
    %c0_63 = arith.constant 0 : index
    %85 = vector.load %arg5[%c15, %c0_63] : memref<32x512xbf16, #tpu.memory_space<vmem>>, vector<1x512xbf16>
    %86 = vector.broadcast %85 : vector<1x512xbf16> to vector<8x512xbf16>
    %87 = arith.mulf %84, %86 : vector<8x512xbf16>
    %c120_64 = arith.constant 120 : index
    %c0_65 = arith.constant 0 : index
    %88 = vector.load %arg12[%c120_64, %c0_65] : memref<128x512xbf16, #tpu.memory_space<vmem>>, vector<8x512xbf16>
    tpu.vector_store %arg12[%c120_64, %c0_65], %87 {strides = array<i32>} : memref<128x512xbf16, #tpu.memory_space<vmem>>, vector<8x512xbf16>,
    %c0_66 = arith.constant 0 : index
    %c0_67 = arith.constant 0 : index
    %89 = vector.load %arg3[%c0_66, %c0_67] : memref<8x256xbf16, #tpu.memory_space<vmem>>, vector<8x128xbf16>
    %c0_68 = arith.constant 0 : index
    %c0_69 = arith.constant 0 : index
    %90 = vector.load %arg12[%c0_68, %c0_69] : memref<128x512xbf16, #tpu.memory_space<vmem>>, vector<128x512xbf16>
    %cst_70 = arith.constant dense<0.000000e+00> : vector<8x512xf32>
    %91 = tpu.matmul %89, %90, %cst_70 {dimension_numbers = #tpu.dot_dimension_numbers<[1], [0], [0], [1], [0, 0, 1, 1], [], []>} : vector<8x128xbf16>, vector<128x512xbf16>, vector<8x512xf32> -> vector<8x512xf32>
    %92 = arith.addf %11, %91 : vector<8x512xf32>
    %c0_71 = arith.constant 0 : index
    %c136 = arith.constant 136 : index
    %93 = vector.load %arg11[%c0_71, %c136] : memref<8x768xbf16, #tpu.memory_space<vmem>>, vector<8x512xbf16>
    %c16_72 = arith.constant 16 : index
    %c0_73 = arith.constant 0 : index
    %94 = vector.load %arg5[%c16_72, %c0_73] : memref<32x512xbf16, #tpu.memory_space<vmem>>, vector<1x512xbf16>
    %95 = vector.broadcast %94 : vector<1x512xbf16> to vector<8x512xbf16>
    %96 = arith.mulf %93, %95 : vector<8x512xbf16>
    %c0_74 = arith.constant 0 : index
    %c0_75 = arith.constant 0 : index
    %97 = vector.load %arg12[%c0_74, %c0_75] : memref<128x512xbf16, #tpu.memory_space<vmem>>, vector<8x512xbf16>
    tpu.vector_store %arg12[%c0_74, %c0_75], %96 {strides = array<i32>} : memref<128x512xbf16, #tpu.memory_space<vmem>>, vector<8x512xbf16>,
    %c0_76 = arith.constant 0 : index
    %c137 = arith.constant 137 : index
    %98 = vector.load %arg11[%c0_76, %c137] : memref<8x768xbf16, #tpu.memory_space<vmem>>, vector<8x512xbf16>
    %c17 = arith.constant 17 : index
    %c0_77 = arith.constant 0 : index
    %99 = vector.load %arg5[%c17, %c0_77] : memref<32x512xbf16, #tpu.memory_space<vmem>>, vector<1x512xbf16>
    %100 = vector.broadcast %99 : vector<1x512xbf16> to vector<8x512xbf16>
    %101 = arith.mulf %98, %100 : vector<8x512xbf16>
    %c8_78 = arith.constant 8 : index
    %c0_79 = arith.constant 0 : index
    %102 = vector.load %arg12[%c8_78, %c0_79] : memref<128x512xbf16, #tpu.memory_space<vmem>>, vector<8x512xbf16>
    tpu.vector_store %arg12[%c8_78, %c0_79], %101 {strides = array<i32>} : memref<128x512xbf16, #tpu.memory_space<vmem>>, vector<8x512xbf16>,
    %c0_80 = arith.constant 0 : index
    %c183 = arith.constant 183 : index
    %103 = vector.load %arg11[%c0_80, %c183] : memref<8x768xbf16, #tpu.memory_space<vmem>>, vector<8x512xbf16>
    %c18 = arith.constant 18 : index
    %c0_81 = arith.constant 0 : index
    %104 = vector.load %arg5[%c18, %c0_81] : memref<32x512xbf16, #tpu.memory_space<vmem>>, vector<1x512xbf16>
    %105 = vector.broadcast %104 : vector<1x512xbf16> to vector<8x512xbf16>
    %106 = arith.mulf %103, %105 : vector<8x512xbf16>
    %c16_82 = arith.constant 16 : index
    %c0_83 = arith.constant 0 : index
    %107 = vector.load %arg12[%c16_82, %c0_83] : memref<128x512xbf16, #tpu.memory_space<vmem>>, vector<8x512xbf16>
    tpu.vector_store %arg12[%c16_82, %c0_83], %106 {strides = array<i32>} : memref<128x512xbf16, #tpu.memory_space<vmem>>, vector<8x512xbf16>,
    %c0_84 = arith.constant 0 : index
    %c184 = arith.constant 184 : index
    %108 = vector.load %arg11[%c0_84, %c184] : memref<8x768xbf16, #tpu.memory_space<vmem>>, vector<8x512xbf16>
    %c19 = arith.constant 19 : index
    %c0_85 = arith.constant 0 : index
    %109 = vector.load %arg5[%c19, %c0_85] : memref<32x512xbf16, #tpu.memory_space<vmem>>, vector<1x512xbf16>
    %110 = vector.broadcast %109 : vector<1x512xbf16> to vector<8x512xbf16>
    %111 = arith.mulf %108, %110 : vector<8x512xbf16>
    %c24_86 = arith.constant 24 : index
    %c0_87 = arith.constant 0 : index
    %112 = vector.load %arg12[%c24_86, %c0_87] : memref<128x512xbf16, #tpu.memory_space<vmem>>, vector<8x512xbf16>
    tpu.vector_store %arg12[%c24_86, %c0_87], %111 {strides = array<i32>} : memref<128x512xbf16, #tpu.memory_space<vmem>>, vector<8x512xbf16>,
    %c0_88 = arith.constant 0 : index
    %c185 = arith.constant 185 : index
    %113 = vector.load %arg11[%c0_88, %c185] : memref<8x768xbf16, #tpu.memory_space<vmem>>, vector<8x512xbf16>
    %c20 = arith.constant 20 : index
    %c0_89 = arith.constant 0 : index
    %114 = vector.load %arg5[%c20, %c0_89] : memref<32x512xbf16, #tpu.memory_space<vmem>>, vector<1x512xbf16>
    %115 = vector.broadcast %114 : vector<1x512xbf16> to vector<8x512xbf16>
    %116 = arith.mulf %113, %115 : vector<8x512xbf16>
    %c32_90 = arith.constant 32 : index
    %c0_91 = arith.constant 0 : index
    %117 = vector.load %arg12[%c32_90, %c0_91] : memref<128x512xbf16, #tpu.memory_space<vmem>>, vector<8x512xbf16>
    tpu.vector_store %arg12[%c32_90, %c0_91], %116 {strides = array<i32>} : memref<128x512xbf16, #tpu.memory_space<vmem>>, vector<8x512xbf16>,
    %c0_92 = arith.constant 0 : index
    %c191 = arith.constant 191 : index
    %118 = vector.load %arg11[%c0_92, %c191] : memref<8x768xbf16, #tpu.memory_space<vmem>>, vector<8x512xbf16>
    %c21 = arith.constant 21 : index
    %c0_93 = arith.constant 0 : index
    %119 = vector.load %arg5[%c21, %c0_93] : memref<32x512xbf16, #tpu.memory_space<vmem>>, vector<1x512xbf16>
    %120 = vector.broadcast %119 : vector<1x512xbf16> to vector<8x512xbf16>
    %121 = arith.mulf %118, %120 : vector<8x512xbf16>
    %c40_94 = arith.constant 40 : index
    %c0_95 = arith.constant 0 : index
    %122 = vector.load %arg12[%c40_94, %c0_95] : memref<128x512xbf16, #tpu.memory_space<vmem>>, vector<8x512xbf16>
    tpu.vector_store %arg12[%c40_94, %c0_95], %121 {strides = array<i32>} : memref<128x512xbf16, #tpu.memory_space<vmem>>, vector<8x512xbf16>,
    %c0_96 = arith.constant 0 : index
    %c192 = arith.constant 192 : index
    %123 = vector.load %arg11[%c0_96, %c192] : memref<8x768xbf16, #tpu.memory_space<vmem>>, vector<8x512xbf16>
    %c22 = arith.constant 22 : index
    %c0_97 = arith.constant 0 : index
    %124 = vector.load %arg5[%c22, %c0_97] : memref<32x512xbf16, #tpu.memory_space<vmem>>, vector<1x512xbf16>
    %125 = vector.broadcast %124 : vector<1x512xbf16> to vector<8x512xbf16>
    %126 = arith.mulf %123, %125 : vector<8x512xbf16>
    %c48_98 = arith.constant 48 : index
    %c0_99 = arith.constant 0 : index
    %127 = vector.load %arg12[%c48_98, %c0_99] : memref<128x512xbf16, #tpu.memory_space<vmem>>, vector<8x512xbf16>
    tpu.vector_store %arg12[%c48_98, %c0_99], %126 {strides = array<i32>} : memref<128x512xbf16, #tpu.memory_space<vmem>>, vector<8x512xbf16>,
    %c0_100 = arith.constant 0 : index
    %c193 = arith.constant 193 : index
    %128 = vector.load %arg11[%c0_100, %c193] : memref<8x768xbf16, #tpu.memory_space<vmem>>, vector<8x512xbf16>
    %c23 = arith.constant 23 : index
    %c0_101 = arith.constant 0 : index
    %129 = vector.load %arg5[%c23, %c0_101] : memref<32x512xbf16, #tpu.memory_space<vmem>>, vector<1x512xbf16>
    %130 = vector.broadcast %129 : vector<1x512xbf16> to vector<8x512xbf16>
    %131 = arith.mulf %128, %130 : vector<8x512xbf16>
    %c56_102 = arith.constant 56 : index
    %c0_103 = arith.constant 0 : index
    %132 = vector.load %arg12[%c56_102, %c0_103] : memref<128x512xbf16, #tpu.memory_space<vmem>>, vector<8x512xbf16>
    tpu.vector_store %arg12[%c56_102, %c0_103], %131 {strides = array<i32>} : memref<128x512xbf16, #tpu.memory_space<vmem>>, vector<8x512xbf16>,
    %c0_104 = arith.constant 0 : index
    %c199 = arith.constant 199 : index
    %133 = vector.load %arg11[%c0_104, %c199] : memref<8x768xbf16, #tpu.memory_space<vmem>>, vector<8x512xbf16>
    %c24_105 = arith.constant 24 : index
    %c0_106 = arith.constant 0 : index
    %134 = vector.load %arg5[%c24_105, %c0_106] : memref<32x512xbf16, #tpu.memory_space<vmem>>, vector<1x512xbf16>
    %135 = vector.broadcast %134 : vector<1x512xbf16> to vector<8x512xbf16>
    %136 = arith.mulf %133, %135 : vector<8x512xbf16>
    %c64_107 = arith.constant 64 : index
    %c0_108 = arith.constant 0 : index
    %137 = vector.load %arg12[%c64_107, %c0_108] : memref<128x512xbf16, #tpu.memory_space<vmem>>, vector<8x512xbf16>
    tpu.vector_store %arg12[%c64_107, %c0_108], %136 {strides = array<i32>} : memref<128x512xbf16, #tpu.memory_space<vmem>>, vector<8x512xbf16>,
    %c0_109 = arith.constant 0 : index
    %c200 = arith.constant 200 : index
    %138 = vector.load %arg11[%c0_109, %c200] : memref<8x768xbf16, #tpu.memory_space<vmem>>, vector<8x512xbf16>
    %c25 = arith.constant 25 : index
    %c0_110 = arith.constant 0 : index
    %139 = vector.load %arg5[%c25, %c0_110] : memref<32x512xbf16, #tpu.memory_space<vmem>>, vector<1x512xbf16>
    %140 = vector.broadcast %139 : vector<1x512xbf16> to vector<8x512xbf16>
    %141 = arith.mulf %138, %140 : vector<8x512xbf16>
    %c72_111 = arith.constant 72 : index
    %c0_112 = arith.constant 0 : index
    %142 = vector.load %arg12[%c72_111, %c0_112] : memref<128x512xbf16, #tpu.memory_space<vmem>>, vector<8x512xbf16>
    tpu.vector_store %arg12[%c72_111, %c0_112], %141 {strides = array<i32>} : memref<128x512xbf16, #tpu.memory_space<vmem>>, vector<8x512xbf16>,
    %c0_113 = arith.constant 0 : index
    %c201 = arith.constant 201 : index
    %143 = vector.load %arg11[%c0_113, %c201] : memref<8x768xbf16, #tpu.memory_space<vmem>>, vector<8x512xbf16>
    %c26 = arith.constant 26 : index
    %c0_114 = arith.constant 0 : index
    %144 = vector.load %arg5[%c26, %c0_114] : memref<32x512xbf16, #tpu.memory_space<vmem>>, vector<1x512xbf16>
    %145 = vector.broadcast %144 : vector<1x512xbf16> to vector<8x512xbf16>
    %146 = arith.mulf %143, %145 : vector<8x512xbf16>
    %c80_115 = arith.constant 80 : index
    %c0_116 = arith.constant 0 : index
    %147 = vector.load %arg12[%c80_115, %c0_116] : memref<128x512xbf16, #tpu.memory_space<vmem>>, vector<8x512xbf16>
    tpu.vector_store %arg12[%c80_115, %c0_116], %146 {strides = array<i32>} : memref<128x512xbf16, #tpu.memory_space<vmem>>, vector<8x512xbf16>,
    %c0_117 = arith.constant 0 : index
    %c128_118 = arith.constant 128 : index
    %148 = vector.load %arg3[%c0_117, %c128_118] : memref<8x256xbf16, #tpu.memory_space<vmem>>, vector<8x128xbf16>
    %c0_119 = arith.constant 0 : index
    %c0_120 = arith.constant 0 : index
    %149 = vector.load %arg12[%c0_119, %c0_120] : memref<128x512xbf16, #tpu.memory_space<vmem>>, vector<128x512xbf16>
    %cst_121 = arith.constant dense<0.000000e+00> : vector<8x512xf32>
    %150 = tpu.matmul %148, %149, %cst_121 {dimension_numbers = #tpu.dot_dimension_numbers<[1], [0], [0], [1], [0, 0, 1, 1], [], []>} : vector<8x128xbf16>, vector<128x512xbf16>, vector<8x512xf32> -> vector<8x512xf32>
    %151 = arith.addf %92, %150 : vector<8x512xf32>
    %c0_122 = arith.constant 0 : index
    %c0_123 = arith.constant 0 : index
    %152 = vector.load %arg4[%c0_122, %c0_123] : memref<8x1xf32, #tpu.memory_space<vmem>>, vector<8x1xf32>
    %153 = vector.broadcast %152 : vector<8x1xf32> to vector<8x512xf32>
    %154 = arith.addf %151, %153 : vector<8x512xf32>
    %155 = vector.broadcast %0 : f32 to vector<8x512xf32>
    %156 = arith.mulf %155, %154 : vector<8x512xf32>
    %cst_124 = arith.constant 0.000000e+00 : f32
    %157 = vector.broadcast %cst_124 : f32 to vector<8x512xf32>
    %158 = arith.subf %157, %156 : vector<8x512xf32>
    %159 = math.exp %158 : vector<8x512xf32>
    %cst_125 = arith.constant 1.000000e+00 : f32
    %160 = vector.broadcast %cst_125 : f32 to vector<8x512xf32>
    %161 = arith.addf %160, %159 : vector<8x512xf32>
    %162 = tpu.reciprocal %161 {approx = true} : vector<8x512xf32> -> vector<8x512xf32>
    %163 = arith.mulf %154, %162 : vector<8x512xf32>
    %164 = arith.truncf %163 : vector<8x512xf32> to vector<8x512xbf16>
    %c0_126 = arith.constant 0 : index
    %c128_127 = arith.constant 128 : index
    %165 = vector.load %arg11[%c0_126, %c128_127] : memref<8x768xbf16, #tpu.memory_space<vmem>>, vector<8x512xbf16>
    tpu.vector_store %arg11[%c0_126, %c128_127], %164 {strides = array<i32>} : memref<8x768xbf16, #tpu.memory_space<vmem>>, vector<8x512xbf16>,
    %cst_128 = arith.constant 0.000000e+00 : f32
    %166 = vector.broadcast %cst_128 : f32 to vector<8x512xf32>
    %c0_129 = arith.constant 0 : index
    %c55_130 = arith.constant 55 : index
    %167 = vector.load %arg11[%c0_129, %c55_130] : memref<8x768xbf16, #tpu.memory_space<vmem>>, vector<8x512xbf16>
    %c0_131 = arith.constant 0 : index
    %c0_132 = arith.constant 0 : index
    %168 = vector.load %arg5[%c0_131, %c0_132] : memref<32x512xbf16, #tpu.memory_space<vmem>>, vector<1x512xbf16>
    %169 = vector.broadcast %168 : vector<1x512xbf16> to vector<8x512xbf16>
    %170 = arith.mulf %167, %169 : vector<8x512xbf16>
    %c0_133 = arith.constant 0 : index
    %c0_134 = arith.constant 0 : index
    %171 = vector.load %arg12[%c0_133, %c0_134] : memref<128x512xbf16, #tpu.memory_space<vmem>>, vector<8x512xbf16>
    tpu.vector_store %arg12[%c0_133, %c0_134], %170 {strides = array<i32>} : memref<128x512xbf16, #tpu.memory_space<vmem>>, vector<8x512xbf16>,
    %c0_135 = arith.constant 0 : index
    %c56_136 = arith.constant 56 : index
    %172 = vector.load %arg11[%c0_135, %c56_136] : memref<8x768xbf16, #tpu.memory_space<vmem>>, vector<8x512xbf16>
    %c1_137 = arith.constant 1 : index
    %c0_138 = arith.constant 0 : index
    %173 = vector.load %arg5[%c1_137, %c0_138] : memref<32x512xbf16, #tpu.memory_space<vmem>>, vector<1x512xbf16>
    %174 = vector.broadcast %173 : vector<1x512xbf16> to vector<8x512xbf16>
    %175 = arith.mulf %172, %174 : vector<8x512xbf16>
    %c8_139 = arith.constant 8 : index
    %c0_140 = arith.constant 0 : index
    %176 = vector.load %arg12[%c8_139, %c0_140] : memref<128x512xbf16, #tpu.memory_space<vmem>>, vector<8x512xbf16>
    tpu.vector_store %arg12[%c8_139, %c0_140], %175 {strides = array<i32>} : memref<128x512xbf16, #tpu.memory_space<vmem>>, vector<8x512xbf16>,
    %c0_141 = arith.constant 0 : index
    %c57_142 = arith.constant 57 : index
    %177 = vector.load %arg11[%c0_141, %c57_142] : memref<8x768xbf16, #tpu.memory_space<vmem>>, vector<8x512xbf16>
    %c2_143 = arith.constant 2 : index
    %c0_144 = arith.constant 0 : index
    %178 = vector.load %arg5[%c2_143, %c0_144] : memref<32x512xbf16, #tpu.memory_space<vmem>>, vector<1x512xbf16>
    %179 = vector.broadcast %178 : vector<1x512xbf16> to vector<8x512xbf16>
    %180 = arith.mulf %177, %179 : vector<8x512xbf16>
    %c16_145 = arith.constant 16 : index
    %c0_146 = arith.constant 0 : index
    %181 = vector.load %arg12[%c16_145, %c0_146] : memref<128x512xbf16, #tpu.memory_space<vmem>>, vector<8x512xbf16>
    tpu.vector_store %arg12[%c16_145, %c0_146], %180 {strides = array<i32>} : memref<128x512xbf16, #tpu.memory_space<vmem>>, vector<8x512xbf16>,
    %c0_147 = arith.constant 0 : index
    %c63_148 = arith.constant 63 : index
    %182 = vector.load %arg11[%c0_147, %c63_148] : memref<8x768xbf16, #tpu.memory_space<vmem>>, vector<8x512xbf16>
    %c3_149 = arith.constant 3 : index
    %c0_150 = arith.constant 0 : index
    %183 = vector.load %arg5[%c3_149, %c0_150] : memref<32x512xbf16, #tpu.memory_space<vmem>>, vector<1x512xbf16>
    %184 = vector.broadcast %183 : vector<1x512xbf16> to vector<8x512xbf16>
    %185 = arith.mulf %182, %184 : vector<8x512xbf16>
    %c24_151 = arith.constant 24 : index
    %c0_152 = arith.constant 0 : index
    %186 = vector.load %arg12[%c24_151, %c0_152] : memref<128x512xbf16, #tpu.memory_space<vmem>>, vector<8x512xbf16>
    tpu.vector_store %arg12[%c24_151, %c0_152], %185 {strides = array<i32>} : memref<128x512xbf16, #tpu.memory_space<vmem>>, vector<8x512xbf16>,
    %c0_153 = arith.constant 0 : index
    %c64_154 = arith.constant 64 : index
    %187 = vector.load %arg11[%c0_153, %c64_154] : memref<8x768xbf16, #tpu.memory_space<vmem>>, vector<8x512xbf16>
    %c4_155 = arith.constant 4 : index
    %c0_156 = arith.constant 0 : index
    %188 = vector.load %arg5[%c4_155, %c0_156] : memref<32x512xbf16, #tpu.memory_space<vmem>>, vector<1x512xbf16>
    %189 = vector.broadcast %188 : vector<1x512xbf16> to vector<8x512xbf16>
    %190 = arith.mulf %187, %189 : vector<8x512xbf16>
    %c32_157 = arith.constant 32 : index
    %c0_158 = arith.constant 0 : index
    %191 = vector.load %arg12[%c32_157, %c0_158] : memref<128x512xbf16, #tpu.memory_space<vmem>>, vector<8x512xbf16>
    tpu.vector_store %arg12[%c32_157, %c0_158], %190 {strides = array<i32>} : memref<128x512xbf16, #tpu.memory_space<vmem>>, vector<8x512xbf16>,
    %c0_159 = arith.constant 0 : index
    %c65_160 = arith.constant 65 : index
    %192 = vector.load %arg11[%c0_159, %c65_160] : memref<8x768xbf16, #tpu.memory_space<vmem>>, vector<8x512xbf16>
    %c5_161 = arith.constant 5 : index
    %c0_162 = arith.constant 0 : index
    %193 = vector.load %arg5[%c5_161, %c0_162] : memref<32x512xbf16, #tpu.memory_space<vmem>>, vector<1x512xbf16>
    %194 = vector.broadcast %193 : vector<1x512xbf16> to vector<8x512xbf16>
    %195 = arith.mulf %192, %194 : vector<8x512xbf16>
    %c40_163 = arith.constant 40 : index
    %c0_164 = arith.constant 0 : index
    %196 = vector.load %arg12[%c40_163, %c0_164] : memref<128x512xbf16, #tpu.memory_space<vmem>>, vector<8x512xbf16>
    tpu.vector_store %arg12[%c40_163, %c0_164], %195 {strides = array<i32>} : memref<128x512xbf16, #tpu.memory_space<vmem>>, vector<8x512xbf16>,
    %c0_165 = arith.constant 0 : index
    %c71_166 = arith.constant 71 : index
    %197 = vector.load %arg11[%c0_165, %c71_166] : memref<8x768xbf16, #tpu.memory_space<vmem>>, vector<8x512xbf16>
    %c6_167 = arith.constant 6 : index
    %c0_168 = arith.constant 0 : index
    %198 = vector.load %arg5[%c6_167, %c0_168] : memref<32x512xbf16, #tpu.memory_space<vmem>>, vector<1x512xbf16>
    %199 = vector.broadcast %198 : vector<1x512xbf16> to vector<8x512xbf16>
    %200 = arith.mulf %197, %199 : vector<8x512xbf16>
    %c48_169 = arith.constant 48 : index
    %c0_170 = arith.constant 0 : index
    %201 = vector.load %arg12[%c48_169, %c0_170] : memref<128x512xbf16, #tpu.memory_space<vmem>>, vector<8x512xbf16>
    tpu.vector_store %arg12[%c48_169, %c0_170], %200 {strides = array<i32>} : memref<128x512xbf16, #tpu.memory_space<vmem>>, vector<8x512xbf16>,
    %c0_171 = arith.constant 0 : index
    %c72_172 = arith.constant 72 : index
    %202 = vector.load %arg11[%c0_171, %c72_172] : memref<8x768xbf16, #tpu.memory_space<vmem>>, vector<8x512xbf16>
    %c7_173 = arith.constant 7 : index
    %c0_174 = arith.constant 0 : index
    %203 = vector.load %arg5[%c7_173, %c0_174] : memref<32x512xbf16, #tpu.memory_space<vmem>>, vector<1x512xbf16>
    %204 = vector.broadcast %203 : vector<1x512xbf16> to vector<8x512xbf16>
    %205 = arith.mulf %202, %204 : vector<8x512xbf16>
    %c56_175 = arith.constant 56 : index
    %c0_176 = arith.constant 0 : index
    %206 = vector.load %arg12[%c56_175, %c0_176] : memref<128x512xbf16, #tpu.memory_space<vmem>>, vector<8x512xbf16>
    tpu.vector_store %arg12[%c56_175, %c0_176], %205 {strides = array<i32>} : memref<128x512xbf16, #tpu.memory_space<vmem>>, vector<8x512xbf16>,
    %c0_177 = arith.constant 0 : index
    %c73_178 = arith.constant 73 : index
    %207 = vector.load %arg11[%c0_177, %c73_178] : memref<8x768xbf16, #tpu.memory_space<vmem>>, vector<8x512xbf16>
    %c8_179 = arith.constant 8 : index
    %c0_180 = arith.constant 0 : index
    %208 = vector.load %arg5[%c8_179, %c0_180] : memref<32x512xbf16, #tpu.memory_space<vmem>>, vector<1x512xbf16>
    %209 = vector.broadcast %208 : vector<1x512xbf16> to vector<8x512xbf16>
    %210 = arith.mulf %207, %209 : vector<8x512xbf16>
    %c64_181 = arith.constant 64 : index
    %c0_182 = arith.constant 0 : index
    %211 = vector.load %arg12[%c64_181, %c0_182] : memref<128x512xbf16, #tpu.memory_space<vmem>>, vector<8x512xbf16>
    tpu.vector_store %arg12[%c64_181, %c0_182], %210 {strides = array<i32>} : memref<128x512xbf16, #tpu.memory_space<vmem>>, vector<8x512xbf16>,
    %c0_183 = arith.constant 0 : index
    %c119_184 = arith.constant 119 : index
    %212 = vector.load %arg11[%c0_183, %c119_184] : memref<8x768xbf16, #tpu.memory_space<vmem>>, vector<8x512xbf16>
    %c9_185 = arith.constant 9 : index
    %c0_186 = arith.constant 0 : index
    %213 = vector.load %arg5[%c9_185, %c0_186] : memref<32x512xbf16, #tpu.memory_space<vmem>>, vector<1x512xbf16>
    %214 = vector.broadcast %213 : vector<1x512xbf16> to vector<8x512xbf16>
    %215 = arith.mulf %212, %214 : vector<8x512xbf16>
    %c72_187 = arith.constant 72 : index
    %c0_188 = arith.constant 0 : index
    %216 = vector.load %arg12[%c72_187, %c0_188] : memref<128x512xbf16, #tpu.memory_space<vmem>>, vector<8x512xbf16>
    tpu.vector_store %arg12[%c72_187, %c0_188], %215 {strides = array<i32>} : memref<128x512xbf16, #tpu.memory_space<vmem>>, vector<8x512xbf16>,
    %c0_189 = arith.constant 0 : index
    %c120_190 = arith.constant 120 : index
    %217 = vector.load %arg11[%c0_189, %c120_190] : memref<8x768xbf16, #tpu.memory_space<vmem>>, vector<8x512xbf16>
    %c10_191 = arith.constant 10 : index
    %c0_192 = arith.constant 0 : index
    %218 = vector.load %arg5[%c10_191, %c0_192] : memref<32x512xbf16, #tpu.memory_space<vmem>>, vector<1x512xbf16>
    %219 = vector.broadcast %218 : vector<1x512xbf16> to vector<8x512xbf16>
    %220 = arith.mulf %217, %219 : vector<8x512xbf16>
    %c80_193 = arith.constant 80 : index
    %c0_194 = arith.constant 0 : index
    %221 = vector.load %arg12[%c80_193, %c0_194] : memref<128x512xbf16, #tpu.memory_space<vmem>>, vector<8x512xbf16>
    tpu.vector_store %arg12[%c80_193, %c0_194], %220 {strides = array<i32>} : memref<128x512xbf16, #tpu.memory_space<vmem>>, vector<8x512xbf16>,
    %c0_195 = arith.constant 0 : index
    %c121_196 = arith.constant 121 : index
    %222 = vector.load %arg11[%c0_195, %c121_196] : memref<8x768xbf16, #tpu.memory_space<vmem>>, vector<8x512xbf16>
    %c11_197 = arith.constant 11 : index
    %c0_198 = arith.constant 0 : index
    %223 = vector.load %arg5[%c11_197, %c0_198] : memref<32x512xbf16, #tpu.memory_space<vmem>>, vector<1x512xbf16>
    %224 = vector.broadcast %223 : vector<1x512xbf16> to vector<8x512xbf16>
    %225 = arith.mulf %222, %224 : vector<8x512xbf16>
    %c88_199 = arith.constant 88 : index
    %c0_200 = arith.constant 0 : index
    %226 = vector.load %arg12[%c88_199, %c0_200] : memref<128x512xbf16, #tpu.memory_space<vmem>>, vector<8x512xbf16>
    tpu.vector_store %arg12[%c88_199, %c0_200], %225 {strides = array<i32>} : memref<128x512xbf16, #tpu.memory_space<vmem>>, vector<8x512xbf16>,
    %c0_201 = arith.constant 0 : index
    %c127_202 = arith.constant 127 : index
    %227 = vector.load %arg11[%c0_201, %c127_202] : memref<8x768xbf16, #tpu.memory_space<vmem>>, vector<8x512xbf16>
    %c12_203 = arith.constant 12 : index
    %c0_204 = arith.constant 0 : index
    %228 = vector.load %arg5[%c12_203, %c0_204] : memref<32x512xbf16, #tpu.memory_space<vmem>>, vector<1x512xbf16>
    %229 = vector.broadcast %228 : vector<1x512xbf16> to vector<8x512xbf16>
    %230 = arith.mulf %227, %229 : vector<8x512xbf16>
    %c96_205 = arith.constant 96 : index
    %c0_206 = arith.constant 0 : index
    %231 = vector.load %arg12[%c96_205, %c0_206] : memref<128x512xbf16, #tpu.memory_space<vmem>>, vector<8x512xbf16>
    tpu.vector_store %arg12[%c96_205, %c0_206], %230 {strides = array<i32>} : memref<128x512xbf16, #tpu.memory_space<vmem>>, vector<8x512xbf16>,
    %c0_207 = arith.constant 0 : index
    %c128_208 = arith.constant 128 : index
    %232 = vector.load %arg11[%c0_207, %c128_208] : memref<8x768xbf16, #tpu.memory_space<vmem>>, vector<8x512xbf16>
    %c104_209 = arith.constant 104 : index
    %c0_210 = arith.constant 0 : index
    %233 = vector.load %arg12[%c104_209, %c0_210] : memref<128x512xbf16, #tpu.memory_space<vmem>>, vector<8x512xbf16>
    tpu.vector_store %arg12[%c104_209, %c0_210], %232 {strides = array<i32>} : memref<128x512xbf16, #tpu.memory_space<vmem>>, vector<8x512xbf16>,
    %c0_211 = arith.constant 0 : index
    %c129_212 = arith.constant 129 : index
    %234 = vector.load %arg11[%c0_211, %c129_212] : memref<8x768xbf16, #tpu.memory_space<vmem>>, vector<8x512xbf16>
    %c14_213 = arith.constant 14 : index
    %c0_214 = arith.constant 0 : index
    %235 = vector.load %arg5[%c14_213, %c0_214] : memref<32x512xbf16, #tpu.memory_space<vmem>>, vector<1x512xbf16>
    %236 = vector.broadcast %235 : vector<1x512xbf16> to vector<8x512xbf16>
    %237 = arith.mulf %234, %236 : vector<8x512xbf16>
    %c112_215 = arith.constant 112 : index
    %c0_216 = arith.constant 0 : index
    %238 = vector.load %arg12[%c112_215, %c0_216] : memref<128x512xbf16, #tpu.memory_space<vmem>>, vector<8x512xbf16>
    tpu.vector_store %arg12[%c112_215, %c0_216], %237 {strides = array<i32>} : memref<128x512xbf16, #tpu.memory_space<vmem>>, vector<8x512xbf16>,
    %c0_217 = arith.constant 0 : index
    %c135_218 = arith.constant 135 : index
    %239 = vector.load %arg11[%c0_217, %c135_218] : memref<8x768xbf16, #tpu.memory_space<vmem>>, vector<8x512xbf16>
    %c15_219 = arith.constant 15 : index
    %c0_220 = arith.constant 0 : index
    %240 = vector.load %arg5[%c15_219, %c0_220] : memref<32x512xbf16, #tpu.memory_space<vmem>>, vector<1x512xbf16>
    %241 = vector.broadcast %240 : vector<1x512xbf16> to vector<8x512xbf16>
    %242 = arith.mulf %239, %241 : vector<8x512xbf16>
    %c120_221 = arith.constant 120 : index
    %c0_222 = arith.constant 0 : index
    %243 = vector.load %arg12[%c120_221, %c0_222] : memref<128x512xbf16, #tpu.memory_space<vmem>>, vector<8x512xbf16>
    tpu.vector_store %arg12[%c120_221, %c0_222], %242 {strides = array<i32>} : memref<128x512xbf16, #tpu.memory_space<vmem>>, vector<8x512xbf16>,
    %c0_223 = arith.constant 0 : index
    %c0_224 = arith.constant 0 : index
    %244 = vector.load %arg3[%c0_223, %c0_224] : memref<8x256xbf16, #tpu.memory_space<vmem>>, vector<8x128xbf16>
    %c0_225 = arith.constant 0 : index
    %c0_226 = arith.constant 0 : index
    %245 = vector.load %arg12[%c0_225, %c0_226] : memref<128x512xbf16, #tpu.memory_space<vmem>>, vector<128x512xbf16>
    %cst_227 = arith.constant dense<0.000000e+00> : vector<8x512xf32>
    %246 = tpu.matmul %244, %245, %cst_227 {dimension_numbers = #tpu.dot_dimension_numbers<[1], [0], [0], [1], [0, 0, 1, 1], [], []>} : vector<8x128xbf16>, vector<128x512xbf16>, vector<8x512xf32> -> vector<8x512xf32>
    %247 = arith.addf %166, %246 : vector<8x512xf32>
    %c0_228 = arith.constant 0 : index
    %c136_229 = arith.constant 136 : index
    %248 = vector.load %arg11[%c0_228, %c136_229] : memref<8x768xbf16, #tpu.memory_space<vmem>>, vector<8x512xbf16>
    %c16_230 = arith.constant 16 : index
    %c0_231 = arith.constant 0 : index
    %249 = vector.load %arg5[%c16_230, %c0_231] : memref<32x512xbf16, #tpu.memory_space<vmem>>, vector<1x512xbf16>
    %250 = vector.broadcast %249 : vector<1x512xbf16> to vector<8x512xbf16>
    %251 = arith.mulf %248, %250 : vector<8x512xbf16>
    %c0_232 = arith.constant 0 : index
    %c0_233 = arith.constant 0 : index
    %252 = vector.load %arg12[%c0_232, %c0_233] : memref<128x512xbf16, #tpu.memory_space<vmem>>, vector<8x512xbf16>
    tpu.vector_store %arg12[%c0_232, %c0_233], %251 {strides = array<i32>} : memref<128x512xbf16, #tpu.memory_space<vmem>>, vector<8x512xbf16>,
    %c0_234 = arith.constant 0 : index
    %c137_235 = arith.constant 137 : index
    %253 = vector.load %arg11[%c0_234, %c137_235] : memref<8x768xbf16, #tpu.memory_space<vmem>>, vector<8x512xbf16>
    %c17_236 = arith.constant 17 : index
    %c0_237 = arith.constant 0 : index
    %254 = vector.load %arg5[%c17_236, %c0_237] : memref<32x512xbf16, #tpu.memory_space<vmem>>, vector<1x512xbf16>
    %255 = vector.broadcast %254 : vector<1x512xbf16> to vector<8x512xbf16>
    %256 = arith.mulf %253, %255 : vector<8x512xbf16>
    %c8_238 = arith.constant 8 : index
    %c0_239 = arith.constant 0 : index
    %257 = vector.load %arg12[%c8_238, %c0_239] : memref<128x512xbf16, #tpu.memory_space<vmem>>, vector<8x512xbf16>
    tpu.vector_store %arg12[%c8_238, %c0_239], %256 {strides = array<i32>} : memref<128x512xbf16, #tpu.memory_space<vmem>>, vector<8x512xbf16>,
    %c0_240 = arith.constant 0 : index
    %c183_241 = arith.constant 183 : index
    %258 = vector.load %arg11[%c0_240, %c183_241] : memref<8x768xbf16, #tpu.memory_space<vmem>>, vector<8x512xbf16>
    %c18_242 = arith.constant 18 : index
    %c0_243 = arith.constant 0 : index
    %259 = vector.load %arg5[%c18_242, %c0_243] : memref<32x512xbf16, #tpu.memory_space<vmem>>, vector<1x512xbf16>
    %260 = vector.broadcast %259 : vector<1x512xbf16> to vector<8x512xbf16>
    %261 = arith.mulf %258, %260 : vector<8x512xbf16>
    %c16_244 = arith.constant 16 : index
    %c0_245 = arith.constant 0 : index
    %262 = vector.load %arg12[%c16_244, %c0_245] : memref<128x512xbf16, #tpu.memory_space<vmem>>, vector<8x512xbf16>
    tpu.vector_store %arg12[%c16_244, %c0_245], %261 {strides = array<i32>} : memref<128x512xbf16, #tpu.memory_space<vmem>>, vector<8x512xbf16>,
    %c0_246 = arith.constant 0 : index
    %c184_247 = arith.constant 184 : index
    %263 = vector.load %arg11[%c0_246, %c184_247] : memref<8x768xbf16, #tpu.memory_space<vmem>>, vector<8x512xbf16>
    %c19_248 = arith.constant 19 : index
    %c0_249 = arith.constant 0 : index
    %264 = vector.load %arg5[%c19_248, %c0_249] : memref<32x512xbf16, #tpu.memory_space<vmem>>, vector<1x512xbf16>
    %265 = vector.broadcast %264 : vector<1x512xbf16> to vector<8x512xbf16>
    %266 = arith.mulf %263, %265 : vector<8x512xbf16>
    %c24_250 = arith.constant 24 : index
    %c0_251 = arith.constant 0 : index
    %267 = vector.load %arg12[%c24_250, %c0_251] : memref<128x512xbf16, #tpu.memory_space<vmem>>, vector<8x512xbf16>
    tpu.vector_store %arg12[%c24_250, %c0_251], %266 {strides = array<i32>} : memref<128x512xbf16, #tpu.memory_space<vmem>>, vector<8x512xbf16>,
    %c0_252 = arith.constant 0 : index
    %c185_253 = arith.constant 185 : index
    %268 = vector.load %arg11[%c0_252, %c185_253] : memref<8x768xbf16, #tpu.memory_space<vmem>>, vector<8x512xbf16>
    %c20_254 = arith.constant 20 : index
    %c0_255 = arith.constant 0 : index
    %269 = vector.load %arg5[%c20_254, %c0_255] : memref<32x512xbf16, #tpu.memory_space<vmem>>, vector<1x512xbf16>
    %270 = vector.broadcast %269 : vector<1x512xbf16> to vector<8x512xbf16>
    %271 = arith.mulf %268, %270 : vector<8x512xbf16>
    %c32_256 = arith.constant 32 : index
    %c0_257 = arith.constant 0 : index
    %272 = vector.load %arg12[%c32_256, %c0_257] : memref<128x512xbf16, #tpu.memory_space<vmem>>, vector<8x512xbf16>
    tpu.vector_store %arg12[%c32_256, %c0_257], %271 {strides = array<i32>} : memref<128x512xbf16, #tpu.memory_space<vmem>>, vector<8x512xbf16>,
    %c0_258 = arith.constant 0 : index
    %c191_259 = arith.constant 191 : index
    %273 = vector.load %arg11[%c0_258, %c191_259] : memref<8x768xbf16, #tpu.memory_space<vmem>>, vector<8x512xbf16>
    %c21_260 = arith.constant 21 : index
    %c0_261 = arith.constant 0 : index
    %274 = vector.load %arg5[%c21_260, %c0_261] : memref<32x512xbf16, #tpu.memory_space<vmem>>, vector<1x512xbf16>
    %275 = vector.broadcast %274 : vector<1x512xbf16> to vector<8x512xbf16>
    %276 = arith.mulf %273, %275 : vector<8x512xbf16>
    %c40_262 = arith.constant 40 : index
    %c0_263 = arith.constant 0 : index
    %277 = vector.load %arg12[%c40_262, %c0_263] : memref<128x512xbf16, #tpu.memory_space<vmem>>, vector<8x512xbf16>
    tpu.vector_store %arg12[%c40_262, %c0_263], %276 {strides = array<i32>} : memref<128x512xbf16, #tpu.memory_space<vmem>>, vector<8x512xbf16>,
    %c0_264 = arith.constant 0 : index
    %c192_265 = arith.constant 192 : index
    %278 = vector.load %arg11[%c0_264, %c192_265] : memref<8x768xbf16, #tpu.memory_space<vmem>>, vector<8x512xbf16>
    %c22_266 = arith.constant 22 : index
    %c0_267 = arith.constant 0 : index
    %279 = vector.load %arg5[%c22_266, %c0_267] : memref<32x512xbf16, #tpu.memory_space<vmem>>, vector<1x512xbf16>
    %280 = vector.broadcast %279 : vector<1x512xbf16> to vector<8x512xbf16>
    %281 = arith.mulf %278, %280 : vector<8x512xbf16>
    %c48_268 = arith.constant 48 : index
    %c0_269 = arith.constant 0 : index
    %282 = vector.load %arg12[%c48_268, %c0_269] : memref<128x512xbf16, #tpu.memory_space<vmem>>, vector<8x512xbf16>
    tpu.vector_store %arg12[%c48_268, %c0_269], %281 {strides = array<i32>} : memref<128x512xbf16, #tpu.memory_space<vmem>>, vector<8x512xbf16>,
    %c0_270 = arith.constant 0 : index
    %c193_271 = arith.constant 193 : index
    %283 = vector.load %arg11[%c0_270, %c193_271] : memref<8x768xbf16, #tpu.memory_space<vmem>>, vector<8x512xbf16>
    %c23_272 = arith.constant 23 : index
    %c0_273 = arith.constant 0 : index
    %284 = vector.load %arg5[%c23_272, %c0_273] : memref<32x512xbf16, #tpu.memory_space<vmem>>, vector<1x512xbf16>
    %285 = vector.broadcast %284 : vector<1x512xbf16> to vector<8x512xbf16>
    %286 = arith.mulf %283, %285 : vector<8x512xbf16>
    %c56_274 = arith.constant 56 : index
    %c0_275 = arith.constant 0 : index
    %287 = vector.load %arg12[%c56_274, %c0_275] : memref<128x512xbf16, #tpu.memory_space<vmem>>, vector<8x512xbf16>
    tpu.vector_store %arg12[%c56_274, %c0_275], %286 {strides = array<i32>} : memref<128x512xbf16, #tpu.memory_space<vmem>>, vector<8x512xbf16>,
    %c0_276 = arith.constant 0 : index
    %c199_277 = arith.constant 199 : index
    %288 = vector.load %arg11[%c0_276, %c199_277] : memref<8x768xbf16, #tpu.memory_space<vmem>>, vector<8x512xbf16>
    %c24_278 = arith.constant 24 : index
    %c0_279 = arith.constant 0 : index
    %289 = vector.load %arg5[%c24_278, %c0_279] : memref<32x512xbf16, #tpu.memory_space<vmem>>, vector<1x512xbf16>
    %290 = vector.broadcast %289 : vector<1x512xbf16> to vector<8x512xbf16>
    %291 = arith.mulf %288, %290 : vector<8x512xbf16>
    %c64_280 = arith.constant 64 : index
    %c0_281 = arith.constant 0 : index
    %292 = vector.load %arg12[%c64_280, %c0_281] : memref<128x512xbf16, #tpu.memory_space<vmem>>, vector<8x512xbf16>
    tpu.vector_store %arg12[%c64_280, %c0_281], %291 {strides = array<i32>} : memref<128x512xbf16, #tpu.memory_space<vmem>>, vector<8x512xbf16>,
    %c0_282 = arith.constant 0 : index
    %c200_283 = arith.constant 200 : index
    %293 = vector.load %arg11[%c0_282, %c200_283] : memref<8x768xbf16, #tpu.memory_space<vmem>>, vector<8x512xbf16>
    %c25_284 = arith.constant 25 : index
    %c0_285 = arith.constant 0 : index
    %294 = vector.load %arg5[%c25_284, %c0_285] : memref<32x512xbf16, #tpu.memory_space<vmem>>, vector<1x512xbf16>
    %295 = vector.broadcast %294 : vector<1x512xbf16> to vector<8x512xbf16>
    %296 = arith.mulf %293, %295 : vector<8x512xbf16>
    %c72_286 = arith.constant 72 : index
    %c0_287 = arith.constant 0 : index
    %297 = vector.load %arg12[%c72_286, %c0_287] : memref<128x512xbf16, #tpu.memory_space<vmem>>, vector<8x512xbf16>
    tpu.vector_store %arg12[%c72_286, %c0_287], %296 {strides = array<i32>} : memref<128x512xbf16, #tpu.memory_space<vmem>>, vector<8x512xbf16>,
    %c0_288 = arith.constant 0 : index
    %c201_289 = arith.constant 201 : index
    %298 = vector.load %arg11[%c0_288, %c201_289] : memref<8x768xbf16, #tpu.memory_space<vmem>>, vector<8x512xbf16>
    %c26_290 = arith.constant 26 : index
    %c0_291 = arith.constant 0 : index
    %299 = vector.load %arg5[%c26_290, %c0_291] : memref<32x512xbf16, #tpu.memory_space<vmem>>, vector<1x512xbf16>
    %300 = vector.broadcast %299 : vector<1x512xbf16> to vector<8x512xbf16>
    %301 = arith.mulf %298, %300 : vector<8x512xbf16>
    %c80_292 = arith.constant 80 : index
    %c0_293 = arith.constant 0 : index
    %302 = vector.load %arg12[%c80_292, %c0_293] : memref<128x512xbf16, #tpu.memory_space<vmem>>, vector<8x512xbf16>
    tpu.vector_store %arg12[%c80_292, %c0_293], %301 {strides = array<i32>} : memref<128x512xbf16, #tpu.memory_space<vmem>>, vector<8x512xbf16>,
    %c0_294 = arith.constant 0 : index
    %c128_295 = arith.constant 128 : index
    %303 = vector.load %arg3[%c0_294, %c128_295] : memref<8x256xbf16, #tpu.memory_space<vmem>>, vector<8x128xbf16>
    %c0_296 = arith.constant 0 : index
    %c0_297 = arith.constant 0 : index
    %304 = vector.load %arg12[%c0_296, %c0_297] : memref<128x512xbf16, #tpu.memory_space<vmem>>, vector<128x512xbf16>
    %cst_298 = arith.constant dense<0.000000e+00> : vector<8x512xf32>
    %305 = tpu.matmul %303, %304, %cst_298 {dimension_numbers = #tpu.dot_dimension_numbers<[1], [0], [0], [1], [0, 0, 1, 1], [], []>} : vector<8x128xbf16>, vector<128x512xbf16>, vector<8x512xf32> -> vector<8x512xf32>
    %306 = arith.addf %247, %305 : vector<8x512xf32>
    %c0_299 = arith.constant 0 : index
    %c0_300 = arith.constant 0 : index
    %307 = vector.load %arg4[%c0_299, %c0_300] : memref<8x1xf32, #tpu.memory_space<vmem>>, vector<8x1xf32>
    %308 = vector.broadcast %307 : vector<8x1xf32> to vector<8x512xf32>
    %309 = arith.addf %306, %308 : vector<8x512xf32>
    %310 = vector.broadcast %1 : f32 to vector<8x512xf32>
    %311 = arith.mulf %310, %309 : vector<8x512xf32>
    %cst_301 = arith.constant 0.000000e+00 : f32
    %312 = vector.broadcast %cst_301 : f32 to vector<8x512xf32>
    %313 = arith.subf %312, %311 : vector<8x512xf32>
    %314 = math.exp %313 : vector<8x512xf32>
    %cst_302 = arith.constant 1.000000e+00 : f32
    %315 = vector.broadcast %cst_302 : f32 to vector<8x512xf32>
    %316 = arith.addf %315, %314 : vector<8x512xf32>
    %317 = tpu.reciprocal %316 {approx = true} : vector<8x512xf32> -> vector<8x512xf32>
    %318 = arith.mulf %309, %317 : vector<8x512xf32>
    %cst_303 = arith.constant dense<0.000000e+00> : vector<8xf32>
    %319 = vector.multi_reduction <add>, %318, %cst_303 [1] : vector<8x512xf32> to vector<8xf32>
    %320 = vector.shape_cast %319 : vector<8xf32> to vector<8x1xf32>
    %cst_304 = arith.constant 5.120000e+02 : f32
    %321 = vector.broadcast %cst_304 : f32 to vector<8x1xf32>
    %322 = arith.divf %320, %321 : vector<8x1xf32>
    %c0_305 = arith.constant 0 : index
    %c0_306 = arith.constant 0 : index
    %323 = vector.load %arg6[%c0_305, %c0_306] : memref<8x4xf32, #tpu.memory_space<vmem>>, vector<8x4xf32>
    %324 = vector.broadcast %322 : vector<8x1xf32> to vector<8x4xf32>
    %325 = arith.mulf %323, %324 : vector<8x4xf32>
    %cst_307 = arith.constant dense<0.000000e+00> : vector<4xf32>
    %326 = vector.multi_reduction <add>, %325, %cst_307 [0] : vector<8x4xf32> to vector<4xf32>
    %327 = vector.shape_cast %326 : vector<4xf32> to vector<1x4xf32>
    %c0_308 = arith.constant 0 : index
    %c0_309 = arith.constant 0 : index
    %328 = vector.load %arg7[%c0_308, %c0_309] : memref<1x4xf32, #tpu.memory_space<vmem>>, vector<1x4xf32>
    %329 = arith.addf %327, %328 : vector<1x4xf32>
    %330 = vector.broadcast %2 : f32 to vector<1x4xf32>
    %331 = arith.mulf %330, %329 : vector<1x4xf32>
    %cst_310 = arith.constant 0.000000e+00 : f32
    %332 = vector.broadcast %cst_310 : f32 to vector<1x4xf32>
    %333 = arith.subf %332, %331 : vector<1x4xf32>
    %334 = math.exp %333 : vector<1x4xf32>
    %cst_311 = arith.constant 1.000000e+00 : f32
    %335 = vector.broadcast %cst_311 : f32 to vector<1x4xf32>
    %336 = arith.addf %335, %334 : vector<1x4xf32>
    %337 = tpu.reciprocal %336 {approx = true} : vector<1x4xf32> -> vector<1x4xf32>
    %338 = arith.mulf %329, %337 : vector<1x4xf32>
    %c0_312 = arith.constant 0 : index
    %c0_313 = arith.constant 0 : index
    %339 = vector.load %arg8[%c0_312, %c0_313] : memref<8x4xf32, #tpu.memory_space<vmem>>, vector<8x4xf32>
    %340 = vector.broadcast %338 : vector<1x4xf32> to vector<8x4xf32>
    %341 = arith.mulf %339, %340 : vector<8x4xf32>
    %cst_314 = arith.constant dense<0.000000e+00> : vector<8xf32>
    %342 = vector.multi_reduction <add>, %341, %cst_314 [1] : vector<8x4xf32> to vector<8xf32>
    %343 = vector.shape_cast %342 : vector<8xf32> to vector<8x1xf32>
    %c0_315 = arith.constant 0 : index
    %c0_316 = arith.constant 0 : index
    %344 = vector.load %arg9[%c0_315, %c0_316] : memref<8x1xf32, #tpu.memory_space<vmem>>, vector<8x1xf32>
    %345 = arith.addf %343, %344 : vector<8x1xf32>
    %cst_317 = arith.constant 0.000000e+00 : f32
    %346 = vector.broadcast %cst_317 : f32 to vector<8x1xf32>
    %347 = arith.subf %346, %345 : vector<8x1xf32>
    %348 = math.exp %347 : vector<8x1xf32>
    %cst_318 = arith.constant 1.000000e+00 : f32
    %349 = vector.broadcast %cst_318 : f32 to vector<8x1xf32>
    %350 = arith.addf %349, %348 : vector<8x1xf32>
    %351 = tpu.reciprocal %350 {approx = true} : vector<8x1xf32> -> vector<8x1xf32>
    %352 = vector.broadcast %351 : vector<8x1xf32> to vector<8x512xf32>
    %353 = arith.mulf %318, %352 : vector<8x512xf32>
    %354 = arith.addf %353, %8 : vector<8x512xf32>
    %c0_319 = arith.constant 0 : index
    %c0_320 = arith.constant 0 : index
    %c0_321 = arith.constant 0 : index
    %355 = vector.load %arg10[%c0_319, %c0_320, %c0_321] : memref<1x8x512xf32, #tpu.memory_space<vmem>>, vector<1x8x512xf32>
    %356 = vector.shape_cast %355 : vector<1x8x512xf32> to vector<8x512xf32>
    %357 = vector.shape_cast %354 : vector<8x512xf32> to vector<1x8x512xf32>
    tpu.vector_store %arg10[%c0_319, %c0_320, %c0_321], %357 {strides = array<i32>} : memref<1x8x512xf32, #tpu.memory_space<vmem>>, vector<1x8x512xf32>,
    return
  }
  func.func @transform_0(%arg0: i32) -> i32 {
    %c0_i32 = arith.constant 0 : i32
    %c0_i32_0 = arith.constant 0 : i32
    return %c0_i32 : i32
  }
  func.func @transform_1(%arg0: i32) -> (i32, i32, i32) {
    %c0_i32 = arith.constant 0 : i32
    %c0_i32_0 = arith.constant 0 : i32
    %c0_i32_1 = arith.constant 0 : i32
    return %arg0, %c0_i32, %c0_i32_0 : i32, i32, i32
  }
  func.func @transform_2(%arg0: i32) -> (i32, i32) {
    %c0_i32 = arith.constant 0 : i32
    %c0_i32_0 = arith.constant 0 : i32
    %c0_i32_1 = arith.constant 0 : i32
    return %c0_i32, %c0_i32_0 : i32, i32
  }
  func.func @transform_3(%arg0: i32) -> (i32, i32) {
    %c0_i32 = arith.constant 0 : i32
    %c0_i32_0 = arith.constant 0 : i32
    %c0_i32_1 = arith.constant 0 : i32
    return %c0_i32, %c0_i32_0 : i32, i32
  }
  func.func @transform_4(%arg0: i32) -> (i32, i32) {
    %c0_i32 = arith.constant 0 : i32
    %c0_i32_0 = arith.constant 0 : i32
    %c0_i32_1 = arith.constant 0 : i32
    return %c0_i32, %c0_i32_0 : i32, i32
  }
  func.func @transform_5(%arg0: i32) -> (i32, i32) {
    %c0_i32 = arith.constant 0 : i32
    %c0_i32_0 = arith.constant 0 : i32
    %c0_i32_1 = arith.constant 0 : i32
    return %c0_i32, %c0_i32_0 : i32, i32
  }
  func.func @transform_6(%arg0: i32) -> (i32, i32) {
    %c0_i32 = arith.constant 0 : i32
    %c0_i32_0 = arith.constant 0 : i32
    %c0_i32_1 = arith.constant 0 : i32
    return %c0_i32, %c0_i32_0 : i32, i32
  }
  func.func @transform_7(%arg0: i32) -> (i32, i32) {
    %c0_i32 = arith.constant 0 : i32
    %c0_i32_0 = arith.constant 0 : i32
    %c0_i32_1 = arith.constant 0 : i32
    return %c0_i32, %c0_i32_0 : i32, i32
  }
  func.func @transform_8(%arg0: i32) -> (i32, i32) {
    %c0_i32 = arith.constant 0 : i32
    %c0_i32_0 = arith.constant 0 : i32
    %c0_i32_1 = arith.constant 0 : i32
    return %c0_i32, %c0_i32_0 : i32, i32
  }
  func.func @transform_9(%arg0: i32) -> (i32, i32, i32) {
    %c0_i32 = arith.constant 0 : i32
    %c0_i32_0 = arith.constant 0 : i32
    %c0_i32_1 = arith.constant 0 : i32
    return %arg0, %c0_i32, %c0_i32_0 : i32, i32, i32
  }
}

</mosaic_0001>

<llo_original>
// kernel: rcab3d_pallas.1
$region0: #{rcab3d_pallas.1}
  #allocation0 [shape = 'u32[]', space=smem, size = 0x4, offset = 0x4, fixed_abs, tag = 'smem constant byte address 0x4 - core index']
  #allocation1 [shape = 'u32[144,128]{1,0:T(1,128)}', space=vmem, size = 0x12000, scoped, tag = 'internal scratch']
  #allocation2 [shape = 'bf16[8,768]{1,0:T(8,128)(2,1)}', space=vmem, size = 0x3000, scoped, tag = 'scratch operand']
  #allocation3 [shape = 'bf16[128,512]{1,0:T(16,128)(2,1)}', space=vmem, size = 0x20000, scoped, tag = 'scratch operand']
  %s0 = inlined_call_operand.vmem [shape: f32[3], index: 0, kind: input, shape index: {}]
  %s1 = inlined_call_operand.vmem [shape: f32[2,8,512], index: 1, kind: input, shape index: {}]
  %s2 = inlined_call_operand.vmem [shape: bf16[8,256], index: 2, kind: input, shape index: {}]
  %s3 = inlined_call_operand.vmem [shape: f32[8,1], index: 3, kind: input, shape index: {}]
  %s4 = inlined_call_operand.vmem [shape: bf16[32,512], index: 4, kind: input, shape index: {}]
  %s5 = inlined_call_operand.vmem [shape: f32[8,4], index: 5, kind: input, shape index: {}]
  %s6 = inlined_call_operand.vmem [shape: f32[1,4], index: 6, kind: input, shape index: {}]
  %s7 = inlined_call_operand.vmem [shape: f32[8,4], index: 7, kind: input, shape index: {}]
  %s8 = inlined_call_operand.vmem [shape: f32[8,1], index: 8, kind: input, shape index: {}]
  %s9 = inlined_call_operand.vmem [shape: f32[2,8,512], index: 9, kind: output, shape index: {}]
  %s10 = sld [smem:[#allocation0]]
  $region73: #{rcab3d_pallas.1} parent=0
    _
  %s12 = ssub.s32 1, %s10
  %s13 = scalar_select 0, %s12, %s10
  $region1: #{rcab3d_pallas.1} parent=0
    #allocation4 [shape = 'u8[512]{0}', space=smem, size = 0x200, scoped, tag = 'input window, operand 0, single buffered']
    #allocation5 [shape = 's32[2]{0}', space=sflag, size = 0x8, scoped, tag = 'scoped memory for rcab3d_pallas.1']
    %14 = vsyncpa [#allocation5], 0
    loop: start=0, step=1, limit=4
    $region2: #{rcab3d_pallas.1} parent=1 // loop_pre_header
      _
    $region3: #{rcab3d_pallas.1} parent=1 // loop_header
      %s16 = sphi 0, %s20
      %p17 = scmp.ge.s32.totalorder %s16, 4
      %s24 = sphi 0, %s24
      %s26 = sphi 0, %s24
      %s27 = sphi 0, %s26
      %s41 = sphi 0, %s27
      %s47 = sphi 0, %s49
      %s50 = sphi 0, %s47
      %s51 = sphi 0, %s50
      %s67 = sphi 0, %s51
      %s71 = sphi 0, %s71
      %s73 = sphi 0, %s71
      %s74 = sphi 0, %s73
      %s88 = sphi 0, %s74
      %s92 = sphi 0, %s92
      %s94 = sphi 0, %s92
      %s95 = sphi 0, %s94
      %s109 = sphi 0, %s95
      %s113 = sphi 0, %s113
      %s115 = sphi 0, %s113
      %s116 = sphi 0, %s115
      %s130 = sphi 0, %s116
      %s134 = sphi 0, %s134
      %s136 = sphi 0, %s134
      %s137 = sphi 0, %s136
      %s151 = sphi 0, %s137
      %s155 = sphi 0, %s155
      %s157 = sphi 0, %s155
      %s158 = sphi 0, %s157
      %s172 = sphi 0, %s158
      %s176 = sphi 0, %s176
      %s178 = sphi 0, %s176
      %s179 = sphi 0, %s178
      %s193 = sphi 0, %s179
      %s197 = sphi 0, %s197
      %s199 = sphi 0, %s197
      %s200 = sphi 0, %s199
      %s214 = sphi 0, %s200
      %s220 = sphi 0, %s222
      %s223 = sphi 0, %s220
      %s224 = sphi 0, %s223
      %s240 = sphi 0, %s224
    $region4: #{rcab3d_pallas.1} parent=1 // loop_header_branch
      %19 = sbr.rel (%p17) target = $region8
    $region5: #{rcab3d_pallas.1} parent=1 // loop_body
      %s21 = ssub.s32 %s16, 1
      %s22 = ssub.s32 %s16, 2
      %s23 = sadd.s32 %s16, 1
      %s25 = sadd.s32 %s24, 1
      %p28 = scmp.eq.s32.totalorder %s16, 1
      %p29 = scmp.ne.s32.totalorder %s24, %s26
      %p30 = scmp.eq.s32.totalorder %s16, 0
      %p31 = por %p29, %p30
      %p32 = scmp.ne.s32.totalorder %s24, %s26
      %p33 = scmp.eq.s32.totalorder %s21, 1
      %p34 = por %p32, %p33
      %p35 = scmp.ne.s32.totalorder %s26, %s27
      %p36 = scmp.eq.s32.totalorder %s21, 0
      %p37 = por %p35, %p36
      %p38 = scmp.ne.s32.totalorder %s26, %s27
      %p39 = scmp.eq.s32.totalorder %s22, 1
      %p40 = por %p38, %p39
      %p42 = scmp.ne.s32.totalorder %s27, %s41
      %p43 = scmp.eq.s32.totalorder %s22, 0
      %p44 = por %p42, %p43
      %s45 = ssub.s32 %s16, %s23
      %p46 = scmp.eq.s32.totalorder %s45, 0
      %s48 = sadd.s32 %s47, 1
      %s49 = scalar_select %p46, %s47, %s48
      %p52 = pneg %p46
      %p53 = scmp.eq.s32.totalorder %s16, 1
      %p54 = por %p52, %p53
      %p55 = scmp.ne.s32.totalorder %s47, %s50
      %p56 = scmp.eq.s32.totalorder %s16, 0
      %p57 = por %p55, %p56
      %p58 = scmp.ne.s32.totalorder %s47, %s50
      %p59 = scmp.eq.s32.totalorder %s21, 1
      %p60 = por %p58, %p59
      %p61 = scmp.ne.s32.totalorder %s50, %s51
      %p62 = scmp.eq.s32.totalorder %s21, 0
      %p63 = por %p61, %p62
      %p64 = scmp.ne.s32.totalorder %s50, %s51
      %p65 = scmp.eq.s32.totalorder %s22, 1
      %p66 = por %p64, %p65
      %p68 = scmp.ne.s32.totalorder %s51, %s67
      %p69 = scmp.eq.s32.totalorder %s22, 0
      %p70 = por %p68, %p69
      %s72 = sadd.s32 %s71, 1
      %p75 = scmp.eq.s32.totalorder %s16, 1
      %p76 = scmp.ne.s32.totalorder %s71, %s73
      %p77 = scmp.eq.s32.totalorder %s16, 0
      %p78 = por %p76, %p77
      %p79 = scmp.ne.s32.totalorder %s71, %s73
      %p80 = scmp.eq.s32.totalorder %s21, 1
      %p81 = por %p79, %p80
      %p82 = scmp.ne.s32.totalorder %s73, %s74
      %p83 = scmp.eq.s32.totalorder %s21, 0
      %p84 = por %p82, %p83
      %p85 = scmp.ne.s32.totalorder %s73, %s74
      %p86 = scmp.eq.s32.totalorder %s22, 1
      %p87 = por %p85, %p86
      %p89 = scmp.ne.s32.totalorder %s74, %s88
      %p90 = scmp.eq.s32.totalorder %s22, 0
      %p91 = por %p89, %p90
      %s93 = sadd.s32 %s92, 1
      %p96 = scmp.eq.s32.totalorder %s16, 1
      %p97 = scmp.ne.s32.totalorder %s92, %s94
      %p98 = scmp.eq.s32.totalorder %s16, 0
      %p99 = por %p97, %p98
      %p100 = scmp.ne.s32.totalorder %s92, %s94
      %p101 = scmp.eq.s32.totalorder %s21, 1
      %p102 = por %p100, %p101
      %p103 = scmp.ne.s32.totalorder %s94, %s95
      %p104 = scmp.eq.s32.totalorder %s21, 0
      %p105 = por %p103, %p104
      %p106 = scmp.ne.s32.totalorder %s94, %s95
      %p107 = scmp.eq.s32.totalorder %s22, 1
      %p108 = por %p106, %p107
      %p110 = scmp.ne.s32.totalorder %s95, %s109
      %p111 = scmp.eq.s32.totalorder %s22, 0
      %p112 = por %p110, %p111
      %s114 = sadd.s32 %s113, 1
      %p117 = scmp.eq.s32.totalorder %s16, 1
      %p118 = scmp.ne.s32.totalorder %s113, %s115
      %p119 = scmp.eq.s32.totalorder %s16, 0
      %p120 = por %p118, %p119
      %p121 = scmp.ne.s32.totalorder %s113, %s115
      %p122 = scmp.eq.s32.totalorder %s21, 1
      %p123 = por %p121, %p122
      %p124 = scmp.ne.s32.totalorder %s115, %s116
      %p125 = scmp.eq.s32.totalorder %s21, 0
      %p126 = por %p124, %p125
      %p127 = scmp.ne.s32.totalorder %s115, %s116
      %p128 = scmp.eq.s32.totalorder %s22, 1
      %p129 = por %p127, %p128
      %p131 = scmp.ne.s32.totalorder %s116, %s130
      %p132 = scmp.eq.s32.totalorder %s22, 0
      %p133 = por %p131, %p132
      %s135 = sadd.s32 %s134, 1
      %p138 = scmp.eq.s32.totalorder %s16, 1
      %p139 = scmp.ne.s32.totalorder %s134, %s136
      %p140 = scmp.eq.s32.totalorder %s16, 0
      %p141 = por %p139, %p140
      %p142 = scmp.ne.s32.totalorder %s134, %s136
      %p143 = scmp.eq.s32.totalorder %s21, 1
      %p144 = por %p142, %p143
      %p145 = scmp.ne.s32.totalorder %s136, %s137
      %p146 = scmp.eq.s32.totalorder %s21, 0
      %p147 = por %p145, %p146
      %p148 = scmp.ne.s32.totalorder %s136, %s137
      %p149 = scmp.eq.s32.totalorder %s22, 1
      %p150 = por %p148, %p149
      %p152 = scmp.ne.s32.totalorder %s137, %s151
      %p153 = scmp.eq.s32.totalorder %s22, 0
      %p154 = por %p152, %p153
      %s156 = sadd.s32 %s155, 1
      %p159 = scmp.eq.s32.totalorder %s16, 1
      %p160 = scmp.ne.s32.totalorder %s155, %s157
      %p161 = scmp.eq.s32.totalorder %s16, 0
      %p162 = por %p160, %p161
      %p163 = scmp.ne.s32.totalorder %s155, %s157
      %p164 = scmp.eq.s32.totalorder %s21, 1
      %p165 = por %p163, %p164
      %p166 = scmp.ne.s32.totalorder %s157, %s158
      %p167 = scmp.eq.s32.totalorder %s21, 0
      %p168 = por %p166, %p167
      %p169 = scmp.ne.s32.totalorder %s157, %s158
      %p170 = scmp.eq.s32.totalorder %s22, 1
      %p171 = por %p169, %p170
      %p173 = scmp.ne.s32.totalorder %s158, %s172
      %p174 = scmp.eq.s32.totalorder %s22, 0
      %p175 = por %p173, %p174
      %s177 = sadd.s32 %s176, 1
      %p180 = scmp.eq.s32.totalorder %s16, 1
      %p181 = scmp.ne.s32.totalorder %s176, %s178
      %p182 = scmp.eq.s32.totalorder %s16, 0
      %p183 = por %p181, %p182
      %p184 = scmp.ne.s32.totalorder %s176, %s178
      %p185 = scmp.eq.s32.totalorder %s21, 1
      %p186 = por %p184, %p185
      %p187 = scmp.ne.s32.totalorder %s178, %s179
      %p188 = scmp.eq.s32.totalorder %s21, 0
      %p189 = por %p187, %p188
      %p190 = scmp.ne.s32.totalorder %s178, %s179
      %p191 = scmp.eq.s32.totalorder %s22, 1
      %p192 = por %p190, %p191
      %p194 = scmp.ne.s32.totalorder %s179, %s193
      %p195 = scmp.eq.s32.totalorder %s22, 0
      %p196 = por %p194, %p195
      %s198 = sadd.s32 %s197, 1
      %p201 = scmp.eq.s32.totalorder %s16, 1
      %p202 = scmp.ne.s32.totalorder %s197, %s199
      %p203 = scmp.eq.s32.totalorder %s16, 0
      %p204 = por %p202, %p203
      %p205 = scmp.ne.s32.totalorder %s197, %s199
      %p206 = scmp.eq.s32.totalorder %s21, 1
      %p207 = por %p205, %p206
      %p208 = scmp.ne.s32.totalorder %s199, %s200
      %p209 = scmp.eq.s32.totalorder %s21, 0
      %p210 = por %p208, %p209
      %p211 = scmp.ne.s32.totalorder %s199, %s200
      %p212 = scmp.eq.s32.totalorder %s22, 1
      %p213 = por %p211, %p212
      %p215 = scmp.ne.s32.totalorder %s200, %s214
      %p216 = scmp.eq.s32.totalorder %s22, 0
      %p217 = por %p215, %p216
      %s218 = ssub.s32 %s16, %s23
      %p219 = scmp.eq.s32.totalorder %s218, 0
      %s221 = sadd.s32 %s220, 1
      %s222 = scalar_select %p219, %s220, %s221
      %p225 = pneg %p219
      %p226 = scmp.eq.s32.totalorder %s16, 1
      %p227 = por %p225, %p226
      %p228 = scmp.ne.s32.totalorder %s220, %s223
      %p229 = scmp.eq.s32.totalorder %s16, 0
      %p230 = por %p228, %p229
      %p231 = scmp.ne.s32.totalorder %s220, %s223
      %p232 = scmp.eq.s32.totalorder %s21, 1
      %p233 = por %p231, %p232
      %p234 = scmp.ne.s32.totalorder %s223, %s224
      %p235 = scmp.eq.s32.totalorder %s21, 0
      %p236 = por %p234, %p235
      %p237 = scmp.ne.s32.totalorder %s223, %s224
      %p238 = scmp.eq.s32.totalorder %s22, 1
      %p239 = por %p237, %p238
      %p241 = scmp.ne.s32.totalorder %s224, %s240
      %p242 = scmp.eq.s32.totalorder %s22, 0
      %p243 = por %p241, %p242
      %p244 = scmp.le.s32.totalorder 1, %s16
      %p245 = scmp.lt.s32.totalorder %s16, 3
      %p246 = pnand %p244, %p245
      %p247 = pneg %p246
      // Predicated region
      $region9: #{rcab3d_pallas.1} parent=5 // pred_check
        _
      $region10: #{rcab3d_pallas.1} parent=5 // pred_check_branch
        %249 = sbr.rel (%p246) target = $region12
      $region11: #{rcab3d_pallas.1} parent=5 // pred_region
        %s250 = ssub.s32 %s16, 1
        // Predicated region
        $region13: #{rcab3d_pallas.1} parent=11 // pred_check
          %p251 = pneg %p37
        $region14: #{rcab3d_pallas.1} parent=11 // pred_check_branch
          %253 = sbr.rel (%p251) target = $region16
        $region15: #{rcab3d_pallas.1} parent=11 // pred_region
          %s255 = ssub.s32 16, 16
          %256 = vsyncadd [#allocation5], %s255
          %s258 = sshll.u32 %s0, 4
          %s259 = int_to_ptr.vmem [resolvable:$true] %s258
          %261 = dma.vmem_to_smem %s259, 16, [#allocation4], [#allocation5]
        $region16: #{rcab3d_pallas.1} parent=11 // pred_fallthru
          _
        // Predicated region
        $region17: #{rcab3d_pallas.1} parent=11 // pred_check
          %p262 = pneg %p84
        $region18: #{rcab3d_pallas.1} parent=11 // pred_check_branch
          %264 = sbr.rel (%p262) target = $region20
        $region19: #{rcab3d_pallas.1} parent=11 // pred_region
          _
        $region20: #{rcab3d_pallas.1} parent=11 // pred_fallthru
          _
        // Predicated region
        $region21: #{rcab3d_pallas.1} parent=11 // pred_check
          %p265 = pneg %p105
        $region22: #{rcab3d_pallas.1} parent=11 // pred_check_branch
          %267 = sbr.rel (%p265) target = $region24
        $region23: #{rcab3d_pallas.1} parent=11 // pred_region
          _
        $region24: #{rcab3d_pallas.1} parent=11 // pred_fallthru
          _
        // Predicated region
        $region25: #{rcab3d_pallas.1} parent=11 // pred_check
          %p268 = pneg %p126
        $region26: #{rcab3d_pallas.1} parent=11 // pred_check_branch
          %270 = sbr.rel (%p268) target = $region28
        $region27: #{rcab3d_pallas.1} parent=11 // pred_region
          _
        $region28: #{rcab3d_pallas.1} parent=11 // pred_fallthru
          _
        // Predicated region
        $region29: #{rcab3d_pallas.1} parent=11 // pred_check
          %p271 = pneg %p147
        $region30: #{rcab3d_pallas.1} parent=11 // pred_check_branch
          %273 = sbr.rel (%p271) target = $region32
        $region31: #{rcab3d_pallas.1} parent=11 // pred_region
          _
        $region32: #{rcab3d_pallas.1} parent=11 // pred_fallthru
          _
        // Predicated region
        $region33: #{rcab3d_pallas.1} parent=11 // pred_check
          %p274 = pneg %p168
        $region34: #{rcab3d_pallas.1} parent=11 // pred_check_branch
          %276 = sbr.rel (%p274) target = $region36
        $region35: #{rcab3d_pallas.1} parent=11 // pred_region
          _
        $region36: #{rcab3d_pallas.1} parent=11 // pred_fallthru
          _
        // Predicated region
        $region37: #{rcab3d_pallas.1} parent=11 // pred_check
          %p277 = pneg %p189
        $region38: #{rcab3d_pallas.1} parent=11 // pred_check_branch
          %279 = sbr.rel (%p277) target = $region40
        $region39: #{rcab3d_pallas.1} parent=11 // pred_region
          _
        $region40: #{rcab3d_pallas.1} parent=11 // pred_fallthru
          _
        // Predicated region
        $region41: #{rcab3d_pallas.1} parent=11 // pred_check
          %p280 = pneg %p210
        $region42: #{rcab3d_pallas.1} parent=11 // pred_check_branch
          %282 = sbr.rel (%p280) target = $region44
        $region43: #{rcab3d_pallas.1} parent=11 // pred_region
          _
        $region44: #{rcab3d_pallas.1} parent=11 // pred_fallthru
          _
      $region12: #{rcab3d_pallas.1} parent=5 // pred_fallthru
        _
      %p283 = scmp.lt.s32.totalorder %s16, 2
      // Predicated region
      $region45: #{rcab3d_pallas.1} parent=5 // pred_check
        %p284 = pneg %p283
      $region46: #{rcab3d_pallas.1} parent=5 // pred_check_branch
        %286 = sbr.rel (%p284) target = $region48
      $region47: #{rcab3d_pallas.1} parent=5 // pred_region
        // Predicated region
        $region49: #{rcab3d_pallas.1} parent=47 // pred_check
          %p287 = pneg %p57
        $region50: #{rcab3d_pallas.1} parent=47 // pred_check_branch
          %289 = sbr.rel (%p287) target = $region52
        $region51: #{rcab3d_pallas.1} parent=47 // pred_region
          %p290 = scmp.lt.s32.totalorder %s16, 1
          %s291 = scalar_select %p290, %s16, 1
          %s292 = smul.addr %s291, 4
          %s293 = smul.addr %s292, 8
          %s294 = scalar_lea.vmem %s1, %s293
        $region52: #{rcab3d_pallas.1} parent=47 // pred_fallthru
          _
      $region48: #{rcab3d_pallas.1} parent=5 // pred_fallthru
        _
      %p295 = scmp.le.s32.totalorder 1, %s16
      %p296 = scmp.lt.s32.totalorder %s16, 3
      %p297 = pnand %p295, %p296
      %p298 = pneg %p297
      // Predicated region
      $region53: #{rcab3d_pallas.1} parent=5 // pred_check
        _
      $region54: #{rcab3d_pallas.1} parent=5 // pred_check_branch
        %300 = sbr.rel (%p297) target = $region56
      $region55: #{rcab3d_pallas.1} parent=5 // pred_region
        %s301 = ssub.s32 %s16, 1
        // Predicated region
        $region57: #{rcab3d_pallas.1} parent=55 // pred_check
          %p302 = pneg %p37
        $region58: #{rcab3d_pallas.1} parent=55 // pred_check_branch
          %304 = sbr.rel (%p302) target = $region60
        $region59: #{rcab3d_pallas.1} parent=55 // pred_region
          %305 = dma.done [#allocation5], 16
        $region60: #{rcab3d_pallas.1} parent=55 // pred_fallthru
          _
        %306 = sfence
        %p307 = pneg %p37
        %p308 = pneg %p34
        %p309 = scmp.lt.s32.totalorder %s21, 1
        %s310 = scalar_select %p309, %s21, 1
        %s311 = smul.addr %s310, 4
        %s312 = smul.addr %s311, 8
        %s313 = scalar_lea.vmem %s1, %s312
        %p314 = pneg %p63
        %p315 = pneg %p60
        %p316 = pneg %p84
        %p317 = pneg %p81
        %p318 = pneg %p105
        %p319 = pneg %p102
        %p320 = pneg %p126
        %p321 = pneg %p123
        %p322 = pneg %p147
        %p323 = pneg %p144
        %p324 = pneg %p168
        %p325 = pneg %p165
        %p326 = pneg %p189
        %p327 = pneg %p186
        %p328 = pneg %p210
        %p329 = pneg %p207
        %p330 = pneg %p236
        %p331 = pneg %p233
        %p332 = scmp.lt.s32.totalorder %s21, 1
        %s333 = scalar_select %p332, %s21, 1
        %s334 = smul.addr %s333, 4
        %s335 = smul.addr %s334, 8
        %s336 = scalar_lea.vmem %s9, %s335
        %p337 = scmp.lt.s32.totalorder %s21, 1
        %s338 = scalar_select %p337, %s21, 1
        %s339 = smul.addr %s338, 4
        %s340 = smul.addr %s339, 8
        %s341 = scalar_lea.vmem %s1, %s340
        %p342 = scmp.lt.s32.totalorder %s21, 1
        %s343 = scalar_select %p342, %s21, 1
        %s344 = smul.addr %s343, 4
        %s345 = smul.addr %s344, 8
        %s346 = scalar_lea.vmem %s9, %s345
        %s348 = sld [smem:[#allocation4]]
        %s349 = sld [smem:[#allocation4 + $0x1]]
        %s350 = sld [smem:[#allocation4 + $0x2]]
        %351 = vst [vmem:[#allocation2] sm:$0xf] 0
        %352 = vst [vmem:[#allocation2 + $0x14] sm:$0xf] 0
        %v353 = vld [vmem:[%s341] sm:$0xff]
        %v354 = vld [vmem:[%s341 + $0x8] sm:$0xff]
        %v355 = vld [vmem:[%s341 + $0x10] sm:$0xff]
        %v356 = vld [vmem:[%s341 + $0x18] sm:$0xff]
        %v357 = vpack.c.bf16 %v353, %v353
        %v358 = vpack.c.bf16 %v354, %v354
        %v359 = vpack.c.bf16 %v355, %v355
        %v360 = vpack.c.bf16 %v356, %v356
        %v365 = vunpack.c.l.b16 %v357
        %v366 = vunpack.c.l.b16 %v358
        %v367 = vunpack.c.l.b16 %v359
        %v368 = vunpack.c.l.b16 %v360
        %v369 = vpack.c.b16 %v366, %v365
        %v370 = vpack.c.b16 %v368, %v367
        %373 = vst [vmem:[#allocation2 + $0x4] sm:$0xff] %v369
        %374 = vst [vmem:[#allocation2 + $0xc] sm:$0xff] %v370
        %v375 = vld [vmem:[#allocation2] sm:$0xff]
        %v376 = vld [vmem:[#allocation2 + $0x8] sm:$0xff]
        %v377 = vld [vmem:[#allocation2 + $0x10] sm:$0xf]
        %v378 = vld [vmem:[%s4] sm:$0x11]
        %v379 = vld [vmem:[%s4 + $0x8] sm:$0x11]
        %v382 = vunpack.c.l.b16 %v378
        %v383 = vunpack.c.h.b16 %v378
        %v384 = vunpack.c.l.b16 %v379
        %v385 = vunpack.c.h.b16 %v379
        %v386 = vpack.c.b16 %v382, %v382
        %v387 = vpack.c.b16 %v383, %v383
        %v388 = vpack.c.b16 %v384, %v384
        %v389 = vpack.c.b16 %v385, %v385
        %v391 = vpack.i.b16 %v386, %v386
        %v393 = vlaneseq
        %v394 = vshrl.u32 %v393, 7
        %v395 = vsub.s32 0, %v394
        %v396 = vrot.slane %v391, %v395
        %v398 = vpack.i.b16 %v387, %v387
        %v400 = vlaneseq
        %v401 = vshrl.u32 %v400, 7
        %v402 = vsub.s32 0, %v401
        %v403 = vrot.slane %v398, %v402
        %v405 = vpack.i.b16 %v388, %v388
        %v407 = vlaneseq
        %v408 = vshrl.u32 %v407, 7
        %v409 = vsub.s32 0, %v408
        %v410 = vrot.slane %v405, %v409
        %v412 = vpack.i.b16 %v389, %v389
        %v414 = vlaneseq
        %v415 = vshrl.u32 %v414, 7
        %v416 = vsub.s32 0, %v415
        %v417 = vrot.slane %v412, %v416
        %v422 = vunpack.c.l.b16 %v396
        %v423 = vunpack.c.l.b16 %v403
        %v424 = vunpack.c.l.b16 %v410
        %v425 = vunpack.c.l.b16 %v417
        %v426 = vpack.c.b16 %v423, %v422
        %v427 = vpack.c.b16 %v425, %v424
        %428 = vrot.lane.b32.xlu0 %v426, 55
        %v429 = vpop.permute.xlu0 %428
        %430 = vrot.lane.b32.xlu0 %v427, 55
        %v431 = vpop.permute.xlu0 %430
        %v432 = vrot.slane %v429, 4
        %v433 = vrot.slane %v431, 4
        %vm434 = vcmask 449536
        %v435 = vsel %vm434, %v432, %v429
        %vm436 = vcmask 1043456
        %v437 = vsel %vm436, %v432, %v433
        %v438 = vsel %vm434, %v437, %v431
        %v442 = vmul.bf16 %v375, %v435
        %v443 = vmul.bf16 %v376, %v438
        %v444 = vmul.bf16 %v377, %v433
        %v448 = vunpack.c.l.b16 %v442
        %v449 = vunpack.c.h.b16 %v442
        %v450 = vunpack.c.l.b16 %v443
        %v451 = vunpack.c.h.b16 %v443
        %v452 = vunpack.c.l.b16 %v444
        %v453 = vpack.c.b16 %v448, %v448
        %v454 = vpack.c.b16 %v449, %v449
        %v455 = vpack.c.b16 %v450, %v450
        %v456 = vpack.c.b16 %v451, %v451
        %v457 = vpack.c.b16 %v452, %v452
        %458 = vrot.lane.b32.xlu0 %v453, 73
        %v459 = vpop.permute.xlu0 %458
        %460 = vrot.lane.b32.xlu0 %v454, 73
        %v461 = vpop.permute.xlu0 %460
        %462 = vrot.lane.b32.xlu0 %v455, 73
        %v463 = vpop.permute.xlu0 %462
        %464 = vrot.lane.b32.xlu0 %v456, 73
        %v465 = vpop.permute.xlu0 %464
        %466 = vrot.lane.b32.xlu0 %v457, 73
        %v467 = vpop.permute.xlu0 %466
        %vm468 = vcmask 596992
        %v469 = vsel %vm468, %v459, %v461
        %v470 = vsel %vm468, %v461, %v463
        %v471 = vsel %vm468, %v463, %v465
        %v472 = vsel %vm468, %v465, %v467
        %477 = vst [vmem:[#allocation3] sm:$0xf] %v469
        %478 = vst [vmem:[#allocation3 + $0x8] sm:$0xf] %v470
        %479 = vst [vmem:[#allocation3 + $0x10] sm:$0xf] %v471
        %480 = vst [vmem:[#allocation3 + $0x18] sm:$0xf] %v472
        %v481 = vld [vmem:[#allocation2] sm:$0xff]
        %v482 = vld [vmem:[#allocation2 + $0x8] sm:$0xff]
        %v483 = vld [vmem:[#allocation2 + $0x10] sm:$0xf]
        %v484 = vld [vmem:[%s4] sm:$0x11]
        %v485 = vld [vmem:[%s4 + $0x8] sm:$0x11]
        %v488 = vunpack.c.l.b16 %v484
        %v489 = vunpack.c.h.b16 %v484
        %v490 = vunpack.c.l.b16 %v485
        %v491 = vunpack.c.h.b16 %v485
        %v492 = vpack.c.b16 %v488, %v488
        %v493 = vpack.c.b16 %v489, %v489
        %v494 = vpack.c.b16 %v490, %v490
        %v495 = vpack.c.b16 %v491, %v491
        %v497 = vshrl.u32 %v492, 16
        %v498 = vpack.i.b16 %v497, %v497
        %v500 = vlaneseq
        %v501 = vshrl.u32 %v500, 7
        %v502 = vsub.s32 0, %v501
        %v503 = vrot.slane %v498, %v502
        %v505 = vshrl.u32 %v493, 16
        %v506 = vpack.i.b16 %v505, %v505
        %v508 = vlaneseq
        %v509 = vshrl.u32 %v508, 7
        %v510 = vsub.s32 0, %v509
        %v511 = vrot.slane %v506, %v510
        %v513 = vshrl.u32 %v494, 16
        %v514 = vpack.i.b16 %v513, %v513
        %v516 = vlaneseq
        %v517 = vshrl.u32 %v516, 7
        %v518 = vsub.s32 0, %v517
        %v519 = vrot.slane %v514, %v518
        %v521 = vshrl.u32 %v495, 16
        %v522 = vpack.i.b16 %v521, %v521
        %v524 = vlaneseq
        %v525 = vshrl.u32 %v524, 7
        %v526 = vsub.s32 0, %v525
        %v527 = vrot.slane %v522, %v526
        %v532 = vunpack.c.l.b16 %v503
        %v533 = vunpack.c.l.b16 %v511
        %v534 = vunpack.c.l.b16 %v519
        %v535 = vunpack.c.l.b16 %v527
        %v536 = vpack.c.b16 %v533, %v532
        %v537 = vpack.c.b16 %v535, %v534
        %538 = vrot.lane.b32.xlu0 %v536, 56
        %v539 = vpop.permute.xlu0 %538
        %540 = vrot.lane.b32.xlu0 %v537, 56
        %v541 = vpop.permute.xlu0 %540
        %v542 = vrot.slane %v539, 4
        %v543 = vrot.slane %v541, 4
        %vm544 = vcmask 457728
        %v545 = vsel %vm544, %v542, %v539
        %v546 = vsel %vm436, %v542, %v543
        %v547 = vsel %vm544, %v546, %v541
        %v551 = vmul.bf16 %v481, %v545
        %v552 = vmul.bf16 %v482, %v547
        %v553 = vmul.bf16 %v483, %v543
        %v557 = vunpack.c.l.b16 %v551
        %v558 = vunpack.c.h.b16 %v551
        %v559 = vunpack.c.l.b16 %v552
        %v560 = vunpack.c.h.b16 %v552
        %v561 = vunpack.c.l.b16 %v553
        %v562 = vpack.c.b16 %v557, %v557
        %v563 = vpack.c.b16 %v558, %v558
        %v564 = vpack.c.b16 %v559, %v559
        %v565 = vpack.c.b16 %v560, %v560
        %v566 = vpack.c.b16 %v561, %v561
        %567 = vrot.lane.b32.xlu0 %v562, 72
        %v568 = vpop.permute.xlu0 %567
        %569 = vrot.lane.b32.xlu0 %v563, 72
        %v570 = vpop.permute.xlu0 %569
        %571 = vrot.lane.b32.xlu0 %v564, 72
        %v572 = vpop.permute.xlu0 %571
        %573 = vrot.lane.b32.xlu0 %v565, 72
        %v574 = vpop.permute.xlu0 %573
        %575 = vrot.lane.b32.xlu0 %v566, 72
        %v576 = vpop.permute.xlu0 %575
        %vm577 = vcmask 588800
        %v578 = vsel %vm577, %v568, %v570
        %v579 = vsel %vm577, %v570, %v572
        %v580 = vsel %vm577, %v572, %v574
        %v581 = vsel %vm577, %v574, %v576
        %586 = vst [vmem:[#allocation3] sm:$0xf0] %v578
        %587 = vst [vmem:[#allocation3 + $0x8] sm:$0xf0] %v579
        %588 = vst [vmem:[#allocation3 + $0x10] sm:$0xf0] %v580
        %589 = vst [vmem:[#allocation3 + $0x18] sm:$0xf0] %v581
        %v590 = vld [vmem:[#allocation2] sm:$0xff]
        %v591 = vld [vmem:[#allocation2 + $0x8] sm:$0xff]
        %v592 = vld [vmem:[#allocation2 + $0x10] sm:$0xf]
        %v593 = vld [vmem:[%s4] sm:$0x22]
        %v594 = vld [vmem:[%s4 + $0x8] sm:$0x22]
        %v597 = vunpack.c.l.b16 %v593
        %v598 = vunpack.c.h.b16 %v593
        %v599 = vunpack.c.l.b16 %v594
        %v600 = vunpack.c.h.b16 %v594
        %v601 = vpack.c.b16 %v597, %v597
        %v602 = vpack.c.b16 %v598, %v598
        %v603 = vpack.c.b16 %v599, %v599
        %v604 = vpack.c.b16 %v600, %v600
        %v606 = vpack.i.b16 %v601, %v601
        %v608 = vlaneseq
        %v609 = vshrl.u32 %v608, 7
        %v610 = vsub.s32 1, %v609
        %v611 = vrot.slane %v606, %v610
        %v613 = vpack.i.b16 %v602, %v602
        %v615 = vlaneseq
        %v616 = vshrl.u32 %v615, 7
        %v617 = vsub.s32 1, %v616
        %v618 = vrot.slane %v613, %v617
        %v620 = vpack.i.b16 %v603, %v603
        %v622 = vlaneseq
        %v623 = vshrl.u32 %v622, 7
        %v624 = vsub.s32 1, %v623
        %v625 = vrot.slane %v620, %v624
        %v627 = vpack.i.b16 %v604, %v604
        %v629 = vlaneseq
        %v630 = vshrl.u32 %v629, 7
        %v631 = vsub.s32 1, %v630
        %v632 = vrot.slane %v627, %v631
        %v637 = vunpack.c.l.b16 %v611
        %v638 = vunpack.c.l.b16 %v618
        %v639 = vunpack.c.l.b16 %v625
        %v640 = vunpack.c.l.b16 %v632
        %v641 = vpack.c.b16 %v638, %v637
        %v642 = vpack.c.b16 %v640, %v639
        %643 = vrot.lane.b32.xlu0 %v641, 57
        %v644 = vpop.permute.xlu0 %643
        %645 = vrot.lane.b32.xlu0 %v642, 57
        %v646 = vpop.permute.xlu0 %645
        %v647 = vrot.slane %v644, 4
        %v648 = vrot.slane %v646, 4
        %vm649 = vcmask 465920
        %v650 = vsel %vm649, %v647, %v644
        %v651 = vsel %vm436, %v647, %v648
        %v652 = vsel %vm649, %v651, %v646
        %v656 = vmul.bf16 %v590, %v650
        %v657 = vmul.bf16 %v591, %v652
        %v658 = vmul.bf16 %v592, %v648
        %v662 = vunpack.c.l.b16 %v656
        %v663 = vunpack.c.h.b16 %v656
        %v664 = vunpack.c.l.b16 %v657
        %v665 = vunpack.c.h.b16 %v657
        %v666 = vunpack.c.l.b16 %v658
        %v667 = vpack.c.b16 %v662, %v662
        %v668 = vpack.c.b16 %v663, %v663
        %v669 = vpack.c.b16 %v664, %v664
        %v670 = vpack.c.b16 %v665, %v665
        %v671 = vpack.c.b16 %v666, %v666
        %672 = vrot.lane.b32.xlu0 %v667, 71
        %v673 = vpop.permute.xlu0 %672
        %674 = vrot.lane.b32.xlu0 %v668, 71
        %v675 = vpop.permute.xlu0 %674
        %676 = vrot.lane.b32.xlu0 %v669, 71
        %v677 = vpop.permute.xlu0 %676
        %678 = vrot.lane.b32.xlu0 %v670, 71
        %v679 = vpop.permute.xlu0 %678
        %680 = vrot.lane.b32.xlu0 %v671, 71
        %v681 = vpop.permute.xlu0 %680
        %vm682 = vcmask 580608
        %v683 = vsel %vm682, %v673, %v675
        %v684 = vsel %vm682, %v675, %v677
        %v685 = vsel %vm682, %v677, %v679
        %v686 = vsel %vm682, %v679, %v681
        %691 = vst [vmem:[#allocation3 + $0x20] sm:$0xf] %v683
        %692 = vst [vmem:[#allocation3 + $0x28] sm:$0xf] %v684
        %693 = vst [vmem:[#allocation3 + $0x30] sm:$0xf] %v685
        %694 = vst [vmem:[#allocation3 + $0x38] sm:$0xf] %v686
        %v695 = vld [vmem:[#allocation2] sm:$0xff]
        %v696 = vld [vmem:[#allocation2 + $0x8] sm:$0xff]
        %v697 = vld [vmem:[#allocation2 + $0x10] sm:$0xf]
        %v698 = vld [vmem:[%s4] sm:$0x22]
        %v699 = vld [vmem:[%s4 + $0x8] sm:$0x22]
        %v702 = vunpack.c.l.b16 %v698
        %v703 = vunpack.c.h.b16 %v698
        %v704 = vunpack.c.l.b16 %v699
        %v705 = vunpack.c.h.b16 %v699
        %v706 = vpack.c.b16 %v702, %v702
        %v707 = vpack.c.b16 %v703, %v703
        %v708 = vpack.c.b16 %v704, %v704
        %v709 = vpack.c.b16 %v705, %v705
        %v711 = vshrl.u32 %v706, 16
        %v712 = vpack.i.b16 %v711, %v711
        %v714 = vlaneseq
        %v715 = vshrl.u32 %v714, 7
        %v716 = vsub.s32 1, %v715
        %v717 = vrot.slane %v712, %v716
        %v719 = vshrl.u32 %v707, 16
        %v720 = vpack.i.b16 %v719, %v719
        %v722 = vlaneseq
        %v723 = vshrl.u32 %v722, 7
        %v724 = vsub.s32 1, %v723
        %v725 = vrot.slane %v720, %v724
        %v727 = vshrl.u32 %v708, 16
        %v728 = vpack.i.b16 %v727, %v727
        %v730 = vlaneseq
        %v731 = vshrl.u32 %v730, 7
        %v732 = vsub.s32 1, %v731
        %v733 = vrot.slane %v728, %v732
        %v735 = vshrl.u32 %v709, 16
        %v736 = vpack.i.b16 %v735, %v735
        %v738 = vlaneseq
        %v739 = vshrl.u32 %v738, 7
        %v740 = vsub.s32 1, %v739
        %v741 = vrot.slane %v736, %v740
        %v746 = vunpack.c.l.b16 %v717
        %v747 = vunpack.c.l.b16 %v725
        %v748 = vunpack.c.l.b16 %v733
        %v749 = vunpack.c.l.b16 %v741
        %v750 = vpack.c.b16 %v747, %v746
        %v751 = vpack.c.b16 %v749, %v748
        %752 = vrot.lane.b32.xlu0 %v750, 63
        %v753 = vpop.permute.xlu0 %752
        %754 = vrot.lane.b32.xlu0 %v751, 63
        %v755 = vpop.permute.xlu0 %754
        %v756 = vrot.slane %v753, 4
        %v757 = vrot.slane %v755, 4
        %vm758 = vcmask 515072
        %v759 = vsel %vm758, %v756, %v753
        %v760 = vsel %vm436, %v756, %v757
        %v761 = vsel %vm758, %v760, %v755
        %v765 = vmul.bf16 %v695, %v759
        %v766 = vmul.bf16 %v696, %v761
        %v767 = vmul.bf16 %v697, %v757
        %v771 = vunpack.c.l.b16 %v765
        %v772 = vunpack.c.h.b16 %v765
        %v773 = vunpack.c.l.b16 %v766
        %v774 = vunpack.c.h.b16 %v766
        %v775 = vunpack.c.l.b16 %v767
        %v776 = vpack.c.b16 %v771, %v771
        %v777 = vpack.c.b16 %v772, %v772
        %v778 = vpack.c.b16 %v773, %v773
        %v779 = vpack.c.b16 %v774, %v774
        %v780 = vpack.c.b16 %v775, %v775
        %781 = vrot.lane.b32.xlu0 %v776, 65
        %v782 = vpop.permute.xlu0 %781
        %783 = vrot.lane.b32.xlu0 %v777, 65
        %v784 = vpop.permute.xlu0 %783
        %785 = vrot.lane.b32.xlu0 %v778, 65
        %v786 = vpop.permute.xlu0 %785
        %787 = vrot.lane.b32.xlu0 %v779, 65
        %v788 = vpop.permute.xlu0 %787
        %789 = vrot.lane.b32.xlu0 %v780, 65
        %v790 = vpop.permute.xlu0 %789
        %vm791 = vcmask 531456
        %v792 = vsel %vm791, %v782, %v784
        %v793 = vsel %vm791, %v784, %v786
        %v794 = vsel %vm791, %v786, %v788
        %v795 = vsel %vm791, %v788, %v790
        %800 = vst [vmem:[#allocation3 + $0x20] sm:$0xf0] %v792
        %801 = vst [vmem:[#allocation3 + $0x28] sm:$0xf0] %v793
        %802 = vst [vmem:[#allocation3 + $0x30] sm:$0xf0] %v794
        %803 = vst [vmem:[#allocation3 + $0x38] sm:$0xf0] %v795
        %v804 = vld [vmem:[#allocation2] sm:$0xff]
        %v805 = vld [vmem:[#allocation2 + $0x8] sm:$0xff]
        %v806 = vld [vmem:[#allocation2 + $0x10] sm:$0xf]
        %v807 = vld [vmem:[%s4] sm:$0x44]
        %v808 = vld [vmem:[%s4 + $0x8] sm:$0x44]
        %v811 = vunpack.c.l.b16 %v807
        %v812 = vunpack.c.h.b16 %v807
        %v813 = vunpack.c.l.b16 %v808
        %v814 = vunpack.c.h.b16 %v808
        %v815 = vpack.c.b16 %v811, %v811
        %v816 = vpack.c.b16 %v812, %v812
        %v817 = vpack.c.b16 %v813, %v813
        %v818 = vpack.c.b16 %v814, %v814
        %v820 = vpack.i.b16 %v815, %v815
        %v822 = vlaneseq
        %v823 = vshrl.u32 %v822, 7
        %v824 = vsub.s32 2, %v823
        %v825 = vrot.slane %v820, %v824
        %v827 = vpack.i.b16 %v816, %v816
        %v829 = vlaneseq
        %v830 = vshrl.u32 %v829, 7
        %v831 = vsub.s32 2, %v830
        %v832 = vrot.slane %v827, %v831
        %v834 = vpack.i.b16 %v817, %v817
        %v836 = vlaneseq
        %v837 = vshrl.u32 %v836, 7
        %v838 = vsub.s32 2, %v837
        %v839 = vrot.slane %v834, %v838
        %v841 = vpack.i.b16 %v818, %v818
        %v843 = vlaneseq
        %v844 = vshrl.u32 %v843, 7
        %v845 = vsub.s32 2, %v844
        %v846 = vrot.slane %v841, %v845
        %v851 = vunpack.c.l.b16 %v825
        %v852 = vunpack.c.l.b16 %v832
        %v853 = vunpack.c.l.b16 %v839
        %v854 = vunpack.c.l.b16 %v846
        %v855 = vpack.c.b16 %v852, %v851
        %v856 = vpack.c.b16 %v854, %v853
        %857 = vrot.lane.b32.xlu0 %v855, 64
        %v858 = vpop.permute.xlu0 %857
        %859 = vrot.lane.b32.xlu0 %v856, 64
        %v860 = vpop.permute.xlu0 %859
        %v861 = vrot.slane %v858, 4
        %v862 = vrot.slane %v860, 4
        %vm863 = vcmask 523264
        %v864 = vsel %vm863, %v861, %v858
        %v865 = vsel %vm436, %v861, %v862
        %v866 = vsel %vm863, %v865, %v860
        %v870 = vmul.bf16 %v804, %v864
        %v871 = vmul.bf16 %v805, %v866
        %v872 = vmul.bf16 %v806, %v862
        %v876 = vunpack.c.l.b16 %v870
        %v877 = vunpack.c.h.b16 %v870
        %v878 = vunpack.c.l.b16 %v871
        %v879 = vunpack.c.h.b16 %v871
        %v880 = vunpack.c.l.b16 %v872
        %v881 = vpack.c.b16 %v876, %v876
        %v882 = vpack.c.b16 %v877, %v877
        %v883 = vpack.c.b16 %v878, %v878
        %v884 = vpack.c.b16 %v879, %v879
        %v885 = vpack.c.b16 %v880, %v880
        %886 = vrot.lane.b32.xlu0 %v881, 64
        %v887 = vpop.permute.xlu0 %886
        %888 = vrot.lane.b32.xlu0 %v882, 64
        %v889 = vpop.permute.xlu0 %888
        %890 = vrot.lane.b32.xlu0 %v883, 64
        %v891 = vpop.permute.xlu0 %890
        %892 = vrot.lane.b32.xlu0 %v884, 64
        %v893 = vpop.permute.xlu0 %892
        %894 = vrot.lane.b32.xlu0 %v885, 64
        %v895 = vpop.permute.xlu0 %894
        %v896 = vsel %vm863, %v887, %v889
        %v897 = vsel %vm863, %v889, %v891
        %v898 = vsel %vm863, %v891, %v893
        %v899 = vsel %vm863, %v893, %v895
        %904 = vst [vmem:[#allocation3 + $0x40] sm:$0xf] %v896
        %905 = vst [vmem:[#allocation3 + $0x48] sm:$0xf] %v897
        %906 = vst [vmem:[#allocation3 + $0x50] sm:$0xf] %v898
        %907 = vst [vmem:[#allocation3 + $0x58] sm:$0xf] %v899
        %v908 = vld [vmem:[#allocation2] sm:$0xff]
        %v909 = vld [vmem:[#allocation2 + $0x8] sm:$0xff]
        %v910 = vld [vmem:[#allocation2 + $0x10] sm:$0xf]
        %v911 = vld [vmem:[%s4] sm:$0x44]
        %v912 = vld [vmem:[%s4 + $0x8] sm:$0x44]
        %v915 = vunpack.c.l.b16 %v911
        %v916 = vunpack.c.h.b16 %v911
        %v917 = vunpack.c.l.b16 %v912
        %v918 = vunpack.c.h.b16 %v912
        %v919 = vpack.c.b16 %v915, %v915
        %v920 = vpack.c.b16 %v916, %v916
        %v921 = vpack.c.b16 %v917, %v917
        %v922 = vpack.c.b16 %v918, %v918
        %v924 = vshrl.u32 %v919, 16
        %v925 = vpack.i.b16 %v924, %v924
        %v927 = vlaneseq
        %v928 = vshrl.u32 %v927, 7
        %v929 = vsub.s32 2, %v928
        %v930 = vrot.slane %v925, %v929
        %v932 = vshrl.u32 %v920, 16
        %v933 = vpack.i.b16 %v932, %v932
        %v935 = vlaneseq
        %v936 = vshrl.u32 %v935, 7
        %v937 = vsub.s32 2, %v936
        %v938 = vrot.slane %v933, %v937
        %v940 = vshrl.u32 %v921, 16
        %v941 = vpack.i.b16 %v940, %v940
        %v943 = vlaneseq
        %v944 = vshrl.u32 %v943, 7
        %v945 = vsub.s32 2, %v944
        %v946 = vrot.slane %v941, %v945
        %v948 = vshrl.u32 %v922, 16
        %v949 = vpack.i.b16 %v948, %v948
        %v951 = vlaneseq
        %v952 = vshrl.u32 %v951, 7
        %v953 = vsub.s32 2, %v952
        %v954 = vrot.slane %v949, %v953
        %v959 = vunpack.c.l.b16 %v930
        %v960 = vunpack.c.l.b16 %v938
        %v961 = vunpack.c.l.b16 %v946
        %v962 = vunpack.c.l.b16 %v954
        %v963 = vpack.c.b16 %v960, %v959
        %v964 = vpack.c.b16 %v962, %v961
        %965 = vrot.lane.b32.xlu0 %v963, 65
        %v966 = vpop.permute.xlu0 %965
        %967 = vrot.lane.b32.xlu0 %v964, 65
        %v968 = vpop.permute.xlu0 %967
        %v969 = vrot.slane %v966, 4
        %v970 = vrot.slane %v968, 4
        %v971 = vsel %vm791, %v969, %v966
        %v972 = vsel %vm436, %v969, %v970
        %v973 = vsel %vm791, %v972, %v968
        %v977 = vmul.bf16 %v908, %v971
        %v978 = vmul.bf16 %v909, %v973
        %v979 = vmul.bf16 %v910, %v970
        %v983 = vunpack.c.l.b16 %v977
        %v984 = vunpack.c.h.b16 %v977
        %v985 = vunpack.c.l.b16 %v978
        %v986 = vunpack.c.h.b16 %v978
        %v987 = vunpack.c.l.b16 %v979
        %v988 = vpack.c.b16 %v983, %v983
        %v989 = vpack.c.b16 %v984, %v984
        %v990 = vpack.c.b16 %v985, %v985
        %v991 = vpack.c.b16 %v986, %v986
        %v992 = vpack.c.b16 %v987, %v987
        %993 = vrot.lane.b32.xlu0 %v988, 63
        %v994 = vpop.permute.xlu0 %993
        %995 = vrot.lane.b32.xlu0 %v989, 63
        %v996 = vpop.permute.xlu0 %995
        %997 = vrot.lane.b32.xlu0 %v990, 63
        %v998 = vpop.permute.xlu0 %997
        %999 = vrot.lane.b32.xlu0 %v991, 63
        %v1000 = vpop.permute.xlu0 %999
        %1001 = vrot.lane.b32.xlu0 %v992, 63
        %v1002 = vpop.permute.xlu0 %1001
        %v1003 = vsel %vm758, %v994, %v996
        %v1004 = vsel %vm758, %v996, %v998
        %v1005 = vsel %vm758, %v998, %v1000
        %v1006 = vsel %vm758, %v1000, %v1002
        %1011 = vst [vmem:[#allocation3 + $0x40] sm:$0xf0] %v1003
        %1012 = vst [vmem:[#allocation3 + $0x48] sm:$0xf0] %v1004
        %1013 = vst [vmem:[#allocation3 + $0x50] sm:$0xf0] %v1005
        %1014 = vst [vmem:[#allocation3 + $0x58] sm:$0xf0] %v1006
        %v1015 = vld [vmem:[#allocation2] sm:$0xff]
        %v1016 = vld [vmem:[#allocation2 + $0x8] sm:$0xff]
        %v1017 = vld [vmem:[#allocation2 + $0x10] sm:$0xf]
        %v1018 = vld [vmem:[%s4] sm:$0x88]
        %v1019 = vld [vmem:[%s4 + $0x8] sm:$0x88]
        %v1022 = vunpack.c.l.b16 %v1018
        %v1023 = vunpack.c.h.b16 %v1018
        %v1024 = vunpack.c.l.b16 %v1019
        %v1025 = vunpack.c.h.b16 %v1019
        %v1026 = vpack.c.b16 %v1022, %v1022
        %v1027 = vpack.c.b16 %v1023, %v1023
        %v1028 = vpack.c.b16 %v1024, %v1024
        %v1029 = vpack.c.b16 %v1025, %v1025
        %v1031 = vpack.i.b16 %v1026, %v1026
        %v1033 = vlaneseq
        %v1034 = vshrl.u32 %v1033, 7
        %v1035 = vsub.s32 3, %v1034
        %v1036 = vrot.slane %v1031, %v1035
        %v1038 = vpack.i.b16 %v1027, %v1027
        %v1040 = vlaneseq
        %v1041 = vshrl.u32 %v1040, 7
        %v1042 = vsub.s32 3, %v1041
        %v1043 = vrot.slane %v1038, %v1042
        %v1045 = vpack.i.b16 %v1028, %v1028
        %v1047 = vlaneseq
        %v1048 = vshrl.u32 %v1047, 7
        %v1049 = vsub.s32 3, %v1048
        %v1050 = vrot.slane %v1045, %v1049
        %v1052 = vpack.i.b16 %v1029, %v1029
        %v1054 = vlaneseq
        %v1055 = vshrl.u32 %v1054, 7
        %v1056 = vsub.s32 3, %v1055
        %v1057 = vrot.slane %v1052, %v1056
        %v1062 = vunpack.c.l.b16 %v1036
        %v1063 = vunpack.c.l.b16 %v1043
        %v1064 = vunpack.c.l.b16 %v1050
        %v1065 = vunpack.c.l.b16 %v1057
        %v1066 = vpack.c.b16 %v1063, %v1062
        %v1067 = vpack.c.b16 %v1065, %v1064
        %1068 = vrot.lane.b32.xlu0 %v1066, 71
        %v1069 = vpop.permute.xlu0 %1068
        %1070 = vrot.lane.b32.xlu0 %v1067, 71
        %v1071 = vpop.permute.xlu0 %1070
        %v1072 = vrot.slane %v1069, 4
        %v1073 = vrot.slane %v1071, 4
        %v1074 = vsel %vm682, %v1072, %v1069
        %v1075 = vsel %vm436, %v1072, %v1073
        %v1076 = vsel %vm682, %v1075, %v1071
        %v1080 = vmul.bf16 %v1015, %v1074
        %v1081 = vmul.bf16 %v1016, %v1076
        %v1082 = vmul.bf16 %v1017, %v1073
        %v1086 = vunpack.c.l.b16 %v1080
        %v1087 = vunpack.c.h.b16 %v1080
        %v1088 = vunpack.c.l.b16 %v1081
        %v1089 = vunpack.c.h.b16 %v1081
        %v1090 = vunpack.c.l.b16 %v1082
        %v1091 = vpack.c.b16 %v1086, %v1086
        %v1092 = vpack.c.b16 %v1087, %v1087
        %v1093 = vpack.c.b16 %v1088, %v1088
        %v1094 = vpack.c.b16 %v1089, %v1089
        %v1095 = vpack.c.b16 %v1090, %v1090
        %1096 = vrot.lane.b32.xlu0 %v1091, 57
        %v1097 = vpop.permute.xlu0 %1096
        %1098 = vrot.lane.b32.xlu0 %v1092, 57
        %v1099 = vpop.permute.xlu0 %1098
        %1100 = vrot.lane.b32.xlu0 %v1093, 57
        %v1101 = vpop.permute.xlu0 %1100
        %1102 = vrot.lane.b32.xlu0 %v1094, 57
        %v1103 = vpop.permute.xlu0 %1102
        %1104 = vrot.lane.b32.xlu0 %v1095, 57
        %v1105 = vpop.permute.xlu0 %1104
        %v1106 = vsel %vm649, %v1097, %v1099
        %v1107 = vsel %vm649, %v1099, %v1101
        %v1108 = vsel %vm649, %v1101, %v1103
        %v1109 = vsel %vm649, %v1103, %v1105
        %1114 = vst [vmem:[#allocation3 + $0x60] sm:$0xf] %v1106
        %1115 = vst [vmem:[#allocation3 + $0x68] sm:$0xf] %v1107
        %1116 = vst [vmem:[#allocation3 + $0x70] sm:$0xf] %v1108
        %1117 = vst [vmem:[#allocation3 + $0x78] sm:$0xf] %v1109
        %v1118 = vld [vmem:[#allocation2] sm:$0xff]
        %v1119 = vld [vmem:[#allocation2 + $0x8] sm:$0xff]
        %v1120 = vld [vmem:[#allocation2 + $0x10] sm:$0xf]
        %v1121 = vld [vmem:[%s4] sm:$0x88]
        %v1122 = vld [vmem:[%s4 + $0x8] sm:$0x88]
        %v1125 = vunpack.c.l.b16 %v1121
        %v1126 = vunpack.c.h.b16 %v1121
        %v1127 = vunpack.c.l.b16 %v1122
        %v1128 = vunpack.c.h.b16 %v1122
        %v1129 = vpack.c.b16 %v1125, %v1125
        %v1130 = vpack.c.b16 %v1126, %v1126
        %v1131 = vpack.c.b16 %v1127, %v1127
        %v1132 = vpack.c.b16 %v1128, %v1128
        %v1134 = vshrl.u32 %v1129, 16
        %v1135 = vpack.i.b16 %v1134, %v1134
        %v1137 = vlaneseq
        %v1138 = vshrl.u32 %v1137, 7
        %v1139 = vsub.s32 3, %v1138
        %v1140 = vrot.slane %v1135, %v1139
        %v1142 = vshrl.u32 %v1130, 16
        %v1143 = vpack.i.b16 %v1142, %v1142
        %v1145 = vlaneseq
        %v1146 = vshrl.u32 %v1145, 7
        %v1147 = vsub.s32 3, %v1146
        %v1148 = vrot.slane %v1143, %v1147
        %v1150 = vshrl.u32 %v1131, 16
        %v1151 = vpack.i.b16 %v1150, %v1150
        %v1153 = vlaneseq
        %v1154 = vshrl.u32 %v1153, 7
        %v1155 = vsub.s32 3, %v1154
        %v1156 = vrot.slane %v1151, %v1155
        %v1158 = vshrl.u32 %v1132, 16
        %v1159 = vpack.i.b16 %v1158, %v1158
        %v1161 = vlaneseq
        %v1162 = vshrl.u32 %v1161, 7
        %v1163 = vsub.s32 3, %v1162
        %v1164 = vrot.slane %v1159, %v1163
        %v1169 = vunpack.c.l.b16 %v1140
        %v1170 = vunpack.c.l.b16 %v1148
        %v1171 = vunpack.c.l.b16 %v1156
        %v1172 = vunpack.c.l.b16 %v1164
        %v1173 = vpack.c.b16 %v1170, %v1169
        %v1174 = vpack.c.b16 %v1172, %v1171
        %1175 = vrot.lane.b32.xlu0 %v1173, 72
        %v1176 = vpop.permute.xlu0 %1175
        %1177 = vrot.lane.b32.xlu0 %v1174, 72
        %v1178 = vpop.permute.xlu0 %1177
        %v1179 = vrot.slane %v1176, 4
        %v1180 = vrot.slane %v1178, 4
        %v1181 = vsel %vm577, %v1179, %v1176
        %v1182 = vsel %vm436, %v1179, %v1180
        %v1183 = vsel %vm577, %v1182, %v1178
        %v1187 = vmul.bf16 %v1118, %v1181
        %v1188 = vmul.bf16 %v1119, %v1183
        %v1189 = vmul.bf16 %v1120, %v1180
        %v1193 = vunpack.c.l.b16 %v1187
        %v1194 = vunpack.c.h.b16 %v1187
        %v1195 = vunpack.c.l.b16 %v1188
        %v1196 = vunpack.c.h.b16 %v1188
        %v1197 = vunpack.c.l.b16 %v1189
        %v1198 = vpack.c.b16 %v1193, %v1193
        %v1199 = vpack.c.b16 %v1194, %v1194
        %v1200 = vpack.c.b16 %v1195, %v1195
        %v1201 = vpack.c.b16 %v1196, %v1196
        %v1202 = vpack.c.b16 %v1197, %v1197
        %1203 = vrot.lane.b32.xlu0 %v1198, 56
        %v1204 = vpop.permute.xlu0 %1203
        %1205 = vrot.lane.b32.xlu0 %v1199, 56
        %v1206 = vpop.permute.xlu0 %1205
        %1207 = vrot.lane.b32.xlu0 %v1200, 56
        %v1208 = vpop.permute.xlu0 %1207
        %1209 = vrot.lane.b32.xlu0 %v1201, 56
        %v1210 = vpop.permute.xlu0 %1209
        %1211 = vrot.lane.b32.xlu0 %v1202, 56
        %v1212 = vpop.permute.xlu0 %1211
        %v1213 = vsel %vm544, %v1204, %v1206
        %v1214 = vsel %vm544, %v1206, %v1208
        %v1215 = vsel %vm544, %v1208, %v1210
        %v1216 = vsel %vm544, %v1210, %v1212
        %1221 = vst [vmem:[#allocation3 + $0x60] sm:$0xf0] %v1213
        %1222 = vst [vmem:[#allocation3 + $0x68] sm:$0xf0] %v1214
        %1223 = vst [vmem:[#allocation3 + $0x70] sm:$0xf0] %v1215
        %1224 = vst [vmem:[#allocation3 + $0x78] sm:$0xf0] %v1216
        %v1225 = vld [vmem:[#allocation2] sm:$0xff]
        %v1226 = vld [vmem:[#allocation2 + $0x8] sm:$0xff]
        %v1227 = vld [vmem:[#allocation2 + $0x10] sm:$0xf]
        %v1228 = vld [vmem:[%s4 + $0x10] sm:$0x11]
        %v1229 = vld [vmem:[%s4 + $0x18] sm:$0x11]
        %v1232 = vunpack.c.l.b16 %v1228
        %v1233 = vunpack.c.h.b16 %v1228
        %v1234 = vunpack.c.l.b16 %v1229
        %v1235 = vunpack.c.h.b16 %v1229
        %v1236 = vpack.c.b16 %v1232, %v1232
        %v1237 = vpack.c.b16 %v1233, %v1233
        %v1238 = vpack.c.b16 %v1234, %v1234
        %v1239 = vpack.c.b16 %v1235, %v1235
        %v1241 = vpack.i.b16 %v1236, %v1236
        %v1243 = vlaneseq
        %v1244 = vshrl.u32 %v1243, 7
        %v1245 = vsub.s32 0, %v1244
        %v1246 = vrot.slane %v1241, %v1245
        %v1248 = vpack.i.b16 %v1237, %v1237
        %v1250 = vlaneseq
        %v1251 = vshrl.u32 %v1250, 7
        %v1252 = vsub.s32 0, %v1251
        %v1253 = vrot.slane %v1248, %v1252
        %v1255 = vpack.i.b16 %v1238, %v1238
        %v1257 = vlaneseq
        %v1258 = vshrl.u32 %v1257, 7
        %v1259 = vsub.s32 0, %v1258
        %v1260 = vrot.slane %v1255, %v1259
        %v1262 = vpack.i.b16 %v1239, %v1239
        %v1264 = vlaneseq
        %v1265 = vshrl.u32 %v1264, 7
        %v1266 = vsub.s32 0, %v1265
        %v1267 = vrot.slane %v1262, %v1266
        %v1272 = vunpack.c.l.b16 %v1246
        %v1273 = vunpack.c.l.b16 %v1253
        %v1274 = vunpack.c.l.b16 %v1260
        %v1275 = vunpack.c.l.b16 %v1267
        %v1276 = vpack.c.b16 %v1273, %v1272
        %v1277 = vpack.c.b16 %v1275, %v1274
        %1278 = vrot.lane.b32.xlu0 %v1276, 73
        %v1279 = vpop.permute.xlu0 %1278
        %1280 = vrot.lane.b32.xlu0 %v1277, 73
        %v1281 = vpop.permute.xlu0 %1280
        %v1282 = vrot.slane %v1279, 4
        %v1283 = vrot.slane %v1281, 4
        %v1284 = vsel %vm468, %v1282, %v1279
        %v1285 = vsel %vm436, %v1282, %v1283
        %v1286 = vsel %vm468, %v1285, %v1281
        %v1290 = vmul.bf16 %v1225, %v1284
        %v1291 = vmul.bf16 %v1226, %v1286
        %v1292 = vmul.bf16 %v1227, %v1283
        %v1296 = vunpack.c.l.b16 %v1290
        %v1297 = vunpack.c.h.b16 %v1290
        %v1298 = vunpack.c.l.b16 %v1291
        %v1299 = vunpack.c.h.b16 %v1291
        %v1300 = vunpack.c.l.b16 %v1292
        %v1301 = vpack.c.b16 %v1296, %v1296
        %v1302 = vpack.c.b16 %v1297, %v1297
        %v1303 = vpack.c.b16 %v1298, %v1298
        %v1304 = vpack.c.b16 %v1299, %v1299
        %v1305 = vpack.c.b16 %v1300, %v1300
        %1306 = vrot.lane.b32.xlu0 %v1301, 55
        %v1307 = vpop.permute.xlu0 %1306
        %1308 = vrot.lane.b32.xlu0 %v1302, 55
        %v1309 = vpop.permute.xlu0 %1308
        %1310 = vrot.lane.b32.xlu0 %v1303, 55
        %v1311 = vpop.permute.xlu0 %1310
        %1312 = vrot.lane.b32.xlu0 %v1304, 55
        %v1313 = vpop.permute.xlu0 %1312
        %1314 = vrot.lane.b32.xlu0 %v1305, 55
        %v1315 = vpop.permute.xlu0 %1314
        %v1316 = vsel %vm434, %v1307, %v1309
        %v1317 = vsel %vm434, %v1309, %v1311
        %v1318 = vsel %vm434, %v1311, %v1313
        %v1319 = vsel %vm434, %v1313, %v1315
        %1324 = vst [vmem:[#allocation3 + $0x80] sm:$0xf] %v1316
        %1325 = vst [vmem:[#allocation3 + $0x88] sm:$0xf] %v1317
        %1326 = vst [vmem:[#allocation3 + $0x90] sm:$0xf] %v1318
        %1327 = vst [vmem:[#allocation3 + $0x98] sm:$0xf] %v1319
        %v1328 = vld [vmem:[#allocation2] sm:$0xff]
        %v1329 = vld [vmem:[#allocation2 + $0x8] sm:$0xff]
        %v1330 = vld [vmem:[#allocation2 + $0x10] sm:$0xf]
        %v1331 = vld [vmem:[%s4 + $0x10] sm:$0x11]
        %v1332 = vld [vmem:[%s4 + $0x18] sm:$0x11]
        %v1335 = vunpack.c.l.b16 %v1331
        %v1336 = vunpack.c.h.b16 %v1331
        %v1337 = vunpack.c.l.b16 %v1332
        %v1338 = vunpack.c.h.b16 %v1332
        %v1339 = vpack.c.b16 %v1335, %v1335
        %v1340 = vpack.c.b16 %v1336, %v1336
        %v1341 = vpack.c.b16 %v1337, %v1337
        %v1342 = vpack.c.b16 %v1338, %v1338
        %v1344 = vshrl.u32 %v1339, 16
        %v1345 = vpack.i.b16 %v1344, %v1344
        %v1347 = vlaneseq
        %v1348 = vshrl.u32 %v1347, 7
        %v1349 = vsub.s32 0, %v1348
        %v1350 = vrot.slane %v1345, %v1349
        %v1352 = vshrl.u32 %v1340, 16
        %v1353 = vpack.i.b16 %v1352, %v1352
        %v1355 = vlaneseq
        %v1356 = vshrl.u32 %v1355, 7
        %v1357 = vsub.s32 0, %v1356
        %v1358 = vrot.slane %v1353, %v1357
        %v1360 = vshrl.u32 %v1341, 16
        %v1361 = vpack.i.b16 %v1360, %v1360
        %v1363 = vlaneseq
        %v1364 = vshrl.u32 %v1363, 7
        %v1365 = vsub.s32 0, %v1364
        %v1366 = vrot.slane %v1361, %v1365
        %v1368 = vshrl.u32 %v1342, 16
        %v1369 = vpack.i.b16 %v1368, %v1368
        %v1371 = vlaneseq
        %v1372 = vshrl.u32 %v1371, 7
        %v1373 = vsub.s32 0, %v1372
        %v1374 = vrot.slane %v1369, %v1373
        %v1379 = vunpack.c.l.b16 %v1350
        %v1380 = vunpack.c.l.b16 %v1358
        %v1381 = vunpack.c.l.b16 %v1366
        %v1382 = vunpack.c.l.b16 %v1374
        %v1383 = vpack.c.b16 %v1380, %v1379
        %v1384 = vpack.c.b16 %v1382, %v1381
        %1385 = vrot.lane.b32.xlu0 %v1383, 119
        %v1386 = vpop.permute.xlu0 %1385
        %1387 = vrot.lane.b32.xlu0 %v1384, 119
        %v1388 = vpop.permute.xlu0 %1387
        %v1389 = vrot.slane %v1386, 4
        %v1390 = vrot.slane %v1388, 4
        %vm1391 = vcmask 973824
        %v1392 = vsel %vm1391, %v1389, %v1386
        %v1393 = vsel %vm436, %v1389, %v1390
        %v1394 = vsel %vm1391, %v1393, %v1388
        %v1398 = vmul.bf16 %v1328, %v1392
        %v1399 = vmul.bf16 %v1329, %v1394
        %v1400 = vmul.bf16 %v1330, %v1390
        %v1404 = vunpack.c.l.b16 %v1398
        %v1405 = vunpack.c.h.b16 %v1398
        %v1406 = vunpack.c.l.b16 %v1399
        %v1407 = vunpack.c.h.b16 %v1399
        %v1408 = vunpack.c.l.b16 %v1400
        %v1409 = vpack.c.b16 %v1404, %v1404
        %v1410 = vpack.c.b16 %v1405, %v1405
        %v1411 = vpack.c.b16 %v1406, %v1406
        %v1412 = vpack.c.b16 %v1407, %v1407
        %v1413 = vpack.c.b16 %v1408, %v1408
        %1414 = vrot.lane.b32.xlu0 %v1409, 9
        %v1415 = vpop.permute.xlu0 %1414
        %1416 = vrot.lane.b32.xlu0 %v1410, 9
        %v1417 = vpop.permute.xlu0 %1416
        %1418 = vrot.lane.b32.xlu0 %v1411, 9
        %v1419 = vpop.permute.xlu0 %1418
        %1420 = vrot.lane.b32.xlu0 %v1412, 9
        %v1421 = vpop.permute.xlu0 %1420
        %1422 = vrot.lane.b32.xlu0 %v1413, 9
        %v1423 = vpop.permute.xlu0 %1422
        %vm1424 = vcmask 72704
        %v1425 = vsel %vm1424, %v1415, %v1417
        %v1426 = vsel %vm1424, %v1417, %v1419
        %v1427 = vsel %vm1424, %v1419, %v1421
        %v1428 = vsel %vm1424, %v1421, %v1423
        %1433 = vst [vmem:[#allocation3 + $0x80] sm:$0xf0] %v1425
        %1434 = vst [vmem:[#allocation3 + $0x88] sm:$0xf0] %v1426
        %1435 = vst [vmem:[#allocation3 + $0x90] sm:$0xf0] %v1427
        %1436 = vst [vmem:[#allocation3 + $0x98] sm:$0xf0] %v1428
        %v1437 = vld [vmem:[#allocation2] sm:$0xff]
        %v1438 = vld [vmem:[#allocation2 + $0x8] sm:$0xff]
        %v1439 = vld [vmem:[#allocation2 + $0x10] sm:$0xf]
        %v1440 = vld [vmem:[%s4 + $0x10] sm:$0x22]
        %v1441 = vld [vmem:[%s4 + $0x18] sm:$0x22]
        %v1444 = vunpack.c.l.b16 %v1440
        %v1445 = vunpack.c.h.b16 %v1440
        %v1446 = vunpack.c.l.b16 %v1441
        %v1447 = vunpack.c.h.b16 %v1441
        %v1448 = vpack.c.b16 %v1444, %v1444
        %v1449 = vpack.c.b16 %v1445, %v1445
        %v1450 = vpack.c.b16 %v1446, %v1446
        %v1451 = vpack.c.b16 %v1447, %v1447
        %v1453 = vpack.i.b16 %v1448, %v1448
        %v1455 = vlaneseq
        %v1456 = vshrl.u32 %v1455, 7
        %v1457 = vsub.s32 1, %v1456
        %v1458 = vrot.slane %v1453, %v1457
        %v1460 = vpack.i.b16 %v1449, %v1449
        %v1462 = vlaneseq
        %v1463 = vshrl.u32 %v1462, 7
        %v1464 = vsub.s32 1, %v1463
        %v1465 = vrot.slane %v1460, %v1464
        %v1467 = vpack.i.b16 %v1450, %v1450
        %v1469 = vlaneseq
        %v1470 = vshrl.u32 %v1469, 7
        %v1471 = vsub.s32 1, %v1470
        %v1472 = vrot.slane %v1467, %v1471
        %v1474 = vpack.i.b16 %v1451, %v1451
        %v1476 = vlaneseq
        %v1477 = vshrl.u32 %v1476, 7
        %v1478 = vsub.s32 1, %v1477
        %v1479 = vrot.slane %v1474, %v1478
        %v1484 = vunpack.c.l.b16 %v1458
        %v1485 = vunpack.c.l.b16 %v1465
        %v1486 = vunpack.c.l.b16 %v1472
        %v1487 = vunpack.c.l.b16 %v1479
        %v1488 = vpack.c.b16 %v1485, %v1484
        %v1489 = vpack.c.b16 %v1487, %v1486
        %1490 = vrot.lane.b32.xlu0 %v1488, 120
        %v1491 = vpop.permute.xlu0 %1490
        %1492 = vrot.lane.b32.xlu0 %v1489, 120
        %v1493 = vpop.permute.xlu0 %1492
        %v1494 = vrot.slane %v1491, 4
        %v1495 = vrot.slane %v1493, 4
        %vm1496 = vcmask 982016
        %v1497 = vsel %vm1496, %v1494, %v1491
        %v1498 = vsel %vm436, %v1494, %v1495
        %v1499 = vsel %vm1496, %v1498, %v1493
        %v1503 = vmul.bf16 %v1437, %v1497
        %v1504 = vmul.bf16 %v1438, %v1499
        %v1505 = vmul.bf16 %v1439, %v1495
        %v1509 = vunpack.c.l.b16 %v1503
        %v1510 = vunpack.c.h.b16 %v1503
        %v1511 = vunpack.c.l.b16 %v1504
        %v1512 = vunpack.c.h.b16 %v1504
        %v1513 = vunpack.c.l.b16 %v1505
        %v1514 = vpack.c.b16 %v1509, %v1509
        %v1515 = vpack.c.b16 %v1510, %v1510
        %v1516 = vpack.c.b16 %v1511, %v1511
        %v1517 = vpack.c.b16 %v1512, %v1512
        %v1518 = vpack.c.b16 %v1513, %v1513
        %1519 = vrot.lane.b32.xlu0 %v1514, 8
        %v1520 = vpop.permute.xlu0 %1519
        %1521 = vrot.lane.b32.xlu0 %v1515, 8
        %v1522 = vpop.permute.xlu0 %1521
        %1523 = vrot.lane.b32.xlu0 %v1516, 8
        %v1524 = vpop.permute.xlu0 %1523
        %1525 = vrot.lane.b32.xlu0 %v1517, 8
        %v1526 = vpop.permute.xlu0 %1525
        %1527 = vrot.lane.b32.xlu0 %v1518, 8
        %v1528 = vpop.permute.xlu0 %1527
        %vm1529 = vcmask 64512
        %v1530 = vsel %vm1529, %v1520, %v1522
        %v1531 = vsel %vm1529, %v1522, %v1524
        %v1532 = vsel %vm1529, %v1524, %v1526
        %v1533 = vsel %vm1529, %v1526, %v1528
        %1538 = vst [vmem:[#allocation3 + $0xa0] sm:$0xf] %v1530
        %1539 = vst [vmem:[#allocation3 + $0xa8] sm:$0xf] %v1531
        %1540 = vst [vmem:[#allocation3 + $0xb0] sm:$0xf] %v1532
        %1541 = vst [vmem:[#allocation3 + $0xb8] sm:$0xf] %v1533
        %v1542 = vld [vmem:[#allocation2] sm:$0xff]
        %v1543 = vld [vmem:[#allocation2 + $0x8] sm:$0xff]
        %v1544 = vld [vmem:[#allocation2 + $0x10] sm:$0xf]
        %v1545 = vld [vmem:[%s4 + $0x10] sm:$0x22]
        %v1546 = vld [vmem:[%s4 + $0x18] sm:$0x22]
        %v1549 = vunpack.c.l.b16 %v1545
        %v1550 = vunpack.c.h.b16 %v1545
        %v1551 = vunpack.c.l.b16 %v1546
        %v1552 = vunpack.c.h.b16 %v1546
        %v1553 = vpack.c.b16 %v1549, %v1549
        %v1554 = vpack.c.b16 %v1550, %v1550
        %v1555 = vpack.c.b16 %v1551, %v1551
        %v1556 = vpack.c.b16 %v1552, %v1552
        %v1558 = vshrl.u32 %v1553, 16
        %v1559 = vpack.i.b16 %v1558, %v1558
        %v1561 = vlaneseq
        %v1562 = vshrl.u32 %v1561, 7
        %v1563 = vsub.s32 1, %v1562
        %v1564 = vrot.slane %v1559, %v1563
        %v1566 = vshrl.u32 %v1554, 16
        %v1567 = vpack.i.b16 %v1566, %v1566
        %v1569 = vlaneseq
        %v1570 = vshrl.u32 %v1569, 7
        %v1571 = vsub.s32 1, %v1570
        %v1572 = vrot.slane %v1567, %v1571
        %v1574 = vshrl.u32 %v1555, 16
        %v1575 = vpack.i.b16 %v1574, %v1574
        %v1577 = vlaneseq
        %v1578 = vshrl.u32 %v1577, 7
        %v1579 = vsub.s32 1, %v1578
        %v1580 = vrot.slane %v1575, %v1579
        %v1582 = vshrl.u32 %v1556, 16
        %v1583 = vpack.i.b16 %v1582, %v1582
        %v1585 = vlaneseq
        %v1586 = vshrl.u32 %v1585, 7
        %v1587 = vsub.s32 1, %v1586
        %v1588 = vrot.slane %v1583, %v1587
        %v1593 = vunpack.c.l.b16 %v1564
        %v1594 = vunpack.c.l.b16 %v1572
        %v1595 = vunpack.c.l.b16 %v1580
        %v1596 = vunpack.c.l.b16 %v1588
        %v1597 = vpack.c.b16 %v1594, %v1593
        %v1598 = vpack.c.b16 %v1596, %v1595
        %1599 = vrot.lane.b32.xlu0 %v1597, 121
        %v1600 = vpop.permute.xlu0 %1599
        %1601 = vrot.lane.b32.xlu0 %v1598, 121
        %v1602 = vpop.permute.xlu0 %1601
        %v1603 = vrot.slane %v1600, 4
        %v1604 = vrot.slane %v1602, 4
        %vm1605 = vcmask 990208
        %v1606 = vsel %vm1605, %v1603, %v1600
        %v1607 = vsel %vm436, %v1603, %v1604
        %v1608 = vsel %vm1605, %v1607, %v1602
        %v1612 = vmul.bf16 %v1542, %v1606
        %v1613 = vmul.bf16 %v1543, %v1608
        %v1614 = vmul.bf16 %v1544, %v1604
        %v1618 = vunpack.c.l.b16 %v1612
        %v1619 = vunpack.c.h.b16 %v1612
        %v1620 = vunpack.c.l.b16 %v1613
        %v1621 = vunpack.c.h.b16 %v1613
        %v1622 = vunpack.c.l.b16 %v1614
        %v1623 = vpack.c.b16 %v1618, %v1618
        %v1624 = vpack.c.b16 %v1619, %v1619
        %v1625 = vpack.c.b16 %v1620, %v1620
        %v1626 = vpack.c.b16 %v1621, %v1621
        %v1627 = vpack.c.b16 %v1622, %v1622
        %1628 = vrot.lane.b32.xlu0 %v1623, 7
        %v1629 = vpop.permute.xlu0 %1628
        %1630 = vrot.lane.b32.xlu0 %v1624, 7
        %v1631 = vpop.permute.xlu0 %1630
        %1632 = vrot.lane.b32.xlu0 %v1625, 7
        %v1633 = vpop.permute.xlu0 %1632
        %1634 = vrot.lane.b32.xlu0 %v1626, 7
        %v1635 = vpop.permute.xlu0 %1634
        %1636 = vrot.lane.b32.xlu0 %v1627, 7
        %v1637 = vpop.permute.xlu0 %1636
        %vm1638 = vcmask 56320
        %v1639 = vsel %vm1638, %v1629, %v1631
        %v1640 = vsel %vm1638, %v1631, %v1633
        %v1641 = vsel %vm1638, %v1633, %v1635
        %v1642 = vsel %vm1638, %v1635, %v1637
        %1647 = vst [vmem:[#allocation3 + $0xa0] sm:$0xf0] %v1639
        %1648 = vst [vmem:[#allocation3 + $0xa8] sm:$0xf0] %v1640
        %1649 = vst [vmem:[#allocation3 + $0xb0] sm:$0xf0] %v1641
        %1650 = vst [vmem:[#allocation3 + $0xb8] sm:$0xf0] %v1642
        %v1651 = vld [vmem:[#allocation2] sm:$0xff]
        %v1652 = vld [vmem:[#allocation2 + $0x8] sm:$0xff]
        %v1653 = vld [vmem:[#allocation2 + $0x10] sm:$0xf]
        %v1654 = vld [vmem:[%s4 + $0x10] sm:$0x44]
        %v1655 = vld [vmem:[%s4 + $0x18] sm:$0x44]
        %v1658 = vunpack.c.l.b16 %v1654
        %v1659 = vunpack.c.h.b16 %v1654
        %v1660 = vunpack.c.l.b16 %v1655
        %v1661 = vunpack.c.h.b16 %v1655
        %v1662 = vpack.c.b16 %v1658, %v1658
        %v1663 = vpack.c.b16 %v1659, %v1659
        %v1664 = vpack.c.b16 %v1660, %v1660
        %v1665 = vpack.c.b16 %v1661, %v1661
        %v1667 = vpack.i.b16 %v1662, %v1662
        %v1669 = vlaneseq
        %v1670 = vshrl.u32 %v1669, 7
        %v1671 = vsub.s32 2, %v1670
        %v1672 = vrot.slane %v1667, %v1671
        %v1674 = vpack.i.b16 %v1663, %v1663
        %v1676 = vlaneseq
        %v1677 = vshrl.u32 %v1676, 7
        %v1678 = vsub.s32 2, %v1677
        %v1679 = vrot.slane %v1674, %v1678
        %v1681 = vpack.i.b16 %v1664, %v1664
        %v1683 = vlaneseq
        %v1684 = vshrl.u32 %v1683, 7
        %v1685 = vsub.s32 2, %v1684
        %v1686 = vrot.slane %v1681, %v1685
        %v1688 = vpack.i.b16 %v1665, %v1665
        %v1690 = vlaneseq
        %v1691 = vshrl.u32 %v1690, 7
        %v1692 = vsub.s32 2, %v1691
        %v1693 = vrot.slane %v1688, %v1692
        %v1698 = vunpack.c.l.b16 %v1672
        %v1699 = vunpack.c.l.b16 %v1679
        %v1700 = vunpack.c.l.b16 %v1686
        %v1701 = vunpack.c.l.b16 %v1693
        %v1702 = vpack.c.b16 %v1699, %v1698
        %v1703 = vpack.c.b16 %v1701, %v1700
        %1704 = vrot.lane.b32.xlu0 %v1702, 127
        %v1705 = vpop.permute.xlu0 %1704
        %1706 = vrot.lane.b32.xlu0 %v1703, 127
        %v1707 = vpop.permute.xlu0 %1706
        %v1708 = vrot.slane %v1705, 4
        %v1709 = vrot.slane %v1707, 4
        %vm1710 = vcmask 1039360
        %v1711 = vsel %vm1710, %v1708, %v1705
        %v1712 = vsel %vm436, %v1708, %v1709
        %v1713 = vsel %vm1710, %v1712, %v1707
        %v1717 = vmul.bf16 %v1651, %v1711
        %v1718 = vmul.bf16 %v1652, %v1713
        %v1719 = vmul.bf16 %v1653, %v1709
        %v1723 = vunpack.c.l.b16 %v1717
        %v1724 = vunpack.c.h.b16 %v1717
        %v1725 = vunpack.c.l.b16 %v1718
        %v1726 = vunpack.c.h.b16 %v1718
        %v1727 = vunpack.c.l.b16 %v1719
        %v1728 = vpack.c.b16 %v1723, %v1723
        %v1729 = vpack.c.b16 %v1724, %v1724
        %v1730 = vpack.c.b16 %v1725, %v1725
        %v1731 = vpack.c.b16 %v1726, %v1726
        %v1732 = vpack.c.b16 %v1727, %v1727
        %1733 = vrot.lane.b32.xlu0 %v1728, 1
        %v1734 = vpop.permute.xlu0 %1733
        %1735 = vrot.lane.b32.xlu0 %v1729, 1
        %v1736 = vpop.permute.xlu0 %1735
        %1737 = vrot.lane.b32.xlu0 %v1730, 1
        %v1738 = vpop.permute.xlu0 %1737
        %1739 = vrot.lane.b32.xlu0 %v1731, 1
        %v1740 = vpop.permute.xlu0 %1739
        %1741 = vrot.lane.b32.xlu0 %v1732, 1
        %v1742 = vpop.permute.xlu0 %1741
        %vm1743 = vcmask 7168
        %v1744 = vsel %vm1743, %v1734, %v1736
        %v1745 = vsel %vm1743, %v1736, %v1738
        %v1746 = vsel %vm1743, %v1738, %v1740
        %v1747 = vsel %vm1743, %v1740, %v1742
        %1752 = vst [vmem:[#allocation3 + $0xc0] sm:$0xf] %v1744
        %1753 = vst [vmem:[#allocation3 + $0xc8] sm:$0xf] %v1745
        %1754 = vst [vmem:[#allocation3 + $0xd0] sm:$0xf] %v1746
        %1755 = vst [vmem:[#allocation3 + $0xd8] sm:$0xf] %v1747
        %v1756 = vld [vmem:[#allocation2 + $0x4] sm:$0xff]
        %v1757 = vld [vmem:[#allocation2 + $0xc] sm:$0xff]
        %v1760 = vunpack.c.l.b16 %v1756
        %v1761 = vunpack.c.h.b16 %v1756
        %v1762 = vunpack.c.l.b16 %v1757
        %v1763 = vunpack.c.h.b16 %v1757
        %v1764 = vpack.c.b16 %v1760, %v1760
        %v1765 = vpack.c.b16 %v1761, %v1761
        %v1766 = vpack.c.b16 %v1762, %v1762
        %v1767 = vpack.c.b16 %v1763, %v1763
        %1772 = vst [vmem:[#allocation3 + $0xc0] sm:$0xf0] %v1764
        %1773 = vst [vmem:[#allocation3 + $0xc8] sm:$0xf0] %v1765
        %1774 = vst [vmem:[#allocation3 + $0xd0] sm:$0xf0] %v1766
        %1775 = vst [vmem:[#allocation3 + $0xd8] sm:$0xf0] %v1767
        %v1776 = vld [vmem:[#allocation2 + $0x4] sm:$0xff]
        %v1777 = vld [vmem:[#allocation2 + $0xc] sm:$0xff]
        %v1778 = vld [vmem:[#allocation2 + $0x14] sm:$0xf]
        %v1779 = vld [vmem:[%s4 + $0x10] sm:$0x88]
        %v1780 = vld [vmem:[%s4 + $0x18] sm:$0x88]
        %v1783 = vunpack.c.l.b16 %v1779
        %v1784 = vunpack.c.h.b16 %v1779
        %v1785 = vunpack.c.l.b16 %v1780
        %v1786 = vunpack.c.h.b16 %v1780
        %v1787 = vpack.c.b16 %v1783, %v1783
        %v1788 = vpack.c.b16 %v1784, %v1784
        %v1789 = vpack.c.b16 %v1785, %v1785
        %v1790 = vpack.c.b16 %v1786, %v1786
        %v1792 = vpack.i.b16 %v1787, %v1787
        %v1794 = vlaneseq
        %v1795 = vshrl.u32 %v1794, 7
        %v1796 = vsub.s32 3, %v1795
        %v1797 = vrot.slane %v1792, %v1796
        %v1799 = vpack.i.b16 %v1788, %v1788
        %v1801 = vlaneseq
        %v1802 = vshrl.u32 %v1801, 7
        %v1803 = vsub.s32 3, %v1802
        %v1804 = vrot.slane %v1799, %v1803
        %v1806 = vpack.i.b16 %v1789, %v1789
        %v1808 = vlaneseq
        %v1809 = vshrl.u32 %v1808, 7
        %v1810 = vsub.s32 3, %v1809
        %v1811 = vrot.slane %v1806, %v1810
        %v1813 = vpack.i.b16 %v1790, %v1790
        %v1815 = vlaneseq
        %v1816 = vshrl.u32 %v1815, 7
        %v1817 = vsub.s32 3, %v1816
        %v1818 = vrot.slane %v1813, %v1817
        %v1823 = vunpack.c.l.b16 %v1797
        %v1824 = vunpack.c.l.b16 %v1804
        %v1825 = vunpack.c.l.b16 %v1811
        %v1826 = vunpack.c.l.b16 %v1818
        %v1827 = vpack.c.b16 %v1824, %v1823
        %v1828 = vpack.c.b16 %v1826, %v1825
        %1829 = vrot.lane.b32.xlu0 %v1827, 1
        %v1830 = vpop.permute.xlu0 %1829
        %1831 = vrot.lane.b32.xlu0 %v1828, 1
        %v1832 = vpop.permute.xlu0 %1831
        %v1833 = vrot.slane %v1830, 4
        %v1834 = vrot.slane %v1832, 4
        %v1835 = vsel %vm1743, %v1833, %v1830
        %v1836 = vsel %vm436, %v1833, %v1834
        %v1837 = vsel %vm1743, %v1836, %v1832
        %v1841 = vmul.bf16 %v1776, %v1835
        %v1842 = vmul.bf16 %v1777, %v1837
        %v1843 = vmul.bf16 %v1778, %v1834
        %v1847 = vunpack.c.l.b16 %v1841
        %v1848 = vunpack.c.h.b16 %v1841
        %v1849 = vunpack.c.l.b16 %v1842
        %v1850 = vunpack.c.h.b16 %v1842
        %v1851 = vunpack.c.l.b16 %v1843
        %v1852 = vpack.c.b16 %v1847, %v1847
        %v1853 = vpack.c.b16 %v1848, %v1848
        %v1854 = vpack.c.b16 %v1849, %v1849
        %v1855 = vpack.c.b16 %v1850, %v1850
        %v1856 = vpack.c.b16 %v1851, %v1851
        %1857 = vrot.lane.b32.xlu0 %v1852, 127
        %v1858 = vpop.permute.xlu0 %1857
        %1859 = vrot.lane.b32.xlu0 %v1853, 127
        %v1860 = vpop.permute.xlu0 %1859
        %1861 = vrot.lane.b32.xlu0 %v1854, 127
        %v1862 = vpop.permute.xlu0 %1861
        %1863 = vrot.lane.b32.xlu0 %v1855, 127
        %v1864 = vpop.permute.xlu0 %1863
        %1865 = vrot.lane.b32.xlu0 %v1856, 127
        %v1866 = vpop.permute.xlu0 %1865
        %v1867 = vsel %vm1710, %v1858, %v1860
        %v1868 = vsel %vm1710, %v1860, %v1862
        %v1869 = vsel %vm1710, %v1862, %v1864
        %v1870 = vsel %vm1710, %v1864, %v1866
        %1875 = vst [vmem:[#allocation3 + $0xe0] sm:$0xf] %v1867
        %1876 = vst [vmem:[#allocation3 + $0xe8] sm:$0xf] %v1868
        %1877 = vst [vmem:[#allocation3 + $0xf0] sm:$0xf] %v1869
        %1878 = vst [vmem:[#allocation3 + $0xf8] sm:$0xf] %v1870
        %v1879 = vld [vmem:[#allocation2 + $0x4] sm:$0xff]
        %v1880 = vld [vmem:[#allocation2 + $0xc] sm:$0xff]
        %v1881 = vld [vmem:[#allocation2 + $0x14] sm:$0xf]
        %v1882 = vld [vmem:[%s4 + $0x10] sm:$0x88]
        %v1883 = vld [vmem:[%s4 + $0x18] sm:$0x88]
        %v1886 = vunpack.c.l.b16 %v1882
        %v1887 = vunpack.c.h.b16 %v1882
        %v1888 = vunpack.c.l.b16 %v1883
        %v1889 = vunpack.c.h.b16 %v1883
        %v1890 = vpack.c.b16 %v1886, %v1886
        %v1891 = vpack.c.b16 %v1887, %v1887
        %v1892 = vpack.c.b16 %v1888, %v1888
        %v1893 = vpack.c.b16 %v1889, %v1889
        %v1895 = vshrl.u32 %v1890, 16
        %v1896 = vpack.i.b16 %v1895, %v1895
        %v1898 = vlaneseq
        %v1899 = vshrl.u32 %v1898, 7
        %v1900 = vsub.s32 3, %v1899
        %v1901 = vrot.slane %v1896, %v1900
        %v1903 = vshrl.u32 %v1891, 16
        %v1904 = vpack.i.b16 %v1903, %v1903
        %v1906 = vlaneseq
        %v1907 = vshrl.u32 %v1906, 7
        %v1908 = vsub.s32 3, %v1907
        %v1909 = vrot.slane %v1904, %v1908
        %v1911 = vshrl.u32 %v1892, 16
        %v1912 = vpack.i.b16 %v1911, %v1911
        %v1914 = vlaneseq
        %v1915 = vshrl.u32 %v1914, 7
        %v1916 = vsub.s32 3, %v1915
        %v1917 = vrot.slane %v1912, %v1916
        %v1919 = vshrl.u32 %v1893, 16
        %v1920 = vpack.i.b16 %v1919, %v1919
        %v1922 = vlaneseq
        %v1923 = vshrl.u32 %v1922, 7
        %v1924 = vsub.s32 3, %v1923
        %v1925 = vrot.slane %v1920, %v1924
        %v1930 = vunpack.c.l.b16 %v1901
        %v1931 = vunpack.c.l.b16 %v1909
        %v1932 = vunpack.c.l.b16 %v1917
        %v1933 = vunpack.c.l.b16 %v1925
        %v1934 = vpack.c.b16 %v1931, %v1930
        %v1935 = vpack.c.b16 %v1933, %v1932
        %1936 = vrot.lane.b32.xlu0 %v1934, 7
        %v1937 = vpop.permute.xlu0 %1936
        %1938 = vrot.lane.b32.xlu0 %v1935, 7
        %v1939 = vpop.permute.xlu0 %1938
        %v1940 = vrot.slane %v1937, 4
        %v1941 = vrot.slane %v1939, 4
        %v1942 = vsel %vm1638, %v1940, %v1937
        %v1943 = vsel %vm436, %v1940, %v1941
        %v1944 = vsel %vm1638, %v1943, %v1939
        %v1948 = vmul.bf16 %v1879, %v1942
        %v1949 = vmul.bf16 %v1880, %v1944
        %v1950 = vmul.bf16 %v1881, %v1941
        %v1954 = vunpack.c.l.b16 %v1948
        %v1955 = vunpack.c.h.b16 %v1948
        %v1956 = vunpack.c.l.b16 %v1949
        %v1957 = vunpack.c.h.b16 %v1949
        %v1958 = vunpack.c.l.b16 %v1950
        %v1959 = vpack.c.b16 %v1954, %v1954
        %v1960 = vpack.c.b16 %v1955, %v1955
        %v1961 = vpack.c.b16 %v1956, %v1956
        %v1962 = vpack.c.b16 %v1957, %v1957
        %v1963 = vpack.c.b16 %v1958, %v1958
        %1964 = vrot.lane.b32.xlu0 %v1959, 121
        %v1965 = vpop.permute.xlu0 %1964
        %1966 = vrot.lane.b32.xlu0 %v1960, 121
        %v1967 = vpop.permute.xlu0 %1966
        %1968 = vrot.lane.b32.xlu0 %v1961, 121
        %v1969 = vpop.permute.xlu0 %1968
        %1970 = vrot.lane.b32.xlu0 %v1962, 121
        %v1971 = vpop.permute.xlu0 %1970
        %1972 = vrot.lane.b32.xlu0 %v1963, 121
        %v1973 = vpop.permute.xlu0 %1972
        %v1974 = vsel %vm1605, %v1965, %v1967
        %v1975 = vsel %vm1605, %v1967, %v1969
        %v1976 = vsel %vm1605, %v1969, %v1971
        %v1977 = vsel %vm1605, %v1971, %v1973
        %1982 = vst [vmem:[#allocation3 + $0xe0] sm:$0xf0] %v1974
        %1983 = vst [vmem:[#allocation3 + $0xe8] sm:$0xf0] %v1975
        %1984 = vst [vmem:[#allocation3 + $0xf0] sm:$0xf0] %v1976
        %1985 = vst [vmem:[#allocation3 + $0xf8] sm:$0xf0] %v1977
        %v1986 = vld [vmem:[%s2] sm:$0xf]
        %v1987 = vld [vmem:[#allocation3] sm:$0xff]
        %v1988 = vld [vmem:[#allocation3 + $0x8] sm:$0xff]
        %v1989 = vld [vmem:[#allocation3 + $0x10] sm:$0xff]
        %v1990 = vld [vmem:[#allocation3 + $0x18] sm:$0xff]
        %v1991 = vld [vmem:[#allocation3 + $0x20] sm:$0xff]
        %v1992 = vld [vmem:[#allocation3 + $0x28] sm:$0xff]
        %v1993 = vld [vmem:[#allocation3 + $0x30] sm:$0xff]
        %v1994 = vld [vmem:[#allocation3 + $0x38] sm:$0xff]
        %v1995 = vld [vmem:[#allocation3 + $0x40] sm:$0xff]
        %v1996 = vld [vmem:[#allocation3 + $0x48] sm:$0xff]
        %v1997 = vld [vmem:[#allocation3 + $0x50] sm:$0xff]
        %v1998 = vld [vmem:[#allocation3 + $0x58] sm:$0xff]
        %v1999 = vld [vmem:[#allocation3 + $0x60] sm:$0xff]
        %v2000 = vld [vmem:[#allocation3 + $0x68] sm:$0xff]
        %v2001 = vld [vmem:[#allocation3 + $0x70] sm:$0xff]
        %v2002 = vld [vmem:[#allocation3 + $0x78] sm:$0xff]
        %v2003 = vld [vmem:[#allocation3 + $0x80] sm:$0xff]
        %v2004 = vld [vmem:[#allocation3 + $0x88] sm:$0xff]
        %v2005 = vld [vmem:[#allocation3 + $0x90] sm:$0xff]
        %v2006 = vld [vmem:[#allocation3 + $0x98] sm:$0xff]
        %v2007 = vld [vmem:[#allocation3 + $0xa0] sm:$0xff]
        %v2008 = vld [vmem:[#allocation3 + $0xa8] sm:$0xff]
        %v2009 = vld [vmem:[#allocation3 + $0xb0] sm:$0xff]
        %v2010 = vld [vmem:[#allocation3 + $0xb8] sm:$0xff]
        %v2011 = vld [vmem:[#allocation3 + $0xc0] sm:$0xff]
        %v2012 = vld [vmem:[#allocation3 + $0xc8] sm:$0xff]
        %v2013 = vld [vmem:[#allocation3 + $0xd0] sm:$0xff]
        %v2014 = vld [vmem:[#allocation3 + $0xd8] sm:$0xff]
        %v2015 = vld [vmem:[#allocation3 + $0xe0] sm:$0xff]
        %v2016 = vld [vmem:[#allocation3 + $0xe8] sm:$0xff]
        %v2017 = vld [vmem:[#allocation3 + $0xf0] sm:$0xff]
        %v2018 = vld [vmem:[#allocation3 + $0xf8] sm:$0xff]
        %v2019 = vld [vmem:[#allocation2 + $0x4] sm:$0xff]
        %v2020 = vld [vmem:[#allocation2 + $0xc] sm:$0xff]
        %v2021 = vld [vmem:[#allocation2 + $0x14] sm:$0xf]
        %v2022 = vld [vmem:[%s4 + $0x20] sm:$0x11]
        %v2023 = vld [vmem:[%s4 + $0x28] sm:$0x11]
        %v2026 = vunpack.c.l.b16 %v2022
        %v2027 = vunpack.c.h.b16 %v2022
        %v2028 = vunpack.c.l.b16 %v2023
        %v2029 = vunpack.c.h.b16 %v2023
        %v2030 = vpack.c.b16 %v2026, %v2026
        %v2031 = vpack.c.b16 %v2027, %v2027
        %v2032 = vpack.c.b16 %v2028, %v2028
        %v2033 = vpack.c.b16 %v2029, %v2029
        %v2035 = vpack.i.b16 %v2030, %v2030
        %v2037 = vlaneseq
        %v2038 = vshrl.u32 %v2037, 7
        %v2039 = vsub.s32 0, %v2038
        %v2040 = vrot.slane %v2035, %v2039
        %v2042 = vpack.i.b16 %v2031, %v2031
        %v2044 = vlaneseq
        %v2045 = vshrl.u32 %v2044, 7
        %v2046 = vsub.s32 0, %v2045
        %v2047 = vrot.slane %v2042, %v2046
        %v2049 = vpack.i.b16 %v2032, %v2032
        %v2051 = vlaneseq
        %v2052 = vshrl.u32 %v2051, 7
        %v2053 = vsub.s32 0, %v2052
        %v2054 = vrot.slane %v2049, %v2053
        %v2056 = vpack.i.b16 %v2033, %v2033
        %v2058 = vlaneseq
        %v2059 = vshrl.u32 %v2058, 7
        %v2060 = vsub.s32 0, %v2059
        %v2061 = vrot.slane %v2056, %v2060
        %v2066 = vunpack.c.l.b16 %v2040
        %v2067 = vunpack.c.l.b16 %v2047
        %v2068 = vunpack.c.l.b16 %v2054
        %v2069 = vunpack.c.l.b16 %v2061
        %v2070 = vpack.c.b16 %v2067, %v2066
        %v2071 = vpack.c.b16 %v2069, %v2068
        %2072 = vrot.lane.b32.xlu0 %v2070, 8
        %v2073 = vpop.permute.xlu0 %2072
        %2074 = vrot.lane.b32.xlu0 %v2071, 8
        %v2075 = vpop.permute.xlu0 %2074
        %v2076 = vrot.slane %v2073, 4
        %v2077 = vrot.slane %v2075, 4
        %v2078 = vsel %vm1529, %v2076, %v2073
        %v2079 = vsel %vm436, %v2076, %v2077
        %v2080 = vsel %vm1529, %v2079, %v2075
        %v2084 = vmul.bf16 %v2019, %v2078
        %v2085 = vmul.bf16 %v2020, %v2080
        %v2086 = vmul.bf16 %v2021, %v2077
        %v2090 = vunpack.c.l.b16 %v2084
        %v2091 = vunpack.c.h.b16 %v2084
        %v2092 = vunpack.c.l.b16 %v2085
        %v2093 = vunpack.c.h.b16 %v2085
        %v2094 = vunpack.c.l.b16 %v2086
        %v2095 = vpack.c.b16 %v2090, %v2090
        %v2096 = vpack.c.b16 %v2091, %v2091
        %v2097 = vpack.c.b16 %v2092, %v2092
        %v2098 = vpack.c.b16 %v2093, %v2093
        %v2099 = vpack.c.b16 %v2094, %v2094
        %2100 = vrot.lane.b32.xlu0 %v2095, 120
        %v2101 = vpop.permute.xlu0 %2100
        %2102 = vrot.lane.b32.xlu0 %v2096, 120
        %v2103 = vpop.permute.xlu0 %2102
        %2104 = vrot.lane.b32.xlu0 %v2097, 120
        %v2105 = vpop.permute.xlu0 %2104
        %2106 = vrot.lane.b32.xlu0 %v2098, 120
        %v2107 = vpop.permute.xlu0 %2106
        %2108 = vrot.lane.b32.xlu0 %v2099, 120
        %v2109 = vpop.permute.xlu0 %2108
        %v2110 = vsel %vm1496, %v2101, %v2103
        %v2111 = vsel %vm1496, %v2103, %v2105
        %v2112 = vsel %vm1496, %v2105, %v2107
        %v2113 = vsel %vm1496, %v2107, %v2109
        %2118 = vst [vmem:[#allocation3] sm:$0xf] %v2110
        %2119 = vst [vmem:[#allocation3 + $0x8] sm:$0xf] %v2111
        %2120 = vst [vmem:[#allocation3 + $0x10] sm:$0xf] %v2112
        %2121 = vst [vmem:[#allocation3 + $0x18] sm:$0xf] %v2113
        %v2122 = vld [vmem:[#allocation2 + $0x4] sm:$0xff]
        %v2123 = vld [vmem:[#allocation2 + $0xc] sm:$0xff]
        %v2124 = vld [vmem:[#allocation2 + $0x14] sm:$0xf]
        %v2125 = vld [vmem:[%s4 + $0x20] sm:$0x11]
        %v2126 = vld [vmem:[%s4 + $0x28] sm:$0x11]
        %v2129 = vunpack.c.l.b16 %v2125
        %v2130 = vunpack.c.h.b16 %v2125
        %v2131 = vunpack.c.l.b16 %v2126
        %v2132 = vunpack.c.h.b16 %v2126
        %v2133 = vpack.c.b16 %v2129, %v2129
        %v2134 = vpack.c.b16 %v2130, %v2130
        %v2135 = vpack.c.b16 %v2131, %v2131
        %v2136 = vpack.c.b16 %v2132, %v2132
        %v2138 = vshrl.u32 %v2133, 16
        %v2139 = vpack.i.b16 %v2138, %v2138
        %v2141 = vlaneseq
        %v2142 = vshrl.u32 %v2141, 7
        %v2143 = vsub.s32 0, %v2142
        %v2144 = vrot.slane %v2139, %v2143
        %v2146 = vshrl.u32 %v2134, 16
        %v2147 = vpack.i.b16 %v2146, %v2146
        %v2149 = vlaneseq
        %v2150 = vshrl.u32 %v2149, 7
        %v2151 = vsub.s32 0, %v2150
        %v2152 = vrot.slane %v2147, %v2151
        %v2154 = vshrl.u32 %v2135, 16
        %v2155 = vpack.i.b16 %v2154, %v2154
        %v2157 = vlaneseq
        %v2158 = vshrl.u32 %v2157, 7
        %v2159 = vsub.s32 0, %v2158
        %v2160 = vrot.slane %v2155, %v2159
        %v2162 = vshrl.u32 %v2136, 16
        %v2163 = vpack.i.b16 %v2162, %v2162
        %v2165 = vlaneseq
        %v2166 = vshrl.u32 %v2165, 7
        %v2167 = vsub.s32 0, %v2166
        %v2168 = vrot.slane %v2163, %v2167
        %v2173 = vunpack.c.l.b16 %v2144
        %v2174 = vunpack.c.l.b16 %v2152
        %v2175 = vunpack.c.l.b16 %v2160
        %v2176 = vunpack.c.l.b16 %v2168
        %v2177 = vpack.c.b16 %v2174, %v2173
        %v2178 = vpack.c.b16 %v2176, %v2175
        %2179 = vrot.lane.b32.xlu0 %v2177, 9
        %v2180 = vpop.permute.xlu0 %2179
        %2181 = vrot.lane.b32.xlu0 %v2178, 9
        %v2182 = vpop.permute.xlu0 %2181
        %v2183 = vrot.slane %v2180, 4
        %v2184 = vrot.slane %v2182, 4
        %v2185 = vsel %vm1424, %v2183, %v2180
        %v2186 = vsel %vm436, %v2183, %v2184
        %v2187 = vsel %vm1424, %v2186, %v2182
        %v2191 = vmul.bf16 %v2122, %v2185
        %v2192 = vmul.bf16 %v2123, %v2187
        %v2193 = vmul.bf16 %v2124, %v2184
        %v2197 = vunpack.c.l.b16 %v2191
        %v2198 = vunpack.c.h.b16 %v2191
        %v2199 = vunpack.c.l.b16 %v2192
        %v2200 = vunpack.c.h.b16 %v2192
        %v2201 = vunpack.c.l.b16 %v2193
        %v2202 = vpack.c.b16 %v2197, %v2197
        %v2203 = vpack.c.b16 %v2198, %v2198
        %v2204 = vpack.c.b16 %v2199, %v2199
        %v2205 = vpack.c.b16 %v2200, %v2200
        %v2206 = vpack.c.b16 %v2201, %v2201
        %2207 = vrot.lane.b32.xlu0 %v2202, 119
        %v2208 = vpop.permute.xlu0 %2207
        %2209 = vrot.lane.b32.xlu0 %v2203, 119
        %v2210 = vpop.permute.xlu0 %2209
        %2211 = vrot.lane.b32.xlu0 %v2204, 119
        %v2212 = vpop.permute.xlu0 %2211
        %2213 = vrot.lane.b32.xlu0 %v2205, 119
        %v2214 = vpop.permute.xlu0 %2213
        %2215 = vrot.lane.b32.xlu0 %v2206, 119
        %v2216 = vpop.permute.xlu0 %2215
        %v2217 = vsel %vm1391, %v2208, %v2210
        %v2218 = vsel %vm1391, %v2210, %v2212
        %v2219 = vsel %vm1391, %v2212, %v2214
        %v2220 = vsel %vm1391, %v2214, %v2216
        %2225 = vst [vmem:[#allocation3] sm:$0xf0] %v2217
        %2226 = vst [vmem:[#allocation3 + $0x8] sm:$0xf0] %v2218
        %2227 = vst [vmem:[#allocation3 + $0x10] sm:$0xf0] %v2219
        %2228 = vst [vmem:[#allocation3 + $0x18] sm:$0xf0] %v2220
        %v2229 = vld [vmem:[#allocation2 + $0x4] sm:$0xff]
        %v2230 = vld [vmem:[#allocation2 + $0xc] sm:$0xff]
        %v2231 = vld [vmem:[#allocation2 + $0x14] sm:$0xf]
        %v2232 = vld [vmem:[%s4 + $0x20] sm:$0x22]
        %v2233 = vld [vmem:[%s4 + $0x28] sm:$0x22]
        %v2236 = vunpack.c.l.b16 %v2232
        %v2237 = vunpack.c.h.b16 %v2232
        %v2238 = vunpack.c.l.b16 %v2233
        %v2239 = vunpack.c.h.b16 %v2233
        %v2240 = vpack.c.b16 %v2236, %v2236
        %v2241 = vpack.c.b16 %v2237, %v2237
        %v2242 = vpack.c.b16 %v2238, %v2238
        %v2243 = vpack.c.b16 %v2239, %v2239
        %v2245 = vpack.i.b16 %v2240, %v2240
        %v2247 = vlaneseq
        %v2248 = vshrl.u32 %v2247, 7
        %v2249 = vsub.s32 1, %v2248
        %v2250 = vrot.slane %v2245, %v2249
        %v2252 = vpack.i.b16 %v2241, %v2241
        %v2254 = vlaneseq
        %v2255 = vshrl.u32 %v2254, 7
        %v2256 = vsub.s32 1, %v2255
        %v2257 = vrot.slane %v2252, %v2256
        %v2259 = vpack.i.b16 %v2242, %v2242
        %v2261 = vlaneseq
        %v2262 = vshrl.u32 %v2261, 7
        %v2263 = vsub.s32 1, %v2262
        %v2264 = vrot.slane %v2259, %v2263
        %v2266 = vpack.i.b16 %v2243, %v2243
        %v2268 = vlaneseq
        %v2269 = vshrl.u32 %v2268, 7
        %v2270 = vsub.s32 1, %v2269
        %v2271 = vrot.slane %v2266, %v2270
        %v2276 = vunpack.c.l.b16 %v2250
        %v2277 = vunpack.c.l.b16 %v2257
        %v2278 = vunpack.c.l.b16 %v2264
        %v2279 = vunpack.c.l.b16 %v2271
        %v2280 = vpack.c.b16 %v2277, %v2276
        %v2281 = vpack.c.b16 %v2279, %v2278
        %2282 = vrot.lane.b32.xlu0 %v2280, 55
        %v2283 = vpop.permute.xlu0 %2282
        %2284 = vrot.lane.b32.xlu0 %v2281, 55
        %v2285 = vpop.permute.xlu0 %2284
        %v2286 = vrot.slane %v2283, 4
        %v2287 = vrot.slane %v2285, 4
        %v2288 = vsel %vm434, %v2286, %v2283
        %v2289 = vsel %vm436, %v2286, %v2287
        %v2290 = vsel %vm434, %v2289, %v2285
        %v2294 = vmul.bf16 %v2229, %v2288
        %v2295 = vmul.bf16 %v2230, %v2290
        %v2296 = vmul.bf16 %v2231, %v2287
        %v2300 = vunpack.c.l.b16 %v2294
        %v2301 = vunpack.c.h.b16 %v2294
        %v2302 = vunpack.c.l.b16 %v2295
        %v2303 = vunpack.c.h.b16 %v2295
        %v2304 = vunpack.c.l.b16 %v2296
        %v2305 = vpack.c.b16 %v2300, %v2300
        %v2306 = vpack.c.b16 %v2301, %v2301
        %v2307 = vpack.c.b16 %v2302, %v2302
        %v2308 = vpack.c.b16 %v2303, %v2303
        %v2309 = vpack.c.b16 %v2304, %v2304
        %2310 = vrot.lane.b32.xlu0 %v2305, 73
        %v2311 = vpop.permute.xlu0 %2310
        %2312 = vrot.lane.b32.xlu0 %v2306, 73
        %v2313 = vpop.permute.xlu0 %2312
        %2314 = vrot.lane.b32.xlu0 %v2307, 73
        %v2315 = vpop.permute.xlu0 %2314
        %2316 = vrot.lane.b32.xlu0 %v2308, 73
        %v2317 = vpop.permute.xlu0 %2316
        %2318 = vrot.lane.b32.xlu0 %v2309, 73
        %v2319 = vpop.permute.xlu0 %2318
        %v2320 = vsel %vm468, %v2311, %v2313
        %v2321 = vsel %vm468, %v2313, %v2315
        %v2322 = vsel %vm468, %v2315, %v2317
        %v2323 = vsel %vm468, %v2317, %v2319
        %2328 = vst [vmem:[#allocation3 + $0x20] sm:$0xf] %v2320
        %2329 = vst [vmem:[#allocation3 + $0x28] sm:$0xf] %v2321
        %2330 = vst [vmem:[#allocation3 + $0x30] sm:$0xf] %v2322
        %2331 = vst [vmem:[#allocation3 + $0x38] sm:$0xf] %v2323
        %v2332 = vld [vmem:[#allocation2 + $0x4] sm:$0xff]
        %v2333 = vld [vmem:[#allocation2 + $0xc] sm:$0xff]
        %v2334 = vld [vmem:[#allocation2 + $0x14] sm:$0xf]
        %v2335 = vld [vmem:[%s4 + $0x20] sm:$0x22]
        %v2336 = vld [vmem:[%s4 + $0x28] sm:$0x22]
        %v2339 = vunpack.c.l.b16 %v2335
        %v2340 = vunpack.c.h.b16 %v2335
        %v2341 = vunpack.c.l.b16 %v2336
        %v2342 = vunpack.c.h.b16 %v2336
        %v2343 = vpack.c.b16 %v2339, %v2339
        %v2344 = vpack.c.b16 %v2340, %v2340
        %v2345 = vpack.c.b16 %v2341, %v2341
        %v2346 = vpack.c.b16 %v2342, %v2342
        %v2348 = vshrl.u32 %v2343, 16
        %v2349 = vpack.i.b16 %v2348, %v2348
        %v2351 = vlaneseq
        %v2352 = vshrl.u32 %v2351, 7
        %v2353 = vsub.s32 1, %v2352
        %v2354 = vrot.slane %v2349, %v2353
        %v2356 = vshrl.u32 %v2344, 16
        %v2357 = vpack.i.b16 %v2356, %v2356
        %v2359 = vlaneseq
        %v2360 = vshrl.u32 %v2359, 7
        %v2361 = vsub.s32 1, %v2360
        %v2362 = vrot.slane %v2357, %v2361
        %v2364 = vshrl.u32 %v2345, 16
        %v2365 = vpack.i.b16 %v2364, %v2364
        %v2367 = vlaneseq
        %v2368 = vshrl.u32 %v2367, 7
        %v2369 = vsub.s32 1, %v2368
        %v2370 = vrot.slane %v2365, %v2369
        %v2372 = vshrl.u32 %v2346, 16
        %v2373 = vpack.i.b16 %v2372, %v2372
        %v2375 = vlaneseq
        %v2376 = vshrl.u32 %v2375, 7
        %v2377 = vsub.s32 1, %v2376
        %v2378 = vrot.slane %v2373, %v2377
        %v2383 = vunpack.c.l.b16 %v2354
        %v2384 = vunpack.c.l.b16 %v2362
        %v2385 = vunpack.c.l.b16 %v2370
        %v2386 = vunpack.c.l.b16 %v2378
        %v2387 = vpack.c.b16 %v2384, %v2383
        %v2388 = vpack.c.b16 %v2386, %v2385
        %2389 = vrot.lane.b32.xlu0 %v2387, 56
        %v2390 = vpop.permute.xlu0 %2389
        %2391 = vrot.lane.b32.xlu0 %v2388, 56
        %v2392 = vpop.permute.xlu0 %2391
        %v2393 = vrot.slane %v2390, 4
        %v2394 = vrot.slane %v2392, 4
        %v2395 = vsel %vm544, %v2393, %v2390
        %v2396 = vsel %vm436, %v2393, %v2394
        %v2397 = vsel %vm544, %v2396, %v2392
        %v2401 = vmul.bf16 %v2332, %v2395
        %v2402 = vmul.bf16 %v2333, %v2397
        %v2403 = vmul.bf16 %v2334, %v2394
        %v2407 = vunpack.c.l.b16 %v2401
        %v2408 = vunpack.c.h.b16 %v2401
        %v2409 = vunpack.c.l.b16 %v2402
        %v2410 = vunpack.c.h.b16 %v2402
        %v2411 = vunpack.c.l.b16 %v2403
        %v2412 = vpack.c.b16 %v2407, %v2407
        %v2413 = vpack.c.b16 %v2408, %v2408
        %v2414 = vpack.c.b16 %v2409, %v2409
        %v2415 = vpack.c.b16 %v2410, %v2410
        %v2416 = vpack.c.b16 %v2411, %v2411
        %2417 = vrot.lane.b32.xlu0 %v2412, 72
        %v2418 = vpop.permute.xlu0 %2417
        %2419 = vrot.lane.b32.xlu0 %v2413, 72
        %v2420 = vpop.permute.xlu0 %2419
        %2421 = vrot.lane.b32.xlu0 %v2414, 72
        %v2422 = vpop.permute.xlu0 %2421
        %2423 = vrot.lane.b32.xlu0 %v2415, 72
        %v2424 = vpop.permute.xlu0 %2423
        %2425 = vrot.lane.b32.xlu0 %v2416, 72
        %v2426 = vpop.permute.xlu0 %2425
        %v2427 = vsel %vm577, %v2418, %v2420
        %v2428 = vsel %vm577, %v2420, %v2422
        %v2429 = vsel %vm577, %v2422, %v2424
        %v2430 = vsel %vm577, %v2424, %v2426
        %2435 = vst [vmem:[#allocation3 + $0x20] sm:$0xf0] %v2427
        %2436 = vst [vmem:[#allocation3 + $0x28] sm:$0xf0] %v2428
        %2437 = vst [vmem:[#allocation3 + $0x30] sm:$0xf0] %v2429
        %2438 = vst [vmem:[#allocation3 + $0x38] sm:$0xf0] %v2430
        %v2439 = vld [vmem:[#allocation2 + $0x4] sm:$0xff]
        %v2440 = vld [vmem:[#allocation2 + $0xc] sm:$0xff]
        %v2441 = vld [vmem:[#allocation2 + $0x14] sm:$0xf]
        %v2442 = vld [vmem:[%s4 + $0x20] sm:$0x44]
        %v2443 = vld [vmem:[%s4 + $0x28] sm:$0x44]
        %v2446 = vunpack.c.l.b16 %v2442
        %v2447 = vunpack.c.h.b16 %v2442
        %v2448 = vunpack.c.l.b16 %v2443
        %v2449 = vunpack.c.h.b16 %v2443
        %v2450 = vpack.c.b16 %v2446, %v2446
        %v2451 = vpack.c.b16 %v2447, %v2447
        %v2452 = vpack.c.b16 %v2448, %v2448
        %v2453 = vpack.c.b16 %v2449, %v2449
        %v2455 = vpack.i.b16 %v2450, %v2450
        %v2457 = vlaneseq
        %v2458 = vshrl.u32 %v2457, 7
        %v2459 = vsub.s32 2, %v2458
        %v2460 = vrot.slane %v2455, %v2459
        %v2462 = vpack.i.b16 %v2451, %v2451
        %v2464 = vlaneseq
        %v2465 = vshrl.u32 %v2464, 7
        %v2466 = vsub.s32 2, %v2465
        %v2467 = vrot.slane %v2462, %v2466
        %v2469 = vpack.i.b16 %v2452, %v2452
        %v2471 = vlaneseq
        %v2472 = vshrl.u32 %v2471, 7
        %v2473 = vsub.s32 2, %v2472
        %v2474 = vrot.slane %v2469, %v2473
        %v2476 = vpack.i.b16 %v2453, %v2453
        %v2478 = vlaneseq
        %v2479 = vshrl.u32 %v2478, 7
        %v2480 = vsub.s32 2, %v2479
        %v2481 = vrot.slane %v2476, %v2480
        %v2486 = vunpack.c.l.b16 %v2460
        %v2487 = vunpack.c.l.b16 %v2467
        %v2488 = vunpack.c.l.b16 %v2474
        %v2489 = vunpack.c.l.b16 %v2481
        %v2490 = vpack.c.b16 %v2487, %v2486
        %v2491 = vpack.c.b16 %v2489, %v2488
        %2492 = vrot.lane.b32.xlu0 %v2490, 57
        %v2493 = vpop.permute.xlu0 %2492
        %2494 = vrot.lane.b32.xlu0 %v2491, 57
        %v2495 = vpop.permute.xlu0 %2494
        %v2496 = vrot.slane %v2493, 4
        %v2497 = vrot.slane %v2495, 4
        %v2498 = vsel %vm649, %v2496, %v2493
        %v2499 = vsel %vm436, %v2496, %v2497
        %v2500 = vsel %vm649, %v2499, %v2495
        %v2504 = vmul.bf16 %v2439, %v2498
        %v2505 = vmul.bf16 %v2440, %v2500
        %v2506 = vmul.bf16 %v2441, %v2497
        %v2510 = vunpack.c.l.b16 %v2504
        %v2511 = vunpack.c.h.b16 %v2504
        %v2512 = vunpack.c.l.b16 %v2505
        %v2513 = vunpack.c.h.b16 %v2505
        %v2514 = vunpack.c.l.b16 %v2506
        %v2515 = vpack.c.b16 %v2510, %v2510
        %v2516 = vpack.c.b16 %v2511, %v2511
        %v2517 = vpack.c.b16 %v2512, %v2512
        %v2518 = vpack.c.b16 %v2513, %v2513
        %v2519 = vpack.c.b16 %v2514, %v2514
        %2520 = vrot.lane.b32.xlu0 %v2515, 71
        %v2521 = vpop.permute.xlu0 %2520
        %2522 = vrot.lane.b32.xlu0 %v2516, 71
        %v2523 = vpop.permute.xlu0 %2522
        %2524 = vrot.lane.b32.xlu0 %v2517, 71
        %v2525 = vpop.permute.xlu0 %2524
        %2526 = vrot.lane.b32.xlu0 %v2518, 71
        %v2527 = vpop.permute.xlu0 %2526
        %2528 = vrot.lane.b32.xlu0 %v2519, 71
        %v2529 = vpop.permute.xlu0 %2528
        %v2530 = vsel %vm682, %v2521, %v2523
        %v2531 = vsel %vm682, %v2523, %v2525
        %v2532 = vsel %vm682, %v2525, %v2527
        %v2533 = vsel %vm682, %v2527, %v2529
        %2538 = vst [vmem:[#allocation3 + $0x40] sm:$0xf] %v2530
        %2539 = vst [vmem:[#allocation3 + $0x48] sm:$0xf] %v2531
        %2540 = vst [vmem:[#allocation3 + $0x50] sm:$0xf] %v2532
        %2541 = vst [vmem:[#allocation3 + $0x58] sm:$0xf] %v2533
        %v2542 = vld [vmem:[#allocation2 + $0x4] sm:$0xff]
        %v2543 = vld [vmem:[#allocation2 + $0xc] sm:$0xff]
        %v2544 = vld [vmem:[#allocation2 + $0x14] sm:$0xf]
        %v2545 = vld [vmem:[%s4 + $0x20] sm:$0x44]
        %v2546 = vld [vmem:[%s4 + $0x28] sm:$0x44]
        %v2549 = vunpack.c.l.b16 %v2545
        %v2550 = vunpack.c.h.b16 %v2545
        %v2551 = vunpack.c.l.b16 %v2546
        %v2552 = vunpack.c.h.b16 %v2546
        %v2553 = vpack.c.b16 %v2549, %v2549
        %v2554 = vpack.c.b16 %v2550, %v2550
        %v2555 = vpack.c.b16 %v2551, %v2551
        %v2556 = vpack.c.b16 %v2552, %v2552
        %v2558 = vshrl.u32 %v2553, 16
        %v2559 = vpack.i.b16 %v2558, %v2558
        %v2561 = vlaneseq
        %v2562 = vshrl.u32 %v2561, 7
        %v2563 = vsub.s32 2, %v2562
        %v2564 = vrot.slane %v2559, %v2563
        %v2566 = vshrl.u32 %v2554, 16
        %v2567 = vpack.i.b16 %v2566, %v2566
        %v2569 = vlaneseq
        %v2570 = vshrl.u32 %v2569, 7
        %v2571 = vsub.s32 2, %v2570
        %v2572 = vrot.slane %v2567, %v2571
        %v2574 = vshrl.u32 %v2555, 16
        %v2575 = vpack.i.b16 %v2574, %v2574
        %v2577 = vlaneseq
        %v2578 = vshrl.u32 %v2577, 7
        %v2579 = vsub.s32 2, %v2578
        %v2580 = vrot.slane %v2575, %v2579
        %v2582 = vshrl.u32 %v2556, 16
        %v2583 = vpack.i.b16 %v2582, %v2582
        %v2585 = vlaneseq
        %v2586 = vshrl.u32 %v2585, 7
        %v2587 = vsub.s32 2, %v2586
        %v2588 = vrot.slane %v2583, %v2587
        %v2593 = vunpack.c.l.b16 %v2564
        %v2594 = vunpack.c.l.b16 %v2572
        %v2595 = vunpack.c.l.b16 %v2580
        %v2596 = vunpack.c.l.b16 %v2588
        %v2597 = vpack.c.b16 %v2594, %v2593
        %v2598 = vpack.c.b16 %v2596, %v2595
        %2599 = vrot.lane.b32.xlu0 %v2597, 63
        %v2600 = vpop.permute.xlu0 %2599
        %2601 = vrot.lane.b32.xlu0 %v2598, 63
        %v2602 = vpop.permute.xlu0 %2601
        %v2603 = vrot.slane %v2600, 4
        %v2604 = vrot.slane %v2602, 4
        %v2605 = vsel %vm758, %v2603, %v2600
        %v2606 = vsel %vm436, %v2603, %v2604
        %v2607 = vsel %vm758, %v2606, %v2602
        %v2611 = vmul.bf16 %v2542, %v2605
        %v2612 = vmul.bf16 %v2543, %v2607
        %v2613 = vmul.bf16 %v2544, %v2604
        %v2617 = vunpack.c.l.b16 %v2611
        %v2618 = vunpack.c.h.b16 %v2611
        %v2619 = vunpack.c.l.b16 %v2612
        %v2620 = vunpack.c.h.b16 %v2612
        %v2621 = vunpack.c.l.b16 %v2613
        %v2622 = vpack.c.b16 %v2617, %v2617
        %v2623 = vpack.c.b16 %v2618, %v2618
        %v2624 = vpack.c.b16 %v2619, %v2619
        %v2625 = vpack.c.b16 %v2620, %v2620
        %v2626 = vpack.c.b16 %v2621, %v2621
        %2627 = vrot.lane.b32.xlu0 %v2622, 65
        %v2628 = vpop.permute.xlu0 %2627
        %2629 = vrot.lane.b32.xlu0 %v2623, 65
        %v2630 = vpop.permute.xlu0 %2629
        %2631 = vrot.lane.b32.xlu0 %v2624, 65
        %v2632 = vpop.permute.xlu0 %2631
        %2633 = vrot.lane.b32.xlu0 %v2625, 65
        %v2634 = vpop.permute.xlu0 %2633
        %2635 = vrot.lane.b32.xlu0 %v2626, 65
        %v2636 = vpop.permute.xlu0 %2635
        %v2637 = vsel %vm791, %v2628, %v2630
        %v2638 = vsel %vm791, %v2630, %v2632
        %v2639 = vsel %vm791, %v2632, %v2634
        %v2640 = vsel %vm791, %v2634, %v2636
        %2645 = vst [vmem:[#allocation3 + $0x40] sm:$0xf0] %v2637
        %2646 = vst [vmem:[#allocation3 + $0x48] sm:$0xf0] %v2638
        %2647 = vst [vmem:[#allocation3 + $0x50] sm:$0xf0] %v2639
        %2648 = vst [vmem:[#allocation3 + $0x58] sm:$0xf0] %v2640
        %v2649 = vld [vmem:[#allocation2 + $0x4] sm:$0xff]
        %v2650 = vld [vmem:[#allocation2 + $0xc] sm:$0xff]
        %v2651 = vld [vmem:[#allocation2 + $0x14] sm:$0xf]
        %v2652 = vld [vmem:[%s4 + $0x20] sm:$0x88]
        %v2653 = vld [vmem:[%s4 + $0x28] sm:$0x88]
        %v2656 = vunpack.c.l.b16 %v2652
        %v2657 = vunpack.c.h.b16 %v2652
        %v2658 = vunpack.c.l.b16 %v2653
        %v2659 = vunpack.c.h.b16 %v2653
        %v2660 = vpack.c.b16 %v2656, %v2656
        %v2661 = vpack.c.b16 %v2657, %v2657
        %v2662 = vpack.c.b16 %v2658, %v2658
        %v2663 = vpack.c.b16 %v2659, %v2659
        %v2665 = vpack.i.b16 %v2660, %v2660
        %v2667 = vlaneseq
        %v2668 = vshrl.u32 %v2667, 7
        %v2669 = vsub.s32 3, %v2668
        %v2670 = vrot.slane %v2665, %v2669
        %v2672 = vpack.i.b16 %v2661, %v2661
        %v2674 = vlaneseq
        %v2675 = vshrl.u32 %v2674, 7
        %v2676 = vsub.s32 3, %v2675
        %v2677 = vrot.slane %v2672, %v2676
        %v2679 = vpack.i.b16 %v2662, %v2662
        %v2681 = vlaneseq
        %v2682 = vshrl.u32 %v2681, 7
        %v2683 = vsub.s32 3, %v2682
        %v2684 = vrot.slane %v2679, %v2683
        %v2686 = vpack.i.b16 %v2663, %v2663
        %v2688 = vlaneseq
        %v2689 = vshrl.u32 %v2688, 7
        %v2690 = vsub.s32 3, %v2689
        %v2691 = vrot.slane %v2686, %v2690
        %v2696 = vunpack.c.l.b16 %v2670
        %v2697 = vunpack.c.l.b16 %v2677
        %v2698 = vunpack.c.l.b16 %v2684
        %v2699 = vunpack.c.l.b16 %v2691
        %v2700 = vpack.c.b16 %v2697, %v2696
        %v2701 = vpack.c.b16 %v2699, %v2698
        %2702 = vrot.lane.b32.xlu0 %v2700, 64
        %v2703 = vpop.permute.xlu0 %2702
        %2704 = vrot.lane.b32.xlu0 %v2701, 64
        %v2705 = vpop.permute.xlu0 %2704
        %v2706 = vrot.slane %v2703, 4
        %v2707 = vrot.slane %v2705, 4
        %v2708 = vsel %vm863, %v2706, %v2703
        %v2709 = vsel %vm436, %v2706, %v2707
        %v2710 = vsel %vm863, %v2709, %v2705
        %v2714 = vmul.bf16 %v2649, %v2708
        %v2715 = vmul.bf16 %v2650, %v2710
        %v2716 = vmul.bf16 %v2651, %v2707
        %v2720 = vunpack.c.l.b16 %v2714
        %v2721 = vunpack.c.h.b16 %v2714
        %v2722 = vunpack.c.l.b16 %v2715
        %v2723 = vunpack.c.h.b16 %v2715
        %v2724 = vunpack.c.l.b16 %v2716
        %v2725 = vpack.c.b16 %v2720, %v2720
        %v2726 = vpack.c.b16 %v2721, %v2721
        %v2727 = vpack.c.b16 %v2722, %v2722
        %v2728 = vpack.c.b16 %v2723, %v2723
        %v2729 = vpack.c.b16 %v2724, %v2724
        %2730 = vrot.lane.b32.xlu0 %v2725, 64
        %v2731 = vpop.permute.xlu0 %2730
        %2732 = vrot.lane.b32.xlu0 %v2726, 64
        %v2733 = vpop.permute.xlu0 %2732
        %2734 = vrot.lane.b32.xlu0 %v2727, 64
        %v2735 = vpop.permute.xlu0 %2734
        %2736 = vrot.lane.b32.xlu0 %v2728, 64
        %v2737 = vpop.permute.xlu0 %2736
        %2738 = vrot.lane.b32.xlu0 %v2729, 64
        %v2739 = vpop.permute.xlu0 %2738
        %v2740 = vsel %vm863, %v2731, %v2733
        %v2741 = vsel %vm863, %v2733, %v2735
        %v2742 = vsel %vm863, %v2735, %v2737
        %v2743 = vsel %vm863, %v2737, %v2739
        %2748 = vst [vmem:[#allocation3 + $0x60] sm:$0xf] %v2740
        %2749 = vst [vmem:[#allocation3 + $0x68] sm:$0xf] %v2741
        %2750 = vst [vmem:[#allocation3 + $0x70] sm:$0xf] %v2742
        %2751 = vst [vmem:[#allocation3 + $0x78] sm:$0xf] %v2743
        %v2752 = vld [vmem:[#allocation2 + $0x4] sm:$0xff]
        %v2753 = vld [vmem:[#allocation2 + $0xc] sm:$0xff]
        %v2754 = vld [vmem:[#allocation2 + $0x14] sm:$0xf]
        %v2755 = vld [vmem:[%s4 + $0x20] sm:$0x88]
        %v2756 = vld [vmem:[%s4 + $0x28] sm:$0x88]
        %v2759 = vunpack.c.l.b16 %v2755
        %v2760 = vunpack.c.h.b16 %v2755
        %v2761 = vunpack.c.l.b16 %v2756
        %v2762 = vunpack.c.h.b16 %v2756
        %v2763 = vpack.c.b16 %v2759, %v2759
        %v2764 = vpack.c.b16 %v2760, %v2760
        %v2765 = vpack.c.b16 %v2761, %v2761
        %v2766 = vpack.c.b16 %v2762, %v2762
        %v2768 = vshrl.u32 %v2763, 16
        %v2769 = vpack.i.b16 %v2768, %v2768
        %v2771 = vlaneseq
        %v2772 = vshrl.u32 %v2771, 7
        %v2773 = vsub.s32 3, %v2772
        %v2774 = vrot.slane %v2769, %v2773
        %v2776 = vshrl.u32 %v2764, 16
        %v2777 = vpack.i.b16 %v2776, %v2776
        %v2779 = vlaneseq
        %v2780 = vshrl.u32 %v2779, 7
        %v2781 = vsub.s32 3, %v2780
        %v2782 = vrot.slane %v2777, %v2781
        %v2784 = vshrl.u32 %v2765, 16
        %v2785 = vpack.i.b16 %v2784, %v2784
        %v2787 = vlaneseq
        %v2788 = vshrl.u32 %v2787, 7
        %v2789 = vsub.s32 3, %v2788
        %v2790 = vrot.slane %v2785, %v2789
        %v2792 = vshrl.u32 %v2766, 16
        %v2793 = vpack.i.b16 %v2792, %v2792
        %v2795 = vlaneseq
        %v2796 = vshrl.u32 %v2795, 7
        %v2797 = vsub.s32 3, %v2796
        %v2798 = vrot.slane %v2793, %v2797
        %v2803 = vunpack.c.l.b16 %v2774
        %v2804 = vunpack.c.l.b16 %v2782
        %v2805 = vunpack.c.l.b16 %v2790
        %v2806 = vunpack.c.l.b16 %v2798
        %v2807 = vpack.c.b16 %v2804, %v2803
        %v2808 = vpack.c.b16 %v2806, %v2805
        %2809 = vrot.lane.b32.xlu0 %v2807, 65
        %v2810 = vpop.permute.xlu0 %2809
        %2811 = vrot.lane.b32.xlu0 %v2808, 65
        %v2812 = vpop.permute.xlu0 %2811
        %v2813 = vrot.slane %v2810, 4
        %v2814 = vrot.slane %v2812, 4
        %v2815 = vsel %vm791, %v2813, %v2810
        %v2816 = vsel %vm436, %v2813, %v2814
        %v2817 = vsel %vm791, %v2816, %v2812
        %v2821 = vmul.bf16 %v2752, %v2815
        %v2822 = vmul.bf16 %v2753, %v2817
        %v2823 = vmul.bf16 %v2754, %v2814
        %v2827 = vunpack.c.l.b16 %v2821
        %v2828 = vunpack.c.h.b16 %v2821
        %v2829 = vunpack.c.l.b16 %v2822
        %v2830 = vunpack.c.h.b16 %v2822
        %v2831 = vunpack.c.l.b16 %v2823
        %v2832 = vpack.c.b16 %v2827, %v2827
        %v2833 = vpack.c.b16 %v2828, %v2828
        %v2834 = vpack.c.b16 %v2829, %v2829
        %v2835 = vpack.c.b16 %v2830, %v2830
        %v2836 = vpack.c.b16 %v2831, %v2831
        %2837 = vrot.lane.b32.xlu0 %v2832, 63
        %v2838 = vpop.permute.xlu0 %2837
        %2839 = vrot.lane.b32.xlu0 %v2833, 63
        %v2840 = vpop.permute.xlu0 %2839
        %2841 = vrot.lane.b32.xlu0 %v2834, 63
        %v2842 = vpop.permute.xlu0 %2841
        %2843 = vrot.lane.b32.xlu0 %v2835, 63
        %v2844 = vpop.permute.xlu0 %2843
        %2845 = vrot.lane.b32.xlu0 %v2836, 63
        %v2846 = vpop.permute.xlu0 %2845
        %v2847 = vsel %vm758, %v2838, %v2840
        %v2848 = vsel %vm758, %v2840, %v2842
        %v2849 = vsel %vm758, %v2842, %v2844
        %v2850 = vsel %vm758, %v2844, %v2846
        %2855 = vst [vmem:[#allocation3 + $0x60] sm:$0xf0] %v2847
        %2856 = vst [vmem:[#allocation3 + $0x68] sm:$0xf0] %v2848
        %2857 = vst [vmem:[#allocation3 + $0x70] sm:$0xf0] %v2849
        %2858 = vst [vmem:[#allocation3 + $0x78] sm:$0xf0] %v2850
        %v2859 = vld [vmem:[#allocation2 + $0x4] sm:$0xff]
        %v2860 = vld [vmem:[#allocation2 + $0xc] sm:$0xff]
        %v2861 = vld [vmem:[#allocation2 + $0x14] sm:$0xf]
        %v2862 = vld [vmem:[%s4 + $0x30] sm:$0x11]
        %v2863 = vld [vmem:[%s4 + $0x38] sm:$0x11]
        %v2866 = vunpack.c.l.b16 %v2862
        %v2867 = vunpack.c.h.b16 %v2862
        %v2868 = vunpack.c.l.b16 %v2863
        %v2869 = vunpack.c.h.b16 %v2863
        %v2870 = vpack.c.b16 %v2866, %v2866
        %v2871 = vpack.c.b16 %v2867, %v2867
        %v2872 = vpack.c.b16 %v2868, %v2868
        %v2873 = vpack.c.b16 %v2869, %v2869
        %v2875 = vpack.i.b16 %v2870, %v2870
        %v2877 = vlaneseq
        %v2878 = vshrl.u32 %v2877, 7
        %v2879 = vsub.s32 0, %v2878
        %v2880 = vrot.slane %v2875, %v2879
        %v2882 = vpack.i.b16 %v2871, %v2871
        %v2884 = vlaneseq
        %v2885 = vshrl.u32 %v2884, 7
        %v2886 = vsub.s32 0, %v2885
        %v2887 = vrot.slane %v2882, %v2886
        %v2889 = vpack.i.b16 %v2872, %v2872
        %v2891 = vlaneseq
        %v2892 = vshrl.u32 %v2891, 7
        %v2893 = vsub.s32 0, %v2892
        %v2894 = vrot.slane %v2889, %v2893
        %v2896 = vpack.i.b16 %v2873, %v2873
        %v2898 = vlaneseq
        %v2899 = vshrl.u32 %v2898, 7
        %v2900 = vsub.s32 0, %v2899
        %v2901 = vrot.slane %v2896, %v2900
        %v2906 = vunpack.c.l.b16 %v2880
        %v2907 = vunpack.c.l.b16 %v2887
        %v2908 = vunpack.c.l.b16 %v2894
        %v2909 = vunpack.c.l.b16 %v2901
        %v2910 = vpack.c.b16 %v2907, %v2906
        %v2911 = vpack.c.b16 %v2909, %v2908
        %2912 = vrot.lane.b32.xlu0 %v2910, 71
        %v2913 = vpop.permute.xlu0 %2912
        %2914 = vrot.lane.b32.xlu0 %v2911, 71
        %v2915 = vpop.permute.xlu0 %2914
        %v2916 = vrot.slane %v2913, 4
        %v2917 = vrot.slane %v2915, 4
        %v2918 = vsel %vm682, %v2916, %v2913
        %v2919 = vsel %vm436, %v2916, %v2917
        %v2920 = vsel %vm682, %v2919, %v2915
        %v2924 = vmul.bf16 %v2859, %v2918
        %v2925 = vmul.bf16 %v2860, %v2920
        %v2926 = vmul.bf16 %v2861, %v2917
        %v2930 = vunpack.c.l.b16 %v2924
        %v2931 = vunpack.c.h.b16 %v2924
        %v2932 = vunpack.c.l.b16 %v2925
        %v2933 = vunpack.c.h.b16 %v2925
        %v2934 = vunpack.c.l.b16 %v2926
        %v2935 = vpack.c.b16 %v2930, %v2930
        %v2936 = vpack.c.b16 %v2931, %v2931
        %v2937 = vpack.c.b16 %v2932, %v2932
        %v2938 = vpack.c.b16 %v2933, %v2933
        %v2939 = vpack.c.b16 %v2934, %v2934
        %2940 = vrot.lane.b32.xlu0 %v2935, 57
        %v2941 = vpop.permute.xlu0 %2940
        %2942 = vrot.lane.b32.xlu0 %v2936, 57
        %v2943 = vpop.permute.xlu0 %2942
        %2944 = vrot.lane.b32.xlu0 %v2937, 57
        %v2945 = vpop.permute.xlu0 %2944
        %2946 = vrot.lane.b32.xlu0 %v2938, 57
        %v2947 = vpop.permute.xlu0 %2946
        %2948 = vrot.lane.b32.xlu0 %v2939, 57
        %v2949 = vpop.permute.xlu0 %2948
        %v2950 = vsel %vm649, %v2941, %v2943
        %v2951 = vsel %vm649, %v2943, %v2945
        %v2952 = vsel %vm649, %v2945, %v2947
        %v2953 = vsel %vm649, %v2947, %v2949
        %2958 = vst [vmem:[#allocation3 + $0x80] sm:$0xf] %v2950
        %2959 = vst [vmem:[#allocation3 + $0x88] sm:$0xf] %v2951
        %2960 = vst [vmem:[#allocation3 + $0x90] sm:$0xf] %v2952
        %2961 = vst [vmem:[#allocation3 + $0x98] sm:$0xf] %v2953
        %v2962 = vld [vmem:[#allocation2 + $0x4] sm:$0xff]
        %v2963 = vld [vmem:[#allocation2 + $0xc] sm:$0xff]
        %v2964 = vld [vmem:[#allocation2 + $0x14] sm:$0xf]
        %v2965 = vld [vmem:[%s4 + $0x30] sm:$0x11]
        %v2966 = vld [vmem:[%s4 + $0x38] sm:$0x11]
        %v2969 = vunpack.c.l.b16 %v2965
        %v2970 = vunpack.c.h.b16 %v2965
        %v2971 = vunpack.c.l.b16 %v2966
        %v2972 = vunpack.c.h.b16 %v2966
        %v2973 = vpack.c.b16 %v2969, %v2969
        %v2974 = vpack.c.b16 %v2970, %v2970
        %v2975 = vpack.c.b16 %v2971, %v2971
        %v2976 = vpack.c.b16 %v2972, %v2972
        %v2978 = vshrl.u32 %v2973, 16
        %v2979 = vpack.i.b16 %v2978, %v2978
        %v2981 = vlaneseq
        %v2982 = vshrl.u32 %v2981, 7
        %v2983 = vsub.s32 0, %v2982
        %v2984 = vrot.slane %v2979, %v2983
        %v2986 = vshrl.u32 %v2974, 16
        %v2987 = vpack.i.b16 %v2986, %v2986
        %v2989 = vlaneseq
        %v2990 = vshrl.u32 %v2989, 7
        %v2991 = vsub.s32 0, %v2990
        %v2992 = vrot.slane %v2987, %v2991
        %v2994 = vshrl.u32 %v2975, 16
        %v2995 = vpack.i.b16 %v2994, %v2994
        %v2997 = vlaneseq
        %v2998 = vshrl.u32 %v2997, 7
        %v2999 = vsub.s32 0, %v2998
        %v3000 = vrot.slane %v2995, %v2999
        %v3002 = vshrl.u32 %v2976, 16
        %v3003 = vpack.i.b16 %v3002, %v3002
        %v3005 = vlaneseq
        %v3006 = vshrl.u32 %v3005, 7
        %v3007 = vsub.s32 0, %v3006
        %v3008 = vrot.slane %v3003, %v3007
        %v3013 = vunpack.c.l.b16 %v2984
        %v3014 = vunpack.c.l.b16 %v2992
        %v3015 = vunpack.c.l.b16 %v3000
        %v3016 = vunpack.c.l.b16 %v3008
        %v3017 = vpack.c.b16 %v3014, %v3013
        %v3018 = vpack.c.b16 %v3016, %v3015
        %3019 = vrot.lane.b32.xlu0 %v3017, 72
        %v3020 = vpop.permute.xlu0 %3019
        %3021 = vrot.lane.b32.xlu0 %v3018, 72
        %v3022 = vpop.permute.xlu0 %3021
        %v3023 = vrot.slane %v3020, 4
        %v3024 = vrot.slane %v3022, 4
        %v3025 = vsel %vm577, %v3023, %v3020
        %v3026 = vsel %vm436, %v3023, %v3024
        %v3027 = vsel %vm577, %v3026, %v3022
        %v3031 = vmul.bf16 %v2962, %v3025
        %v3032 = vmul.bf16 %v2963, %v3027
        %v3033 = vmul.bf16 %v2964, %v3024
        %v3037 = vunpack.c.l.b16 %v3031
        %v3038 = vunpack.c.h.b16 %v3031
        %v3039 = vunpack.c.l.b16 %v3032
        %v3040 = vunpack.c.h.b16 %v3032
        %v3041 = vunpack.c.l.b16 %v3033
        %v3042 = vpack.c.b16 %v3037, %v3037
        %v3043 = vpack.c.b16 %v3038, %v3038
        %v3044 = vpack.c.b16 %v3039, %v3039
        %v3045 = vpack.c.b16 %v3040, %v3040
        %v3046 = vpack.c.b16 %v3041, %v3041
        %3047 = vrot.lane.b32.xlu0 %v3042, 56
        %v3048 = vpop.permute.xlu0 %3047
        %3049 = vrot.lane.b32.xlu0 %v3043, 56
        %v3050 = vpop.permute.xlu0 %3049
        %3051 = vrot.lane.b32.xlu0 %v3044, 56
        %v3052 = vpop.permute.xlu0 %3051
        %3053 = vrot.lane.b32.xlu0 %v3045, 56
        %v3054 = vpop.permute.xlu0 %3053
        %3055 = vrot.lane.b32.xlu0 %v3046, 56
        %v3056 = vpop.permute.xlu0 %3055
        %v3057 = vsel %vm544, %v3048, %v3050
        %v3058 = vsel %vm544, %v3050, %v3052
        %v3059 = vsel %vm544, %v3052, %v3054
        %v3060 = vsel %vm544, %v3054, %v3056
        %3065 = vst [vmem:[#allocation3 + $0x80] sm:$0xf0] %v3057
        %3066 = vst [vmem:[#allocation3 + $0x88] sm:$0xf0] %v3058
        %3067 = vst [vmem:[#allocation3 + $0x90] sm:$0xf0] %v3059
        %3068 = vst [vmem:[#allocation3 + $0x98] sm:$0xf0] %v3060
        %v3069 = vld [vmem:[#allocation2 + $0x4] sm:$0xff]
        %v3070 = vld [vmem:[#allocation2 + $0xc] sm:$0xff]
        %v3071 = vld [vmem:[#allocation2 + $0x14] sm:$0xf]
        %v3072 = vld [vmem:[%s4 + $0x30] sm:$0x22]
        %v3073 = vld [vmem:[%s4 + $0x38] sm:$0x22]
        %v3076 = vunpack.c.l.b16 %v3072
        %v3077 = vunpack.c.h.b16 %v3072
        %v3078 = vunpack.c.l.b16 %v3073
        %v3079 = vunpack.c.h.b16 %v3073
        %v3080 = vpack.c.b16 %v3076, %v3076
        %v3081 = vpack.c.b16 %v3077, %v3077
        %v3082 = vpack.c.b16 %v3078, %v3078
        %v3083 = vpack.c.b16 %v3079, %v3079
        %v3085 = vpack.i.b16 %v3080, %v3080
        %v3087 = vlaneseq
        %v3088 = vshrl.u32 %v3087, 7
        %v3089 = vsub.s32 1, %v3088
        %v3090 = vrot.slane %v3085, %v3089
        %v3092 = vpack.i.b16 %v3081, %v3081
        %v3094 = vlaneseq
        %v3095 = vshrl.u32 %v3094, 7
        %v3096 = vsub.s32 1, %v3095
        %v3097 = vrot.slane %v3092, %v3096
        %v3099 = vpack.i.b16 %v3082, %v3082
        %v3101 = vlaneseq
        %v3102 = vshrl.u32 %v3101, 7
        %v3103 = vsub.s32 1, %v3102
        %v3104 = vrot.slane %v3099, %v3103
        %v3106 = vpack.i.b16 %v3083, %v3083
        %v3108 = vlaneseq
        %v3109 = vshrl.u32 %v3108, 7
        %v3110 = vsub.s32 1, %v3109
        %v3111 = vrot.slane %v3106, %v3110
        %v3116 = vunpack.c.l.b16 %v3090
        %v3117 = vunpack.c.l.b16 %v3097
        %v3118 = vunpack.c.l.b16 %v3104
        %v3119 = vunpack.c.l.b16 %v3111
        %v3120 = vpack.c.b16 %v3117, %v3116
        %v3121 = vpack.c.b16 %v3119, %v3118
        %3122 = vrot.lane.b32.xlu0 %v3120, 73
        %v3123 = vpop.permute.xlu0 %3122
        %3124 = vrot.lane.b32.xlu0 %v3121, 73
        %v3125 = vpop.permute.xlu0 %3124
        %v3126 = vrot.slane %v3123, 4
        %v3127 = vrot.slane %v3125, 4
        %v3128 = vsel %vm468, %v3126, %v3123
        %v3129 = vsel %vm436, %v3126, %v3127
        %v3130 = vsel %vm468, %v3129, %v3125
        %v3134 = vmul.bf16 %v3069, %v3128
        %v3135 = vmul.bf16 %v3070, %v3130
        %v3136 = vmul.bf16 %v3071, %v3127
        %v3140 = vunpack.c.l.b16 %v3134
        %v3141 = vunpack.c.h.b16 %v3134
        %v3142 = vunpack.c.l.b16 %v3135
        %v3143 = vunpack.c.h.b16 %v3135
        %v3144 = vunpack.c.l.b16 %v3136
        %v3145 = vpack.c.b16 %v3140, %v3140
        %v3146 = vpack.c.b16 %v3141, %v3141
        %v3147 = vpack.c.b16 %v3142, %v3142
        %v3148 = vpack.c.b16 %v3143, %v3143
        %v3149 = vpack.c.b16 %v3144, %v3144
        %3150 = vrot.lane.b32.xlu0 %v3145, 55
        %v3151 = vpop.permute.xlu0 %3150
        %3152 = vrot.lane.b32.xlu0 %v3146, 55
        %v3153 = vpop.permute.xlu0 %3152
        %3154 = vrot.lane.b32.xlu0 %v3147, 55
        %v3155 = vpop.permute.xlu0 %3154
        %3156 = vrot.lane.b32.xlu0 %v3148, 55
        %v3157 = vpop.permute.xlu0 %3156
        %3158 = vrot.lane.b32.xlu0 %v3149, 55
        %v3159 = vpop.permute.xlu0 %3158
        %v3160 = vsel %vm434, %v3151, %v3153
        %v3161 = vsel %vm434, %v3153, %v3155
        %v3162 = vsel %vm434, %v3155, %v3157
        %v3163 = vsel %vm434, %v3157, %v3159
        %3168 = vst [vmem:[#allocation3 + $0xa0] sm:$0xf] %v3160
        %3169 = vst [vmem:[#allocation3 + $0xa8] sm:$0xf] %v3161
        %3170 = vst [vmem:[#allocation3 + $0xb0] sm:$0xf] %v3162
        %3171 = vst [vmem:[#allocation3 + $0xb8] sm:$0xf] %v3163
        %v3172 = vld [vmem:[%s2 + $0x4] sm:$0xf]
        %v3173 = vld [vmem:[#allocation3] sm:$0xff]
        %v3174 = vld [vmem:[#allocation3 + $0x8] sm:$0xff]
        %v3175 = vld [vmem:[#allocation3 + $0x10] sm:$0xff]
        %v3176 = vld [vmem:[#allocation3 + $0x18] sm:$0xff]
        %v3177 = vld [vmem:[#allocation3 + $0x20] sm:$0xff]
        %v3178 = vld [vmem:[#allocation3 + $0x28] sm:$0xff]
        %v3179 = vld [vmem:[#allocation3 + $0x30] sm:$0xff]
        %v3180 = vld [vmem:[#allocation3 + $0x38] sm:$0xff]
        %v3181 = vld [vmem:[#allocation3 + $0x40] sm:$0xff]
        %v3182 = vld [vmem:[#allocation3 + $0x48] sm:$0xff]
        %v3183 = vld [vmem:[#allocation3 + $0x50] sm:$0xff]
        %v3184 = vld [vmem:[#allocation3 + $0x58] sm:$0xff]
        %v3185 = vld [vmem:[#allocation3 + $0x60] sm:$0xff]
        %v3186 = vld [vmem:[#allocation3 + $0x68] sm:$0xff]
        %v3187 = vld [vmem:[#allocation3 + $0x70] sm:$0xff]
        %v3188 = vld [vmem:[#allocation3 + $0x78] sm:$0xff]
        %v3189 = vld [vmem:[#allocation3 + $0x80] sm:$0xff]
        %v3190 = vld [vmem:[#allocation3 + $0x88] sm:$0xff]
        %v3191 = vld [vmem:[#allocation3 + $0x90] sm:$0xff]
        %v3192 = vld [vmem:[#allocation3 + $0x98] sm:$0xff]
        %v3193 = vld [vmem:[#allocation3 + $0xa0] sm:$0xff]
        %v3194 = vld [vmem:[#allocation3 + $0xa8] sm:$0xff]
        %v3195 = vld [vmem:[#allocation3 + $0xb0] sm:$0xff]
        %v3196 = vld [vmem:[#allocation3 + $0xb8] sm:$0xff]
        %v3197 = vld [vmem:[#allocation3 + $0xc0] sm:$0xff]
        %v3198 = vld [vmem:[#allocation3 + $0xc8] sm:$0xff]
        %v3199 = vld [vmem:[#allocation3 + $0xd0] sm:$0xff]
        %v3200 = vld [vmem:[#allocation3 + $0xd8] sm:$0xff]
        %v3201 = vld [vmem:[#allocation3 + $0xe0] sm:$0xff]
        %v3202 = vld [vmem:[#allocation3 + $0xe8] sm:$0xff]
        %v3203 = vld [vmem:[#allocation3 + $0xf0] sm:$0xff]
        %v3204 = vld [vmem:[#allocation3 + $0xf8] sm:$0xff]
        %3205 = vmatprep.subr.bf16.mxu0 %v3174
        %3206 = vmatpush1.bf16.msra.mxu0 %v3173
        %3207 = vmatprep.subr.bf16.mxu0 %v3178
        %3208 = vmatpush1.bf16.msra.mxu0 %v3177
        %3209 = vmatprep.subr.bf16.mxu0 %v3182
        %3210 = vmatpush1.bf16.msra.mxu0 %v3181
        %3211 = vmatprep.subr.bf16.mxu0 %v3186
        %3212 = vmatpush1.bf16.msra.mxu0 %v3185
        %3213 = vmatprep.subr.bf16.mxu0 %v3190
        %3214 = vmatpush1.bf16.msra.mxu0 %v3189
        %3215 = vmatprep.subr.bf16.mxu0 %v3194
        %3216 = vmatpush1.bf16.msra.mxu0 %v3193
        %3217 = vmatprep.subr.bf16.mxu0 %v3198
        %3218 = vmatpush1.bf16.msra.mxu0 %v3197
        %3219 = vmatprep.subr.bf16.mxu0 %v3202
        %3220 = vmatpush1.bf16.msra.mxu0 %v3201
        %3221 = vmatprep.subr.bf16.mxu0 0
        %3222 = vmatpush1.bf16.msra.mxu0 0
        %3223 = vmatprep.subr.bf16.mxu0 0
        %3224 = vmatpush1.bf16.msra.mxu0 0
        %3225 = vmatprep.subr.bf16.mxu0 0
        %3226 = vmatpush1.bf16.msra.mxu0 0
        %3227 = vmatprep.subr.bf16.mxu0 0
        %3228 = vmatpush1.bf16.msra.mxu0 0
        %3229 = vmatprep.subr.bf16.mxu0 0
        %3230 = vmatpush1.bf16.msra.mxu0 0
        %3231 = vmatprep.subr.bf16.mxu0 0
        %3232 = vmatpush1.bf16.msra.mxu0 0
        %3233 = vmatprep.subr.bf16.mxu0 0
        %3234 = vmatpush1.bf16.msra.mxu0 0
        %3235 = vmatprep.subr.bf16.mxu0 0
        %3236 = vmatpush1.bf16.msra.mxu0 0
        %3237 = vmatprep.mubr.bf16.mxu0 0
        %3238 = vmatmul.mubr.bf16.gmra.mrb[0].mxu0 %v3172
        %v3239 = vpop.f32.mrb[0].mxu0
        %v3240 = vadd.f32 0.0, %v3239
        %v3241 = vpop.f32.mrb[0].mxu0
        %v3242 = vadd.f32 0.0, %v3241
        %v3243 = vpop.f32.mrb[0].mxu0
        %v3244 = vpop.f32.mrb[0].mxu0
        %3245 = vdwg.mxu0
        %3246 = vmatprep.subr.bf16.mxu0 %v3176
        %3247 = vmatpush1.bf16.msra.mxu0 %v3175
        %3248 = vmatprep.subr.bf16.mxu0 %v3180
        %3249 = vmatpush1.bf16.msra.mxu0 %v3179
        %3250 = vmatprep.subr.bf16.mxu0 %v3184
        %3251 = vmatpush1.bf16.msra.mxu0 %v3183
        %3252 = vmatprep.subr.bf16.mxu0 %v3188
        %3253 = vmatpush1.bf16.msra.mxu0 %v3187
        %3254 = vmatprep.subr.bf16.mxu0 %v3192
        %3255 = vmatpush1.bf16.msra.mxu0 %v3191
        %3256 = vmatprep.subr.bf16.mxu0 %v3196
        %3257 = vmatpush1.bf16.msra.mxu0 %v3195
        %3258 = vmatprep.subr.bf16.mxu0 %v3200
        %3259 = vmatpush1.bf16.msra.mxu0 %v3199
        %3260 = vmatprep.subr.bf16.mxu0 %v3204
        %3261 = vmatpush1.bf16.msra.mxu0 %v3203
        %3262 = vmatprep.subr.bf16.mxu0 0
        %3263 = vmatpush1.bf16.msra.mxu0 0
        %3264 = vmatprep.subr.bf16.mxu0 0
        %3265 = vmatpush1.bf16.msra.mxu0 0
        %3266 = vmatprep.subr.bf16.mxu0 0
        %3267 = vmatpush1.bf16.msra.mxu0 0
        %3268 = vmatprep.subr.bf16.mxu0 0
        %3269 = vmatpush1.bf16.msra.mxu0 0
        %3270 = vmatprep.subr.bf16.mxu0 0
        %3271 = vmatpush1.bf16.msra.mxu0 0
        %3272 = vmatprep.subr.bf16.mxu0 0
        %3273 = vmatpush1.bf16.msra.mxu0 0
        %3274 = vmatprep.subr.bf16.mxu0 0
        %3275 = vmatpush1.bf16.msra.mxu0 0
        %3276 = vmatprep.subr.bf16.mxu0 0
        %3277 = vmatpush1.bf16.msra.mxu0 0
        %3278 = vmatprep.mubr.bf16.mxu0 0
        %3279 = vmatmul.mubr.bf16.gmra.mrb[0].mxu0 %v3172
        %v3280 = vpop.f32.mrb[0].mxu0
        %v3281 = vadd.f32 0.0, %v3280
        %v3282 = vpop.f32.mrb[0].mxu0
        %v3283 = vadd.f32 0.0, %v3282
        %v3284 = vpop.f32.mrb[0].mxu0
        %v3285 = vpop.f32.mrb[0].mxu0
        %3286 = vdwg.mxu0
        %3287 = vmatprep.subr.bf16.mxu0 %v1988
        %3288 = vmatpush1.bf16.msra.mxu0 %v1987
        %3289 = vmatprep.subr.bf16.mxu0 %v1992
        %3290 = vmatpush1.bf16.msra.mxu0 %v1991
        %3291 = vmatprep.subr.bf16.mxu0 %v1996
        %3292 = vmatpush1.bf16.msra.mxu0 %v1995
        %3293 = vmatprep.subr.bf16.mxu0 %v2000
        %3294 = vmatpush1.bf16.msra.mxu0 %v1999
        %3295 = vmatprep.subr.bf16.mxu0 %v2004
        %3296 = vmatpush1.bf16.msra.mxu0 %v2003
        %3297 = vmatprep.subr.bf16.mxu0 %v2008
        %3298 = vmatpush1.bf16.msra.mxu0 %v2007
        %3299 = vmatprep.subr.bf16.mxu0 %v2012
        %3300 = vmatpush1.bf16.msra.mxu0 %v2011
        %3301 = vmatprep.subr.bf16.mxu0 %v2016
        %3302 = vmatpush1.bf16.msra.mxu0 %v2015
        %3303 = vmatprep.subr.bf16.mxu0 0
        %3304 = vmatpush1.bf16.msra.mxu0 0
        %3305 = vmatprep.subr.bf16.mxu0 0
        %3306 = vmatpush1.bf16.msra.mxu0 0
        %3307 = vmatprep.subr.bf16.mxu0 0
        %3308 = vmatpush1.bf16.msra.mxu0 0
        %3309 = vmatprep.subr.bf16.mxu0 0
        %3310 = vmatpush1.bf16.msra.mxu0 0
        %3311 = vmatprep.subr.bf16.mxu0 0
        %3312 = vmatpush1.bf16.msra.mxu0 0
        %3313 = vmatprep.subr.bf16.mxu0 0
        %3314 = vmatpush1.bf16.msra.mxu0 0
        %3315 = vmatprep.subr.bf16.mxu0 0
        %3316 = vmatpush1.bf16.msra.mxu0 0
        %3317 = vmatprep.subr.bf16.mxu0 0
        %3318 = vmatpush1.bf16.msra.mxu0 0
        %3319 = vmatprep.mubr.bf16.mxu0 0
        %3320 = vmatmul.mubr.bf16.gmra.mrb[0].mxu0 %v1986
        %v3321 = vpop.f32.mrb[0].mxu0
        %v3322 = vadd.f32 %v3240, %v3321
        %v3323 = vpop.f32.mrb[0].mxu0
        %v3324 = vadd.f32 %v3242, %v3323
        %v3325 = vpop.f32.mrb[0].mxu0
        %v3326 = vpop.f32.mrb[0].mxu0
        %3327 = vdwg.mxu0
        %3328 = vmatprep.subr.bf16.mxu0 %v1990
        %3329 = vmatpush1.bf16.msra.mxu0 %v1989
        %3330 = vmatprep.subr.bf16.mxu0 %v1994
        %3331 = vmatpush1.bf16.msra.mxu0 %v1993
        %3332 = vmatprep.subr.bf16.mxu0 %v1998
        %3333 = vmatpush1.bf16.msra.mxu0 %v1997
        %3334 = vmatprep.subr.bf16.mxu0 %v2002
        %3335 = vmatpush1.bf16.msra.mxu0 %v2001
        %3336 = vmatprep.subr.bf16.mxu0 %v2006
        %3337 = vmatpush1.bf16.msra.mxu0 %v2005
        %3338 = vmatprep.subr.bf16.mxu0 %v2010
        %3339 = vmatpush1.bf16.msra.mxu0 %v2009
        %3340 = vmatprep.subr.bf16.mxu0 %v2014
        %3341 = vmatpush1.bf16.msra.mxu0 %v2013
        %3342 = vmatprep.subr.bf16.mxu0 %v2018
        %3343 = vmatpush1.bf16.msra.mxu0 %v2017
        %3344 = vmatprep.subr.bf16.mxu0 0
        %3345 = vmatpush1.bf16.msra.mxu0 0
        %3346 = vmatprep.subr.bf16.mxu0 0
        %3347 = vmatpush1.bf16.msra.mxu0 0
        %3348 = vmatprep.subr.bf16.mxu0 0
        %3349 = vmatpush1.bf16.msra.mxu0 0
        %3350 = vmatprep.subr.bf16.mxu0 0
        %3351 = vmatpush1.bf16.msra.mxu0 0
        %3352 = vmatprep.subr.bf16.mxu0 0
        %3353 = vmatpush1.bf16.msra.mxu0 0
        %3354 = vmatprep.subr.bf16.mxu0 0
        %3355 = vmatpush1.bf16.msra.mxu0 0
        %3356 = vmatprep.subr.bf16.mxu0 0
        %3357 = vmatpush1.bf16.msra.mxu0 0
        %3358 = vmatprep.subr.bf16.mxu0 0
        %3359 = vmatpush1.bf16.msra.mxu0 0
        %3360 = vmatprep.mubr.bf16.mxu0 0
        %3361 = vmatmul.mubr.bf16.gmra.mrb[0].mxu0 %v1986
        %v3362 = vpop.f32.mrb[0].mxu0
        %v3363 = vadd.f32 %v3281, %v3362
        %v3364 = vpop.f32.mrb[0].mxu0
        %v3365 = vadd.f32 %v3283, %v3364
        %v3366 = vpop.f32.mrb[0].mxu0
        %v3367 = vpop.f32.mrb[0].mxu0
        %3368 = vdwg.mxu0
        %v3369 = vld [vmem:[%s3] sm:$0xff]
        %3371 = vset.pattern.permute.xlu0 0
        %3372 = vperm.xlu0 %3371, %v3369
        %v3373 = vpop.permute.xlu0 %3372
        %v3375 = vadd.f32 %v3322, %v3373
        %v3376 = vadd.f32 %v3324, %v3373
        %v3377 = vadd.f32 %v3363, %v3373
        %v3378 = vadd.f32 %v3365, %v3373
        %v3379 = vstv %s348
        %v3380 = vmul.f32 %v3379, %v3375
        %v3381 = vmul.f32 %v3379, %v3376
        %v3382 = vmul.f32 %v3379, %v3377
        %v3383 = vmul.f32 %v3379, %v3378
        %v3384 = vsub.f32 0.0, %v3380
        %v3385 = vsub.f32 0.0, %v3381
        %v3386 = vsub.f32 0.0, %v3382
        %v3387 = vsub.f32 0.0, %v3383
        %v3388 = vmul.f32 %v3384, 1.442695
        %v3389 = vpow.pop %v3388
        %v3390 = vmul.f32 %v3385, 1.442695
        %v3391 = vpow.pop %v3390
        %v3392 = vmul.f32 %v3386, 1.442695
        %v3393 = vpow.pop %v3392
        %v3394 = vmul.f32 %v3387, 1.442695
        %v3395 = vpow.pop %v3394
        %v3396 = vadd.f32 %v3389, 1.0
        %v3397 = vadd.f32 %v3391, 1.0
        %v3398 = vadd.f32 %v3393, 1.0
        %v3399 = vadd.f32 %v3395, 1.0
        %v3400 = vrcp.pop %v3396
        %v3401 = vrcp.pop %v3397
        %v3402 = vrcp.pop %v3398
        %v3403 = vrcp.pop %v3399
        %v3404 = vmul.f32 %v3375, %v3400
        %v3405 = vmul.f32 %v3376, %v3401
        %v3406 = vmul.f32 %v3377, %v3402
        %v3407 = vmul.f32 %v3378, %v3403
        %v3408 = vpack.c.bf16 %v3404, %v3404
        %v3409 = vpack.c.bf16 %v3405, %v3405
        %v3410 = vpack.c.bf16 %v3406, %v3406
        %v3411 = vpack.c.bf16 %v3407, %v3407
        %v3416 = vunpack.c.l.b16 %v3408
        %v3417 = vunpack.c.l.b16 %v3409
        %v3418 = vunpack.c.l.b16 %v3410
        %v3419 = vunpack.c.l.b16 %v3411
        %v3420 = vpack.c.b16 %v3417, %v3416
        %v3421 = vpack.c.b16 %v3419, %v3418
        %3424 = vst [vmem:[#allocation2 + $0x4] sm:$0xff] %v3420
        %3425 = vst [vmem:[#allocation2 + $0xc] sm:$0xff] %v3421
        %v3426 = vld [vmem:[#allocation2] sm:$0xff]
        %v3427 = vld [vmem:[#allocation2 + $0x8] sm:$0xff]
        %v3428 = vld [vmem:[#allocation2 + $0x10] sm:$0xf]
        %v3429 = vld [vmem:[%s4] sm:$0x11]
        %v3430 = vld [vmem:[%s4 + $0x8] sm:$0x11]
        %v3433 = vunpack.c.l.b16 %v3429
        %v3434 = vunpack.c.h.b16 %v3429
        %v3435 = vunpack.c.l.b16 %v3430
        %v3436 = vunpack.c.h.b16 %v3430
        %v3437 = vpack.c.b16 %v3433, %v3433
        %v3438 = vpack.c.b16 %v3434, %v3434
        %v3439 = vpack.c.b16 %v3435, %v3435
        %v3440 = vpack.c.b16 %v3436, %v3436
        %v3442 = vpack.i.b16 %v3437, %v3437
        %v3444 = vlaneseq
        %v3445 = vshrl.u32 %v3444, 7
        %v3446 = vsub.s32 0, %v3445
        %v3447 = vrot.slane %v3442, %v3446
        %v3449 = vpack.i.b16 %v3438, %v3438
        %v3451 = vlaneseq
        %v3452 = vshrl.u32 %v3451, 7
        %v3453 = vsub.s32 0, %v3452
        %v3454 = vrot.slane %v3449, %v3453
        %v3456 = vpack.i.b16 %v3439, %v3439
        %v3458 = vlaneseq
        %v3459 = vshrl.u32 %v3458, 7
        %v3460 = vsub.s32 0, %v3459
        %v3461 = vrot.slane %v3456, %v3460
        %v3463 = vpack.i.b16 %v3440, %v3440
        %v3465 = vlaneseq
        %v3466 = vshrl.u32 %v3465, 7
        %v3467 = vsub.s32 0, %v3466
        %v3468 = vrot.slane %v3463, %v3467
        %v3473 = vunpack.c.l.b16 %v3447
        %v3474 = vunpack.c.l.b16 %v3454
        %v3475 = vunpack.c.l.b16 %v3461
        %v3476 = vunpack.c.l.b16 %v3468
        %v3477 = vpack.c.b16 %v3474, %v3473
        %v3478 = vpack.c.b16 %v3476, %v3475
        %3479 = vrot.lane.b32.xlu0 %v3477, 55
        %v3480 = vpop.permute.xlu0 %3479
        %3481 = vrot.lane.b32.xlu0 %v3478, 55
        %v3482 = vpop.permute.xlu0 %3481
        %v3483 = vrot.slane %v3480, 4
        %v3484 = vrot.slane %v3482, 4
        %v3485 = vsel %vm434, %v3483, %v3480
        %v3486 = vsel %vm436, %v3483, %v3484
        %v3487 = vsel %vm434, %v3486, %v3482
        %v3491 = vmul.bf16 %v3426, %v3485
        %v3492 = vmul.bf16 %v3427, %v3487
        %v3493 = vmul.bf16 %v3428, %v3484
        %v3497 = vunpack.c.l.b16 %v3491
        %v3498 = vunpack.c.h.b16 %v3491
        %v3499 = vunpack.c.l.b16 %v3492
        %v3500 = vunpack.c.h.b16 %v3492
        %v3501 = vunpack.c.l.b16 %v3493
        %v3502 = vpack.c.b16 %v3497, %v3497
        %v3503 = vpack.c.b16 %v3498, %v3498
        %v3504 = vpack.c.b16 %v3499, %v3499
        %v3505 = vpack.c.b16 %v3500, %v3500
        %v3506 = vpack.c.b16 %v3501, %v3501
        %3507 = vrot.lane.b32.xlu0 %v3502, 73
        %v3508 = vpop.permute.xlu0 %3507
        %3509 = vrot.lane.b32.xlu0 %v3503, 73
        %v3510 = vpop.permute.xlu0 %3509
        %3511 = vrot.lane.b32.xlu0 %v3504, 73
        %v3512 = vpop.permute.xlu0 %3511
        %3513 = vrot.lane.b32.xlu0 %v3505, 73
        %v3514 = vpop.permute.xlu0 %3513
        %3515 = vrot.lane.b32.xlu0 %v3506, 73
        %v3516 = vpop.permute.xlu0 %3515
        %v3517 = vsel %vm468, %v3508, %v3510
        %v3518 = vsel %vm468, %v3510, %v3512
        %v3519 = vsel %vm468, %v3512, %v3514
        %v3520 = vsel %vm468, %v3514, %v3516
        %3525 = vst [vmem:[#allocation3] sm:$0xf] %v3517
        %3526 = vst [vmem:[#allocation3 + $0x8] sm:$0xf] %v3518
        %3527 = vst [vmem:[#allocation3 + $0x10] sm:$0xf] %v3519
        %3528 = vst [vmem:[#allocation3 + $0x18] sm:$0xf] %v3520
        %v3529 = vld [vmem:[#allocation2] sm:$0xff]
        %v3530 = vld [vmem:[#allocation2 + $0x8] sm:$0xff]
        %v3531 = vld [vmem:[#allocation2 + $0x10] sm:$0xf]
        %v3532 = vld [vmem:[%s4] sm:$0x11]
        %v3533 = vld [vmem:[%s4 + $0x8] sm:$0x11]
        %v3536 = vunpack.c.l.b16 %v3532
        %v3537 = vunpack.c.h.b16 %v3532
        %v3538 = vunpack.c.l.b16 %v3533
        %v3539 = vunpack.c.h.b16 %v3533
        %v3540 = vpack.c.b16 %v3536, %v3536
        %v3541 = vpack.c.b16 %v3537, %v3537
        %v3542 = vpack.c.b16 %v3538, %v3538
        %v3543 = vpack.c.b16 %v3539, %v3539
        %v3545 = vshrl.u32 %v3540, 16
        %v3546 = vpack.i.b16 %v3545, %v3545
        %v3548 = vlaneseq
        %v3549 = vshrl.u32 %v3548, 7
        %v3550 = vsub.s32 0, %v3549
        %v3551 = vrot.slane %v3546, %v3550
        %v3553 = vshrl.u32 %v3541, 16
        %v3554 = vpack.i.b16 %v3553, %v3553
        %v3556 = vlaneseq
        %v3557 = vshrl.u32 %v3556, 7
        %v3558 = vsub.s32 0, %v3557
        %v3559 = vrot.slane %v3554, %v3558
        %v3561 = vshrl.u32 %v3542, 16
        %v3562 = vpack.i.b16 %v3561, %v3561
        %v3564 = vlaneseq
        %v3565 = vshrl.u32 %v3564, 7
        %v3566 = vsub.s32 0, %v3565
        %v3567 = vrot.slane %v3562, %v3566
        %v3569 = vshrl.u32 %v3543, 16
        %v3570 = vpack.i.b16 %v3569, %v3569
        %v3572 = vlaneseq
        %v3573 = vshrl.u32 %v3572, 7
        %v3574 = vsub.s32 0, %v3573
        %v3575 = vrot.slane %v3570, %v3574
        %v3580 = vunpack.c.l.b16 %v3551
        %v3581 = vunpack.c.l.b16 %v3559
        %v3582 = vunpack.c.l.b16 %v3567
        %v3583 = vunpack.c.l.b16 %v3575
        %v3584 = vpack.c.b16 %v3581, %v3580
        %v3585 = vpack.c.b16 %v3583, %v3582
        %3586 = vrot.lane.b32.xlu0 %v3584, 56
        %v3587 = vpop.permute.xlu0 %3586
        %3588 = vrot.lane.b32.xlu0 %v3585, 56
        %v3589 = vpop.permute.xlu0 %3588
        %v3590 = vrot.slane %v3587, 4
        %v3591 = vrot.slane %v3589, 4
        %v3592 = vsel %vm544, %v3590, %v3587
        %v3593 = vsel %vm436, %v3590, %v3591
        %v3594 = vsel %vm544, %v3593, %v3589
        %v3598 = vmul.bf16 %v3529, %v3592
        %v3599 = vmul.bf16 %v3530, %v3594
        %v3600 = vmul.bf16 %v3531, %v3591
        %v3604 = vunpack.c.l.b16 %v3598
        %v3605 = vunpack.c.h.b16 %v3598
        %v3606 = vunpack.c.l.b16 %v3599
        %v3607 = vunpack.c.h.b16 %v3599
        %v3608 = vunpack.c.l.b16 %v3600
        %v3609 = vpack.c.b16 %v3604, %v3604
        %v3610 = vpack.c.b16 %v3605, %v3605
        %v3611 = vpack.c.b16 %v3606, %v3606
        %v3612 = vpack.c.b16 %v3607, %v3607
        %v3613 = vpack.c.b16 %v3608, %v3608
        %3614 = vrot.lane.b32.xlu0 %v3609, 72
        %v3615 = vpop.permute.xlu0 %3614
        %3616 = vrot.lane.b32.xlu0 %v3610, 72
        %v3617 = vpop.permute.xlu0 %3616
        %3618 = vrot.lane.b32.xlu0 %v3611, 72
        %v3619 = vpop.permute.xlu0 %3618
        %3620 = vrot.lane.b32.xlu0 %v3612, 72
        %v3621 = vpop.permute.xlu0 %3620
        %3622 = vrot.lane.b32.xlu0 %v3613, 72
        %v3623 = vpop.permute.xlu0 %3622
        %v3624 = vsel %vm577, %v3615, %v3617
        %v3625 = vsel %vm577, %v3617, %v3619
        %v3626 = vsel %vm577, %v3619, %v3621
        %v3627 = vsel %vm577, %v3621, %v3623
        %3632 = vst [vmem:[#allocation3] sm:$0xf0] %v3624
        %3633 = vst [vmem:[#allocation3 + $0x8] sm:$0xf0] %v3625
        %3634 = vst [vmem:[#allocation3 + $0x10] sm:$0xf0] %v3626
        %3635 = vst [vmem:[#allocation3 + $0x18] sm:$0xf0] %v3627
        %v3636 = vld [vmem:[#allocation2] sm:$0xff]
        %v3637 = vld [vmem:[#allocation2 + $0x8] sm:$0xff]
        %v3638 = vld [vmem:[#allocation2 + $0x10] sm:$0xf]
        %v3639 = vld [vmem:[%s4] sm:$0x22]
        %v3640 = vld [vmem:[%s4 + $0x8] sm:$0x22]
        %v3643 = vunpack.c.l.b16 %v3639
        %v3644 = vunpack.c.h.b16 %v3639
        %v3645 = vunpack.c.l.b16 %v3640
        %v3646 = vunpack.c.h.b16 %v3640
        %v3647 = vpack.c.b16 %v3643, %v3643
        %v3648 = vpack.c.b16 %v3644, %v3644
        %v3649 = vpack.c.b16 %v3645, %v3645
        %v3650 = vpack.c.b16 %v3646, %v3646
        %v3652 = vpack.i.b16 %v3647, %v3647
        %v3654 = vlaneseq
        %v3655 = vshrl.u32 %v3654, 7
        %v3656 = vsub.s32 1, %v3655
        %v3657 = vrot.slane %v3652, %v3656
        %v3659 = vpack.i.b16 %v3648, %v3648
        %v3661 = vlaneseq
        %v3662 = vshrl.u32 %v3661, 7
        %v3663 = vsub.s32 1, %v3662
        %v3664 = vrot.slane %v3659, %v3663
        %v3666 = vpack.i.b16 %v3649, %v3649
        %v3668 = vlaneseq
        %v3669 = vshrl.u32 %v3668, 7
        %v3670 = vsub.s32 1, %v3669
        %v3671 = vrot.slane %v3666, %v3670
        %v3673 = vpack.i.b16 %v3650, %v3650
        %v3675 = vlaneseq
        %v3676 = vshrl.u32 %v3675, 7
        %v3677 = vsub.s32 1, %v3676
        %v3678 = vrot.slane %v3673, %v3677
        %v3683 = vunpack.c.l.b16 %v3657
        %v3684 = vunpack.c.l.b16 %v3664
        %v3685 = vunpack.c.l.b16 %v3671
        %v3686 = vunpack.c.l.b16 %v3678
        %v3687 = vpack.c.b16 %v3684, %v3683
        %v3688 = vpack.c.b16 %v3686, %v3685
        %3689 = vrot.lane.b32.xlu0 %v3687, 57
        %v3690 = vpop.permute.xlu0 %3689
        %3691 = vrot.lane.b32.xlu0 %v3688, 57
        %v3692 = vpop.permute.xlu0 %3691
        %v3693 = vrot.slane %v3690, 4
        %v3694 = vrot.slane %v3692, 4
        %v3695 = vsel %vm649, %v3693, %v3690
        %v3696 = vsel %vm436, %v3693, %v3694
        %v3697 = vsel %vm649, %v3696, %v3692
        %v3701 = vmul.bf16 %v3636, %v3695
        %v3702 = vmul.bf16 %v3637, %v3697
        %v3703 = vmul.bf16 %v3638, %v3694
        %v3707 = vunpack.c.l.b16 %v3701
        %v3708 = vunpack.c.h.b16 %v3701
        %v3709 = vunpack.c.l.b16 %v3702
        %v3710 = vunpack.c.h.b16 %v3702
        %v3711 = vunpack.c.l.b16 %v3703
        %v3712 = vpack.c.b16 %v3707, %v3707
        %v3713 = vpack.c.b16 %v3708, %v3708
        %v3714 = vpack.c.b16 %v3709, %v3709
        %v3715 = vpack.c.b16 %v3710, %v3710
        %v3716 = vpack.c.b16 %v3711, %v3711
        %3717 = vrot.lane.b32.xlu0 %v3712, 71
        %v3718 = vpop.permute.xlu0 %3717
        %3719 = vrot.lane.b32.xlu0 %v3713, 71
        %v3720 = vpop.permute.xlu0 %3719
        %3721 = vrot.lane.b32.xlu0 %v3714, 71
        %v3722 = vpop.permute.xlu0 %3721
        %3723 = vrot.lane.b32.xlu0 %v3715, 71
        %v3724 = vpop.permute.xlu0 %3723
        %3725 = vrot.lane.b32.xlu0 %v3716, 71
        %v3726 = vpop.permute.xlu0 %3725
        %v3727 = vsel %vm682, %v3718, %v3720
        %v3728 = vsel %vm682, %v3720, %v3722
        %v3729 = vsel %vm682, %v3722, %v3724
        %v3730 = vsel %vm682, %v3724, %v3726
        %3735 = vst [vmem:[#allocation3 + $0x20] sm:$0xf] %v3727
        %3736 = vst [vmem:[#allocation3 + $0x28] sm:$0xf] %v3728
        %3737 = vst [vmem:[#allocation3 + $0x30] sm:$0xf] %v3729
        %3738 = vst [vmem:[#allocation3 + $0x38] sm:$0xf] %v3730
        %v3739 = vld [vmem:[#allocation2] sm:$0xff]
        %v3740 = vld [vmem:[#allocation2 + $0x8] sm:$0xff]
        %v3741 = vld [vmem:[#allocation2 + $0x10] sm:$0xf]
        %v3742 = vld [vmem:[%s4] sm:$0x22]
        %v3743 = vld [vmem:[%s4 + $0x8] sm:$0x22]
        %v3746 = vunpack.c.l.b16 %v3742
        %v3747 = vunpack.c.h.b16 %v3742
        %v3748 = vunpack.c.l.b16 %v3743
        %v3749 = vunpack.c.h.b16 %v3743
        %v3750 = vpack.c.b16 %v3746, %v3746
        %v3751 = vpack.c.b16 %v3747, %v3747
        %v3752 = vpack.c.b16 %v3748, %v3748
        %v3753 = vpack.c.b16 %v3749, %v3749
        %v3755 = vshrl.u32 %v3750, 16
        %v3756 = vpack.i.b16 %v3755, %v3755
        %v3758 = vlaneseq
        %v3759 = vshrl.u32 %v3758, 7
        %v3760 = vsub.s32 1, %v3759
        %v3761 = vrot.slane %v3756, %v3760
        %v3763 = vshrl.u32 %v3751, 16
        %v3764 = vpack.i.b16 %v3763, %v3763
        %v3766 = vlaneseq
        %v3767 = vshrl.u32 %v3766, 7
        %v3768 = vsub.s32 1, %v3767
        %v3769 = vrot.slane %v3764, %v3768
        %v3771 = vshrl.u32 %v3752, 16
        %v3772 = vpack.i.b16 %v3771, %v3771
        %v3774 = vlaneseq
        %v3775 = vshrl.u32 %v3774, 7
        %v3776 = vsub.s32 1, %v3775
        %v3777 = vrot.slane %v3772, %v3776
        %v3779 = vshrl.u32 %v3753, 16
        %v3780 = vpack.i.b16 %v3779, %v3779
        %v3782 = vlaneseq
        %v3783 = vshrl.u32 %v3782, 7
        %v3784 = vsub.s32 1, %v3783
        %v3785 = vrot.slane %v3780, %v3784
        %v3790 = vunpack.c.l.b16 %v3761
        %v3791 = vunpack.c.l.b16 %v3769
        %v3792 = vunpack.c.l.b16 %v3777
        %v3793 = vunpack.c.l.b16 %v3785
        %v3794 = vpack.c.b16 %v3791, %v3790
        %v3795 = vpack.c.b16 %v3793, %v3792
        %3796 = vrot.lane.b32.xlu0 %v3794, 63
        %v3797 = vpop.permute.xlu0 %3796
        %3798 = vrot.lane.b32.xlu0 %v3795, 63
        %v3799 = vpop.permute.xlu0 %3798
        %v3800 = vrot.slane %v3797, 4
        %v3801 = vrot.slane %v3799, 4
        %v3802 = vsel %vm758, %v3800, %v3797
        %v3803 = vsel %vm436, %v3800, %v3801
        %v3804 = vsel %vm758, %v3803, %v3799
        %v3808 = vmul.bf16 %v3739, %v3802
        %v3809 = vmul.bf16 %v3740, %v3804
        %v3810 = vmul.bf16 %v3741, %v3801
        %v3814 = vunpack.c.l.b16 %v3808
        %v3815 = vunpack.c.h.b16 %v3808
        %v3816 = vunpack.c.l.b16 %v3809
        %v3817 = vunpack.c.h.b16 %v3809
        %v3818 = vunpack.c.l.b16 %v3810
        %v3819 = vpack.c.b16 %v3814, %v3814
        %v3820 = vpack.c.b16 %v3815, %v3815
        %v3821 = vpack.c.b16 %v3816, %v3816
        %v3822 = vpack.c.b16 %v3817, %v3817
        %v3823 = vpack.c.b16 %v3818, %v3818
        %3824 = vrot.lane.b32.xlu0 %v3819, 65
        %v3825 = vpop.permute.xlu0 %3824
        %3826 = vrot.lane.b32.xlu0 %v3820, 65
        %v3827 = vpop.permute.xlu0 %3826
        %3828 = vrot.lane.b32.xlu0 %v3821, 65
        %v3829 = vpop.permute.xlu0 %3828
        %3830 = vrot.lane.b32.xlu0 %v3822, 65
        %v3831 = vpop.permute.xlu0 %3830
        %3832 = vrot.lane.b32.xlu0 %v3823, 65
        %v3833 = vpop.permute.xlu0 %3832
        %v3834 = vsel %vm791, %v3825, %v3827
        %v3835 = vsel %vm791, %v3827, %v3829
        %v3836 = vsel %vm791, %v3829, %v3831
        %v3837 = vsel %vm791, %v3831, %v3833
        %3842 = vst [vmem:[#allocation3 + $0x20] sm:$0xf0] %v3834
        %3843 = vst [vmem:[#allocation3 + $0x28] sm:$0xf0] %v3835
        %3844 = vst [vmem:[#allocation3 + $0x30] sm:$0xf0] %v3836
        %3845 = vst [vmem:[#allocation3 + $0x38] sm:$0xf0] %v3837
        %v3846 = vld [vmem:[#allocation2] sm:$0xff]
        %v3847 = vld [vmem:[#allocation2 + $0x8] sm:$0xff]
        %v3848 = vld [vmem:[#allocation2 + $0x10] sm:$0xf]
        %v3849 = vld [vmem:[%s4] sm:$0x44]
        %v3850 = vld [vmem:[%s4 + $0x8] sm:$0x44]
        %v3853 = vunpack.c.l.b16 %v3849
        %v3854 = vunpack.c.h.b16 %v3849
        %v3855 = vunpack.c.l.b16 %v3850
        %v3856 = vunpack.c.h.b16 %v3850
        %v3857 = vpack.c.b16 %v3853, %v3853
        %v3858 = vpack.c.b16 %v3854, %v3854
        %v3859 = vpack.c.b16 %v3855, %v3855
        %v3860 = vpack.c.b16 %v3856, %v3856
        %v3862 = vpack.i.b16 %v3857, %v3857
        %v3864 = vlaneseq
        %v3865 = vshrl.u32 %v3864, 7
        %v3866 = vsub.s32 2, %v3865
        %v3867 = vrot.slane %v3862, %v3866
        %v3869 = vpack.i.b16 %v3858, %v3858
        %v3871 = vlaneseq
        %v3872 = vshrl.u32 %v3871, 7
        %v3873 = vsub.s32 2, %v3872
        %v3874 = vrot.slane %v3869, %v3873
        %v3876 = vpack.i.b16 %v3859, %v3859
        %v3878 = vlaneseq
        %v3879 = vshrl.u32 %v3878, 7
        %v3880 = vsub.s32 2, %v3879
        %v3881 = vrot.slane %v3876, %v3880
        %v3883 = vpack.i.b16 %v3860, %v3860
        %v3885 = vlaneseq
        %v3886 = vshrl.u32 %v3885, 7
        %v3887 = vsub.s32 2, %v3886
        %v3888 = vrot.slane %v3883, %v3887
        %v3893 = vunpack.c.l.b16 %v3867
        %v3894 = vunpack.c.l.b16 %v3874
        %v3895 = vunpack.c.l.b16 %v3881
        %v3896 = vunpack.c.l.b16 %v3888
        %v3897 = vpack.c.b16 %v3894, %v3893
        %v3898 = vpack.c.b16 %v3896, %v3895
        %3899 = vrot.lane.b32.xlu0 %v3897, 64
        %v3900 = vpop.permute.xlu0 %3899
        %3901 = vrot.lane.b32.xlu0 %v3898, 64
        %v3902 = vpop.permute.xlu0 %3901
        %v3903 = vrot.slane %v3900, 4
        %v3904 = vrot.slane %v3902, 4
        %v3905 = vsel %vm863, %v3903, %v3900
        %v3906 = vsel %vm436, %v3903, %v3904
        %v3907 = vsel %vm863, %v3906, %v3902
        %v3911 = vmul.bf16 %v3846, %v3905
        %v3912 = vmul.bf16 %v3847, %v3907
        %v3913 = vmul.bf16 %v3848, %v3904
        %v3917 = vunpack.c.l.b16 %v3911
        %v3918 = vunpack.c.h.b16 %v3911
        %v3919 = vunpack.c.l.b16 %v3912
        %v3920 = vunpack.c.h.b16 %v3912
        %v3921 = vunpack.c.l.b16 %v3913
        %v3922 = vpack.c.b16 %v3917, %v3917
        %v3923 = vpack.c.b16 %v3918, %v3918
        %v3924 = vpack.c.b16 %v3919, %v3919
        %v3925 = vpack.c.b16 %v3920, %v3920
        %v3926 = vpack.c.b16 %v3921, %v3921
        %3927 = vrot.lane.b32.xlu0 %v3922, 64
        %v3928 = vpop.permute.xlu0 %3927
        %3929 = vrot.lane.b32.xlu0 %v3923, 64
        %v3930 = vpop.permute.xlu0 %3929
        %3931 = vrot.lane.b32.xlu0 %v3924, 64
        %v3932 = vpop.permute.xlu0 %3931
        %3933 = vrot.lane.b32.xlu0 %v3925, 64
        %v3934 = vpop.permute.xlu0 %3933
        %3935 = vrot.lane.b32.xlu0 %v3926, 64
        %v3936 = vpop.permute.xlu0 %3935
        %v3937 = vsel %vm863, %v3928, %v3930
        %v3938 = vsel %vm863, %v3930, %v3932
        %v3939 = vsel %vm863, %v3932, %v3934
        %v3940 = vsel %vm863, %v3934, %v3936
        %3945 = vst [vmem:[#allocation3 + $0x40] sm:$0xf] %v3937
        %3946 = vst [vmem:[#allocation3 + $0x48] sm:$0xf] %v3938
        %3947 = vst [vmem:[#allocation3 + $0x50] sm:$0xf] %v3939
        %3948 = vst [vmem:[#allocation3 + $0x58] sm:$0xf] %v3940
        %v3949 = vld [vmem:[#allocation2] sm:$0xff]
        %v3950 = vld [vmem:[#allocation2 + $0x8] sm:$0xff]
        %v3951 = vld [vmem:[#allocation2 + $0x10] sm:$0xf]
        %v3952 = vld [vmem:[%s4] sm:$0x44]
        %v3953 = vld [vmem:[%s4 + $0x8] sm:$0x44]
        %v3956 = vunpack.c.l.b16 %v3952
        %v3957 = vunpack.c.h.b16 %v3952
        %v3958 = vunpack.c.l.b16 %v3953
        %v3959 = vunpack.c.h.b16 %v3953
        %v3960 = vpack.c.b16 %v3956, %v3956
        %v3961 = vpack.c.b16 %v3957, %v3957
        %v3962 = vpack.c.b16 %v3958, %v3958
        %v3963 = vpack.c.b16 %v3959, %v3959
        %v3965 = vshrl.u32 %v3960, 16
        %v3966 = vpack.i.b16 %v3965, %v3965
        %v3968 = vlaneseq
        %v3969 = vshrl.u32 %v3968, 7
        %v3970 = vsub.s32 2, %v3969
        %v3971 = vrot.slane %v3966, %v3970
        %v3973 = vshrl.u32 %v3961, 16
        %v3974 = vpack.i.b16 %v3973, %v3973
        %v3976 = vlaneseq
        %v3977 = vshrl.u32 %v3976, 7
        %v3978 = vsub.s32 2, %v3977
        %v3979 = vrot.slane %v3974, %v3978
        %v3981 = vshrl.u32 %v3962, 16
        %v3982 = vpack.i.b16 %v3981, %v3981
        %v3984 = vlaneseq
        %v3985 = vshrl.u32 %v3984, 7
        %v3986 = vsub.s32 2, %v3985
        %v3987 = vrot.slane %v3982, %v3986
        %v3989 = vshrl.u32 %v3963, 16
        %v3990 = vpack.i.b16 %v3989, %v3989
        %v3992 = vlaneseq
        %v3993 = vshrl.u32 %v3992, 7
        %v3994 = vsub.s32 2, %v3993
        %v3995 = vrot.slane %v3990, %v3994
        %v4000 = vunpack.c.l.b16 %v3971
        %v4001 = vunpack.c.l.b16 %v3979
        %v4002 = vunpack.c.l.b16 %v3987
        %v4003 = vunpack.c.l.b16 %v3995
        %v4004 = vpack.c.b16 %v4001, %v4000
        %v4005 = vpack.c.b16 %v4003, %v4002
        %4006 = vrot.lane.b32.xlu0 %v4004, 65
        %v4007 = vpop.permute.xlu0 %4006
        %4008 = vrot.lane.b32.xlu0 %v4005, 65
        %v4009 = vpop.permute.xlu0 %4008
        %v4010 = vrot.slane %v4007, 4
        %v4011 = vrot.slane %v4009, 4
        %v4012 = vsel %vm791, %v4010, %v4007
        %v4013 = vsel %vm436, %v4010, %v4011
        %v4014 = vsel %vm791, %v4013, %v4009
        %v4018 = vmul.bf16 %v3949, %v4012
        %v4019 = vmul.bf16 %v3950, %v4014
        %v4020 = vmul.bf16 %v3951, %v4011
        %v4024 = vunpack.c.l.b16 %v4018
        %v4025 = vunpack.c.h.b16 %v4018
        %v4026 = vunpack.c.l.b16 %v4019
        %v4027 = vunpack.c.h.b16 %v4019
        %v4028 = vunpack.c.l.b16 %v4020
        %v4029 = vpack.c.b16 %v4024, %v4024
        %v4030 = vpack.c.b16 %v4025, %v4025
        %v4031 = vpack.c.b16 %v4026, %v4026
        %v4032 = vpack.c.b16 %v4027, %v4027
        %v4033 = vpack.c.b16 %v4028, %v4028
        %4034 = vrot.lane.b32.xlu0 %v4029, 63
        %v4035 = vpop.permute.xlu0 %4034
        %4036 = vrot.lane.b32.xlu0 %v4030, 63
        %v4037 = vpop.permute.xlu0 %4036
        %4038 = vrot.lane.b32.xlu0 %v4031, 63
        %v4039 = vpop.permute.xlu0 %4038
        %4040 = vrot.lane.b32.xlu0 %v4032, 63
        %v4041 = vpop.permute.xlu0 %4040
        %4042 = vrot.lane.b32.xlu0 %v4033, 63
        %v4043 = vpop.permute.xlu0 %4042
        %v4044 = vsel %vm758, %v4035, %v4037
        %v4045 = vsel %vm758, %v4037, %v4039
        %v4046 = vsel %vm758, %v4039, %v4041
        %v4047 = vsel %vm758, %v4041, %v4043
        %4052 = vst [vmem:[#allocation3 + $0x40] sm:$0xf0] %v4044
        %4053 = vst [vmem:[#allocation3 + $0x48] sm:$0xf0] %v4045
        %4054 = vst [vmem:[#allocation3 + $0x50] sm:$0xf0] %v4046
        %4055 = vst [vmem:[#allocation3 + $0x58] sm:$0xf0] %v4047
        %v4056 = vld [vmem:[#allocation2] sm:$0xff]
        %v4057 = vld [vmem:[#allocation2 + $0x8] sm:$0xff]
        %v4058 = vld [vmem:[#allocation2 + $0x10] sm:$0xf]
        %v4059 = vld [vmem:[%s4] sm:$0x88]
        %v4060 = vld [vmem:[%s4 + $0x8] sm:$0x88]
        %v4063 = vunpack.c.l.b16 %v4059
        %v4064 = vunpack.c.h.b16 %v4059
        %v4065 = vunpack.c.l.b16 %v4060
        %v4066 = vunpack.c.h.b16 %v4060
        %v4067 = vpack.c.b16 %v4063, %v4063
        %v4068 = vpack.c.b16 %v4064, %v4064
        %v4069 = vpack.c.b16 %v4065, %v4065
        %v4070 = vpack.c.b16 %v4066, %v4066
        %v4072 = vpack.i.b16 %v4067, %v4067
        %v4074 = vlaneseq
        %v4075 = vshrl.u32 %v4074, 7
        %v4076 = vsub.s32 3, %v4075
        %v4077 = vrot.slane %v4072, %v4076
        %v4079 = vpack.i.b16 %v4068, %v4068
        %v4081 = vlaneseq
        %v4082 = vshrl.u32 %v4081, 7
        %v4083 = vsub.s32 3, %v4082
        %v4084 = vrot.slane %v4079, %v4083
        %v4086 = vpack.i.b16 %v4069, %v4069
        %v4088 = vlaneseq
        %v4089 = vshrl.u32 %v4088, 7
        %v4090 = vsub.s32 3, %v4089
        %v4091 = vrot.slane %v4086, %v4090
        %v4093 = vpack.i.b16 %v4070, %v4070
        %v4095 = vlaneseq
        %v4096 = vshrl.u32 %v4095, 7
        %v4097 = vsub.s32 3, %v4096
        %v4098 = vrot.slane %v4093, %v4097
        %v4103 = vunpack.c.l.b16 %v4077
        %v4104 = vunpack.c.l.b16 %v4084
        %v4105 = vunpack.c.l.b16 %v4091
        %v4106 = vunpack.c.l.b16 %v4098
        %v4107 = vpack.c.b16 %v4104, %v4103
        %v4108 = vpack.c.b16 %v4106, %v4105
        %4109 = vrot.lane.b32.xlu0 %v4107, 71
        %v4110 = vpop.permute.xlu0 %4109
        %4111 = vrot.lane.b32.xlu0 %v4108, 71
        %v4112 = vpop.permute.xlu0 %4111
        %v4113 = vrot.slane %v4110, 4
        %v4114 = vrot.slane %v4112, 4
        %v4115 = vsel %vm682, %v4113, %v4110
        %v4116 = vsel %vm436, %v4113, %v4114
        %v4117 = vsel %vm682, %v4116, %v4112
        %v4121 = vmul.bf16 %v4056, %v4115
        %v4122 = vmul.bf16 %v4057, %v4117
        %v4123 = vmul.bf16 %v4058, %v4114
        %v4127 = vunpack.c.l.b16 %v4121
        %v4128 = vunpack.c.h.b16 %v4121
        %v4129 = vunpack.c.l.b16 %v4122
        %v4130 = vunpack.c.h.b16 %v4122
        %v4131 = vunpack.c.l.b16 %v4123
        %v4132 = vpack.c.b16 %v4127, %v4127
        %v4133 = vpack.c.b16 %v4128, %v4128
        %v4134 = vpack.c.b16 %v4129, %v4129
        %v4135 = vpack.c.b16 %v4130, %v4130
        %v4136 = vpack.c.b16 %v4131, %v4131
        %4137 = vrot.lane.b32.xlu0 %v4132, 57
        %v4138 = vpop.permute.xlu0 %4137
        %4139 = vrot.lane.b32.xlu0 %v4133, 57
        %v4140 = vpop.permute.xlu0 %4139
        %4141 = vrot.lane.b32.xlu0 %v4134, 57
        %v4142 = vpop.permute.xlu0 %4141
        %4143 = vrot.lane.b32.xlu0 %v4135, 57
        %v4144 = vpop.permute.xlu0 %4143
        %4145 = vrot.lane.b32.xlu0 %v4136, 57
        %v4146 = vpop.permute.xlu0 %4145
        %v4147 = vsel %vm649, %v4138, %v4140
        %v4148 = vsel %vm649, %v4140, %v4142
        %v4149 = vsel %vm649, %v4142, %v4144
        %v4150 = vsel %vm649, %v4144, %v4146
        %4155 = vst [vmem:[#allocation3 + $0x60] sm:$0xf] %v4147
        %4156 = vst [vmem:[#allocation3 + $0x68] sm:$0xf] %v4148
        %4157 = vst [vmem:[#allocation3 + $0x70] sm:$0xf] %v4149
        %4158 = vst [vmem:[#allocation3 + $0x78] sm:$0xf] %v4150
        %v4159 = vld [vmem:[#allocation2] sm:$0xff]
        %v4160 = vld [vmem:[#allocation2 + $0x8] sm:$0xff]
        %v4161 = vld [vmem:[#allocation2 + $0x10] sm:$0xf]
        %v4162 = vld [vmem:[%s4] sm:$0x88]
        %v4163 = vld [vmem:[%s4 + $0x8] sm:$0x88]
        %v4166 = vunpack.c.l.b16 %v4162
        %v4167 = vunpack.c.h.b16 %v4162
        %v4168 = vunpack.c.l.b16 %v4163
        %v4169 = vunpack.c.h.b16 %v4163
        %v4170 = vpack.c.b16 %v4166, %v4166
        %v4171 = vpack.c.b16 %v4167, %v4167
        %v4172 = vpack.c.b16 %v4168, %v4168
        %v4173 = vpack.c.b16 %v4169, %v4169
        %v4175 = vshrl.u32 %v4170, 16
        %v4176 = vpack.i.b16 %v4175, %v4175
        %v4178 = vlaneseq
        %v4179 = vshrl.u32 %v4178, 7
        %v4180 = vsub.s32 3, %v4179
        %v4181 = vrot.slane %v4176, %v4180
        %v4183 = vshrl.u32 %v4171, 16
        %v4184 = vpack.i.b16 %v4183, %v4183
        %v4186 = vlaneseq
        %v4187 = vshrl.u32 %v4186, 7
        %v4188 = vsub.s32 3, %v4187
        %v4189 = vrot.slane %v4184, %v4188
        %v4191 = vshrl.u32 %v4172, 16
        %v4192 = vpack.i.b16 %v4191, %v4191
        %v4194 = vlaneseq
        %v4195 = vshrl.u32 %v4194, 7
        %v4196 = vsub.s32 3, %v4195
        %v4197 = vrot.slane %v4192, %v4196
        %v4199 = vshrl.u32 %v4173, 16
        %v4200 = vpack.i.b16 %v4199, %v4199
        %v4202 = vlaneseq
        %v4203 = vshrl.u32 %v4202, 7
        %v4204 = vsub.s32 3, %v4203
        %v4205 = vrot.slane %v4200, %v4204
        %v4210 = vunpack.c.l.b16 %v4181
        %v4211 = vunpack.c.l.b16 %v4189
        %v4212 = vunpack.c.l.b16 %v4197
        %v4213 = vunpack.c.l.b16 %v4205
        %v4214 = vpack.c.b16 %v4211, %v4210
        %v4215 = vpack.c.b16 %v4213, %v4212
        %4216 = vrot.lane.b32.xlu0 %v4214, 72
        %v4217 = vpop.permute.xlu0 %4216
        %4218 = vrot.lane.b32.xlu0 %v4215, 72
        %v4219 = vpop.permute.xlu0 %4218
        %v4220 = vrot.slane %v4217, 4
        %v4221 = vrot.slane %v4219, 4
        %v4222 = vsel %vm577, %v4220, %v4217
        %v4223 = vsel %vm436, %v4220, %v4221
        %v4224 = vsel %vm577, %v4223, %v4219
        %v4228 = vmul.bf16 %v4159, %v4222
        %v4229 = vmul.bf16 %v4160, %v4224
        %v4230 = vmul.bf16 %v4161, %v4221
        %v4234 = vunpack.c.l.b16 %v4228
        %v4235 = vunpack.c.h.b16 %v4228
        %v4236 = vunpack.c.l.b16 %v4229
        %v4237 = vunpack.c.h.b16 %v4229
        %v4238 = vunpack.c.l.b16 %v4230
        %v4239 = vpack.c.b16 %v4234, %v4234
        %v4240 = vpack.c.b16 %v4235, %v4235
        %v4241 = vpack.c.b16 %v4236, %v4236
        %v4242 = vpack.c.b16 %v4237, %v4237
        %v4243 = vpack.c.b16 %v4238, %v4238
        %4244 = vrot.lane.b32.xlu0 %v4239, 56
        %v4245 = vpop.permute.xlu0 %4244
        %4246 = vrot.lane.b32.xlu0 %v4240, 56
        %v4247 = vpop.permute.xlu0 %4246
        %4248 = vrot.lane.b32.xlu0 %v4241, 56
        %v4249 = vpop.permute.xlu0 %4248
        %4250 = vrot.lane.b32.xlu0 %v4242, 56
        %v4251 = vpop.permute.xlu0 %4250
        %4252 = vrot.lane.b32.xlu0 %v4243, 56
        %v4253 = vpop.permute.xlu0 %4252
        %v4254 = vsel %vm544, %v4245, %v4247
        %v4255 = vsel %vm544, %v4247, %v4249
        %v4256 = vsel %vm544, %v4249, %v4251
        %v4257 = vsel %vm544, %v4251, %v4253
        %4262 = vst [vmem:[#allocation3 + $0x60] sm:$0xf0] %v4254
        %4263 = vst [vmem:[#allocation3 + $0x68] sm:$0xf0] %v4255
        %4264 = vst [vmem:[#allocation3 + $0x70] sm:$0xf0] %v4256
        %4265 = vst [vmem:[#allocation3 + $0x78] sm:$0xf0] %v4257
        %v4266 = vld [vmem:[#allocation2] sm:$0xff]
        %v4267 = vld [vmem:[#allocation2 + $0x8] sm:$0xff]
        %v4268 = vld [vmem:[#allocation2 + $0x10] sm:$0xf]
        %v4269 = vld [vmem:[%s4 + $0x10] sm:$0x11]
        %v4270 = vld [vmem:[%s4 + $0x18] sm:$0x11]
        %v4273 = vunpack.c.l.b16 %v4269
        %v4274 = vunpack.c.h.b16 %v4269
        %v4275 = vunpack.c.l.b16 %v4270
        %v4276 = vunpack.c.h.b16 %v4270
        %v4277 = vpack.c.b16 %v4273, %v4273
        %v4278 = vpack.c.b16 %v4274, %v4274
        %v4279 = vpack.c.b16 %v4275, %v4275
        %v4280 = vpack.c.b16 %v4276, %v4276
        %v4282 = vpack.i.b16 %v4277, %v4277
        %v4284 = vlaneseq
        %v4285 = vshrl.u32 %v4284, 7
        %v4286 = vsub.s32 0, %v4285
        %v4287 = vrot.slane %v4282, %v4286
        %v4289 = vpack.i.b16 %v4278, %v4278
        %v4291 = vlaneseq
        %v4292 = vshrl.u32 %v4291, 7
        %v4293 = vsub.s32 0, %v4292
        %v4294 = vrot.slane %v4289, %v4293
        %v4296 = vpack.i.b16 %v4279, %v4279
        %v4298 = vlaneseq
        %v4299 = vshrl.u32 %v4298, 7
        %v4300 = vsub.s32 0, %v4299
        %v4301 = vrot.slane %v4296, %v4300
        %v4303 = vpack.i.b16 %v4280, %v4280
        %v4305 = vlaneseq
        %v4306 = vshrl.u32 %v4305, 7
        %v4307 = vsub.s32 0, %v4306
        %v4308 = vrot.slane %v4303, %v4307
        %v4313 = vunpack.c.l.b16 %v4287
        %v4314 = vunpack.c.l.b16 %v4294
        %v4315 = vunpack.c.l.b16 %v4301
        %v4316 = vunpack.c.l.b16 %v4308
        %v4317 = vpack.c.b16 %v4314, %v4313
        %v4318 = vpack.c.b16 %v4316, %v4315
        %4319 = vrot.lane.b32.xlu0 %v4317, 73
        %v4320 = vpop.permute.xlu0 %4319
        %4321 = vrot.lane.b32.xlu0 %v4318, 73
        %v4322 = vpop.permute.xlu0 %4321
        %v4323 = vrot.slane %v4320, 4
        %v4324 = vrot.slane %v4322, 4
        %v4325 = vsel %vm468, %v4323, %v4320
        %v4326 = vsel %vm436, %v4323, %v4324
        %v4327 = vsel %vm468, %v4326, %v4322
        %v4331 = vmul.bf16 %v4266, %v4325
        %v4332 = vmul.bf16 %v4267, %v4327
        %v4333 = vmul.bf16 %v4268, %v4324
        %v4337 = vunpack.c.l.b16 %v4331
        %v4338 = vunpack.c.h.b16 %v4331
        %v4339 = vunpack.c.l.b16 %v4332
        %v4340 = vunpack.c.h.b16 %v4332
        %v4341 = vunpack.c.l.b16 %v4333
        %v4342 = vpack.c.b16 %v4337, %v4337
        %v4343 = vpack.c.b16 %v4338, %v4338
        %v4344 = vpack.c.b16 %v4339, %v4339
        %v4345 = vpack.c.b16 %v4340, %v4340
        %v4346 = vpack.c.b16 %v4341, %v4341
        %4347 = vrot.lane.b32.xlu0 %v4342, 55
        %v4348 = vpop.permute.xlu0 %4347
        %4349 = vrot.lane.b32.xlu0 %v4343, 55
        %v4350 = vpop.permute.xlu0 %4349
        %4351 = vrot.lane.b32.xlu0 %v4344, 55
        %v4352 = vpop.permute.xlu0 %4351
        %4353 = vrot.lane.b32.xlu0 %v4345, 55
        %v4354 = vpop.permute.xlu0 %4353
        %4355 = vrot.lane.b32.xlu0 %v4346, 55
        %v4356 = vpop.permute.xlu0 %4355
        %v4357 = vsel %vm434, %v4348, %v4350
        %v4358 = vsel %vm434, %v4350, %v4352
        %v4359 = vsel %vm434, %v4352, %v4354
        %v4360 = vsel %vm434, %v4354, %v4356
        %4365 = vst [vmem:[#allocation3 + $0x80] sm:$0xf] %v4357
        %4366 = vst [vmem:[#allocation3 + $0x88] sm:$0xf] %v4358
        %4367 = vst [vmem:[#allocation3 + $0x90] sm:$0xf] %v4359
        %4368 = vst [vmem:[#allocation3 + $0x98] sm:$0xf] %v4360
        %v4369 = vld [vmem:[#allocation2] sm:$0xff]
        %v4370 = vld [vmem:[#allocation2 + $0x8] sm:$0xff]
        %v4371 = vld [vmem:[#allocation2 + $0x10] sm:$0xf]
        %v4372 = vld [vmem:[%s4 + $0x10] sm:$0x11]
        %v4373 = vld [vmem:[%s4 + $0x18] sm:$0x11]
        %v4376 = vunpack.c.l.b16 %v4372
        %v4377 = vunpack.c.h.b16 %v4372
        %v4378 = vunpack.c.l.b16 %v4373
        %v4379 = vunpack.c.h.b16 %v4373
        %v4380 = vpack.c.b16 %v4376, %v4376
        %v4381 = vpack.c.b16 %v4377, %v4377
        %v4382 = vpack.c.b16 %v4378, %v4378
        %v4383 = vpack.c.b16 %v4379, %v4379
        %v4385 = vshrl.u32 %v4380, 16
        %v4386 = vpack.i.b16 %v4385, %v4385
        %v4388 = vlaneseq
        %v4389 = vshrl.u32 %v4388, 7
        %v4390 = vsub.s32 0, %v4389
        %v4391 = vrot.slane %v4386, %v4390
        %v4393 = vshrl.u32 %v4381, 16
        %v4394 = vpack.i.b16 %v4393, %v4393
        %v4396 = vlaneseq
        %v4397 = vshrl.u32 %v4396, 7
        %v4398 = vsub.s32 0, %v4397
        %v4399 = vrot.slane %v4394, %v4398
        %v4401 = vshrl.u32 %v4382, 16
        %v4402 = vpack.i.b16 %v4401, %v4401
        %v4404 = vlaneseq
        %v4405 = vshrl.u32 %v4404, 7
        %v4406 = vsub.s32 0, %v4405
        %v4407 = vrot.slane %v4402, %v4406
        %v4409 = vshrl.u32 %v4383, 16
        %v4410 = vpack.i.b16 %v4409, %v4409
        %v4412 = vlaneseq
        %v4413 = vshrl.u32 %v4412, 7
        %v4414 = vsub.s32 0, %v4413
        %v4415 = vrot.slane %v4410, %v4414
        %v4420 = vunpack.c.l.b16 %v4391
        %v4421 = vunpack.c.l.b16 %v4399
        %v4422 = vunpack.c.l.b16 %v4407
        %v4423 = vunpack.c.l.b16 %v4415
        %v4424 = vpack.c.b16 %v4421, %v4420
        %v4425 = vpack.c.b16 %v4423, %v4422
        %4426 = vrot.lane.b32.xlu0 %v4424, 119
        %v4427 = vpop.permute.xlu0 %4426
        %4428 = vrot.lane.b32.xlu0 %v4425, 119
        %v4429 = vpop.permute.xlu0 %4428
        %v4430 = vrot.slane %v4427, 4
        %v4431 = vrot.slane %v4429, 4
        %v4432 = vsel %vm1391, %v4430, %v4427
        %v4433 = vsel %vm436, %v4430, %v4431
        %v4434 = vsel %vm1391, %v4433, %v4429
        %v4438 = vmul.bf16 %v4369, %v4432
        %v4439 = vmul.bf16 %v4370, %v4434
        %v4440 = vmul.bf16 %v4371, %v4431
        %v4444 = vunpack.c.l.b16 %v4438
        %v4445 = vunpack.c.h.b16 %v4438
        %v4446 = vunpack.c.l.b16 %v4439
        %v4447 = vunpack.c.h.b16 %v4439
        %v4448 = vunpack.c.l.b16 %v4440
        %v4449 = vpack.c.b16 %v4444, %v4444
        %v4450 = vpack.c.b16 %v4445, %v4445
        %v4451 = vpack.c.b16 %v4446, %v4446
        %v4452 = vpack.c.b16 %v4447, %v4447
        %v4453 = vpack.c.b16 %v4448, %v4448
        %4454 = vrot.lane.b32.xlu0 %v4449, 9
        %v4455 = vpop.permute.xlu0 %4454
        %4456 = vrot.lane.b32.xlu0 %v4450, 9
        %v4457 = vpop.permute.xlu0 %4456
        %4458 = vrot.lane.b32.xlu0 %v4451, 9
        %v4459 = vpop.permute.xlu0 %4458
        %4460 = vrot.lane.b32.xlu0 %v4452, 9
        %v4461 = vpop.permute.xlu0 %4460
        %4462 = vrot.lane.b32.xlu0 %v4453, 9
        %v4463 = vpop.permute.xlu0 %4462
        %v4464 = vsel %vm1424, %v4455, %v4457
        %v4465 = vsel %vm1424, %v4457, %v4459
        %v4466 = vsel %vm1424, %v4459, %v4461
        %v4467 = vsel %vm1424, %v4461, %v4463
        %4472 = vst [vmem:[#allocation3 + $0x80] sm:$0xf0] %v4464
        %4473 = vst [vmem:[#allocation3 + $0x88] sm:$0xf0] %v4465
        %4474 = vst [vmem:[#allocation3 + $0x90] sm:$0xf0] %v4466
        %4475 = vst [vmem:[#allocation3 + $0x98] sm:$0xf0] %v4467
        %v4476 = vld [vmem:[#allocation2] sm:$0xff]
        %v4477 = vld [vmem:[#allocation2 + $0x8] sm:$0xff]
        %v4478 = vld [vmem:[#allocation2 + $0x10] sm:$0xf]
        %v4479 = vld [vmem:[%s4 + $0x10] sm:$0x22]
        %v4480 = vld [vmem:[%s4 + $0x18] sm:$0x22]
        %v4483 = vunpack.c.l.b16 %v4479
        %v4484 = vunpack.c.h.b16 %v4479
        %v4485 = vunpack.c.l.b16 %v4480
        %v4486 = vunpack.c.h.b16 %v4480
        %v4487 = vpack.c.b16 %v4483, %v4483
        %v4488 = vpack.c.b16 %v4484, %v4484
        %v4489 = vpack.c.b16 %v4485, %v4485
        %v4490 = vpack.c.b16 %v4486, %v4486
        %v4492 = vpack.i.b16 %v4487, %v4487
        %v4494 = vlaneseq
        %v4495 = vshrl.u32 %v4494, 7
        %v4496 = vsub.s32 1, %v4495
        %v4497 = vrot.slane %v4492, %v4496
        %v4499 = vpack.i.b16 %v4488, %v4488
        %v4501 = vlaneseq
        %v4502 = vshrl.u32 %v4501, 7
        %v4503 = vsub.s32 1, %v4502
        %v4504 = vrot.slane %v4499, %v4503
        %v4506 = vpack.i.b16 %v4489, %v4489
        %v4508 = vlaneseq
        %v4509 = vshrl.u32 %v4508, 7
        %v4510 = vsub.s32 1, %v4509
        %v4511 = vrot.slane %v4506, %v4510
        %v4513 = vpack.i.b16 %v4490, %v4490
        %v4515 = vlaneseq
        %v4516 = vshrl.u32 %v4515, 7
        %v4517 = vsub.s32 1, %v4516
        %v4518 = vrot.slane %v4513, %v4517
        %v4523 = vunpack.c.l.b16 %v4497
        %v4524 = vunpack.c.l.b16 %v4504
        %v4525 = vunpack.c.l.b16 %v4511
        %v4526 = vunpack.c.l.b16 %v4518
        %v4527 = vpack.c.b16 %v4524, %v4523
        %v4528 = vpack.c.b16 %v4526, %v4525
        %4529 = vrot.lane.b32.xlu0 %v4527, 120
        %v4530 = vpop.permute.xlu0 %4529
        %4531 = vrot.lane.b32.xlu0 %v4528, 120
        %v4532 = vpop.permute.xlu0 %4531
        %v4533 = vrot.slane %v4530, 4
        %v4534 = vrot.slane %v4532, 4
        %v4535 = vsel %vm1496, %v4533, %v4530
        %v4536 = vsel %vm436, %v4533, %v4534
        %v4537 = vsel %vm1496, %v4536, %v4532
        %v4541 = vmul.bf16 %v4476, %v4535
        %v4542 = vmul.bf16 %v4477, %v4537
        %v4543 = vmul.bf16 %v4478, %v4534
        %v4547 = vunpack.c.l.b16 %v4541
        %v4548 = vunpack.c.h.b16 %v4541
        %v4549 = vunpack.c.l.b16 %v4542
        %v4550 = vunpack.c.h.b16 %v4542
        %v4551 = vunpack.c.l.b16 %v4543
        %v4552 = vpack.c.b16 %v4547, %v4547
        %v4553 = vpack.c.b16 %v4548, %v4548
        %v4554 = vpack.c.b16 %v4549, %v4549
        %v4555 = vpack.c.b16 %v4550, %v4550
        %v4556 = vpack.c.b16 %v4551, %v4551
        %4557 = vrot.lane.b32.xlu0 %v4552, 8
        %v4558 = vpop.permute.xlu0 %4557
        %4559 = vrot.lane.b32.xlu0 %v4553, 8
        %v4560 = vpop.permute.xlu0 %4559
        %4561 = vrot.lane.b32.xlu0 %v4554, 8
        %v4562 = vpop.permute.xlu0 %4561
        %4563 = vrot.lane.b32.xlu0 %v4555, 8
        %v4564 = vpop.permute.xlu0 %4563
        %4565 = vrot.lane.b32.xlu0 %v4556, 8
        %v4566 = vpop.permute.xlu0 %4565
        %v4567 = vsel %vm1529, %v4558, %v4560
        %v4568 = vsel %vm1529, %v4560, %v4562
        %v4569 = vsel %vm1529, %v4562, %v4564
        %v4570 = vsel %vm1529, %v4564, %v4566
        %4575 = vst [vmem:[#allocation3 + $0xa0] sm:$0xf] %v4567
        %4576 = vst [vmem:[#allocation3 + $0xa8] sm:$0xf] %v4568
        %4577 = vst [vmem:[#allocation3 + $0xb0] sm:$0xf] %v4569
        %4578 = vst [vmem:[#allocation3 + $0xb8] sm:$0xf] %v4570
        %v4579 = vld [vmem:[#allocation2] sm:$0xff]
        %v4580 = vld [vmem:[#allocation2 + $0x8] sm:$0xff]
        %v4581 = vld [vmem:[#allocation2 + $0x10] sm:$0xf]
        %v4582 = vld [vmem:[%s4 + $0x10] sm:$0x22]
        %v4583 = vld [vmem:[%s4 + $0x18] sm:$0x22]
        %v4586 = vunpack.c.l.b16 %v4582
        %v4587 = vunpack.c.h.b16 %v4582
        %v4588 = vunpack.c.l.b16 %v4583
        %v4589 = vunpack.c.h.b16 %v4583
        %v4590 = vpack.c.b16 %v4586, %v4586
        %v4591 = vpack.c.b16 %v4587, %v4587
        %v4592 = vpack.c.b16 %v4588, %v4588
        %v4593 = vpack.c.b16 %v4589, %v4589
        %v4595 = vshrl.u32 %v4590, 16
        %v4596 = vpack.i.b16 %v4595, %v4595
        %v4598 = vlaneseq
        %v4599 = vshrl.u32 %v4598, 7
        %v4600 = vsub.s32 1, %v4599
        %v4601 = vrot.slane %v4596, %v4600
        %v4603 = vshrl.u32 %v4591, 16
        %v4604 = vpack.i.b16 %v4603, %v4603
        %v4606 = vlaneseq
        %v4607 = vshrl.u32 %v4606, 7
        %v4608 = vsub.s32 1, %v4607
        %v4609 = vrot.slane %v4604, %v4608
        %v4611 = vshrl.u32 %v4592, 16
        %v4612 = vpack.i.b16 %v4611, %v4611
        %v4614 = vlaneseq
        %v4615 = vshrl.u32 %v4614, 7
        %v4616 = vsub.s32 1, %v4615
        %v4617 = vrot.slane %v4612, %v4616
        %v4619 = vshrl.u32 %v4593, 16
        %v4620 = vpack.i.b16 %v4619, %v4619
        %v4622 = vlaneseq
        %v4623 = vshrl.u32 %v4622, 7
        %v4624 = vsub.s32 1, %v4623
        %v4625 = vrot.slane %v4620, %v4624
        %v4630 = vunpack.c.l.b16 %v4601
        %v4631 = vunpack.c.l.b16 %v4609
        %v4632 = vunpack.c.l.b16 %v4617
        %v4633 = vunpack.c.l.b16 %v4625
        %v4634 = vpack.c.b16 %v4631, %v4630
        %v4635 = vpack.c.b16 %v4633, %v4632
        %4636 = vrot.lane.b32.xlu0 %v4634, 121
        %v4637 = vpop.permute.xlu0 %4636
        %4638 = vrot.lane.b32.xlu0 %v4635, 121
        %v4639 = vpop.permute.xlu0 %4638
        %v4640 = vrot.slane %v4637, 4
        %v4641 = vrot.slane %v4639, 4
        %v4642 = vsel %vm1605, %v4640, %v4637
        %v4643 = vsel %vm436, %v4640, %v4641
        %v4644 = vsel %vm1605, %v4643, %v4639
        %v4648 = vmul.bf16 %v4579, %v4642
        %v4649 = vmul.bf16 %v4580, %v4644
        %v4650 = vmul.bf16 %v4581, %v4641
        %v4654 = vunpack.c.l.b16 %v4648
        %v4655 = vunpack.c.h.b16 %v4648
        %v4656 = vunpack.c.l.b16 %v4649
        %v4657 = vunpack.c.h.b16 %v4649
        %v4658 = vunpack.c.l.b16 %v4650
        %v4659 = vpack.c.b16 %v4654, %v4654
        %v4660 = vpack.c.b16 %v4655, %v4655
        %v4661 = vpack.c.b16 %v4656, %v4656
        %v4662 = vpack.c.b16 %v4657, %v4657
        %v4663 = vpack.c.b16 %v4658, %v4658
        %4664 = vrot.lane.b32.xlu0 %v4659, 7
        %v4665 = vpop.permute.xlu0 %4664
        %4666 = vrot.lane.b32.xlu0 %v4660, 7
        %v4667 = vpop.permute.xlu0 %4666
        %4668 = vrot.lane.b32.xlu0 %v4661, 7
        %v4669 = vpop.permute.xlu0 %4668
        %4670 = vrot.lane.b32.xlu0 %v4662, 7
        %v4671 = vpop.permute.xlu0 %4670
        %4672 = vrot.lane.b32.xlu0 %v4663, 7
        %v4673 = vpop.permute.xlu0 %4672
        %v4674 = vsel %vm1638, %v4665, %v4667
        %v4675 = vsel %vm1638, %v4667, %v4669
        %v4676 = vsel %vm1638, %v4669, %v4671
        %v4677 = vsel %vm1638, %v4671, %v4673
        %4682 = vst [vmem:[#allocation3 + $0xa0] sm:$0xf0] %v4674
        %4683 = vst [vmem:[#allocation3 + $0xa8] sm:$0xf0] %v4675
        %4684 = vst [vmem:[#allocation3 + $0xb0] sm:$0xf0] %v4676
        %4685 = vst [vmem:[#allocation3 + $0xb8] sm:$0xf0] %v4677
        %v4686 = vld [vmem:[#allocation2] sm:$0xff]
        %v4687 = vld [vmem:[#allocation2 + $0x8] sm:$0xff]
        %v4688 = vld [vmem:[#allocation2 + $0x10] sm:$0xf]
        %v4689 = vld [vmem:[%s4 + $0x10] sm:$0x44]
        %v4690 = vld [vmem:[%s4 + $0x18] sm:$0x44]
        %v4693 = vunpack.c.l.b16 %v4689
        %v4694 = vunpack.c.h.b16 %v4689
        %v4695 = vunpack.c.l.b16 %v4690
        %v4696 = vunpack.c.h.b16 %v4690
        %v4697 = vpack.c.b16 %v4693, %v4693
        %v4698 = vpack.c.b16 %v4694, %v4694
        %v4699 = vpack.c.b16 %v4695, %v4695
        %v4700 = vpack.c.b16 %v4696, %v4696
        %v4702 = vpack.i.b16 %v4697, %v4697
        %v4704 = vlaneseq
        %v4705 = vshrl.u32 %v4704, 7
        %v4706 = vsub.s32 2, %v4705
        %v4707 = vrot.slane %v4702, %v4706
        %v4709 = vpack.i.b16 %v4698, %v4698
        %v4711 = vlaneseq
        %v4712 = vshrl.u32 %v4711, 7
        %v4713 = vsub.s32 2, %v4712
        %v4714 = vrot.slane %v4709, %v4713
        %v4716 = vpack.i.b16 %v4699, %v4699
        %v4718 = vlaneseq
        %v4719 = vshrl.u32 %v4718, 7
        %v4720 = vsub.s32 2, %v4719
        %v4721 = vrot.slane %v4716, %v4720
        %v4723 = vpack.i.b16 %v4700, %v4700
        %v4725 = vlaneseq
        %v4726 = vshrl.u32 %v4725, 7
        %v4727 = vsub.s32 2, %v4726
        %v4728 = vrot.slane %v4723, %v4727
        %v4733 = vunpack.c.l.b16 %v4707
        %v4734 = vunpack.c.l.b16 %v4714
        %v4735 = vunpack.c.l.b16 %v4721
        %v4736 = vunpack.c.l.b16 %v4728
        %v4737 = vpack.c.b16 %v4734, %v4733
        %v4738 = vpack.c.b16 %v4736, %v4735
        %4739 = vrot.lane.b32.xlu0 %v4737, 127
        %v4740 = vpop.permute.xlu0 %4739
        %4741 = vrot.lane.b32.xlu0 %v4738, 127
        %v4742 = vpop.permute.xlu0 %4741
        %v4743 = vrot.slane %v4740, 4
        %v4744 = vrot.slane %v4742, 4
        %v4745 = vsel %vm1710, %v4743, %v4740
        %v4746 = vsel %vm436, %v4743, %v4744
        %v4747 = vsel %vm1710, %v4746, %v4742
        %v4751 = vmul.bf16 %v4686, %v4745
        %v4752 = vmul.bf16 %v4687, %v4747
        %v4753 = vmul.bf16 %v4688, %v4744
        %v4757 = vunpack.c.l.b16 %v4751
        %v4758 = vunpack.c.h.b16 %v4751
        %v4759 = vunpack.c.l.b16 %v4752
        %v4760 = vunpack.c.h.b16 %v4752
        %v4761 = vunpack.c.l.b16 %v4753
        %v4762 = vpack.c.b16 %v4757, %v4757
        %v4763 = vpack.c.b16 %v4758, %v4758
        %v4764 = vpack.c.b16 %v4759, %v4759
        %v4765 = vpack.c.b16 %v4760, %v4760
        %v4766 = vpack.c.b16 %v4761, %v4761
        %4767 = vrot.lane.b32.xlu0 %v4762, 1
        %v4768 = vpop.permute.xlu0 %4767
        %4769 = vrot.lane.b32.xlu0 %v4763, 1
        %v4770 = vpop.permute.xlu0 %4769
        %4771 = vrot.lane.b32.xlu0 %v4764, 1
        %v4772 = vpop.permute.xlu0 %4771
        %4773 = vrot.lane.b32.xlu0 %v4765, 1
        %v4774 = vpop.permute.xlu0 %4773
        %4775 = vrot.lane.b32.xlu0 %v4766, 1
        %v4776 = vpop.permute.xlu0 %4775
        %v4777 = vsel %vm1743, %v4768, %v4770
        %v4778 = vsel %vm1743, %v4770, %v4772
        %v4779 = vsel %vm1743, %v4772, %v4774
        %v4780 = vsel %vm1743, %v4774, %v4776
        %4785 = vst [vmem:[#allocation3 + $0xc0] sm:$0xf] %v4777
        %4786 = vst [vmem:[#allocation3 + $0xc8] sm:$0xf] %v4778
        %4787 = vst [vmem:[#allocation3 + $0xd0] sm:$0xf] %v4779
        %4788 = vst [vmem:[#allocation3 + $0xd8] sm:$0xf] %v4780
        %v4789 = vld [vmem:[#allocation2 + $0x4] sm:$0xff]
        %v4790 = vld [vmem:[#allocation2 + $0xc] sm:$0xff]
        %v4793 = vunpack.c.l.b16 %v4789
        %v4794 = vunpack.c.h.b16 %v4789
        %v4795 = vunpack.c.l.b16 %v4790
        %v4796 = vunpack.c.h.b16 %v4790
        %v4797 = vpack.c.b16 %v4793, %v4793
        %v4798 = vpack.c.b16 %v4794, %v4794
        %v4799 = vpack.c.b16 %v4795, %v4795
        %v4800 = vpack.c.b16 %v4796, %v4796
        %4805 = vst [vmem:[#allocation3 + $0xc0] sm:$0xf0] %v4797
        %4806 = vst [vmem:[#allocation3 + $0xc8] sm:$0xf0] %v4798
        %4807 = vst [vmem:[#allocation3 + $0xd0] sm:$0xf0] %v4799
        %4808 = vst [vmem:[#allocation3 + $0xd8] sm:$0xf0] %v4800
        %v4809 = vld [vmem:[#allocation2 + $0x4] sm:$0xff]
        %v4810 = vld [vmem:[#allocation2 + $0xc] sm:$0xff]
        %v4811 = vld [vmem:[#allocation2 + $0x14] sm:$0xf]
        %v4812 = vld [vmem:[%s4 + $0x10] sm:$0x88]
        %v4813 = vld [vmem:[%s4 + $0x18] sm:$0x88]
        %v4816 = vunpack.c.l.b16 %v4812
        %v4817 = vunpack.c.h.b16 %v4812
        %v4818 = vunpack.c.l.b16 %v4813
        %v4819 = vunpack.c.h.b16 %v4813
        %v4820 = vpack.c.b16 %v4816, %v4816
        %v4821 = vpack.c.b16 %v4817, %v4817
        %v4822 = vpack.c.b16 %v4818, %v4818
        %v4823 = vpack.c.b16 %v4819, %v4819
        %v4825 = vpack.i.b16 %v4820, %v4820
        %v4827 = vlaneseq
        %v4828 = vshrl.u32 %v4827, 7
        %v4829 = vsub.s32 3, %v4828
        %v4830 = vrot.slane %v4825, %v4829
        %v4832 = vpack.i.b16 %v4821, %v4821
        %v4834 = vlaneseq
        %v4835 = vshrl.u32 %v4834, 7
        %v4836 = vsub.s32 3, %v4835
        %v4837 = vrot.slane %v4832, %v4836
        %v4839 = vpack.i.b16 %v4822, %v4822
        %v4841 = vlaneseq
        %v4842 = vshrl.u32 %v4841, 7
        %v4843 = vsub.s32 3, %v4842
        %v4844 = vrot.slane %v4839, %v4843
        %v4846 = vpack.i.b16 %v4823, %v4823
        %v4848 = vlaneseq
        %v4849 = vshrl.u32 %v4848, 7
        %v4850 = vsub.s32 3, %v4849
        %v4851 = vrot.slane %v4846, %v4850
        %v4856 = vunpack.c.l.b16 %v4830
        %v4857 = vunpack.c.l.b16 %v4837
        %v4858 = vunpack.c.l.b16 %v4844
        %v4859 = vunpack.c.l.b16 %v4851
        %v4860 = vpack.c.b16 %v4857, %v4856
        %v4861 = vpack.c.b16 %v4859, %v4858
        %4862 = vrot.lane.b32.xlu0 %v4860, 1
        %v4863 = vpop.permute.xlu0 %4862
        %4864 = vrot.lane.b32.xlu0 %v4861, 1
        %v4865 = vpop.permute.xlu0 %4864
        %v4866 = vrot.slane %v4863, 4
        %v4867 = vrot.slane %v4865, 4
        %v4868 = vsel %vm1743, %v4866, %v4863
        %v4869 = vsel %vm436, %v4866, %v4867
        %v4870 = vsel %vm1743, %v4869, %v4865
        %v4874 = vmul.bf16 %v4809, %v4868
        %v4875 = vmul.bf16 %v4810, %v4870
        %v4876 = vmul.bf16 %v4811, %v4867
        %v4880 = vunpack.c.l.b16 %v4874
        %v4881 = vunpack.c.h.b16 %v4874
        %v4882 = vunpack.c.l.b16 %v4875
        %v4883 = vunpack.c.h.b16 %v4875
        %v4884 = vunpack.c.l.b16 %v4876
        %v4885 = vpack.c.b16 %v4880, %v4880
        %v4886 = vpack.c.b16 %v4881, %v4881
        %v4887 = vpack.c.b16 %v4882, %v4882
        %v4888 = vpack.c.b16 %v4883, %v4883
        %v4889 = vpack.c.b16 %v4884, %v4884
        %4890 = vrot.lane.b32.xlu0 %v4885, 127
        %v4891 = vpop.permute.xlu0 %4890
        %4892 = vrot.lane.b32.xlu0 %v4886, 127
        %v4893 = vpop.permute.xlu0 %4892
        %4894 = vrot.lane.b32.xlu0 %v4887, 127
        %v4895 = vpop.permute.xlu0 %4894
        %4896 = vrot.lane.b32.xlu0 %v4888, 127
        %v4897 = vpop.permute.xlu0 %4896
        %4898 = vrot.lane.b32.xlu0 %v4889, 127
        %v4899 = vpop.permute.xlu0 %4898
        %v4900 = vsel %vm1710, %v4891, %v4893
        %v4901 = vsel %vm1710, %v4893, %v4895
        %v4902 = vsel %vm1710, %v4895, %v4897
        %v4903 = vsel %vm1710, %v4897, %v4899
        %4908 = vst [vmem:[#allocation3 + $0xe0] sm:$0xf] %v4900
        %4909 = vst [vmem:[#allocation3 + $0xe8] sm:$0xf] %v4901
        %4910 = vst [vmem:[#allocation3 + $0xf0] sm:$0xf] %v4902
        %4911 = vst [vmem:[#allocation3 + $0xf8] sm:$0xf] %v4903
        %v4912 = vld [vmem:[#allocation2 + $0x4] sm:$0xff]
        %v4913 = vld [vmem:[#allocation2 + $0xc] sm:$0xff]
        %v4914 = vld [vmem:[#allocation2 + $0x14] sm:$0xf]
        %v4915 = vld [vmem:[%s4 + $0x10] sm:$0x88]
        %v4916 = vld [vmem:[%s4 + $0x18] sm:$0x88]
        %v4919 = vunpack.c.l.b16 %v4915
        %v4920 = vunpack.c.h.b16 %v4915
        %v4921 = vunpack.c.l.b16 %v4916
        %v4922 = vunpack.c.h.b16 %v4916
        %v4923 = vpack.c.b16 %v4919, %v4919
        %v4924 = vpack.c.b16 %v4920, %v4920
        %v4925 = vpack.c.b16 %v4921, %v4921
        %v4926 = vpack.c.b16 %v4922, %v4922
        %v4928 = vshrl.u32 %v4923, 16
        %v4929 = vpack.i.b16 %v4928, %v4928
        %v4931 = vlaneseq
        %v4932 = vshrl.u32 %v4931, 7
        %v4933 = vsub.s32 3, %v4932
        %v4934 = vrot.slane %v4929, %v4933
        %v4936 = vshrl.u32 %v4924, 16
        %v4937 = vpack.i.b16 %v4936, %v4936
        %v4939 = vlaneseq
        %v4940 = vshrl.u32 %v4939, 7
        %v4941 = vsub.s32 3, %v4940
        %v4942 = vrot.slane %v4937, %v4941
        %v4944 = vshrl.u32 %v4925, 16
        %v4945 = vpack.i.b16 %v4944, %v4944
        %v4947 = vlaneseq
        %v4948 = vshrl.u32 %v4947, 7
        %v4949 = vsub.s32 3, %v4948
        %v4950 = vrot.slane %v4945, %v4949
        %v4952 = vshrl.u32 %v4926, 16
        %v4953 = vpack.i.b16 %v4952, %v4952
        %v4955 = vlaneseq
        %v4956 = vshrl.u32 %v4955, 7
        %v4957 = vsub.s32 3, %v4956
        %v4958 = vrot.slane %v4953, %v4957
        %v4963 = vunpack.c.l.b16 %v4934
        %v4964 = vunpack.c.l.b16 %v4942
        %v4965 = vunpack.c.l.b16 %v4950
        %v4966 = vunpack.c.l.b16 %v4958
        %v4967 = vpack.c.b16 %v4964, %v4963
        %v4968 = vpack.c.b16 %v4966, %v4965
        %4969 = vrot.lane.b32.xlu0 %v4967, 7
        %v4970 = vpop.permute.xlu0 %4969
        %4971 = vrot.lane.b32.xlu0 %v4968, 7
        %v4972 = vpop.permute.xlu0 %4971
        %v4973 = vrot.slane %v4970, 4
        %v4974 = vrot.slane %v4972, 4
        %v4975 = vsel %vm1638, %v4973, %v4970
        %v4976 = vsel %vm436, %v4973, %v4974
        %v4977 = vsel %vm1638, %v4976, %v4972
        %v4981 = vmul.bf16 %v4912, %v4975
        %v4982 = vmul.bf16 %v4913, %v4977
        %v4983 = vmul.bf16 %v4914, %v4974
        %v4987 = vunpack.c.l.b16 %v4981
        %v4988 = vunpack.c.h.b16 %v4981
        %v4989 = vunpack.c.l.b16 %v4982
        %v4990 = vunpack.c.h.b16 %v4982
        %v4991 = vunpack.c.l.b16 %v4983
        %v4992 = vpack.c.b16 %v4987, %v4987
        %v4993 = vpack.c.b16 %v4988, %v4988
        %v4994 = vpack.c.b16 %v4989, %v4989
        %v4995 = vpack.c.b16 %v4990, %v4990
        %v4996 = vpack.c.b16 %v4991, %v4991
        %4997 = vrot.lane.b32.xlu0 %v4992, 121
        %v4998 = vpop.permute.xlu0 %4997
        %4999 = vrot.lane.b32.xlu0 %v4993, 121
        %v5000 = vpop.permute.xlu0 %4999
        %5001 = vrot.lane.b32.xlu0 %v4994, 121
        %v5002 = vpop.permute.xlu0 %5001
        %5003 = vrot.lane.b32.xlu0 %v4995, 121
        %v5004 = vpop.permute.xlu0 %5003
        %5005 = vrot.lane.b32.xlu0 %v4996, 121
        %v5006 = vpop.permute.xlu0 %5005
        %v5007 = vsel %vm1605, %v4998, %v5000
        %v5008 = vsel %vm1605, %v5000, %v5002
        %v5009 = vsel %vm1605, %v5002, %v5004
        %v5010 = vsel %vm1605, %v5004, %v5006
        %5015 = vst [vmem:[#allocation3 + $0xe0] sm:$0xf0] %v5007
        %5016 = vst [vmem:[#allocation3 + $0xe8] sm:$0xf0] %v5008
        %5017 = vst [vmem:[#allocation3 + $0xf0] sm:$0xf0] %v5009
        %5018 = vst [vmem:[#allocation3 + $0xf8] sm:$0xf0] %v5010
        %v5019 = vld [vmem:[%s2] sm:$0xf]
        %v5020 = vld [vmem:[#allocation3] sm:$0xff]
        %v5021 = vld [vmem:[#allocation3 + $0x8] sm:$0xff]
        %v5022 = vld [vmem:[#allocation3 + $0x10] sm:$0xff]
        %v5023 = vld [vmem:[#allocation3 + $0x18] sm:$0xff]
        %v5024 = vld [vmem:[#allocation3 + $0x20] sm:$0xff]
        %v5025 = vld [vmem:[#allocation3 + $0x28] sm:$0xff]
        %v5026 = vld [vmem:[#allocation3 + $0x30] sm:$0xff]
        %v5027 = vld [vmem:[#allocation3 + $0x38] sm:$0xff]
        %v5028 = vld [vmem:[#allocation3 + $0x40] sm:$0xff]
        %v5029 = vld [vmem:[#allocation3 + $0x48] sm:$0xff]
        %v5030 = vld [vmem:[#allocation3 + $0x50] sm:$0xff]
        %v5031 = vld [vmem:[#allocation3 + $0x58] sm:$0xff]
        %v5032 = vld [vmem:[#allocation3 + $0x60] sm:$0xff]
        %v5033 = vld [vmem:[#allocation3 + $0x68] sm:$0xff]
        %v5034 = vld [vmem:[#allocation3 + $0x70] sm:$0xff]
        %v5035 = vld [vmem:[#allocation3 + $0x78] sm:$0xff]
        %v5036 = vld [vmem:[#allocation3 + $0x80] sm:$0xff]
        %v5037 = vld [vmem:[#allocation3 + $0x88] sm:$0xff]
        %v5038 = vld [vmem:[#allocation3 + $0x90] sm:$0xff]
        %v5039 = vld [vmem:[#allocation3 + $0x98] sm:$0xff]
        %v5040 = vld [vmem:[#allocation3 + $0xa0] sm:$0xff]
        %v5041 = vld [vmem:[#allocation3 + $0xa8] sm:$0xff]
        %v5042 = vld [vmem:[#allocation3 + $0xb0] sm:$0xff]
        %v5043 = vld [vmem:[#allocation3 + $0xb8] sm:$0xff]
        %v5044 = vld [vmem:[#allocation3 + $0xc0] sm:$0xff]
        %v5045 = vld [vmem:[#allocation3 + $0xc8] sm:$0xff]
        %v5046 = vld [vmem:[#allocation3 + $0xd0] sm:$0xff]
        %v5047 = vld [vmem:[#allocation3 + $0xd8] sm:$0xff]
        %v5048 = vld [vmem:[#allocation3 + $0xe0] sm:$0xff]
        %v5049 = vld [vmem:[#allocation3 + $0xe8] sm:$0xff]
        %v5050 = vld [vmem:[#allocation3 + $0xf0] sm:$0xff]
        %v5051 = vld [vmem:[#allocation3 + $0xf8] sm:$0xff]
        %v5052 = vld [vmem:[#allocation2 + $0x4] sm:$0xff]
        %v5053 = vld [vmem:[#allocation2 + $0xc] sm:$0xff]
        %v5054 = vld [vmem:[#allocation2 + $0x14] sm:$0xf]
        %v5055 = vld [vmem:[%s4 + $0x20] sm:$0x11]
        %v5056 = vld [vmem:[%s4 + $0x28] sm:$0x11]
        %v5059 = vunpack.c.l.b16 %v5055
        %v5060 = vunpack.c.h.b16 %v5055
        %v5061 = vunpack.c.l.b16 %v5056
        %v5062 = vunpack.c.h.b16 %v5056
        %v5063 = vpack.c.b16 %v5059, %v5059
        %v5064 = vpack.c.b16 %v5060, %v5060
        %v5065 = vpack.c.b16 %v5061, %v5061
        %v5066 = vpack.c.b16 %v5062, %v5062
        %v5068 = vpack.i.b16 %v5063, %v5063
        %v5070 = vlaneseq
        %v5071 = vshrl.u32 %v5070, 7
        %v5072 = vsub.s32 0, %v5071
        %v5073 = vrot.slane %v5068, %v5072
        %v5075 = vpack.i.b16 %v5064, %v5064
        %v5077 = vlaneseq
        %v5078 = vshrl.u32 %v5077, 7
        %v5079 = vsub.s32 0, %v5078
        %v5080 = vrot.slane %v5075, %v5079
        %v5082 = vpack.i.b16 %v5065, %v5065
        %v5084 = vlaneseq
        %v5085 = vshrl.u32 %v5084, 7
        %v5086 = vsub.s32 0, %v5085
        %v5087 = vrot.slane %v5082, %v5086
        %v5089 = vpack.i.b16 %v5066, %v5066
        %v5091 = vlaneseq
        %v5092 = vshrl.u32 %v5091, 7
        %v5093 = vsub.s32 0, %v5092
        %v5094 = vrot.slane %v5089, %v5093
        %v5099 = vunpack.c.l.b16 %v5073
        %v5100 = vunpack.c.l.b16 %v5080
        %v5101 = vunpack.c.l.b16 %v5087
        %v5102 = vunpack.c.l.b16 %v5094
        %v5103 = vpack.c.b16 %v5100, %v5099
        %v5104 = vpack.c.b16 %v5102, %v5101
        %5105 = vrot.lane.b32.xlu0 %v5103, 8
        %v5106 = vpop.permute.xlu0 %5105
        %5107 = vrot.lane.b32.xlu0 %v5104, 8
        %v5108 = vpop.permute.xlu0 %5107
        %v5109 = vrot.slane %v5106, 4
        %v5110 = vrot.slane %v5108, 4
        %v5111 = vsel %vm1529, %v5109, %v5106
        %v5112 = vsel %vm436, %v5109, %v5110
        %v5113 = vsel %vm1529, %v5112, %v5108
        %v5117 = vmul.bf16 %v5052, %v5111
        %v5118 = vmul.bf16 %v5053, %v5113
        %v5119 = vmul.bf16 %v5054, %v5110
        %v5123 = vunpack.c.l.b16 %v5117
        %v5124 = vunpack.c.h.b16 %v5117
        %v5125 = vunpack.c.l.b16 %v5118
        %v5126 = vunpack.c.h.b16 %v5118
        %v5127 = vunpack.c.l.b16 %v5119
        %v5128 = vpack.c.b16 %v5123, %v5123
        %v5129 = vpack.c.b16 %v5124, %v5124
        %v5130 = vpack.c.b16 %v5125, %v5125
        %v5131 = vpack.c.b16 %v5126, %v5126
        %v5132 = vpack.c.b16 %v5127, %v5127
        %5133 = vrot.lane.b32.xlu0 %v5128, 120
        %v5134 = vpop.permute.xlu0 %5133
        %5135 = vrot.lane.b32.xlu0 %v5129, 120
        %v5136 = vpop.permute.xlu0 %5135
        %5137 = vrot.lane.b32.xlu0 %v5130, 120
        %v5138 = vpop.permute.xlu0 %5137
        %5139 = vrot.lane.b32.xlu0 %v5131, 120
        %v5140 = vpop.permute.xlu0 %5139
        %5141 = vrot.lane.b32.xlu0 %v5132, 120
        %v5142 = vpop.permute.xlu0 %5141
        %v5143 = vsel %vm1496, %v5134, %v5136
        %v5144 = vsel %vm1496, %v5136, %v5138
        %v5145 = vsel %vm1496, %v5138, %v5140
        %v5146 = vsel %vm1496, %v5140, %v5142
        %5151 = vst [vmem:[#allocation3] sm:$0xf] %v5143
        %5152 = vst [vmem:[#allocation3 + $0x8] sm:$0xf] %v5144
        %5153 = vst [vmem:[#allocation3 + $0x10] sm:$0xf] %v5145
        %5154 = vst [vmem:[#allocation3 + $0x18] sm:$0xf] %v5146
        %v5155 = vld [vmem:[#allocation2 + $0x4] sm:$0xff]
        %v5156 = vld [vmem:[#allocation2 + $0xc] sm:$0xff]
        %v5157 = vld [vmem:[#allocation2 + $0x14] sm:$0xf]
        %v5158 = vld [vmem:[%s4 + $0x20] sm:$0x11]
        %v5159 = vld [vmem:[%s4 + $0x28] sm:$0x11]
        %v5162 = vunpack.c.l.b16 %v5158
        %v5163 = vunpack.c.h.b16 %v5158
        %v5164 = vunpack.c.l.b16 %v5159
        %v5165 = vunpack.c.h.b16 %v5159
        %v5166 = vpack.c.b16 %v5162, %v5162
        %v5167 = vpack.c.b16 %v5163, %v5163
        %v5168 = vpack.c.b16 %v5164, %v5164
        %v5169 = vpack.c.b16 %v5165, %v5165
        %v5171 = vshrl.u32 %v5166, 16
        %v5172 = vpack.i.b16 %v5171, %v5171
        %v5174 = vlaneseq
        %v5175 = vshrl.u32 %v5174, 7
        %v5176 = vsub.s32 0, %v5175
        %v5177 = vrot.slane %v5172, %v5176
        %v5179 = vshrl.u32 %v5167, 16
        %v5180 = vpack.i.b16 %v5179, %v5179
        %v5182 = vlaneseq
        %v5183 = vshrl.u32 %v5182, 7
        %v5184 = vsub.s32 0, %v5183
        %v5185 = vrot.slane %v5180, %v5184
        %v5187 = vshrl.u32 %v5168, 16
        %v5188 = vpack.i.b16 %v5187, %v5187
        %v5190 = vlaneseq
        %v5191 = vshrl.u32 %v5190, 7
        %v5192 = vsub.s32 0, %v5191
        %v5193 = vrot.slane %v5188, %v5192
        %v5195 = vshrl.u32 %v5169, 16
        %v5196 = vpack.i.b16 %v5195, %v5195
        %v5198 = vlaneseq
        %v5199 = vshrl.u32 %v5198, 7
        %v5200 = vsub.s32 0, %v5199
        %v5201 = vrot.slane %v5196, %v5200
        %v5206 = vunpack.c.l.b16 %v5177
        %v5207 = vunpack.c.l.b16 %v5185
        %v5208 = vunpack.c.l.b16 %v5193
        %v5209 = vunpack.c.l.b16 %v5201
        %v5210 = vpack.c.b16 %v5207, %v5206
        %v5211 = vpack.c.b16 %v5209, %v5208
        %5212 = vrot.lane.b32.xlu0 %v5210, 9
        %v5213 = vpop.permute.xlu0 %5212
        %5214 = vrot.lane.b32.xlu0 %v5211, 9
        %v5215 = vpop.permute.xlu0 %5214
        %v5216 = vrot.slane %v5213, 4
        %v5217 = vrot.slane %v5215, 4
        %v5218 = vsel %vm1424, %v5216, %v5213
        %v5219 = vsel %vm436, %v5216, %v5217
        %v5220 = vsel %vm1424, %v5219, %v5215
        %v5224 = vmul.bf16 %v5155, %v5218
        %v5225 = vmul.bf16 %v5156, %v5220
        %v5226 = vmul.bf16 %v5157, %v5217
        %v5230 = vunpack.c.l.b16 %v5224
        %v5231 = vunpack.c.h.b16 %v5224
        %v5232 = vunpack.c.l.b16 %v5225
        %v5233 = vunpack.c.h.b16 %v5225
        %v5234 = vunpack.c.l.b16 %v5226
        %v5235 = vpack.c.b16 %v5230, %v5230
        %v5236 = vpack.c.b16 %v5231, %v5231
        %v5237 = vpack.c.b16 %v5232, %v5232
        %v5238 = vpack.c.b16 %v5233, %v5233
        %v5239 = vpack.c.b16 %v5234, %v5234
        %5240 = vrot.lane.b32.xlu0 %v5235, 119
        %v5241 = vpop.permute.xlu0 %5240
        %5242 = vrot.lane.b32.xlu0 %v5236, 119
        %v5243 = vpop.permute.xlu0 %5242
        %5244 = vrot.lane.b32.xlu0 %v5237, 119
        %v5245 = vpop.permute.xlu0 %5244
        %5246 = vrot.lane.b32.xlu0 %v5238, 119
        %v5247 = vpop.permute.xlu0 %5246
        %5248 = vrot.lane.b32.xlu0 %v5239, 119
        %v5249 = vpop.permute.xlu0 %5248
        %v5250 = vsel %vm1391, %v5241, %v5243
        %v5251 = vsel %vm1391, %v5243, %v5245
        %v5252 = vsel %vm1391, %v5245, %v5247
        %v5253 = vsel %vm1391, %v5247, %v5249
        %5258 = vst [vmem:[#allocation3] sm:$0xf0] %v5250
        %5259 = vst [vmem:[#allocation3 + $0x8] sm:$0xf0] %v5251
        %5260 = vst [vmem:[#allocation3 + $0x10] sm:$0xf0] %v5252
        %5261 = vst [vmem:[#allocation3 + $0x18] sm:$0xf0] %v5253
        %v5262 = vld [vmem:[#allocation2 + $0x4] sm:$0xff]
        %v5263 = vld [vmem:[#allocation2 + $0xc] sm:$0xff]
        %v5264 = vld [vmem:[#allocation2 + $0x14] sm:$0xf]
        %v5265 = vld [vmem:[%s4 + $0x20] sm:$0x22]
        %v5266 = vld [vmem:[%s4 + $0x28] sm:$0x22]
        %v5269 = vunpack.c.l.b16 %v5265
        %v5270 = vunpack.c.h.b16 %v5265
        %v5271 = vunpack.c.l.b16 %v5266
        %v5272 = vunpack.c.h.b16 %v5266
        %v5273 = vpack.c.b16 %v5269, %v5269
        %v5274 = vpack.c.b16 %v5270, %v5270
        %v5275 = vpack.c.b16 %v5271, %v5271
        %v5276 = vpack.c.b16 %v5272, %v5272
        %v5278 = vpack.i.b16 %v5273, %v5273
        %v5280 = vlaneseq
        %v5281 = vshrl.u32 %v5280, 7
        %v5282 = vsub.s32 1, %v5281
        %v5283 = vrot.slane %v5278, %v5282
        %v5285 = vpack.i.b16 %v5274, %v5274
        %v5287 = vlaneseq
        %v5288 = vshrl.u32 %v5287, 7
        %v5289 = vsub.s32 1, %v5288
        %v5290 = vrot.slane %v5285, %v5289
        %v5292 = vpack.i.b16 %v5275, %v5275
        %v5294 = vlaneseq
        %v5295 = vshrl.u32 %v5294, 7
        %v5296 = vsub.s32 1, %v5295
        %v5297 = vrot.slane %v5292, %v5296
        %v5299 = vpack.i.b16 %v5276, %v5276
        %v5301 = vlaneseq
        %v5302 = vshrl.u32 %v5301, 7
        %v5303 = vsub.s32 1, %v5302
        %v5304 = vrot.slane %v5299, %v5303
        %v5309 = vunpack.c.l.b16 %v5283
        %v5310 = vunpack.c.l.b16 %v5290
        %v5311 = vunpack.c.l.b16 %v5297
        %v5312 = vunpack.c.l.b16 %v5304
        %v5313 = vpack.c.b16 %v5310, %v5309
        %v5314 = vpack.c.b16 %v5312, %v5311
        %5315 = vrot.lane.b32.xlu0 %v5313, 55
        %v5316 = vpop.permute.xlu0 %5315
        %5317 = vrot.lane.b32.xlu0 %v5314, 55
        %v5318 = vpop.permute.xlu0 %5317
        %v5319 = vrot.slane %v5316, 4
        %v5320 = vrot.slane %v5318, 4
        %v5321 = vsel %vm434, %v5319, %v5316
        %v5322 = vsel %vm436, %v5319, %v5320
        %v5323 = vsel %vm434, %v5322, %v5318
        %v5327 = vmul.bf16 %v5262, %v5321
        %v5328 = vmul.bf16 %v5263, %v5323
        %v5329 = vmul.bf16 %v5264, %v5320
        %v5333 = vunpack.c.l.b16 %v5327
        %v5334 = vunpack.c.h.b16 %v5327
        %v5335 = vunpack.c.l.b16 %v5328
        %v5336 = vunpack.c.h.b16 %v5328
        %v5337 = vunpack.c.l.b16 %v5329
        %v5338 = vpack.c.b16 %v5333, %v5333
        %v5339 = vpack.c.b16 %v5334, %v5334
        %v5340 = vpack.c.b16 %v5335, %v5335
        %v5341 = vpack.c.b16 %v5336, %v5336
        %v5342 = vpack.c.b16 %v5337, %v5337
        %5343 = vrot.lane.b32.xlu0 %v5338, 73
        %v5344 = vpop.permute.xlu0 %5343
        %5345 = vrot.lane.b32.xlu0 %v5339, 73
        %v5346 = vpop.permute.xlu0 %5345
        %5347 = vrot.lane.b32.xlu0 %v5340, 73
        %v5348 = vpop.permute.xlu0 %5347
        %5349 = vrot.lane.b32.xlu0 %v5341, 73
        %v5350 = vpop.permute.xlu0 %5349
        %5351 = vrot.lane.b32.xlu0 %v5342, 73
        %v5352 = vpop.permute.xlu0 %5351
        %v5353 = vsel %vm468, %v5344, %v5346
        %v5354 = vsel %vm468, %v5346, %v5348
        %v5355 = vsel %vm468, %v5348, %v5350
        %v5356 = vsel %vm468, %v5350, %v5352
        %5361 = vst [vmem:[#allocation3 + $0x20] sm:$0xf] %v5353
        %5362 = vst [vmem:[#allocation3 + $0x28] sm:$0xf] %v5354
        %5363 = vst [vmem:[#allocation3 + $0x30] sm:$0xf] %v5355
        %5364 = vst [vmem:[#allocation3 + $0x38] sm:$0xf] %v5356
        %v5365 = vld [vmem:[#allocation2 + $0x4] sm:$0xff]
        %v5366 = vld [vmem:[#allocation2 + $0xc] sm:$0xff]
        %v5367 = vld [vmem:[#allocation2 + $0x14] sm:$0xf]
        %v5368 = vld [vmem:[%s4 + $0x20] sm:$0x22]
        %v5369 = vld [vmem:[%s4 + $0x28] sm:$0x22]
        %v5372 = vunpack.c.l.b16 %v5368
        %v5373 = vunpack.c.h.b16 %v5368
        %v5374 = vunpack.c.l.b16 %v5369
        %v5375 = vunpack.c.h.b16 %v5369
        %v5376 = vpack.c.b16 %v5372, %v5372
        %v5377 = vpack.c.b16 %v5373, %v5373
        %v5378 = vpack.c.b16 %v5374, %v5374
        %v5379 = vpack.c.b16 %v5375, %v5375
        %v5381 = vshrl.u32 %v5376, 16
        %v5382 = vpack.i.b16 %v5381, %v5381
        %v5384 = vlaneseq
        %v5385 = vshrl.u32 %v5384, 7
        %v5386 = vsub.s32 1, %v5385
        %v5387 = vrot.slane %v5382, %v5386
        %v5389 = vshrl.u32 %v5377, 16
        %v5390 = vpack.i.b16 %v5389, %v5389
        %v5392 = vlaneseq
        %v5393 = vshrl.u32 %v5392, 7
        %v5394 = vsub.s32 1, %v5393
        %v5395 = vrot.slane %v5390, %v5394
        %v5397 = vshrl.u32 %v5378, 16
        %v5398 = vpack.i.b16 %v5397, %v5397
        %v5400 = vlaneseq
        %v5401 = vshrl.u32 %v5400, 7
        %v5402 = vsub.s32 1, %v5401
        %v5403 = vrot.slane %v5398, %v5402
        %v5405 = vshrl.u32 %v5379, 16
        %v5406 = vpack.i.b16 %v5405, %v5405
        %v5408 = vlaneseq
        %v5409 = vshrl.u32 %v5408, 7
        %v5410 = vsub.s32 1, %v5409
        %v5411 = vrot.slane %v5406, %v5410
        %v5416 = vunpack.c.l.b16 %v5387
        %v5417 = vunpack.c.l.b16 %v5395
        %v5418 = vunpack.c.l.b16 %v5403
        %v5419 = vunpack.c.l.b16 %v5411
        %v5420 = vpack.c.b16 %v5417, %v5416
        %v5421 = vpack.c.b16 %v5419, %v5418
        %5422 = vrot.lane.b32.xlu0 %v5420, 56
        %v5423 = vpop.permute.xlu0 %5422
        %5424 = vrot.lane.b32.xlu0 %v5421, 56
        %v5425 = vpop.permute.xlu0 %5424
        %v5426 = vrot.slane %v5423, 4
        %v5427 = vrot.slane %v5425, 4
        %v5428 = vsel %vm544, %v5426, %v5423
        %v5429 = vsel %vm436, %v5426, %v5427
        %v5430 = vsel %vm544, %v5429, %v5425
        %v5434 = vmul.bf16 %v5365, %v5428
        %v5435 = vmul.bf16 %v5366, %v5430
        %v5436 = vmul.bf16 %v5367, %v5427
        %v5440 = vunpack.c.l.b16 %v5434
        %v5441 = vunpack.c.h.b16 %v5434
        %v5442 = vunpack.c.l.b16 %v5435
        %v5443 = vunpack.c.h.b16 %v5435
        %v5444 = vunpack.c.l.b16 %v5436
        %v5445 = vpack.c.b16 %v5440, %v5440
        %v5446 = vpack.c.b16 %v5441, %v5441
        %v5447 = vpack.c.b16 %v5442, %v5442
        %v5448 = vpack.c.b16 %v5443, %v5443
        %v5449 = vpack.c.b16 %v5444, %v5444
        %5450 = vrot.lane.b32.xlu0 %v5445, 72
        %v5451 = vpop.permute.xlu0 %5450
        %5452 = vrot.lane.b32.xlu0 %v5446, 72
        %v5453 = vpop.permute.xlu0 %5452
        %5454 = vrot.lane.b32.xlu0 %v5447, 72
        %v5455 = vpop.permute.xlu0 %5454
        %5456 = vrot.lane.b32.xlu0 %v5448, 72
        %v5457 = vpop.permute.xlu0 %5456
        %5458 = vrot.lane.b32.xlu0 %v5449, 72
        %v5459 = vpop.permute.xlu0 %5458
        %v5460 = vsel %vm577, %v5451, %v5453
        %v5461 = vsel %vm577, %v5453, %v5455
        %v5462 = vsel %vm577, %v5455, %v5457
        %v5463 = vsel %vm577, %v5457, %v5459
        %5468 = vst [vmem:[#allocation3 + $0x20] sm:$0xf0] %v5460
        %5469 = vst [vmem:[#allocation3 + $0x28] sm:$0xf0] %v5461
        %5470 = vst [vmem:[#allocation3 + $0x30] sm:$0xf0] %v5462
        %5471 = vst [vmem:[#allocation3 + $0x38] sm:$0xf0] %v5463
        %v5472 = vld [vmem:[#allocation2 + $0x4] sm:$0xff]
        %v5473 = vld [vmem:[#allocation2 + $0xc] sm:$0xff]
        %v5474 = vld [vmem:[#allocation2 + $0x14] sm:$0xf]
        %v5475 = vld [vmem:[%s4 + $0x20] sm:$0x44]
        %v5476 = vld [vmem:[%s4 + $0x28] sm:$0x44]
        %v5479 = vunpack.c.l.b16 %v5475
        %v5480 = vunpack.c.h.b16 %v5475
        %v5481 = vunpack.c.l.b16 %v5476
        %v5482 = vunpack.c.h.b16 %v5476
        %v5483 = vpack.c.b16 %v5479, %v5479
        %v5484 = vpack.c.b16 %v5480, %v5480
        %v5485 = vpack.c.b16 %v5481, %v5481
        %v5486 = vpack.c.b16 %v5482, %v5482
        %v5488 = vpack.i.b16 %v5483, %v5483
        %v5490 = vlaneseq
        %v5491 = vshrl.u32 %v5490, 7
        %v5492 = vsub.s32 2, %v5491
        %v5493 = vrot.slane %v5488, %v5492
        %v5495 = vpack.i.b16 %v5484, %v5484
        %v5497 = vlaneseq
        %v5498 = vshrl.u32 %v5497, 7
        %v5499 = vsub.s32 2, %v5498
        %v5500 = vrot.slane %v5495, %v5499
        %v5502 = vpack.i.b16 %v5485, %v5485
        %v5504 = vlaneseq
        %v5505 = vshrl.u32 %v5504, 7
        %v5506 = vsub.s32 2, %v5505
        %v5507 = vrot.slane %v5502, %v5506
        %v5509 = vpack.i.b16 %v5486, %v5486
        %v5511 = vlaneseq
        %v5512 = vshrl.u32 %v5511, 7
        %v5513 = vsub.s32 2, %v5512
        %v5514 = vrot.slane %v5509, %v5513
        %v5519 = vunpack.c.l.b16 %v5493
        %v5520 = vunpack.c.l.b16 %v5500
        %v5521 = vunpack.c.l.b16 %v5507
        %v5522 = vunpack.c.l.b16 %v5514
        %v5523 = vpack.c.b16 %v5520, %v5519
        %v5524 = vpack.c.b16 %v5522, %v5521
        %5525 = vrot.lane.b32.xlu0 %v5523, 57
        %v5526 = vpop.permute.xlu0 %5525
        %5527 = vrot.lane.b32.xlu0 %v5524, 57
        %v5528 = vpop.permute.xlu0 %5527
        %v5529 = vrot.slane %v5526, 4
        %v5530 = vrot.slane %v5528, 4
        %v5531 = vsel %vm649, %v5529, %v5526
        %v5532 = vsel %vm436, %v5529, %v5530
        %v5533 = vsel %vm649, %v5532, %v5528
        %v5537 = vmul.bf16 %v5472, %v5531
        %v5538 = vmul.bf16 %v5473, %v5533
        %v5539 = vmul.bf16 %v5474, %v5530
        %v5543 = vunpack.c.l.b16 %v5537
        %v5544 = vunpack.c.h.b16 %v5537
        %v5545 = vunpack.c.l.b16 %v5538
        %v5546 = vunpack.c.h.b16 %v5538
        %v5547 = vunpack.c.l.b16 %v5539
        %v5548 = vpack.c.b16 %v5543, %v5543
        %v5549 = vpack.c.b16 %v5544, %v5544
        %v5550 = vpack.c.b16 %v5545, %v5545
        %v5551 = vpack.c.b16 %v5546, %v5546
        %v5552 = vpack.c.b16 %v5547, %v5547
        %5553 = vrot.lane.b32.xlu0 %v5548, 71
        %v5554 = vpop.permute.xlu0 %5553
        %5555 = vrot.lane.b32.xlu0 %v5549, 71
        %v5556 = vpop.permute.xlu0 %5555
        %5557 = vrot.lane.b32.xlu0 %v5550, 71
        %v5558 = vpop.permute.xlu0 %5557
        %5559 = vrot.lane.b32.xlu0 %v5551, 71
        %v5560 = vpop.permute.xlu0 %5559
        %5561 = vrot.lane.b32.xlu0 %v5552, 71
        %v5562 = vpop.permute.xlu0 %5561
        %v5563 = vsel %vm682, %v5554, %v5556
        %v5564 = vsel %vm682, %v5556, %v5558
        %v5565 = vsel %vm682, %v5558, %v5560
        %v5566 = vsel %vm682, %v5560, %v5562
        %5571 = vst [vmem:[#allocation3 + $0x40] sm:$0xf] %v5563
        %5572 = vst [vmem:[#allocation3 + $0x48] sm:$0xf] %v5564
        %5573 = vst [vmem:[#allocation3 + $0x50] sm:$0xf] %v5565
        %5574 = vst [vmem:[#allocation3 + $0x58] sm:$0xf] %v5566
        %v5575 = vld [vmem:[#allocation2 + $0x4] sm:$0xff]
        %v5576 = vld [vmem:[#allocation2 + $0xc] sm:$0xff]
        %v5577 = vld [vmem:[#allocation2 + $0x14] sm:$0xf]
        %v5578 = vld [vmem:[%s4 + $0x20] sm:$0x44]
        %v5579 = vld [vmem:[%s4 + $0x28] sm:$0x44]
        %v5582 = vunpack.c.l.b16 %v5578
        %v5583 = vunpack.c.h.b16 %v5578
        %v5584 = vunpack.c.l.b16 %v5579
        %v5585 = vunpack.c.h.b16 %v5579
        %v5586 = vpack.c.b16 %v5582, %v5582
        %v5587 = vpack.c.b16 %v5583, %v5583
        %v5588 = vpack.c.b16 %v5584, %v5584
        %v5589 = vpack.c.b16 %v5585, %v5585
        %v5591 = vshrl.u32 %v5586, 16
        %v5592 = vpack.i.b16 %v5591, %v5591
        %v5594 = vlaneseq
        %v5595 = vshrl.u32 %v5594, 7
        %v5596 = vsub.s32 2, %v5595
        %v5597 = vrot.slane %v5592, %v5596
        %v5599 = vshrl.u32 %v5587, 16
        %v5600 = vpack.i.b16 %v5599, %v5599
        %v5602 = vlaneseq
        %v5603 = vshrl.u32 %v5602, 7
        %v5604 = vsub.s32 2, %v5603
        %v5605 = vrot.slane %v5600, %v5604
        %v5607 = vshrl.u32 %v5588, 16
        %v5608 = vpack.i.b16 %v5607, %v5607
        %v5610 = vlaneseq
        %v5611 = vshrl.u32 %v5610, 7
        %v5612 = vsub.s32 2, %v5611
        %v5613 = vrot.slane %v5608, %v5612
        %v5615 = vshrl.u32 %v5589, 16
        %v5616 = vpack.i.b16 %v5615, %v5615
        %v5618 = vlaneseq
        %v5619 = vshrl.u32 %v5618, 7
        %v5620 = vsub.s32 2, %v5619
        %v5621 = vrot.slane %v5616, %v5620
        %v5626 = vunpack.c.l.b16 %v5597
        %v5627 = vunpack.c.l.b16 %v5605
        %v5628 = vunpack.c.l.b16 %v5613
        %v5629 = vunpack.c.l.b16 %v5621
        %v5630 = vpack.c.b16 %v5627, %v5626
        %v5631 = vpack.c.b16 %v5629, %v5628
        %5632 = vrot.lane.b32.xlu0 %v5630, 63
        %v5633 = vpop.permute.xlu0 %5632
        %5634 = vrot.lane.b32.xlu0 %v5631, 63
        %v5635 = vpop.permute.xlu0 %5634
        %v5636 = vrot.slane %v5633, 4
        %v5637 = vrot.slane %v5635, 4
        %v5638 = vsel %vm758, %v5636, %v5633
        %v5639 = vsel %vm436, %v5636, %v5637
        %v5640 = vsel %vm758, %v5639, %v5635
        %v5644 = vmul.bf16 %v5575, %v5638
        %v5645 = vmul.bf16 %v5576, %v5640
        %v5646 = vmul.bf16 %v5577, %v5637
        %v5650 = vunpack.c.l.b16 %v5644
        %v5651 = vunpack.c.h.b16 %v5644
        %v5652 = vunpack.c.l.b16 %v5645
        %v5653 = vunpack.c.h.b16 %v5645
        %v5654 = vunpack.c.l.b16 %v5646
        %v5655 = vpack.c.b16 %v5650, %v5650
        %v5656 = vpack.c.b16 %v5651, %v5651
        %v5657 = vpack.c.b16 %v5652, %v5652
        %v5658 = vpack.c.b16 %v5653, %v5653
        %v5659 = vpack.c.b16 %v5654, %v5654
        %5660 = vrot.lane.b32.xlu0 %v5655, 65
        %v5661 = vpop.permute.xlu0 %5660
        %5662 = vrot.lane.b32.xlu0 %v5656, 65
        %v5663 = vpop.permute.xlu0 %5662
        %5664 = vrot.lane.b32.xlu0 %v5657, 65
        %v5665 = vpop.permute.xlu0 %5664
        %5666 = vrot.lane.b32.xlu0 %v5658, 65
        %v5667 = vpop.permute.xlu0 %5666
        %5668 = vrot.lane.b32.xlu0 %v5659, 65
        %v5669 = vpop.permute.xlu0 %5668
        %v5670 = vsel %vm791, %v5661, %v5663
        %v5671 = vsel %vm791, %v5663, %v5665
        %v5672 = vsel %vm791, %v5665, %v5667
        %v5673 = vsel %vm791, %v5667, %v5669
        %5678 = vst [vmem:[#allocation3 + $0x40] sm:$0xf0] %v5670
        %5679 = vst [vmem:[#allocation3 + $0x48] sm:$0xf0] %v5671
        %5680 = vst [vmem:[#allocation3 + $0x50] sm:$0xf0] %v5672
        %5681 = vst [vmem:[#allocation3 + $0x58] sm:$0xf0] %v5673
        %v5682 = vld [vmem:[#allocation2 + $0x4] sm:$0xff]
        %v5683 = vld [vmem:[#allocation2 + $0xc] sm:$0xff]
        %v5684 = vld [vmem:[#allocation2 + $0x14] sm:$0xf]
        %v5685 = vld [vmem:[%s4 + $0x20] sm:$0x88]
        %v5686 = vld [vmem:[%s4 + $0x28] sm:$0x88]
        %v5689 = vunpack.c.l.b16 %v5685
        %v5690 = vunpack.c.h.b16 %v5685
        %v5691 = vunpack.c.l.b16 %v5686
        %v5692 = vunpack.c.h.b16 %v5686
        %v5693 = vpack.c.b16 %v5689, %v5689
        %v5694 = vpack.c.b16 %v5690, %v5690
        %v5695 = vpack.c.b16 %v5691, %v5691
        %v5696 = vpack.c.b16 %v5692, %v5692
        %v5698 = vpack.i.b16 %v5693, %v5693
        %v5700 = vlaneseq
        %v5701 = vshrl.u32 %v5700, 7
        %v5702 = vsub.s32 3, %v5701
        %v5703 = vrot.slane %v5698, %v5702
        %v5705 = vpack.i.b16 %v5694, %v5694
        %v5707 = vlaneseq
        %v5708 = vshrl.u32 %v5707, 7
        %v5709 = vsub.s32 3, %v5708
        %v5710 = vrot.slane %v5705, %v5709
        %v5712 = vpack.i.b16 %v5695, %v5695
        %v5714 = vlaneseq
        %v5715 = vshrl.u32 %v5714, 7
        %v5716 = vsub.s32 3, %v5715
        %v5717 = vrot.slane %v5712, %v5716
        %v5719 = vpack.i.b16 %v5696, %v5696
        %v5721 = vlaneseq
        %v5722 = vshrl.u32 %v5721, 7
        %v5723 = vsub.s32 3, %v5722
        %v5724 = vrot.slane %v5719, %v5723
        %v5729 = vunpack.c.l.b16 %v5703
        %v5730 = vunpack.c.l.b16 %v5710
        %v5731 = vunpack.c.l.b16 %v5717
        %v5732 = vunpack.c.l.b16 %v5724
        %v5733 = vpack.c.b16 %v5730, %v5729
        %v5734 = vpack.c.b16 %v5732, %v5731
        %5735 = vrot.lane.b32.xlu0 %v5733, 64
        %v5736 = vpop.permute.xlu0 %5735
        %5737 = vrot.lane.b32.xlu0 %v5734, 64
        %v5738 = vpop.permute.xlu0 %5737
        %v5739 = vrot.slane %v5736, 4
        %v5740 = vrot.slane %v5738, 4
        %v5741 = vsel %vm863, %v5739, %v5736
        %v5742 = vsel %vm436, %v5739, %v5740
        %v5743 = vsel %vm863, %v5742, %v5738
        %v5747 = vmul.bf16 %v5682, %v5741
        %v5748 = vmul.bf16 %v5683, %v5743
        %v5749 = vmul.bf16 %v5684, %v5740
        %v5753 = vunpack.c.l.b16 %v5747
        %v5754 = vunpack.c.h.b16 %v5747
        %v5755 = vunpack.c.l.b16 %v5748
        %v5756 = vunpack.c.h.b16 %v5748
        %v5757 = vunpack.c.l.b16 %v5749
        %v5758 = vpack.c.b16 %v5753, %v5753
        %v5759 = vpack.c.b16 %v5754, %v5754
        %v5760 = vpack.c.b16 %v5755, %v5755
        %v5761 = vpack.c.b16 %v5756, %v5756
        %v5762 = vpack.c.b16 %v5757, %v5757
        %5763 = vrot.lane.b32.xlu0 %v5758, 64
        %v5764 = vpop.permute.xlu0 %5763
        %5765 = vrot.lane.b32.xlu0 %v5759, 64
        %v5766 = vpop.permute.xlu0 %5765
        %5767 = vrot.lane.b32.xlu0 %v5760, 64
        %v5768 = vpop.permute.xlu0 %5767
        %5769 = vrot.lane.b32.xlu0 %v5761, 64
        %v5770 = vpop.permute.xlu0 %5769
        %5771 = vrot.lane.b32.xlu0 %v5762, 64
        %v5772 = vpop.permute.xlu0 %5771
        %v5773 = vsel %vm863, %v5764, %v5766
        %v5774 = vsel %vm863, %v5766, %v5768
        %v5775 = vsel %vm863, %v5768, %v5770
        %v5776 = vsel %vm863, %v5770, %v5772
        %5781 = vst [vmem:[#allocation3 + $0x60] sm:$0xf] %v5773
        %5782 = vst [vmem:[#allocation3 + $0x68] sm:$0xf] %v5774
        %5783 = vst [vmem:[#allocation3 + $0x70] sm:$0xf] %v5775
        %5784 = vst [vmem:[#allocation3 + $0x78] sm:$0xf] %v5776
        %v5785 = vld [vmem:[#allocation2 + $0x4] sm:$0xff]
        %v5786 = vld [vmem:[#allocation2 + $0xc] sm:$0xff]
        %v5787 = vld [vmem:[#allocation2 + $0x14] sm:$0xf]
        %v5788 = vld [vmem:[%s4 + $0x20] sm:$0x88]
        %v5789 = vld [vmem:[%s4 + $0x28] sm:$0x88]
        %v5792 = vunpack.c.l.b16 %v5788
        %v5793 = vunpack.c.h.b16 %v5788
        %v5794 = vunpack.c.l.b16 %v5789
        %v5795 = vunpack.c.h.b16 %v5789
        %v5796 = vpack.c.b16 %v5792, %v5792
        %v5797 = vpack.c.b16 %v5793, %v5793
        %v5798 = vpack.c.b16 %v5794, %v5794
        %v5799 = vpack.c.b16 %v5795, %v5795
        %v5801 = vshrl.u32 %v5796, 16
        %v5802 = vpack.i.b16 %v5801, %v5801
        %v5804 = vlaneseq
        %v5805 = vshrl.u32 %v5804, 7
        %v5806 = vsub.s32 3, %v5805
        %v5807 = vrot.slane %v5802, %v5806
        %v5809 = vshrl.u32 %v5797, 16
        %v5810 = vpack.i.b16 %v5809, %v5809
        %v5812 = vlaneseq
        %v5813 = vshrl.u32 %v5812, 7
        %v5814 = vsub.s32 3, %v5813
        %v5815 = vrot.slane %v5810, %v5814
        %v5817 = vshrl.u32 %v5798, 16
        %v5818 = vpack.i.b16 %v5817, %v5817
        %v5820 = vlaneseq
        %v5821 = vshrl.u32 %v5820, 7
        %v5822 = vsub.s32 3, %v5821
        %v5823 = vrot.slane %v5818, %v5822
        %v5825 = vshrl.u32 %v5799, 16
        %v5826 = vpack.i.b16 %v5825, %v5825
        %v5828 = vlaneseq
        %v5829 = vshrl.u32 %v5828, 7
        %v5830 = vsub.s32 3, %v5829
        %v5831 = vrot.slane %v5826, %v5830
        %v5836 = vunpack.c.l.b16 %v5807
        %v5837 = vunpack.c.l.b16 %v5815
        %v5838 = vunpack.c.l.b16 %v5823
        %v5839 = vunpack.c.l.b16 %v5831
        %v5840 = vpack.c.b16 %v5837, %v5836
        %v5841 = vpack.c.b16 %v5839, %v5838
        %5842 = vrot.lane.b32.xlu0 %v5840, 65
        %v5843 = vpop.permute.xlu0 %5842
        %5844 = vrot.lane.b32.xlu0 %v5841, 65
        %v5845 = vpop.permute.xlu0 %5844
        %v5846 = vrot.slane %v5843, 4
        %v5847 = vrot.slane %v5845, 4
        %v5848 = vsel %vm791, %v5846, %v5843
        %v5849 = vsel %vm436, %v5846, %v5847
        %v5850 = vsel %vm791, %v5849, %v5845
        %v5854 = vmul.bf16 %v5785, %v5848
        %v5855 = vmul.bf16 %v5786, %v5850
        %v5856 = vmul.bf16 %v5787, %v5847
        %v5860 = vunpack.c.l.b16 %v5854
        %v5861 = vunpack.c.h.b16 %v5854
        %v5862 = vunpack.c.l.b16 %v5855
        %v5863 = vunpack.c.h.b16 %v5855
        %v5864 = vunpack.c.l.b16 %v5856
        %v5865 = vpack.c.b16 %v5860, %v5860
        %v5866 = vpack.c.b16 %v5861, %v5861
        %v5867 = vpack.c.b16 %v5862, %v5862
        %v5868 = vpack.c.b16 %v5863, %v5863
        %v5869 = vpack.c.b16 %v5864, %v5864
        %5870 = vrot.lane.b32.xlu0 %v5865, 63
        %v5871 = vpop.permute.xlu0 %5870
        %5872 = vrot.lane.b32.xlu0 %v5866, 63
        %v5873 = vpop.permute.xlu0 %5872
        %5874 = vrot.lane.b32.xlu0 %v5867, 63
        %v5875 = vpop.permute.xlu0 %5874
        %5876 = vrot.lane.b32.xlu0 %v5868, 63
        %v5877 = vpop.permute.xlu0 %5876
        %5878 = vrot.lane.b32.xlu0 %v5869, 63
        %v5879 = vpop.permute.xlu0 %5878
        %v5880 = vsel %vm758, %v5871, %v5873
        %v5881 = vsel %vm758, %v5873, %v5875
        %v5882 = vsel %vm758, %v5875, %v5877
        %v5883 = vsel %vm758, %v5877, %v5879
        %5888 = vst [vmem:[#allocation3 + $0x60] sm:$0xf0] %v5880
        %5889 = vst [vmem:[#allocation3 + $0x68] sm:$0xf0] %v5881
        %5890 = vst [vmem:[#allocation3 + $0x70] sm:$0xf0] %v5882
        %5891 = vst [vmem:[#allocation3 + $0x78] sm:$0xf0] %v5883
        %v5892 = vld [vmem:[#allocation2 + $0x4] sm:$0xff]
        %v5893 = vld [vmem:[#allocation2 + $0xc] sm:$0xff]
        %v5894 = vld [vmem:[#allocation2 + $0x14] sm:$0xf]
        %v5895 = vld [vmem:[%s4 + $0x30] sm:$0x11]
        %v5896 = vld [vmem:[%s4 + $0x38] sm:$0x11]
        %v5899 = vunpack.c.l.b16 %v5895
        %v5900 = vunpack.c.h.b16 %v5895
        %v5901 = vunpack.c.l.b16 %v5896
        %v5902 = vunpack.c.h.b16 %v5896
        %v5903 = vpack.c.b16 %v5899, %v5899
        %v5904 = vpack.c.b16 %v5900, %v5900
        %v5905 = vpack.c.b16 %v5901, %v5901
        %v5906 = vpack.c.b16 %v5902, %v5902
        %v5908 = vpack.i.b16 %v5903, %v5903
        %v5910 = vlaneseq
        %v5911 = vshrl.u32 %v5910, 7
        %v5912 = vsub.s32 0, %v5911
        %v5913 = vrot.slane %v5908, %v5912
        %v5915 = vpack.i.b16 %v5904, %v5904
        %v5917 = vlaneseq
        %v5918 = vshrl.u32 %v5917, 7
        %v5919 = vsub.s32 0, %v5918
        %v5920 = vrot.slane %v5915, %v5919
        %v5922 = vpack.i.b16 %v5905, %v5905
        %v5924 = vlaneseq
        %v5925 = vshrl.u32 %v5924, 7
        %v5926 = vsub.s32 0, %v5925
        %v5927 = vrot.slane %v5922, %v5926
        %v5929 = vpack.i.b16 %v5906, %v5906
        %v5931 = vlaneseq
        %v5932 = vshrl.u32 %v5931, 7
        %v5933 = vsub.s32 0, %v5932
        %v5934 = vrot.slane %v5929, %v5933
        %v5939 = vunpack.c.l.b16 %v5913
        %v5940 = vunpack.c.l.b16 %v5920
        %v5941 = vunpack.c.l.b16 %v5927
        %v5942 = vunpack.c.l.b16 %v5934
        %v5943 = vpack.c.b16 %v5940, %v5939
        %v5944 = vpack.c.b16 %v5942, %v5941
        %5945 = vrot.lane.b32.xlu0 %v5943, 71
        %v5946 = vpop.permute.xlu0 %5945
        %5947 = vrot.lane.b32.xlu0 %v5944, 71
        %v5948 = vpop.permute.xlu0 %5947
        %v5949 = vrot.slane %v5946, 4
        %v5950 = vrot.slane %v5948, 4
        %v5951 = vsel %vm682, %v5949, %v5946
        %v5952 = vsel %vm436, %v5949, %v5950
        %v5953 = vsel %vm682, %v5952, %v5948
        %v5957 = vmul.bf16 %v5892, %v5951
        %v5958 = vmul.bf16 %v5893, %v5953
        %v5959 = vmul.bf16 %v5894, %v5950
        %v5963 = vunpack.c.l.b16 %v5957
        %v5964 = vunpack.c.h.b16 %v5957
        %v5965 = vunpack.c.l.b16 %v5958
        %v5966 = vunpack.c.h.b16 %v5958
        %v5967 = vunpack.c.l.b16 %v5959
        %v5968 = vpack.c.b16 %v5963, %v5963
        %v5969 = vpack.c.b16 %v5964, %v5964
        %v5970 = vpack.c.b16 %v5965, %v5965
        %v5971 = vpack.c.b16 %v5966, %v5966
        %v5972 = vpack.c.b16 %v5967, %v5967
        %5973 = vrot.lane.b32.xlu0 %v5968, 57
        %v5974 = vpop.permute.xlu0 %5973
        %5975 = vrot.lane.b32.xlu0 %v5969, 57
        %v5976 = vpop.permute.xlu0 %5975
        %5977 = vrot.lane.b32.xlu0 %v5970, 57
        %v5978 = vpop.permute.xlu0 %5977
        %5979 = vrot.lane.b32.xlu0 %v5971, 57
        %v5980 = vpop.permute.xlu0 %5979
        %5981 = vrot.lane.b32.xlu0 %v5972, 57
        %v5982 = vpop.permute.xlu0 %5981
        %v5983 = vsel %vm649, %v5974, %v5976
        %v5984 = vsel %vm649, %v5976, %v5978
        %v5985 = vsel %vm649, %v5978, %v5980
        %v5986 = vsel %vm649, %v5980, %v5982
        %5991 = vst [vmem:[#allocation3 + $0x80] sm:$0xf] %v5983
        %5992 = vst [vmem:[#allocation3 + $0x88] sm:$0xf] %v5984
        %5993 = vst [vmem:[#allocation3 + $0x90] sm:$0xf] %v5985
        %5994 = vst [vmem:[#allocation3 + $0x98] sm:$0xf] %v5986
        %v5995 = vld [vmem:[#allocation2 + $0x4] sm:$0xff]
        %v5996 = vld [vmem:[#allocation2 + $0xc] sm:$0xff]
        %v5997 = vld [vmem:[#allocation2 + $0x14] sm:$0xf]
        %v5998 = vld [vmem:[%s4 + $0x30] sm:$0x11]
        %v5999 = vld [vmem:[%s4 + $0x38] sm:$0x11]
        %v6002 = vunpack.c.l.b16 %v5998
        %v6003 = vunpack.c.h.b16 %v5998
        %v6004 = vunpack.c.l.b16 %v5999
        %v6005 = vunpack.c.h.b16 %v5999
        %v6006 = vpack.c.b16 %v6002, %v6002
        %v6007 = vpack.c.b16 %v6003, %v6003
        %v6008 = vpack.c.b16 %v6004, %v6004
        %v6009 = vpack.c.b16 %v6005, %v6005
        %v6011 = vshrl.u32 %v6006, 16
        %v6012 = vpack.i.b16 %v6011, %v6011
        %v6014 = vlaneseq
        %v6015 = vshrl.u32 %v6014, 7
        %v6016 = vsub.s32 0, %v6015
        %v6017 = vrot.slane %v6012, %v6016
        %v6019 = vshrl.u32 %v6007, 16
        %v6020 = vpack.i.b16 %v6019, %v6019
        %v6022 = vlaneseq
        %v6023 = vshrl.u32 %v6022, 7
        %v6024 = vsub.s32 0, %v6023
        %v6025 = vrot.slane %v6020, %v6024
        %v6027 = vshrl.u32 %v6008, 16
        %v6028 = vpack.i.b16 %v6027, %v6027
        %v6030 = vlaneseq
        %v6031 = vshrl.u32 %v6030, 7
        %v6032 = vsub.s32 0, %v6031
        %v6033 = vrot.slane %v6028, %v6032
        %v6035 = vshrl.u32 %v6009, 16
        %v6036 = vpack.i.b16 %v6035, %v6035
        %v6038 = vlaneseq
        %v6039 = vshrl.u32 %v6038, 7
        %v6040 = vsub.s32 0, %v6039
        %v6041 = vrot.slane %v6036, %v6040
        %v6046 = vunpack.c.l.b16 %v6017
        %v6047 = vunpack.c.l.b16 %v6025
        %v6048 = vunpack.c.l.b16 %v6033
        %v6049 = vunpack.c.l.b16 %v6041
        %v6050 = vpack.c.b16 %v6047, %v6046
        %v6051 = vpack.c.b16 %v6049, %v6048
        %6052 = vrot.lane.b32.xlu0 %v6050, 72
        %v6053 = vpop.permute.xlu0 %6052
        %6054 = vrot.lane.b32.xlu0 %v6051, 72
        %v6055 = vpop.permute.xlu0 %6054
        %v6056 = vrot.slane %v6053, 4
        %v6057 = vrot.slane %v6055, 4
        %v6058 = vsel %vm577, %v6056, %v6053
        %v6059 = vsel %vm436, %v6056, %v6057
        %v6060 = vsel %vm577, %v6059, %v6055
        %v6064 = vmul.bf16 %v5995, %v6058
        %v6065 = vmul.bf16 %v5996, %v6060
        %v6066 = vmul.bf16 %v5997, %v6057
        %v6070 = vunpack.c.l.b16 %v6064
        %v6071 = vunpack.c.h.b16 %v6064
        %v6072 = vunpack.c.l.b16 %v6065
        %v6073 = vunpack.c.h.b16 %v6065
        %v6074 = vunpack.c.l.b16 %v6066
        %v6075 = vpack.c.b16 %v6070, %v6070
        %v6076 = vpack.c.b16 %v6071, %v6071
        %v6077 = vpack.c.b16 %v6072, %v6072
        %v6078 = vpack.c.b16 %v6073, %v6073
        %v6079 = vpack.c.b16 %v6074, %v6074
        %6080 = vrot.lane.b32.xlu0 %v6075, 56
        %v6081 = vpop.permute.xlu0 %6080
        %6082 = vrot.lane.b32.xlu0 %v6076, 56
        %v6083 = vpop.permute.xlu0 %6082
        %6084 = vrot.lane.b32.xlu0 %v6077, 56
        %v6085 = vpop.permute.xlu0 %6084
        %6086 = vrot.lane.b32.xlu0 %v6078, 56
        %v6087 = vpop.permute.xlu0 %6086
        %6088 = vrot.lane.b32.xlu0 %v6079, 56
        %v6089 = vpop.permute.xlu0 %6088
        %v6090 = vsel %vm544, %v6081, %v6083
        %v6091 = vsel %vm544, %v6083, %v6085
        %v6092 = vsel %vm544, %v6085, %v6087
        %v6093 = vsel %vm544, %v6087, %v6089
        %6098 = vst [vmem:[#allocation3 + $0x80] sm:$0xf0] %v6090
        %6099 = vst [vmem:[#allocation3 + $0x88] sm:$0xf0] %v6091
        %6100 = vst [vmem:[#allocation3 + $0x90] sm:$0xf0] %v6092
        %6101 = vst [vmem:[#allocation3 + $0x98] sm:$0xf0] %v6093
        %v6102 = vld [vmem:[#allocation2 + $0x4] sm:$0xff]
        %v6103 = vld [vmem:[#allocation2 + $0xc] sm:$0xff]
        %v6104 = vld [vmem:[#allocation2 + $0x14] sm:$0xf]
        %v6105 = vld [vmem:[%s4 + $0x30] sm:$0x22]
        %v6106 = vld [vmem:[%s4 + $0x38] sm:$0x22]
        %v6109 = vunpack.c.l.b16 %v6105
        %v6110 = vunpack.c.h.b16 %v6105
        %v6111 = vunpack.c.l.b16 %v6106
        %v6112 = vunpack.c.h.b16 %v6106
        %v6113 = vpack.c.b16 %v6109, %v6109
        %v6114 = vpack.c.b16 %v6110, %v6110
        %v6115 = vpack.c.b16 %v6111, %v6111
        %v6116 = vpack.c.b16 %v6112, %v6112
        %v6118 = vpack.i.b16 %v6113, %v6113
        %v6120 = vlaneseq
        %v6121 = vshrl.u32 %v6120, 7
        %v6122 = vsub.s32 1, %v6121
        %v6123 = vrot.slane %v6118, %v6122
        %v6125 = vpack.i.b16 %v6114, %v6114
        %v6127 = vlaneseq
        %v6128 = vshrl.u32 %v6127, 7
        %v6129 = vsub.s32 1, %v6128
        %v6130 = vrot.slane %v6125, %v6129
        %v6132 = vpack.i.b16 %v6115, %v6115
        %v6134 = vlaneseq
        %v6135 = vshrl.u32 %v6134, 7
        %v6136 = vsub.s32 1, %v6135
        %v6137 = vrot.slane %v6132, %v6136
        %v6139 = vpack.i.b16 %v6116, %v6116
        %v6141 = vlaneseq
        %v6142 = vshrl.u32 %v6141, 7
        %v6143 = vsub.s32 1, %v6142
        %v6144 = vrot.slane %v6139, %v6143
        %v6149 = vunpack.c.l.b16 %v6123
        %v6150 = vunpack.c.l.b16 %v6130
        %v6151 = vunpack.c.l.b16 %v6137
        %v6152 = vunpack.c.l.b16 %v6144
        %v6153 = vpack.c.b16 %v6150, %v6149
        %v6154 = vpack.c.b16 %v6152, %v6151
        %6155 = vrot.lane.b32.xlu0 %v6153, 73
        %v6156 = vpop.permute.xlu0 %6155
        %6157 = vrot.lane.b32.xlu0 %v6154, 73
        %v6158 = vpop.permute.xlu0 %6157
        %v6159 = vrot.slane %v6156, 4
        %v6160 = vrot.slane %v6158, 4
        %v6161 = vsel %vm468, %v6159, %v6156
        %v6162 = vsel %vm436, %v6159, %v6160
        %v6163 = vsel %vm468, %v6162, %v6158
        %v6167 = vmul.bf16 %v6102, %v6161
        %v6168 = vmul.bf16 %v6103, %v6163
        %v6169 = vmul.bf16 %v6104, %v6160
        %v6173 = vunpack.c.l.b16 %v6167
        %v6174 = vunpack.c.h.b16 %v6167
        %v6175 = vunpack.c.l.b16 %v6168
        %v6176 = vunpack.c.h.b16 %v6168
        %v6177 = vunpack.c.l.b16 %v6169
        %v6178 = vpack.c.b16 %v6173, %v6173
        %v6179 = vpack.c.b16 %v6174, %v6174
        %v6180 = vpack.c.b16 %v6175, %v6175
        %v6181 = vpack.c.b16 %v6176, %v6176
        %v6182 = vpack.c.b16 %v6177, %v6177
        %6183 = vrot.lane.b32.xlu0 %v6178, 55
        %v6184 = vpop.permute.xlu0 %6183
        %6185 = vrot.lane.b32.xlu0 %v6179, 55
        %v6186 = vpop.permute.xlu0 %6185
        %6187 = vrot.lane.b32.xlu0 %v6180, 55
        %v6188 = vpop.permute.xlu0 %6187
        %6189 = vrot.lane.b32.xlu0 %v6181, 55
        %v6190 = vpop.permute.xlu0 %6189
        %6191 = vrot.lane.b32.xlu0 %v6182, 55
        %v6192 = vpop.permute.xlu0 %6191
        %v6193 = vsel %vm434, %v6184, %v6186
        %v6194 = vsel %vm434, %v6186, %v6188
        %v6195 = vsel %vm434, %v6188, %v6190
        %v6196 = vsel %vm434, %v6190, %v6192
        %6201 = vst [vmem:[#allocation3 + $0xa0] sm:$0xf] %v6193
        %6202 = vst [vmem:[#allocation3 + $0xa8] sm:$0xf] %v6194
        %6203 = vst [vmem:[#allocation3 + $0xb0] sm:$0xf] %v6195
        %6204 = vst [vmem:[#allocation3 + $0xb8] sm:$0xf] %v6196
        %v6205 = vld [vmem:[%s2 + $0x4] sm:$0xf]
        %v6206 = vld [vmem:[#allocation3] sm:$0xff]
        %v6207 = vld [vmem:[#allocation3 + $0x8] sm:$0xff]
        %v6208 = vld [vmem:[#allocation3 + $0x10] sm:$0xff]
        %v6209 = vld [vmem:[#allocation3 + $0x18] sm:$0xff]
        %v6210 = vld [vmem:[#allocation3 + $0x20] sm:$0xff]
        %v6211 = vld [vmem:[#allocation3 + $0x28] sm:$0xff]
        %v6212 = vld [vmem:[#allocation3 + $0x30] sm:$0xff]
        %v6213 = vld [vmem:[#allocation3 + $0x38] sm:$0xff]
        %v6214 = vld [vmem:[#allocation3 + $0x40] sm:$0xff]
        %v6215 = vld [vmem:[#allocation3 + $0x48] sm:$0xff]
        %v6216 = vld [vmem:[#allocation3 + $0x50] sm:$0xff]
        %v6217 = vld [vmem:[#allocation3 + $0x58] sm:$0xff]
        %v6218 = vld [vmem:[#allocation3 + $0x60] sm:$0xff]
        %v6219 = vld [vmem:[#allocation3 + $0x68] sm:$0xff]
        %v6220 = vld [vmem:[#allocation3 + $0x70] sm:$0xff]
        %v6221 = vld [vmem:[#allocation3 + $0x78] sm:$0xff]
        %v6222 = vld [vmem:[#allocation3 + $0x80] sm:$0xff]
        %v6223 = vld [vmem:[#allocation3 + $0x88] sm:$0xff]
        %v6224 = vld [vmem:[#allocation3 + $0x90] sm:$0xff]
        %v6225 = vld [vmem:[#allocation3 + $0x98] sm:$0xff]
        %v6226 = vld [vmem:[#allocation3 + $0xa0] sm:$0xff]
        %v6227 = vld [vmem:[#allocation3 + $0xa8] sm:$0xff]
        %v6228 = vld [vmem:[#allocation3 + $0xb0] sm:$0xff]
        %v6229 = vld [vmem:[#allocation3 + $0xb8] sm:$0xff]
        %v6230 = vld [vmem:[#allocation3 + $0xc0] sm:$0xff]
        %v6231 = vld [vmem:[#allocation3 + $0xc8] sm:$0xff]
        %v6232 = vld [vmem:[#allocation3 + $0xd0] sm:$0xff]
        %v6233 = vld [vmem:[#allocation3 + $0xd8] sm:$0xff]
        %v6234 = vld [vmem:[#allocation3 + $0xe0] sm:$0xff]
        %v6235 = vld [vmem:[#allocation3 + $0xe8] sm:$0xff]
        %v6236 = vld [vmem:[#allocation3 + $0xf0] sm:$0xff]
        %v6237 = vld [vmem:[#allocation3 + $0xf8] sm:$0xff]
        %6238 = vmatprep.subr.bf16.mxu0 %v6207
        %6239 = vmatpush1.bf16.msra.mxu0 %v6206
        %6240 = vmatprep.subr.bf16.mxu0 %v6211
        %6241 = vmatpush1.bf16.msra.mxu0 %v6210
        %6242 = vmatprep.subr.bf16.mxu0 %v6215
        %6243 = vmatpush1.bf16.msra.mxu0 %v6214
        %6244 = vmatprep.subr.bf16.mxu0 %v6219
        %6245 = vmatpush1.bf16.msra.mxu0 %v6218
        %6246 = vmatprep.subr.bf16.mxu0 %v6223
        %6247 = vmatpush1.bf16.msra.mxu0 %v6222
        %6248 = vmatprep.subr.bf16.mxu0 %v6227
        %6249 = vmatpush1.bf16.msra.mxu0 %v6226
        %6250 = vmatprep.subr.bf16.mxu0 %v6231
        %6251 = vmatpush1.bf16.msra.mxu0 %v6230
        %6252 = vmatprep.subr.bf16.mxu0 %v6235
        %6253 = vmatpush1.bf16.msra.mxu0 %v6234
        %6254 = vmatprep.subr.bf16.mxu0 0
        %6255 = vmatpush1.bf16.msra.mxu0 0
        %6256 = vmatprep.subr.bf16.mxu0 0
        %6257 = vmatpush1.bf16.msra.mxu0 0
        %6258 = vmatprep.subr.bf16.mxu0 0
        %6259 = vmatpush1.bf16.msra.mxu0 0
        %6260 = vmatprep.subr.bf16.mxu0 0
        %6261 = vmatpush1.bf16.msra.mxu0 0
        %6262 = vmatprep.subr.bf16.mxu0 0
        %6263 = vmatpush1.bf16.msra.mxu0 0
        %6264 = vmatprep.subr.bf16.mxu0 0
        %6265 = vmatpush1.bf16.msra.mxu0 0
        %6266 = vmatprep.subr.bf16.mxu0 0
        %6267 = vmatpush1.bf16.msra.mxu0 0
        %6268 = vmatprep.subr.bf16.mxu0 0
        %6269 = vmatpush1.bf16.msra.mxu0 0
        %6270 = vmatprep.mubr.bf16.mxu0 0
        %6271 = vmatmul.mubr.bf16.gmra.mrb[0].mxu0 %v6205
        %v6272 = vpop.f32.mrb[0].mxu0
        %v6273 = vadd.f32 0.0, %v6272
        %v6274 = vpop.f32.mrb[0].mxu0
        %v6275 = vadd.f32 0.0, %v6274
        %v6276 = vpop.f32.mrb[0].mxu0
        %v6277 = vpop.f32.mrb[0].mxu0
        %6278 = vdwg.mxu0
        %6279 = vmatprep.subr.bf16.mxu0 %v6209
        %6280 = vmatpush1.bf16.msra.mxu0 %v6208
        %6281 = vmatprep.subr.bf16.mxu0 %v6213
        %6282 = vmatpush1.bf16.msra.mxu0 %v6212
        %6283 = vmatprep.subr.bf16.mxu0 %v6217
        %6284 = vmatpush1.bf16.msra.mxu0 %v6216
        %6285 = vmatprep.subr.bf16.mxu0 %v6221
        %6286 = vmatpush1.bf16.msra.mxu0 %v6220
        %6287 = vmatprep.subr.bf16.mxu0 %v6225
        %6288 = vmatpush1.bf16.msra.mxu0 %v6224
        %6289 = vmatprep.subr.bf16.mxu0 %v6229
        %6290 = vmatpush1.bf16.msra.mxu0 %v6228
        %6291 = vmatprep.subr.bf16.mxu0 %v6233
        %6292 = vmatpush1.bf16.msra.mxu0 %v6232
        %6293 = vmatprep.subr.bf16.mxu0 %v6237
        %6294 = vmatpush1.bf16.msra.mxu0 %v6236
        %6295 = vmatprep.subr.bf16.mxu0 0
        %6296 = vmatpush1.bf16.msra.mxu0 0
        %6297 = vmatprep.subr.bf16.mxu0 0
        %6298 = vmatpush1.bf16.msra.mxu0 0
        %6299 = vmatprep.subr.bf16.mxu0 0
        %6300 = vmatpush1.bf16.msra.mxu0 0
        %6301 = vmatprep.subr.bf16.mxu0 0
        %6302 = vmatpush1.bf16.msra.mxu0 0
        %6303 = vmatprep.subr.bf16.mxu0 0
        %6304 = vmatpush1.bf16.msra.mxu0 0
        %6305 = vmatprep.subr.bf16.mxu0 0
        %6306 = vmatpush1.bf16.msra.mxu0 0
        %6307 = vmatprep.subr.bf16.mxu0 0
        %6308 = vmatpush1.bf16.msra.mxu0 0
        %6309 = vmatprep.subr.bf16.mxu0 0
        %6310 = vmatpush1.bf16.msra.mxu0 0
        %6311 = vmatprep.mubr.bf16.mxu0 0
        %6312 = vmatmul.mubr.bf16.gmra.mrb[0].mxu0 %v6205
        %v6313 = vpop.f32.mrb[0].mxu0
        %v6314 = vadd.f32 0.0, %v6313
        %v6315 = vpop.f32.mrb[0].mxu0
        %v6316 = vadd.f32 0.0, %v6315
        %v6317 = vpop.f32.mrb[0].mxu0
        %v6318 = vpop.f32.mrb[0].mxu0
        %6319 = vdwg.mxu0
        %6320 = vmatprep.subr.bf16.mxu0 %v5021
        %6321 = vmatpush1.bf16.msra.mxu0 %v5020
        %6322 = vmatprep.subr.bf16.mxu0 %v5025
        %6323 = vmatpush1.bf16.msra.mxu0 %v5024
        %6324 = vmatprep.subr.bf16.mxu0 %v5029
        %6325 = vmatpush1.bf16.msra.mxu0 %v5028
        %6326 = vmatprep.subr.bf16.mxu0 %v5033
        %6327 = vmatpush1.bf16.msra.mxu0 %v5032
        %6328 = vmatprep.subr.bf16.mxu0 %v5037
        %6329 = vmatpush1.bf16.msra.mxu0 %v5036
        %6330 = vmatprep.subr.bf16.mxu0 %v5041
        %6331 = vmatpush1.bf16.msra.mxu0 %v5040
        %6332 = vmatprep.subr.bf16.mxu0 %v5045
        %6333 = vmatpush1.bf16.msra.mxu0 %v5044
        %6334 = vmatprep.subr.bf16.mxu0 %v5049
        %6335 = vmatpush1.bf16.msra.mxu0 %v5048
        %6336 = vmatprep.subr.bf16.mxu0 0
        %6337 = vmatpush1.bf16.msra.mxu0 0
        %6338 = vmatprep.subr.bf16.mxu0 0
        %6339 = vmatpush1.bf16.msra.mxu0 0
        %6340 = vmatprep.subr.bf16.mxu0 0
        %6341 = vmatpush1.bf16.msra.mxu0 0
        %6342 = vmatprep.subr.bf16.mxu0 0
        %6343 = vmatpush1.bf16.msra.mxu0 0
        %6344 = vmatprep.subr.bf16.mxu0 0
        %6345 = vmatpush1.bf16.msra.mxu0 0
        %6346 = vmatprep.subr.bf16.mxu0 0
        %6347 = vmatpush1.bf16.msra.mxu0 0
        %6348 = vmatprep.subr.bf16.mxu0 0
        %6349 = vmatpush1.bf16.msra.mxu0 0
        %6350 = vmatprep.subr.bf16.mxu0 0
        %6351 = vmatpush1.bf16.msra.mxu0 0
        %6352 = vmatprep.mubr.bf16.mxu0 0
        %6353 = vmatmul.mubr.bf16.gmra.mrb[0].mxu0 %v5019
        %v6354 = vpop.f32.mrb[0].mxu0
        %v6355 = vadd.f32 %v6273, %v6354
        %v6356 = vpop.f32.mrb[0].mxu0
        %v6357 = vadd.f32 %v6275, %v6356
        %v6358 = vpop.f32.mrb[0].mxu0
        %v6359 = vpop.f32.mrb[0].mxu0
        %6360 = vdwg.mxu0
        %6361 = vmatprep.subr.bf16.mxu0 %v5023
        %6362 = vmatpush1.bf16.msra.mxu0 %v5022
        %6363 = vmatprep.subr.bf16.mxu0 %v5027
        %6364 = vmatpush1.bf16.msra.mxu0 %v5026
        %6365 = vmatprep.subr.bf16.mxu0 %v5031
        %6366 = vmatpush1.bf16.msra.mxu0 %v5030
        %6367 = vmatprep.subr.bf16.mxu0 %v5035
        %6368 = vmatpush1.bf16.msra.mxu0 %v5034
        %6369 = vmatprep.subr.bf16.mxu0 %v5039
        %6370 = vmatpush1.bf16.msra.mxu0 %v5038
        %6371 = vmatprep.subr.bf16.mxu0 %v5043
        %6372 = vmatpush1.bf16.msra.mxu0 %v5042
        %6373 = vmatprep.subr.bf16.mxu0 %v5047
        %6374 = vmatpush1.bf16.msra.mxu0 %v5046
        %6375 = vmatprep.subr.bf16.mxu0 %v5051
        %6376 = vmatpush1.bf16.msra.mxu0 %v5050
        %6377 = vmatprep.subr.bf16.mxu0 0
        %6378 = vmatpush1.bf16.msra.mxu0 0
        %6379 = vmatprep.subr.bf16.mxu0 0
        %6380 = vmatpush1.bf16.msra.mxu0 0
        %6381 = vmatprep.subr.bf16.mxu0 0
        %6382 = vmatpush1.bf16.msra.mxu0 0
        %6383 = vmatprep.subr.bf16.mxu0 0
        %6384 = vmatpush1.bf16.msra.mxu0 0
        %6385 = vmatprep.subr.bf16.mxu0 0
        %6386 = vmatpush1.bf16.msra.mxu0 0
        %6387 = vmatprep.subr.bf16.mxu0 0
        %6388 = vmatpush1.bf16.msra.mxu0 0
        %6389 = vmatprep.subr.bf16.mxu0 0
        %6390 = vmatpush1.bf16.msra.mxu0 0
        %6391 = vmatprep.subr.bf16.mxu0 0
        %6392 = vmatpush1.bf16.msra.mxu0 0
        %6393 = vmatprep.mubr.bf16.mxu0 0
        %6394 = vmatmul.mubr.bf16.gmra.mrb[0].mxu0 %v5019
        %v6395 = vpop.f32.mrb[0].mxu0
        %v6396 = vadd.f32 %v6314, %v6395
        %v6397 = vpop.f32.mrb[0].mxu0
        %v6398 = vadd.f32 %v6316, %v6397
        %v6399 = vpop.f32.mrb[0].mxu0
        %v6400 = vpop.f32.mrb[0].mxu0
        %6401 = vdwg.mxu0
        %v6402 = vld [vmem:[%s3] sm:$0xff]
        %6404 = vset.pattern.permute.xlu0 0
        %6405 = vperm.xlu0 %6404, %v6402
        %v6406 = vpop.permute.xlu0 %6405
        %v6408 = vadd.f32 %v6355, %v6406
        %v6409 = vadd.f32 %v6357, %v6406
        %v6410 = vadd.f32 %v6396, %v6406
        %v6411 = vadd.f32 %v6398, %v6406
        %v6412 = vstv %s349
        %v6413 = vmul.f32 %v6412, %v6408
        %v6414 = vmul.f32 %v6412, %v6409
        %v6415 = vmul.f32 %v6412, %v6410
        %v6416 = vmul.f32 %v6412, %v6411
        %v6417 = vsub.f32 0.0, %v6413
        %v6418 = vsub.f32 0.0, %v6414
        %v6419 = vsub.f32 0.0, %v6415
        %v6420 = vsub.f32 0.0, %v6416
        %v6421 = vmul.f32 %v6417, 1.442695
        %v6422 = vpow.pop %v6421
        %v6423 = vmul.f32 %v6418, 1.442695
        %v6424 = vpow.pop %v6423
        %v6425 = vmul.f32 %v6419, 1.442695
        %v6426 = vpow.pop %v6425
        %v6427 = vmul.f32 %v6420, 1.442695
        %v6428 = vpow.pop %v6427
        %v6429 = vadd.f32 %v6422, 1.0
        %v6430 = vadd.f32 %v6424, 1.0
        %v6431 = vadd.f32 %v6426, 1.0
        %v6432 = vadd.f32 %v6428, 1.0
        %v6433 = vrcp.pop %v6429
        %v6434 = vrcp.pop %v6430
        %v6435 = vrcp.pop %v6431
        %v6436 = vrcp.pop %v6432
        %v6437 = vmul.f32 %v6408, %v6433
        %v6438 = vmul.f32 %v6409, %v6434
        %v6439 = vmul.f32 %v6410, %v6435
        %v6440 = vmul.f32 %v6411, %v6436
        %v6441 = vadd.f32 %v6437, %v6438
        %v6442 = vadd.f32 %v6441, %v6439
        %v6443 = vadd.f32 %v6442, %v6440
        %6444 = vadd.xlane.f32.xlu0 %v6443
        %v6445 = vpop.xlane.xlu0 %6444
        %v6446 = vrcp.pop 512.0
        %v6447 = vmul.f32 %v6445, %v6446
        %v6448 = vld [vmem:[%s5] sm:$0xff]
        %v6449 = vmul.f32 %v6448, %v6447
        %vm6450 = vcmask 31744
        %v6451 = vsel %vm6450, %v6449, 0.0
        %v6452 = vrot.slane %v6451, 4
        %v6453 = vadd.f32 %v6451, %v6452
        %v6454 = vrot.slane %v6453, 2
        %v6455 = vadd.f32 %v6453, %v6454
        %v6456 = vrot.slane %v6455, 1
        %v6457 = vadd.f32 %v6455, %v6456
        %v6458 = vld [vmem:[%s6] sm:$0x1]
        %v6459 = vadd.f32 %v6457, %v6458
        %v6460 = vstv %s350
        %v6461 = vmul.f32 %v6460, %v6459
        %v6462 = vsub.f32 0.0, %v6461
        %v6463 = vmul.f32 %v6462, 1.442695
        %v6464 = vpow.pop %v6463
        %v6465 = vadd.f32 %v6464, 1.0
        %v6466 = vrcp.pop %v6465
        %v6467 = vmul.f32 %v6459, %v6466
        %v6468 = vld [vmem:[%s7] sm:$0xff]
        %v6469 = vlaneseq
        %v6470 = vshrl.u32 %v6469, 7
        %v6471 = vsub.s32 0, %v6470
        %v6472 = vrot.slane %v6467, %v6471
        %v6473 = vmul.f32 %v6468, %v6472
        %v6474 = vsel %vm6450, %v6473, 0.0
        %6475 = vadd.xlane.f32.xlu0 %v6474
        %v6476 = vpop.xlane.xlu0 %6475
        %v6477 = vld [vmem:[%s8] sm:$0xff]
        %v6478 = vadd.f32 %v6476, %v6477
        %v6479 = vsub.f32 0.0, %v6478
        %v6480 = vmul.f32 %v6479, 1.442695
        %v6481 = vpow.pop %v6480
        %v6482 = vadd.f32 %v6481, 1.0
        %v6483 = vrcp.pop %v6482
        %6485 = vset.pattern.permute.xlu0 0
        %6486 = vperm.xlu0 %6485, %v6483
        %v6487 = vpop.permute.xlu0 %6486
        %v6489 = vmul.f32 %v6437, %v6487
        %v6490 = vmul.f32 %v6438, %v6487
        %v6491 = vmul.f32 %v6439, %v6487
        %v6492 = vmul.f32 %v6440, %v6487
        %v6493 = vadd.f32 %v6489, %v353
        %v6494 = vadd.f32 %v6490, %v354
        %v6495 = vadd.f32 %v6491, %v355
        %v6496 = vadd.f32 %v6492, %v356
        %6497 = vst [vmem:[%s346] sm:$0xff] %v6493
        %6498 = vst [vmem:[%s346 + $0x8] sm:$0xff] %v6494
        %6499 = vst [vmem:[%s346 + $0x10] sm:$0xff] %v6495
        %6500 = vst [vmem:[%s346 + $0x18] sm:$0xff] %v6496
        %p6501 = scmp.lt.s32.totalorder %s21, 1
        %s6502 = scalar_select %p6501, %s21, 1
        %s6503 = smul.addr %s6502, 4
        %s6504 = smul.addr %s6503, 8
        %s6505 = scalar_lea.vmem %s9, %s6504
        // Predicated region
        $region61: #{rcab3d_pallas.1} parent=55 // pred_check
          %p6506 = pneg %p233
        $region62: #{rcab3d_pallas.1} parent=55 // pred_check_branch
          %6508 = sbr.rel (%p6506) target = $region64
        $region63: #{rcab3d_pallas.1} parent=55 // pred_region
          _
        $region64: #{rcab3d_pallas.1} parent=55 // pred_fallthru
          _
      $region56: #{rcab3d_pallas.1} parent=5 // pred_fallthru
        _
      %p6509 = scmp.le.s32.totalorder 2, %s16
      // Predicated region
      $region65: #{rcab3d_pallas.1} parent=5 // pred_check
        %p6510 = pneg %p6509
      $region66: #{rcab3d_pallas.1} parent=5 // pred_check_branch
        %6512 = sbr.rel (%p6510) target = $region68
      $region67: #{rcab3d_pallas.1} parent=5 // pred_region
        %s6513 = ssub.s32 %s16, 2
        // Predicated region
        $region69: #{rcab3d_pallas.1} parent=67 // pred_check
          %p6514 = pneg %p239
        $region70: #{rcab3d_pallas.1} parent=67 // pred_check_branch
          %6516 = sbr.rel (%p6514) target = $region72
        $region71: #{rcab3d_pallas.1} parent=67 // pred_region
          %p6517 = scmp.lt.s32.totalorder %s22, 1
          %s6518 = scalar_select %p6517, %s22, 1
          %s6519 = smul.addr %s6518, 4
          %s6520 = smul.addr %s6519, 8
          %s6521 = scalar_lea.vmem %s9, %s6520
        $region72: #{rcab3d_pallas.1} parent=67 // pred_fallthru
          _
      $region68: #{rcab3d_pallas.1} parent=5 // pred_fallthru
        _
    $region6: #{rcab3d_pallas.1} parent=1 // loop_footer
      %s20 = sadd.s32 1, %s16
    $region7: #{rcab3d_pallas.1} parent=1 // loop_footer_branch
      %15 = sbr.rel target = $region3
    $region8: #{rcab3d_pallas.1} parent=1 // loop_exit
      _
    %6522 = vsyncpa [#allocation5], 1
    %s6523 = scalar_lea.sflag [#allocation5], 1
    %6524 = vsyncpa %s6523, 1

</llo_original>
